<compile_context>
chip_gen: v7x
topology: tpu7x:2x2x1
jax: 0.10.0
libtpu: 0.0.40
codegen_flags: <defaults>
</compile_context>

<pallas_src>
import jax
import jax.numpy as jnp
from jax.experimental import pallas as pl
from jax.experimental.pallas import tpu as pltpu


# ----------------------------------------------------------------------------
# Fused Pallas kernel: preprocess + conv3x3/ReLU + conv3x3/ReLU for one image.
# ----------------------------------------------------------------------------
def _ocr_fused_kernel(x_ref, w1_ref, b1_ref, w2_ref, b2_ref, o_ref,
                      xpad_ref, f1pad_ref):
    # x_ref    : (1, H, W, 3)     f32  -- raw image, RGB, values in [0, 1]
    # w1_ref   : (3, 3, 3, CH)    bf16 -- BGR-flipped, /255-folded layer-1 weights
    # b1_ref   : (1, CH)          f32
    # w2_ref   : (9*CH, COUT)     bf16 -- im2col-reshaped layer-2 weights
    # b2_ref   : (1, COUT)        f32
    # o_ref    : (1, H, W, COUT)  f32
    # xpad_ref : (H+2, W+2, 3)    bf16 scratch: quantized input + zero halo
    # f1pad_ref: (H+2, W+2, CH)   bf16 scratch: layer-1 output + zero halo
    H, W = o_ref.shape[1], o_ref.shape[2]
    CH = f1pad_ref.shape[-1]
    COUT = o_ref.shape[-1]

    b1 = b1_ref[...]
    b2 = b2_ref[...]

    # ---- preprocessing fused into the kernel load path -----------------
    # ToPILImage + np.astype('uint8') truncates (pic.mul(255).byte()); emulate
    # with floor in f32 (exact), store as bf16 (integers 0..255 are exact in
    # bf16).  RGB->BGR and /255 are already folded into w1 by the wrapper.
    x = x_ref[0]
    xq = jnp.floor(jnp.clip(x, 0.0, 1.0) * 255.0)
    xpad_ref[...] = jnp.zeros_like(xpad_ref)              # zero 'same' halo
    xpad_ref[1:H + 1, 1:W + 1, :] = xq.astype(jnp.bfloat16)

    # ---- layer 1: 3x3 conv + bias + ReLU (Cin = 3 -> keep 9-tap form) ---
    acc1 = jnp.zeros((H * W, CH), jnp.float32)
    for dy in range(3):
        for dx in range(3):
            patch = xpad_ref[dy:dy + H, dx:dx + W, :].reshape(H * W, 3)
            acc1 = acc1 + jnp.dot(patch, w1_ref[dy, dx],
                                  preferred_element_type=jnp.float32)
    f1 = jnp.maximum(acc1 + b1, 0.0)                      # (H*W, CH) f32

    # ---- layer-1 output stays in VMEM (no HBM round trip), bf16 + halo --
    f1pad_ref[...] = jnp.zeros_like(f1pad_ref)            # zero 'same' halo
    f1pad_ref[1:H + 1, 1:W + 1, :] = f1.reshape(H, W, CH).astype(jnp.bfloat16)

    # ---- layer 2: im2col -> single (H*W, 9*CH) x (9*CH, COUT) MXU matmul
    cols = [f1pad_ref[dy:dy + H, dx:dx + W, :].reshape(H * W, CH)
            for dy in range(3) for dx in range(3)]
    p2 = jnp.concatenate(cols, axis=-1)                   # (H*W, 9*CH) bf16
    acc2 = jnp.dot(p2, w2_ref[...], preferred_element_type=jnp.float32)
    out = jnp.maximum(acc2 + b2, 0.0)
    o_ref[0] = out.reshape(H, W, COUT)                    # lane-dense store


def _ocr_backbone(x_nhwc, w1_eff, b1_eff, w2_eff, b2_eff):
    """x_nhwc: (B, H, W, 3) f32 in [0,1]. Returns (B, H, W, COUT) f32."""
    B, H, W, _ = x_nhwc.shape
    CH = w1_eff.shape[-1]
    COUT = w2_eff.shape[-1]

    # TODO(synk): at real OCR resolutions, add an H-strip grid axis (with a
    #             1-row halo) so blocks fit v7x's 64 MiB VMEM and both
    #             TensorCores stay busy even at B=1; per-image blocks are fine
    #             at these small demo shapes.
    return pl.pallas_call(
        _ocr_fused_kernel,
        out_shape=jax.ShapeDtypeStruct((B, H, W, COUT), jnp.float32),
        grid_spec=pltpu.PrefetchScalarGridSpec(
            num_scalar_prefetch=0,
            grid=(B,),                                    # one image per step
            in_specs=[
                pl.BlockSpec((1, H, W, 3), lambda b: (b, 0, 0, 0)),
                pl.BlockSpec((3, 3, 3, CH), lambda b: (0, 0, 0, 0)),
                pl.BlockSpec((1, CH), lambda b: (0, 0)),
                pl.BlockSpec((9 * CH, COUT), lambda b: (0, 0)),
                pl.BlockSpec((1, COUT), lambda b: (0, 0)),
            ],
            out_specs=pl.BlockSpec((1, H, W, COUT), lambda b: (b, 0, 0, 0)),
            scratch_shapes=[
                pltpu.VMEM((H + 2, W + 2, 3), jnp.bfloat16),    # padded input
                pltpu.VMEM((H + 2, W + 2, CH), jnp.bfloat16),   # padded f1
            ],
        ),
        compiler_params=pltpu.CompilerParams(
            dimension_semantics=("parallel",),
            vmem_limit_bytes=32 * 1024 * 1024,
        ),
    )(x_nhwc, w1_eff, b1_eff, w2_eff, b2_eff)


# ----------------------------------------------------------------------------
# OCRFeatureExtractor forward (thin JAX glue around the fused Pallas kernel)
# ----------------------------------------------------------------------------
def ocr_feature_extractor_forward(images, params):
    """images: (B, 3, H, W) float in [0, 1] (PyTorch NCHW convention)."""
    w1, b1, w2, b2 = params
    CH = w1.shape[-1]
    COUT = w2.shape[-1]

    # One-time parameter prep (zero per-step cost):
    #  * cv2 RGB->BGR conversion folded into w1 by flipping its Cin axis
    #  * /255 normalization folded into w1's scale
    #  * w2 pre-reshaped into the im2col (9*CH, COUT) slab; both cast to bf16
    w1_eff = (w1[:, :, ::-1, :] * (1.0 / 255.0)).astype(jnp.bfloat16)
    w2_eff = w2.reshape(9 * CH, COUT).astype(jnp.bfloat16)
    b1_eff = b1.reshape(1, CH).astype(jnp.float32)
    b2_eff = b2.reshape(1, COUT).astype(jnp.float32)

    # Only wrapper-side data-movement op: NCHW -> NHWC.  Quantization, BGR
    # flip, /255, halo padding and both conv layers are fused in the kernel.
    x_nhwc = jnp.transpose(images, (0, 2, 3, 1)).astype(jnp.float32)

    # cv2.resize to IMAGE_DIMS: IMAGE_DIMS equals the input spatial size here,
    # so the resize is the identity.
    # TODO(synk): bilinear cv2.resize / padding() aspect-ratio fix-up not
    #             implemented (identity at these shapes).
    feats = _ocr_backbone(x_nhwc, w1_eff, b1_eff, w2_eff, b2_eff)

    # torch.as_tensor(batch) stacks per-image .predict() outputs, each with a
    # leading batch dim of 1 -> logits shape (B, 1, H, W, C).
    return feats[:, None, ...]


def make_params(key, c_in=3, c_hid=128, c_out=128):
    k1, k2, k3, k4 = jax.random.split(key, 4)
    w1 = jax.random.normal(k1, (3, 3, c_in, c_hid), jnp.float32) * 0.1
    b1 = jax.random.normal(k2, (c_hid,), jnp.float32) * 0.01
    w2 = jax.random.normal(k3, (3, 3, c_hid, c_out), jnp.float32) * 0.05
    b2 = jax.random.normal(k4, (c_out,), jnp.float32) * 0.01
    return w1, b1, w2, b2


if __name__ == "__main__":
    key = jax.random.PRNGKey(0)
    k_img, k_par = jax.random.split(key)

    B, C, H, W = 2, 3, 16, 16          # small shapes; IMAGE_DIMS == (H, W, 3)
    images = jax.random.uniform(k_img, (B, C, H, W), jnp.float32)
    params = make_params(k_par)

    forward = jax.jit(ocr_feature_extractor_forward)
    logits = forward(images, params)
    logits = jax.block_until_ready(logits)

    assert logits.shape == (B, 1, H, W, 128), logits.shape
    assert logits.dtype == jnp.float32
    assert bool(jnp.all(jnp.isfinite(logits)))
    print("KERNEL_OK")
</pallas_src>

<mosaic_0001>
module attributes {stable_mosaic.version = 11 : i64} {
  func.func @_ocr_fused_kernel(%arg0: i32, %arg1: memref<1x16x16x3xf32, #tpu.memory_space<vmem>>, %arg2: memref<3x3x3x128xbf16, #tpu.memory_space<vmem>>, %arg3: memref<1x128xf32, #tpu.memory_space<vmem>>, %arg4: memref<1152x128xbf16, #tpu.memory_space<vmem>>, %arg5: memref<1x128xf32, #tpu.memory_space<vmem>>, %arg6: memref<1x16x16x128xf32, #tpu.memory_space<vmem>>, %arg7: memref<18x18x3xbf16, #tpu.memory_space<vmem>>, %arg8: memref<18x18x128xbf16, #tpu.memory_space<vmem>>) attributes {dimension_semantics = [#tpu.dimension_semantics<parallel>], iteration_bounds = array<i64: 2>, scalar_prefetch = 0 : i64, scratch_operands = 2 : i64, tpu.core_type = #tpu.core_type<tc>, window_params = [{transform_indices = @transform_0, window_bounds = array<i64: 1, 16, 16, 3>}, {pipeline_mode = #tpu.pipeline_mode<synchronous>, transform_indices = @transform_1, window_bounds = array<i64: 3, 3, 3, 128>}, {pipeline_mode = #tpu.pipeline_mode<synchronous>, transform_indices = @transform_2, window_bounds = array<i64: 1, 128>}, {pipeline_mode = #tpu.pipeline_mode<synchronous>, transform_indices = @transform_3, window_bounds = array<i64: 1152, 128>}, {pipeline_mode = #tpu.pipeline_mode<synchronous>, transform_indices = @transform_4, window_bounds = array<i64: 1, 128>}, {transform_indices = @transform_5, window_bounds = array<i64: 1, 16, 16, 128>}]} {
    %c0 = arith.constant 0 : index
    %c0_0 = arith.constant 0 : index
    %0 = vector.load %arg3[%c0, %c0_0] : memref<1x128xf32, #tpu.memory_space<vmem>>, vector<1x128xf32>
    %c0_1 = arith.constant 0 : index
    %c0_2 = arith.constant 0 : index
    %1 = vector.load %arg5[%c0_1, %c0_2] : memref<1x128xf32, #tpu.memory_space<vmem>>, vector<1x128xf32>
    %c0_3 = arith.constant 0 : index
    %c0_4 = arith.constant 0 : index
    %c0_5 = arith.constant 0 : index
    %c0_6 = arith.constant 0 : index
    %2 = vector.load %arg1[%c0_3, %c0_4, %c0_5, %c0_6] : memref<1x16x16x3xf32, #tpu.memory_space<vmem>>, vector<1x16x16x3xf32>
    %3 = vector.shape_cast %2 : vector<1x16x16x3xf32> to vector<16x16x3xf32>
    %cst = arith.constant 0.000000e+00 : f32
    %cst_7 = arith.constant 1.000000e+00 : f32
    %4 = vector.broadcast %cst : f32 to vector<16x16x3xf32>
    %5 = arith.maximumf %4, %3 : vector<16x16x3xf32>
    %6 = vector.broadcast %cst_7 : f32 to vector<16x16x3xf32>
    %7 = arith.minimumf %6, %5 : vector<16x16x3xf32>
    %cst_8 = arith.constant 2.550000e+02 : f32
    %8 = vector.broadcast %cst_8 : f32 to vector<16x16x3xf32>
    %9 = arith.mulf %7, %8 : vector<16x16x3xf32>
    %10 = math.floor %9 : vector<16x16x3xf32>
    %cst_9 = arith.constant 0.000000e+00 : bf16
    %11 = vector.broadcast %cst_9 : bf16 to vector<18x18x3xbf16>
    %c0_10 = arith.constant 0 : index
    %c0_11 = arith.constant 0 : index
    %c0_12 = arith.constant 0 : index
    %12 = vector.load %arg7[%c0_10, %c0_11, %c0_12] : memref<18x18x3xbf16, #tpu.memory_space<vmem>>, vector<18x18x3xbf16>
    tpu.vector_store %arg7[%c0_10, %c0_11, %c0_12], %11 {strides = array<i32>} : memref<18x18x3xbf16, #tpu.memory_space<vmem>>, vector<18x18x3xbf16>,
    %13 = arith.truncf %10 : vector<16x16x3xf32> to vector<16x16x3xbf16>
    %c1 = arith.constant 1 : index
    %c1_13 = arith.constant 1 : index
    %c0_14 = arith.constant 0 : index
    %14 = vector.load %arg7[%c1, %c1_13, %c0_14] : memref<18x18x3xbf16, #tpu.memory_space<vmem>>, vector<16x16x3xbf16>
    tpu.vector_store %arg7[%c1, %c1_13, %c0_14], %13 {strides = array<i32>} : memref<18x18x3xbf16, #tpu.memory_space<vmem>>, vector<16x16x3xbf16>,
    %cst_15 = arith.constant 0.000000e+00 : f32
    %15 = vector.broadcast %cst_15 : f32 to vector<256x128xf32>
    %c0_16 = arith.constant 0 : index
    %c0_17 = arith.constant 0 : index
    %c0_18 = arith.constant 0 : index
    %16 = vector.load %arg7[%c0_16, %c0_17, %c0_18] : memref<18x18x3xbf16, #tpu.memory_space<vmem>>, vector<16x16x3xbf16>
    %17 = vector.shape_cast %16 : vector<16x16x3xbf16> to vector<256x3xbf16>
    %c0_19 = arith.constant 0 : index
    %c0_20 = arith.constant 0 : index
    %c0_21 = arith.constant 0 : index
    %c0_22 = arith.constant 0 : index
    %18 = vector.load %arg2[%c0_19, %c0_20, %c0_21, %c0_22] : memref<3x3x3x128xbf16, #tpu.memory_space<vmem>>, vector<1x1x3x128xbf16>
    %19 = vector.shape_cast %18 : vector<1x1x3x128xbf16> to vector<3x128xbf16>
    %cst_23 = arith.constant dense<0.000000e+00> : vector<256x128xf32>
    %20 = tpu.matmul %17, %19, %cst_23 {dimension_numbers = #tpu.dot_dimension_numbers<[1], [0], [0], [1], [0, 0, 1, 1], [], []>} : vector<256x3xbf16>, vector<3x128xbf16>, vector<256x128xf32> -> vector<256x128xf32>
    %21 = arith.addf %15, %20 : vector<256x128xf32>
    %c0_24 = arith.constant 0 : index
    %c1_25 = arith.constant 1 : index
    %c0_26 = arith.constant 0 : index
    %22 = vector.load %arg7[%c0_24, %c1_25, %c0_26] : memref<18x18x3xbf16, #tpu.memory_space<vmem>>, vector<16x16x3xbf16>
    %23 = vector.shape_cast %22 : vector<16x16x3xbf16> to vector<256x3xbf16>
    %c0_27 = arith.constant 0 : index
    %c1_28 = arith.constant 1 : index
    %c0_29 = arith.constant 0 : index
    %c0_30 = arith.constant 0 : index
    %24 = vector.load %arg2[%c0_27, %c1_28, %c0_29, %c0_30] : memref<3x3x3x128xbf16, #tpu.memory_space<vmem>>, vector<1x1x3x128xbf16>
    %25 = vector.shape_cast %24 : vector<1x1x3x128xbf16> to vector<3x128xbf16>
    %cst_31 = arith.constant dense<0.000000e+00> : vector<256x128xf32>
    %26 = tpu.matmul %23, %25, %cst_31 {dimension_numbers = #tpu.dot_dimension_numbers<[1], [0], [0], [1], [0, 0, 1, 1], [], []>} : vector<256x3xbf16>, vector<3x128xbf16>, vector<256x128xf32> -> vector<256x128xf32>
    %27 = arith.addf %21, %26 : vector<256x128xf32>
    %c0_32 = arith.constant 0 : index
    %c2 = arith.constant 2 : index
    %c0_33 = arith.constant 0 : index
    %28 = vector.load %arg7[%c0_32, %c2, %c0_33] : memref<18x18x3xbf16, #tpu.memory_space<vmem>>, vector<16x16x3xbf16>
    %29 = vector.shape_cast %28 : vector<16x16x3xbf16> to vector<256x3xbf16>
    %c0_34 = arith.constant 0 : index
    %c2_35 = arith.constant 2 : index
    %c0_36 = arith.constant 0 : index
    %c0_37 = arith.constant 0 : index
    %30 = vector.load %arg2[%c0_34, %c2_35, %c0_36, %c0_37] : memref<3x3x3x128xbf16, #tpu.memory_space<vmem>>, vector<1x1x3x128xbf16>
    %31 = vector.shape_cast %30 : vector<1x1x3x128xbf16> to vector<3x128xbf16>
    %cst_38 = arith.constant dense<0.000000e+00> : vector<256x128xf32>
    %32 = tpu.matmul %29, %31, %cst_38 {dimension_numbers = #tpu.dot_dimension_numbers<[1], [0], [0], [1], [0, 0, 1, 1], [], []>} : vector<256x3xbf16>, vector<3x128xbf16>, vector<256x128xf32> -> vector<256x128xf32>
    %33 = arith.addf %27, %32 : vector<256x128xf32>
    %c1_39 = arith.constant 1 : index
    %c0_40 = arith.constant 0 : index
    %c0_41 = arith.constant 0 : index
    %34 = vector.load %arg7[%c1_39, %c0_40, %c0_41] : memref<18x18x3xbf16, #tpu.memory_space<vmem>>, vector<16x16x3xbf16>
    %35 = vector.shape_cast %34 : vector<16x16x3xbf16> to vector<256x3xbf16>
    %c1_42 = arith.constant 1 : index
    %c0_43 = arith.constant 0 : index
    %c0_44 = arith.constant 0 : index
    %c0_45 = arith.constant 0 : index
    %36 = vector.load %arg2[%c1_42, %c0_43, %c0_44, %c0_45] : memref<3x3x3x128xbf16, #tpu.memory_space<vmem>>, vector<1x1x3x128xbf16>
    %37 = vector.shape_cast %36 : vector<1x1x3x128xbf16> to vector<3x128xbf16>
    %cst_46 = arith.constant dense<0.000000e+00> : vector<256x128xf32>
    %38 = tpu.matmul %35, %37, %cst_46 {dimension_numbers = #tpu.dot_dimension_numbers<[1], [0], [0], [1], [0, 0, 1, 1], [], []>} : vector<256x3xbf16>, vector<3x128xbf16>, vector<256x128xf32> -> vector<256x128xf32>
    %39 = arith.addf %33, %38 : vector<256x128xf32>
    %c1_47 = arith.constant 1 : index
    %c1_48 = arith.constant 1 : index
    %c0_49 = arith.constant 0 : index
    %40 = vector.load %arg7[%c1_47, %c1_48, %c0_49] : memref<18x18x3xbf16, #tpu.memory_space<vmem>>, vector<16x16x3xbf16>
    %41 = vector.shape_cast %40 : vector<16x16x3xbf16> to vector<256x3xbf16>
    %c1_50 = arith.constant 1 : index
    %c1_51 = arith.constant 1 : index
    %c0_52 = arith.constant 0 : index
    %c0_53 = arith.constant 0 : index
    %42 = vector.load %arg2[%c1_50, %c1_51, %c0_52, %c0_53] : memref<3x3x3x128xbf16, #tpu.memory_space<vmem>>, vector<1x1x3x128xbf16>
    %43 = vector.shape_cast %42 : vector<1x1x3x128xbf16> to vector<3x128xbf16>
    %cst_54 = arith.constant dense<0.000000e+00> : vector<256x128xf32>
    %44 = tpu.matmul %41, %43, %cst_54 {dimension_numbers = #tpu.dot_dimension_numbers<[1], [0], [0], [1], [0, 0, 1, 1], [], []>} : vector<256x3xbf16>, vector<3x128xbf16>, vector<256x128xf32> -> vector<256x128xf32>
    %45 = arith.addf %39, %44 : vector<256x128xf32>
    %c1_55 = arith.constant 1 : index
    %c2_56 = arith.constant 2 : index
    %c0_57 = arith.constant 0 : index
    %46 = vector.load %arg7[%c1_55, %c2_56, %c0_57] : memref<18x18x3xbf16, #tpu.memory_space<vmem>>, vector<16x16x3xbf16>
    %47 = vector.shape_cast %46 : vector<16x16x3xbf16> to vector<256x3xbf16>
    %c1_58 = arith.constant 1 : index
    %c2_59 = arith.constant 2 : index
    %c0_60 = arith.constant 0 : index
    %c0_61 = arith.constant 0 : index
    %48 = vector.load %arg2[%c1_58, %c2_59, %c0_60, %c0_61] : memref<3x3x3x128xbf16, #tpu.memory_space<vmem>>, vector<1x1x3x128xbf16>
    %49 = vector.shape_cast %48 : vector<1x1x3x128xbf16> to vector<3x128xbf16>
    %cst_62 = arith.constant dense<0.000000e+00> : vector<256x128xf32>
    %50 = tpu.matmul %47, %49, %cst_62 {dimension_numbers = #tpu.dot_dimension_numbers<[1], [0], [0], [1], [0, 0, 1, 1], [], []>} : vector<256x3xbf16>, vector<3x128xbf16>, vector<256x128xf32> -> vector<256x128xf32>
    %51 = arith.addf %45, %50 : vector<256x128xf32>
    %c2_63 = arith.constant 2 : index
    %c0_64 = arith.constant 0 : index
    %c0_65 = arith.constant 0 : index
    %52 = vector.load %arg7[%c2_63, %c0_64, %c0_65] : memref<18x18x3xbf16, #tpu.memory_space<vmem>>, vector<16x16x3xbf16>
    %53 = vector.shape_cast %52 : vector<16x16x3xbf16> to vector<256x3xbf16>
    %c2_66 = arith.constant 2 : index
    %c0_67 = arith.constant 0 : index
    %c0_68 = arith.constant 0 : index
    %c0_69 = arith.constant 0 : index
    %54 = vector.load %arg2[%c2_66, %c0_67, %c0_68, %c0_69] : memref<3x3x3x128xbf16, #tpu.memory_space<vmem>>, vector<1x1x3x128xbf16>
    %55 = vector.shape_cast %54 : vector<1x1x3x128xbf16> to vector<3x128xbf16>
    %cst_70 = arith.constant dense<0.000000e+00> : vector<256x128xf32>
    %56 = tpu.matmul %53, %55, %cst_70 {dimension_numbers = #tpu.dot_dimension_numbers<[1], [0], [0], [1], [0, 0, 1, 1], [], []>} : vector<256x3xbf16>, vector<3x128xbf16>, vector<256x128xf32> -> vector<256x128xf32>
    %57 = arith.addf %51, %56 : vector<256x128xf32>
    %c2_71 = arith.constant 2 : index
    %c1_72 = arith.constant 1 : index
    %c0_73 = arith.constant 0 : index
    %58 = vector.load %arg7[%c2_71, %c1_72, %c0_73] : memref<18x18x3xbf16, #tpu.memory_space<vmem>>, vector<16x16x3xbf16>
    %59 = vector.shape_cast %58 : vector<16x16x3xbf16> to vector<256x3xbf16>
    %c2_74 = arith.constant 2 : index
    %c1_75 = arith.constant 1 : index
    %c0_76 = arith.constant 0 : index
    %c0_77 = arith.constant 0 : index
    %60 = vector.load %arg2[%c2_74, %c1_75, %c0_76, %c0_77] : memref<3x3x3x128xbf16, #tpu.memory_space<vmem>>, vector<1x1x3x128xbf16>
    %61 = vector.shape_cast %60 : vector<1x1x3x128xbf16> to vector<3x128xbf16>
    %cst_78 = arith.constant dense<0.000000e+00> : vector<256x128xf32>
    %62 = tpu.matmul %59, %61, %cst_78 {dimension_numbers = #tpu.dot_dimension_numbers<[1], [0], [0], [1], [0, 0, 1, 1], [], []>} : vector<256x3xbf16>, vector<3x128xbf16>, vector<256x128xf32> -> vector<256x128xf32>
    %63 = arith.addf %57, %62 : vector<256x128xf32>
    %c2_79 = arith.constant 2 : index
    %c2_80 = arith.constant 2 : index
    %c0_81 = arith.constant 0 : index
    %64 = vector.load %arg7[%c2_79, %c2_80, %c0_81] : memref<18x18x3xbf16, #tpu.memory_space<vmem>>, vector<16x16x3xbf16>
    %65 = vector.shape_cast %64 : vector<16x16x3xbf16> to vector<256x3xbf16>
    %c2_82 = arith.constant 2 : index
    %c2_83 = arith.constant 2 : index
    %c0_84 = arith.constant 0 : index
    %c0_85 = arith.constant 0 : index
    %66 = vector.load %arg2[%c2_82, %c2_83, %c0_84, %c0_85] : memref<3x3x3x128xbf16, #tpu.memory_space<vmem>>, vector<1x1x3x128xbf16>
    %67 = vector.shape_cast %66 : vector<1x1x3x128xbf16> to vector<3x128xbf16>
    %cst_86 = arith.constant dense<0.000000e+00> : vector<256x128xf32>
    %68 = tpu.matmul %65, %67, %cst_86 {dimension_numbers = #tpu.dot_dimension_numbers<[1], [0], [0], [1], [0, 0, 1, 1], [], []>} : vector<256x3xbf16>, vector<3x128xbf16>, vector<256x128xf32> -> vector<256x128xf32>
    %69 = arith.addf %63, %68 : vector<256x128xf32>
    %70 = vector.broadcast %0 : vector<1x128xf32> to vector<256x128xf32>
    %71 = arith.addf %69, %70 : vector<256x128xf32>
    %cst_87 = arith.constant 0.000000e+00 : f32
    %72 = vector.broadcast %cst_87 : f32 to vector<256x128xf32>
    %73 = arith.maximumf %71, %72 : vector<256x128xf32>
    %cst_88 = arith.constant 0.000000e+00 : bf16
    %74 = vector.broadcast %cst_88 : bf16 to vector<18x18x128xbf16>
    %c0_89 = arith.constant 0 : index
    %c0_90 = arith.constant 0 : index
    %c0_91 = arith.constant 0 : index
    %75 = vector.load %arg8[%c0_89, %c0_90, %c0_91] : memref<18x18x128xbf16, #tpu.memory_space<vmem>>, vector<18x18x128xbf16>
    tpu.vector_store %arg8[%c0_89, %c0_90, %c0_91], %74 {strides = array<i32>} : memref<18x18x128xbf16, #tpu.memory_space<vmem>>, vector<18x18x128xbf16>,
    %76 = vector.shape_cast %73 : vector<256x128xf32> to vector<16x16x128xf32>
    %77 = arith.truncf %76 : vector<16x16x128xf32> to vector<16x16x128xbf16>
    %c1_92 = arith.constant 1 : index
    %c1_93 = arith.constant 1 : index
    %c0_94 = arith.constant 0 : index
    %78 = vector.load %arg8[%c1_92, %c1_93, %c0_94] : memref<18x18x128xbf16, #tpu.memory_space<vmem>>, vector<16x16x128xbf16>
    tpu.vector_store %arg8[%c1_92, %c1_93, %c0_94], %77 {strides = array<i32>} : memref<18x18x128xbf16, #tpu.memory_space<vmem>>, vector<16x16x128xbf16>,
    %c0_95 = arith.constant 0 : index
    %c0_96 = arith.constant 0 : index
    %c0_97 = arith.constant 0 : index
    %79 = vector.load %arg8[%c0_95, %c0_96, %c0_97] : memref<18x18x128xbf16, #tpu.memory_space<vmem>>, vector<16x16x128xbf16>
    %80 = vector.shape_cast %79 : vector<16x16x128xbf16> to vector<256x128xbf16>
    %c0_98 = arith.constant 0 : index
    %c1_99 = arith.constant 1 : index
    %c0_100 = arith.constant 0 : index
    %81 = vector.load %arg8[%c0_98, %c1_99, %c0_100] : memref<18x18x128xbf16, #tpu.memory_space<vmem>>, vector<16x16x128xbf16>
    %82 = vector.shape_cast %81 : vector<16x16x128xbf16> to vector<256x128xbf16>
    %c0_101 = arith.constant 0 : index
    %c2_102 = arith.constant 2 : index
    %c0_103 = arith.constant 0 : index
    %83 = vector.load %arg8[%c0_101, %c2_102, %c0_103] : memref<18x18x128xbf16, #tpu.memory_space<vmem>>, vector<16x16x128xbf16>
    %84 = vector.shape_cast %83 : vector<16x16x128xbf16> to vector<256x128xbf16>
    %c1_104 = arith.constant 1 : index
    %c0_105 = arith.constant 0 : index
    %c0_106 = arith.constant 0 : index
    %85 = vector.load %arg8[%c1_104, %c0_105, %c0_106] : memref<18x18x128xbf16, #tpu.memory_space<vmem>>, vector<16x16x128xbf16>
    %86 = vector.shape_cast %85 : vector<16x16x128xbf16> to vector<256x128xbf16>
    %c1_107 = arith.constant 1 : index
    %c1_108 = arith.constant 1 : index
    %c0_109 = arith.constant 0 : index
    %87 = vector.load %arg8[%c1_107, %c1_108, %c0_109] : memref<18x18x128xbf16, #tpu.memory_space<vmem>>, vector<16x16x128xbf16>
    %88 = vector.shape_cast %87 : vector<16x16x128xbf16> to vector<256x128xbf16>
    %c1_110 = arith.constant 1 : index
    %c2_111 = arith.constant 2 : index
    %c0_112 = arith.constant 0 : index
    %89 = vector.load %arg8[%c1_110, %c2_111, %c0_112] : memref<18x18x128xbf16, #tpu.memory_space<vmem>>, vector<16x16x128xbf16>
    %90 = vector.shape_cast %89 : vector<16x16x128xbf16> to vector<256x128xbf16>
    %c2_113 = arith.constant 2 : index
    %c0_114 = arith.constant 0 : index
    %c0_115 = arith.constant 0 : index
    %91 = vector.load %arg8[%c2_113, %c0_114, %c0_115] : memref<18x18x128xbf16, #tpu.memory_space<vmem>>, vector<16x16x128xbf16>
    %92 = vector.shape_cast %91 : vector<16x16x128xbf16> to vector<256x128xbf16>
    %c2_116 = arith.constant 2 : index
    %c1_117 = arith.constant 1 : index
    %c0_118 = arith.constant 0 : index
    %93 = vector.load %arg8[%c2_116, %c1_117, %c0_118] : memref<18x18x128xbf16, #tpu.memory_space<vmem>>, vector<16x16x128xbf16>
    %94 = vector.shape_cast %93 : vector<16x16x128xbf16> to vector<256x128xbf16>
    %c2_119 = arith.constant 2 : index
    %c2_120 = arith.constant 2 : index
    %c0_121 = arith.constant 0 : index
    %95 = vector.load %arg8[%c2_119, %c2_120, %c0_121] : memref<18x18x128xbf16, #tpu.memory_space<vmem>>, vector<16x16x128xbf16>
    %96 = vector.shape_cast %95 : vector<16x16x128xbf16> to vector<256x128xbf16>
    %97 = tpu.concatenate %80, %82, %84, %86, %88, %90, %92, %94, %96 in 1 : vector<256x128xbf16>, vector<256x128xbf16>, vector<256x128xbf16>, vector<256x128xbf16>, vector<256x128xbf16>, vector<256x128xbf16>, vector<256x128xbf16>, vector<256x128xbf16>, vector<256x128xbf16> -> vector<256x1152xbf16>
    %c0_122 = arith.constant 0 : index
    %c0_123 = arith.constant 0 : index
    %98 = vector.load %arg4[%c0_122, %c0_123] : memref<1152x128xbf16, #tpu.memory_space<vmem>>, vector<1152x128xbf16>
    %cst_124 = arith.constant dense<0.000000e+00> : vector<256x128xf32>
    %99 = tpu.matmul %97, %98, %cst_124 {dimension_numbers = #tpu.dot_dimension_numbers<[1], [0], [0], [1], [0, 0, 1, 1], [], []>} : vector<256x1152xbf16>, vector<1152x128xbf16>, vector<256x128xf32> -> vector<256x128xf32>
    %100 = vector.broadcast %1 : vector<1x128xf32> to vector<256x128xf32>
    %101 = arith.addf %99, %100 : vector<256x128xf32>
    %cst_125 = arith.constant 0.000000e+00 : f32
    %102 = vector.broadcast %cst_125 : f32 to vector<256x128xf32>
    %103 = arith.maximumf %101, %102 : vector<256x128xf32>
    %104 = vector.shape_cast %103 : vector<256x128xf32> to vector<16x16x128xf32>
    %c0_126 = arith.constant 0 : index
    %c0_127 = arith.constant 0 : index
    %c0_128 = arith.constant 0 : index
    %c0_129 = arith.constant 0 : index
    %105 = vector.load %arg6[%c0_126, %c0_127, %c0_128, %c0_129] : memref<1x16x16x128xf32, #tpu.memory_space<vmem>>, vector<1x16x16x128xf32>
    %106 = vector.shape_cast %105 : vector<1x16x16x128xf32> to vector<16x16x128xf32>
    %107 = vector.shape_cast %104 : vector<16x16x128xf32> to vector<1x16x16x128xf32>
    tpu.vector_store %arg6[%c0_126, %c0_127, %c0_128, %c0_129], %107 {strides = array<i32>} : memref<1x16x16x128xf32, #tpu.memory_space<vmem>>, vector<1x16x16x128xf32>,
    return
  }
  func.func @transform_0(%arg0: i32) -> (i32, i32, i32, i32) {
    %c0_i32 = arith.constant 0 : i32
    %c0_i32_0 = arith.constant 0 : i32
    %c0_i32_1 = arith.constant 0 : i32
    %c0_i32_2 = arith.constant 0 : i32
    return %arg0, %c0_i32, %c0_i32_0, %c0_i32_1 : i32, i32, i32, i32
  }
  func.func @transform_1(%arg0: i32) -> (i32, i32, i32, i32) {
    %c0_i32 = arith.constant 0 : i32
    %c0_i32_0 = arith.constant 0 : i32
    %c0_i32_1 = arith.constant 0 : i32
    %c0_i32_2 = arith.constant 0 : i32
    %c0_i32_3 = arith.constant 0 : i32
    return %c0_i32, %c0_i32_0, %c0_i32_1, %c0_i32_2 : i32, i32, i32, i32
  }
  func.func @transform_2(%arg0: i32) -> (i32, i32) {
    %c0_i32 = arith.constant 0 : i32
    %c0_i32_0 = arith.constant 0 : i32
    %c0_i32_1 = arith.constant 0 : i32
    return %c0_i32, %c0_i32_0 : i32, i32
  }
  func.func @transform_3(%arg0: i32) -> (i32, i32) {
    %c0_i32 = arith.constant 0 : i32
    %c0_i32_0 = arith.constant 0 : i32
    %c0_i32_1 = arith.constant 0 : i32
    return %c0_i32, %c0_i32_0 : i32, i32
  }
  func.func @transform_4(%arg0: i32) -> (i32, i32) {
    %c0_i32 = arith.constant 0 : i32
    %c0_i32_0 = arith.constant 0 : i32
    %c0_i32_1 = arith.constant 0 : i32
    return %c0_i32, %c0_i32_0 : i32, i32
  }
  func.func @transform_5(%arg0: i32) -> (i32, i32, i32, i32) {
    %c0_i32 = arith.constant 0 : i32
    %c0_i32_0 = arith.constant 0 : i32
    %c0_i32_1 = arith.constant 0 : i32
    %c0_i32_2 = arith.constant 0 : i32
    return %arg0, %c0_i32, %c0_i32_0, %c0_i32_1 : i32, i32, i32, i32
  }
}

</mosaic_0001>

<llo_original>
// kernel: ocr_feature_extractor_forward.1
$region0: #{ocr_feature_extractor_forward.1}
  #allocation0 [shape = 'u32[]', space=smem, size = 0x4, offset = 0x4, fixed_abs, tag = 'smem constant byte address 0x4 - core index']
  #allocation1 [shape = 'u32[144,128]{1,0:T(1,128)}', space=vmem, size = 0x12000, scoped, tag = 'internal scratch']
  #allocation2 [shape = 'bf16[18,18,3]{2,1,0:T(8,128)(2,1)}', space=vmem, size = 0x1b000, scoped, tag = 'scratch operand']
  #allocation3 [shape = 'bf16[18,18,128]{2,1,0:T(8,128)(2,1)}', space=vmem, size = 0x1b000, scoped, tag = 'scratch operand']
  %s0 = inlined_call_operand.vmem [shape: f32[2,16,16,3], index: 0, kind: input, shape index: {}]
  %s1 = inlined_call_operand.vmem [shape: bf16[3,3,3,128], index: 1, kind: input, shape index: {}]
  %s2 = inlined_call_operand.vmem [shape: f32[1,128], index: 2, kind: input, shape index: {}]
  %s3 = inlined_call_operand.vmem [shape: bf16[1152,128], index: 3, kind: input, shape index: {}]
  %s4 = inlined_call_operand.vmem [shape: f32[1,128], index: 4, kind: input, shape index: {}]
  %s5 = inlined_call_operand.hbm [shape: f32[2,16,16,128], index: 5, kind: output, shape index: {}]
  %s6 = sld [smem:[#allocation0]]
  $region53: #{ocr_feature_extractor_forward.1} parent=0
    _
  %s8 = ssub.s32 1, %s6
  %s9 = scalar_select 0, %s8, %s6
  $region1: #{ocr_feature_extractor_forward.1} parent=0
    #allocation4 [shape = 'u8[262144]{0}', space=vmem, size = 0x40000, scoped, tag = 'output window, operand 0']
    #allocation5 [shape = 's32[2]{0}', space=sflag, size = 0x8, scoped, tag = 'scoped memory for ocr_feature_extractor_forward.1']
    %10 = vsyncpa [#allocation5], 0
    %s11 = scalar_lea.sflag [#allocation5], 1
    %12 = vsyncpa %s11, 0
    loop: start=0, step=1, limit=4
    $region2: #{ocr_feature_extractor_forward.1} parent=1 // loop_pre_header
      _
    $region3: #{ocr_feature_extractor_forward.1} parent=1 // loop_header
      %s14 = sphi 0, %s18
      %p15 = scmp.ge.s32.totalorder %s14, 4
      %s24 = sphi 0, %s26
      %s27 = sphi 0, %s24
      %s28 = sphi 0, %s27
      %s44 = sphi 0, %s28
      %s48 = sphi 0, %s48
      %s50 = sphi 0, %s48
      %s51 = sphi 0, %s50
      %s65 = sphi 0, %s51
      %s69 = sphi 0, %s69
      %s71 = sphi 0, %s69
      %s72 = sphi 0, %s71
      %s86 = sphi 0, %s72
      %s90 = sphi 0, %s90
      %s92 = sphi 0, %s90
      %s93 = sphi 0, %s92
      %s107 = sphi 0, %s93
      %s111 = sphi 0, %s111
      %s113 = sphi 0, %s111
      %s114 = sphi 0, %s113
      %s128 = sphi 0, %s114
      %s134 = sphi 0, %s136
      %s137 = sphi 0, %s134
      %s138 = sphi 0, %s137
      %s154 = sphi 0, %s138
    $region4: #{ocr_feature_extractor_forward.1} parent=1 // loop_header_branch
      %17 = sbr.rel (%p15) target = $region8
    $region5: #{ocr_feature_extractor_forward.1} parent=1 // loop_body
      %s19 = ssub.s32 %s14, 1
      %s20 = ssub.s32 %s14, 2
      %s21 = sadd.s32 %s14, 1
      %s22 = ssub.s32 %s14, %s21
      %p23 = scmp.eq.s32.totalorder %s22, 0
      %s25 = sadd.s32 %s24, 1
      %s26 = scalar_select %p23, %s24, %s25
      %p29 = pneg %p23
      %p30 = scmp.eq.s32.totalorder %s14, 1
      %p31 = por %p29, %p30
      %p32 = scmp.ne.s32.totalorder %s24, %s27
      %p33 = scmp.eq.s32.totalorder %s14, 0
      %p34 = por %p32, %p33
      %p35 = scmp.ne.s32.totalorder %s24, %s27
      %p36 = scmp.eq.s32.totalorder %s19, 1
      %p37 = por %p35, %p36
      %p38 = scmp.ne.s32.totalorder %s27, %s28
      %p39 = scmp.eq.s32.totalorder %s19, 0
      %p40 = por %p38, %p39
      %p41 = scmp.ne.s32.totalorder %s27, %s28
      %p42 = scmp.eq.s32.totalorder %s20, 1
      %p43 = por %p41, %p42
      %p45 = scmp.ne.s32.totalorder %s28, %s44
      %p46 = scmp.eq.s32.totalorder %s20, 0
      %p47 = por %p45, %p46
      %s49 = sadd.s32 %s48, 1
      %p52 = scmp.eq.s32.totalorder %s14, 1
      %p53 = scmp.ne.s32.totalorder %s48, %s50
      %p54 = scmp.eq.s32.totalorder %s14, 0
      %p55 = por %p53, %p54
      %p56 = scmp.ne.s32.totalorder %s48, %s50
      %p57 = scmp.eq.s32.totalorder %s19, 1
      %p58 = por %p56, %p57
      %p59 = scmp.ne.s32.totalorder %s50, %s51
      %p60 = scmp.eq.s32.totalorder %s19, 0
      %p61 = por %p59, %p60
      %p62 = scmp.ne.s32.totalorder %s50, %s51
      %p63 = scmp.eq.s32.totalorder %s20, 1
      %p64 = por %p62, %p63
      %p66 = scmp.ne.s32.totalorder %s51, %s65
      %p67 = scmp.eq.s32.totalorder %s20, 0
      %p68 = por %p66, %p67
      %s70 = sadd.s32 %s69, 1
      %p73 = scmp.eq.s32.totalorder %s14, 1
      %p74 = scmp.ne.s32.totalorder %s69, %s71
      %p75 = scmp.eq.s32.totalorder %s14, 0
      %p76 = por %p74, %p75
      %p77 = scmp.ne.s32.totalorder %s69, %s71
      %p78 = scmp.eq.s32.totalorder %s19, 1
      %p79 = por %p77, %p78
      %p80 = scmp.ne.s32.totalorder %s71, %s72
      %p81 = scmp.eq.s32.totalorder %s19, 0
      %p82 = por %p80, %p81
      %p83 = scmp.ne.s32.totalorder %s71, %s72
      %p84 = scmp.eq.s32.totalorder %s20, 1
      %p85 = por %p83, %p84
      %p87 = scmp.ne.s32.totalorder %s72, %s86
      %p88 = scmp.eq.s32.totalorder %s20, 0
      %p89 = por %p87, %p88
      %s91 = sadd.s32 %s90, 1
      %p94 = scmp.eq.s32.totalorder %s14, 1
      %p95 = scmp.ne.s32.totalorder %s90, %s92
      %p96 = scmp.eq.s32.totalorder %s14, 0
      %p97 = por %p95, %p96
      %p98 = scmp.ne.s32.totalorder %s90, %s92
      %p99 = scmp.eq.s32.totalorder %s19, 1
      %p100 = por %p98, %p99
      %p101 = scmp.ne.s32.totalorder %s92, %s93
      %p102 = scmp.eq.s32.totalorder %s19, 0
      %p103 = por %p101, %p102
      %p104 = scmp.ne.s32.totalorder %s92, %s93
      %p105 = scmp.eq.s32.totalorder %s20, 1
      %p106 = por %p104, %p105
      %p108 = scmp.ne.s32.totalorder %s93, %s107
      %p109 = scmp.eq.s32.totalorder %s20, 0
      %p110 = por %p108, %p109
      %s112 = sadd.s32 %s111, 1
      %p115 = scmp.eq.s32.totalorder %s14, 1
      %p116 = scmp.ne.s32.totalorder %s111, %s113
      %p117 = scmp.eq.s32.totalorder %s14, 0
      %p118 = por %p116, %p117
      %p119 = scmp.ne.s32.totalorder %s111, %s113
      %p120 = scmp.eq.s32.totalorder %s19, 1
      %p121 = por %p119, %p120
      %p122 = scmp.ne.s32.totalorder %s113, %s114
      %p123 = scmp.eq.s32.totalorder %s19, 0
      %p124 = por %p122, %p123
      %p125 = scmp.ne.s32.totalorder %s113, %s114
      %p126 = scmp.eq.s32.totalorder %s20, 1
      %p127 = por %p125, %p126
      %p129 = scmp.ne.s32.totalorder %s114, %s128
      %p130 = scmp.eq.s32.totalorder %s20, 0
      %p131 = por %p129, %p130
      %s132 = ssub.s32 %s14, %s21
      %p133 = scmp.eq.s32.totalorder %s132, 0
      %s135 = sadd.s32 %s134, 1
      %s136 = scalar_select %p133, %s134, %s135
      %p139 = pneg %p133
      %p140 = scmp.eq.s32.totalorder %s14, 1
      %p141 = por %p139, %p140
      %p142 = scmp.ne.s32.totalorder %s134, %s137
      %p143 = scmp.eq.s32.totalorder %s14, 0
      %p144 = por %p142, %p143
      %p145 = scmp.ne.s32.totalorder %s134, %s137
      %p146 = scmp.eq.s32.totalorder %s19, 1
      %p147 = por %p145, %p146
      %p148 = scmp.ne.s32.totalorder %s137, %s138
      %p149 = scmp.eq.s32.totalorder %s19, 0
      %p150 = por %p148, %p149
      %p151 = scmp.ne.s32.totalorder %s137, %s138
      %p152 = scmp.eq.s32.totalorder %s20, 1
      %p153 = por %p151, %p152
      %p155 = scmp.ne.s32.totalorder %s138, %s154
      %p156 = scmp.eq.s32.totalorder %s20, 0
      %p157 = por %p155, %p156
      %p158 = scmp.le.s32.totalorder 1, %s14
      %p159 = scmp.lt.s32.totalorder %s14, 3
      %p160 = pnand %p158, %p159
      %p161 = pneg %p160
      // Predicated region
      $region9: #{ocr_feature_extractor_forward.1} parent=5 // pred_check
        _
      $region10: #{ocr_feature_extractor_forward.1} parent=5 // pred_check_branch
        %163 = sbr.rel (%p160) target = $region12
      $region11: #{ocr_feature_extractor_forward.1} parent=5 // pred_region
        %s164 = ssub.s32 %s14, 1
        // Predicated region
        $region13: #{ocr_feature_extractor_forward.1} parent=11 // pred_check
          %p165 = pneg %p61
        $region14: #{ocr_feature_extractor_forward.1} parent=11 // pred_check_branch
          %167 = sbr.rel (%p165) target = $region16
        $region15: #{ocr_feature_extractor_forward.1} parent=11 // pred_region
          _
        $region16: #{ocr_feature_extractor_forward.1} parent=11 // pred_fallthru
          _
        // Predicated region
        $region17: #{ocr_feature_extractor_forward.1} parent=11 // pred_check
          %p168 = pneg %p82
        $region18: #{ocr_feature_extractor_forward.1} parent=11 // pred_check_branch
          %170 = sbr.rel (%p168) target = $region20
        $region19: #{ocr_feature_extractor_forward.1} parent=11 // pred_region
          _
        $region20: #{ocr_feature_extractor_forward.1} parent=11 // pred_fallthru
          _
        // Predicated region
        $region21: #{ocr_feature_extractor_forward.1} parent=11 // pred_check
          %p171 = pneg %p103
        $region22: #{ocr_feature_extractor_forward.1} parent=11 // pred_check_branch
          %173 = sbr.rel (%p171) target = $region24
        $region23: #{ocr_feature_extractor_forward.1} parent=11 // pred_region
          _
        $region24: #{ocr_feature_extractor_forward.1} parent=11 // pred_fallthru
          _
        // Predicated region
        $region25: #{ocr_feature_extractor_forward.1} parent=11 // pred_check
          %p174 = pneg %p124
        $region26: #{ocr_feature_extractor_forward.1} parent=11 // pred_check_branch
          %176 = sbr.rel (%p174) target = $region28
        $region27: #{ocr_feature_extractor_forward.1} parent=11 // pred_region
          _
        $region28: #{ocr_feature_extractor_forward.1} parent=11 // pred_fallthru
          _
      $region12: #{ocr_feature_extractor_forward.1} parent=5 // pred_fallthru
        _
      %p177 = scmp.lt.s32.totalorder %s14, 2
      // Predicated region
      $region29: #{ocr_feature_extractor_forward.1} parent=5 // pred_check
        %p178 = pneg %p177
      $region30: #{ocr_feature_extractor_forward.1} parent=5 // pred_check_branch
        %180 = sbr.rel (%p178) target = $region32
      $region31: #{ocr_feature_extractor_forward.1} parent=5 // pred_region
        // Predicated region
        $region33: #{ocr_feature_extractor_forward.1} parent=31 // pred_check
          %p181 = pneg %p34
        $region34: #{ocr_feature_extractor_forward.1} parent=31 // pred_check_branch
          %183 = sbr.rel (%p181) target = $region36
        $region35: #{ocr_feature_extractor_forward.1} parent=31 // pred_region
          %p184 = scmp.lt.s32.totalorder %s14, 1
          %s185 = scalar_select %p184, %s14, 1
          %s186 = smul.addr %s185, 32
          %s187 = smul.addr %s186, 8
          %s188 = scalar_lea.vmem %s0, %s187
        $region36: #{ocr_feature_extractor_forward.1} parent=31 // pred_fallthru
          _
      $region32: #{ocr_feature_extractor_forward.1} parent=5 // pred_fallthru
        _
      %p189 = scmp.le.s32.totalorder 1, %s14
      %p190 = scmp.lt.s32.totalorder %s14, 3
      %p191 = pnand %p189, %p190
      %p192 = pneg %p191
      // Predicated region
      $region37: #{ocr_feature_extractor_forward.1} parent=5 // pred_check
        _
      $region38: #{ocr_feature_extractor_forward.1} parent=5 // pred_check_branch
        %194 = sbr.rel (%p191) target = $region40
      $region39: #{ocr_feature_extractor_forward.1} parent=5 // pred_region
        %s195 = ssub.s32 %s14, 1
        %p196 = scmp.lt.s32.totalorder %s19, 1
        %s197 = scalar_select %p196, %s19, 1
        %s198 = smul.addr %s197, 32
        %s199 = smul.addr %s198, 8
        %s200 = scalar_lea.vmem %s0, %s199
        %p201 = pneg %p40
        %p202 = pneg %p37
        %p203 = pneg %p61
        %p204 = pneg %p58
        %p205 = pneg %p82
        %p206 = pneg %p79
        %p207 = pneg %p103
        %p208 = pneg %p100
        %p209 = pneg %p124
        %p210 = pneg %p121
        %p211 = pneg %p150
        %p212 = pneg %p147
        %s213 = sand.u32 %s137, 1
        %s214 = scalar_lea.sflag [#allocation5], %s213
        %s215 = sand.u32 %s137, 1
        %s216 = smul.addr %s215, 256
        %s217 = scalar_lea.vmem [#allocation4], %s216
        %p218 = scmp.lt.s32.totalorder %s19, 1
        %s219 = scalar_select %p218, %s19, 1
        %s220 = smul.addr %s219, 32
        %s221 = smul.addr %s220, 8
        %s222 = scalar_lea.vmem %s0, %s221
        %v224 = vld [vmem:[%s2] sm:$0x1]
        %v225 = vld [vmem:[%s4] sm:$0x1]
        %v226 = vld [vmem:[%s222] sm:$0xff]
        %v227 = vld [vmem:[%s222 + $0x8] sm:$0xff]
        %v228 = vld [vmem:[%s222 + $0x10] sm:$0xff]
        %v229 = vld [vmem:[%s222 + $0x18] sm:$0xff]
        %v230 = vld [vmem:[%s222 + $0x20] sm:$0xff]
        %v231 = vld [vmem:[%s222 + $0x28] sm:$0xff]
        %v232 = vld [vmem:[%s222 + $0x30] sm:$0xff]
        %v233 = vld [vmem:[%s222 + $0x38] sm:$0xff]
        %v234 = vld [vmem:[%s222 + $0x40] sm:$0xff]
        %v235 = vld [vmem:[%s222 + $0x48] sm:$0xff]
        %v236 = vld [vmem:[%s222 + $0x50] sm:$0xff]
        %v237 = vld [vmem:[%s222 + $0x58] sm:$0xff]
        %v238 = vld [vmem:[%s222 + $0x60] sm:$0xff]
        %v239 = vld [vmem:[%s222 + $0x68] sm:$0xff]
        %v240 = vld [vmem:[%s222 + $0x70] sm:$0xff]
        %v241 = vld [vmem:[%s222 + $0x78] sm:$0xff]
        %v242 = vld [vmem:[%s222 + $0x80] sm:$0xff]
        %v243 = vld [vmem:[%s222 + $0x88] sm:$0xff]
        %v244 = vld [vmem:[%s222 + $0x90] sm:$0xff]
        %v245 = vld [vmem:[%s222 + $0x98] sm:$0xff]
        %v246 = vld [vmem:[%s222 + $0xa0] sm:$0xff]
        %v247 = vld [vmem:[%s222 + $0xa8] sm:$0xff]
        %v248 = vld [vmem:[%s222 + $0xb0] sm:$0xff]
        %v249 = vld [vmem:[%s222 + $0xb8] sm:$0xff]
        %v250 = vld [vmem:[%s222 + $0xc0] sm:$0xff]
        %v251 = vld [vmem:[%s222 + $0xc8] sm:$0xff]
        %v252 = vld [vmem:[%s222 + $0xd0] sm:$0xff]
        %v253 = vld [vmem:[%s222 + $0xd8] sm:$0xff]
        %v254 = vld [vmem:[%s222 + $0xe0] sm:$0xff]
        %v255 = vld [vmem:[%s222 + $0xe8] sm:$0xff]
        %v256 = vld [vmem:[%s222 + $0xf0] sm:$0xff]
        %v257 = vld [vmem:[%s222 + $0xf8] sm:$0xff]
        %v258 = vmax.f32 %v226, 0.0
        %v259 = vmax.f32 %v227, 0.0
        %v260 = vmax.f32 %v228, 0.0
        %v261 = vmax.f32 %v229, 0.0
        %v262 = vmax.f32 %v230, 0.0
        %v263 = vmax.f32 %v231, 0.0
        %v264 = vmax.f32 %v232, 0.0
        %v265 = vmax.f32 %v233, 0.0
        %v266 = vmax.f32 %v234, 0.0
        %v267 = vmax.f32 %v235, 0.0
        %v268 = vmax.f32 %v236, 0.0
        %v269 = vmax.f32 %v237, 0.0
        %v270 = vmax.f32 %v238, 0.0
        %v271 = vmax.f32 %v239, 0.0
        %v272 = vmax.f32 %v240, 0.0
        %v273 = vmax.f32 %v241, 0.0
        %v274 = vmax.f32 %v242, 0.0
        %v275 = vmax.f32 %v243, 0.0
        %v276 = vmax.f32 %v244, 0.0
        %v277 = vmax.f32 %v245, 0.0
        %v278 = vmax.f32 %v246, 0.0
        %v279 = vmax.f32 %v247, 0.0
        %v280 = vmax.f32 %v248, 0.0
        %v281 = vmax.f32 %v249, 0.0
        %v282 = vmax.f32 %v250, 0.0
        %v283 = vmax.f32 %v251, 0.0
        %v284 = vmax.f32 %v252, 0.0
        %v285 = vmax.f32 %v253, 0.0
        %v286 = vmax.f32 %v254, 0.0
        %v287 = vmax.f32 %v255, 0.0
        %v288 = vmax.f32 %v256, 0.0
        %v289 = vmax.f32 %v257, 0.0
        %v290 = vmin.f32 %v258, 1.0
        %v291 = vmin.f32 %v259, 1.0
        %v292 = vmin.f32 %v260, 1.0
        %v293 = vmin.f32 %v261, 1.0
        %v294 = vmin.f32 %v262, 1.0
        %v295 = vmin.f32 %v263, 1.0
        %v296 = vmin.f32 %v264, 1.0
        %v297 = vmin.f32 %v265, 1.0
        %v298 = vmin.f32 %v266, 1.0
        %v299 = vmin.f32 %v267, 1.0
        %v300 = vmin.f32 %v268, 1.0
        %v301 = vmin.f32 %v269, 1.0
        %v302 = vmin.f32 %v270, 1.0
        %v303 = vmin.f32 %v271, 1.0
        %v304 = vmin.f32 %v272, 1.0
        %v305 = vmin.f32 %v273, 1.0
        %v306 = vmin.f32 %v274, 1.0
        %v307 = vmin.f32 %v275, 1.0
        %v308 = vmin.f32 %v276, 1.0
        %v309 = vmin.f32 %v277, 1.0
        %v310 = vmin.f32 %v278, 1.0
        %v311 = vmin.f32 %v279, 1.0
        %v312 = vmin.f32 %v280, 1.0
        %v313 = vmin.f32 %v281, 1.0
        %v314 = vmin.f32 %v282, 1.0
        %v315 = vmin.f32 %v283, 1.0
        %v316 = vmin.f32 %v284, 1.0
        %v317 = vmin.f32 %v285, 1.0
        %v318 = vmin.f32 %v286, 1.0
        %v319 = vmin.f32 %v287, 1.0
        %v320 = vmin.f32 %v288, 1.0
        %v321 = vmin.f32 %v289, 1.0
        %v322 = vmul.f32 %v290, 255.0
        %v323 = vmul.f32 %v291, 255.0
        %v324 = vmul.f32 %v292, 255.0
        %v325 = vmul.f32 %v293, 255.0
        %v326 = vmul.f32 %v294, 255.0
        %v327 = vmul.f32 %v295, 255.0
        %v328 = vmul.f32 %v296, 255.0
        %v329 = vmul.f32 %v297, 255.0
        %v330 = vmul.f32 %v298, 255.0
        %v331 = vmul.f32 %v299, 255.0
        %v332 = vmul.f32 %v300, 255.0
        %v333 = vmul.f32 %v301, 255.0
        %v334 = vmul.f32 %v302, 255.0
        %v335 = vmul.f32 %v303, 255.0
        %v336 = vmul.f32 %v304, 255.0
        %v337 = vmul.f32 %v305, 255.0
        %v338 = vmul.f32 %v306, 255.0
        %v339 = vmul.f32 %v307, 255.0
        %v340 = vmul.f32 %v308, 255.0
        %v341 = vmul.f32 %v309, 255.0
        %v342 = vmul.f32 %v310, 255.0
        %v343 = vmul.f32 %v311, 255.0
        %v344 = vmul.f32 %v312, 255.0
        %v345 = vmul.f32 %v313, 255.0
        %v346 = vmul.f32 %v314, 255.0
        %v347 = vmul.f32 %v315, 255.0
        %v348 = vmul.f32 %v316, 255.0
        %v349 = vmul.f32 %v317, 255.0
        %v350 = vmul.f32 %v318, 255.0
        %v351 = vmul.f32 %v319, 255.0
        %v352 = vmul.f32 %v320, 255.0
        %v353 = vmul.f32 %v321, 255.0
        %v354 = vfloor.f32 %v322
        %v355 = vfloor.f32 %v323
        %v356 = vfloor.f32 %v324
        %v357 = vfloor.f32 %v325
        %v358 = vfloor.f32 %v326
        %v359 = vfloor.f32 %v327
        %v360 = vfloor.f32 %v328
        %v361 = vfloor.f32 %v329
        %v362 = vfloor.f32 %v330
        %v363 = vfloor.f32 %v331
        %v364 = vfloor.f32 %v332
        %v365 = vfloor.f32 %v333
        %v366 = vfloor.f32 %v334
        %v367 = vfloor.f32 %v335
        %v368 = vfloor.f32 %v336
        %v369 = vfloor.f32 %v337
        %v370 = vfloor.f32 %v338
        %v371 = vfloor.f32 %v339
        %v372 = vfloor.f32 %v340
        %v373 = vfloor.f32 %v341
        %v374 = vfloor.f32 %v342
        %v375 = vfloor.f32 %v343
        %v376 = vfloor.f32 %v344
        %v377 = vfloor.f32 %v345
        %v378 = vfloor.f32 %v346
        %v379 = vfloor.f32 %v347
        %v380 = vfloor.f32 %v348
        %v381 = vfloor.f32 %v349
        %v382 = vfloor.f32 %v350
        %v383 = vfloor.f32 %v351
        %v384 = vfloor.f32 %v352
        %v385 = vfloor.f32 %v353
        %vm386 = vcmask 19456
        %387 = vst.msk [vmem:[#allocation2] sm:$0xf] %vm386, 0
        %388 = vst.msk [vmem:[#allocation2 + $0x4] sm:$0xf] %vm386, 0
        %vm389 = vcmask 16384
        %390 = vst.msk [vmem:[#allocation2 + $0x8] sm:$0x1] %vm389, 0
        %391 = vst.msk [vmem:[#allocation2 + $0xc] sm:$0xf] %vm386, 0
        %392 = vst.msk [vmem:[#allocation2 + $0x10] sm:$0xf] %vm386, 0
        %393 = vst.msk [vmem:[#allocation2 + $0x14] sm:$0x1] %vm389, 0
        %394 = vst.msk [vmem:[#allocation2 + $0x18] sm:$0xf] %vm386, 0
        %395 = vst.msk [vmem:[#allocation2 + $0x1c] sm:$0xf] %vm386, 0
        %396 = vst.msk [vmem:[#allocation2 + $0x20] sm:$0x1] %vm389, 0
        %397 = vst.msk [vmem:[#allocation2 + $0x24] sm:$0xf] %vm386, 0
        %398 = vst.msk [vmem:[#allocation2 + $0x28] sm:$0xf] %vm386, 0
        %399 = vst.msk [vmem:[#allocation2 + $0x2c] sm:$0x1] %vm389, 0
        %400 = vst.msk [vmem:[#allocation2 + $0x30] sm:$0xf] %vm386, 0
        %401 = vst.msk [vmem:[#allocation2 + $0x34] sm:$0xf] %vm386, 0
        %402 = vst.msk [vmem:[#allocation2 + $0x38] sm:$0x1] %vm389, 0
        %403 = vst.msk [vmem:[#allocation2 + $0x3c] sm:$0xf] %vm386, 0
        %404 = vst.msk [vmem:[#allocation2 + $0x40] sm:$0xf] %vm386, 0
        %405 = vst.msk [vmem:[#allocation2 + $0x44] sm:$0x1] %vm389, 0
        %406 = vst.msk [vmem:[#allocation2 + $0x48] sm:$0xf] %vm386, 0
        %407 = vst.msk [vmem:[#allocation2 + $0x4c] sm:$0xf] %vm386, 0
        %408 = vst.msk [vmem:[#allocation2 + $0x50] sm:$0x1] %vm389, 0
        %409 = vst.msk [vmem:[#allocation2 + $0x54] sm:$0xf] %vm386, 0
        %410 = vst.msk [vmem:[#allocation2 + $0x58] sm:$0xf] %vm386, 0
        %411 = vst.msk [vmem:[#allocation2 + $0x5c] sm:$0x1] %vm389, 0
        %412 = vst.msk [vmem:[#allocation2 + $0x60] sm:$0xf] %vm386, 0
        %413 = vst.msk [vmem:[#allocation2 + $0x64] sm:$0xf] %vm386, 0
        %414 = vst.msk [vmem:[#allocation2 + $0x68] sm:$0x1] %vm389, 0
        %415 = vst.msk [vmem:[#allocation2 + $0x6c] sm:$0xf] %vm386, 0
        %416 = vst.msk [vmem:[#allocation2 + $0x70] sm:$0xf] %vm386, 0
        %417 = vst.msk [vmem:[#allocation2 + $0x74] sm:$0x1] %vm389, 0
        %418 = vst.msk [vmem:[#allocation2 + $0x78] sm:$0xf] %vm386, 0
        %419 = vst.msk [vmem:[#allocation2 + $0x7c] sm:$0xf] %vm386, 0
        %420 = vst.msk [vmem:[#allocation2 + $0x80] sm:$0x1] %vm389, 0
        %421 = vst.msk [vmem:[#allocation2 + $0x84] sm:$0xf] %vm386, 0
        %422 = vst.msk [vmem:[#allocation2 + $0x88] sm:$0xf] %vm386, 0
        %423 = vst.msk [vmem:[#allocation2 + $0x8c] sm:$0x1] %vm389, 0
        %424 = vst.msk [vmem:[#allocation2 + $0x90] sm:$0xf] %vm386, 0
        %425 = vst.msk [vmem:[#allocation2 + $0x94] sm:$0xf] %vm386, 0
        %426 = vst.msk [vmem:[#allocation2 + $0x98] sm:$0x1] %vm389, 0
        %427 = vst.msk [vmem:[#allocation2 + $0x9c] sm:$0xf] %vm386, 0
        %428 = vst.msk [vmem:[#allocation2 + $0xa0] sm:$0xf] %vm386, 0
        %429 = vst.msk [vmem:[#allocation2 + $0xa4] sm:$0x1] %vm389, 0
        %430 = vst.msk [vmem:[#allocation2 + $0xa8] sm:$0xf] %vm386, 0
        %431 = vst.msk [vmem:[#allocation2 + $0xac] sm:$0xf] %vm386, 0
        %432 = vst.msk [vmem:[#allocation2 + $0xb0] sm:$0x1] %vm389, 0
        %433 = vst.msk [vmem:[#allocation2 + $0xb4] sm:$0xf] %vm386, 0
        %434 = vst.msk [vmem:[#allocation2 + $0xb8] sm:$0xf] %vm386, 0
        %435 = vst.msk [vmem:[#allocation2 + $0xbc] sm:$0x1] %vm389, 0
        %436 = vst.msk [vmem:[#allocation2 + $0xc0] sm:$0xf] %vm386, 0
        %437 = vst.msk [vmem:[#allocation2 + $0xc4] sm:$0xf] %vm386, 0
        %438 = vst.msk [vmem:[#allocation2 + $0xc8] sm:$0x1] %vm389, 0
        %439 = vst.msk [vmem:[#allocation2 + $0xcc] sm:$0xf] %vm386, 0
        %440 = vst.msk [vmem:[#allocation2 + $0xd0] sm:$0xf] %vm386, 0
        %441 = vst.msk [vmem:[#allocation2 + $0xd4] sm:$0x1] %vm389, 0
        %v442 = vpack.c.bf16 %v355, %v354
        %v443 = vpack.c.bf16 %v357, %v356
        %v444 = vpack.c.bf16 %v359, %v358
        %v445 = vpack.c.bf16 %v361, %v360
        %v446 = vpack.c.bf16 %v363, %v362
        %v447 = vpack.c.bf16 %v365, %v364
        %v448 = vpack.c.bf16 %v367, %v366
        %v449 = vpack.c.bf16 %v369, %v368
        %v450 = vpack.c.bf16 %v371, %v370
        %v451 = vpack.c.bf16 %v373, %v372
        %v452 = vpack.c.bf16 %v375, %v374
        %v453 = vpack.c.bf16 %v377, %v376
        %v454 = vpack.c.bf16 %v379, %v378
        %v455 = vpack.c.bf16 %v381, %v380
        %v456 = vpack.c.bf16 %v383, %v382
        %v457 = vpack.c.bf16 %v385, %v384
        %v474 = vunpack.c.l.b16 %v442
        %v475 = vunpack.c.h.b16 %v442
        %v476 = vunpack.c.l.b16 %v443
        %v477 = vunpack.c.h.b16 %v443
        %v478 = vunpack.c.l.b16 %v444
        %v479 = vunpack.c.h.b16 %v444
        %v480 = vunpack.c.l.b16 %v445
        %v481 = vunpack.c.h.b16 %v445
        %v482 = vunpack.c.l.b16 %v446
        %v483 = vunpack.c.h.b16 %v446
        %v484 = vunpack.c.l.b16 %v447
        %v485 = vunpack.c.h.b16 %v447
        %v486 = vunpack.c.l.b16 %v448
        %v487 = vunpack.c.h.b16 %v448
        %v488 = vunpack.c.l.b16 %v449
        %v489 = vunpack.c.h.b16 %v449
        %v490 = vunpack.c.l.b16 %v450
        %v491 = vunpack.c.h.b16 %v450
        %v492 = vunpack.c.l.b16 %v451
        %v493 = vunpack.c.h.b16 %v451
        %v494 = vunpack.c.l.b16 %v452
        %v495 = vunpack.c.h.b16 %v452
        %v496 = vunpack.c.l.b16 %v453
        %v497 = vunpack.c.h.b16 %v453
        %v498 = vunpack.c.l.b16 %v454
        %v499 = vunpack.c.h.b16 %v454
        %v500 = vunpack.c.l.b16 %v455
        %v501 = vunpack.c.h.b16 %v455
        %v502 = vunpack.c.l.b16 %v456
        %v503 = vunpack.c.h.b16 %v456
        %v504 = vunpack.c.l.b16 %v457
        %v505 = vunpack.c.h.b16 %v457
        %v506 = vpack.c.b16 %v474, %v474
        %v507 = vpack.c.b16 %v475, %v475
        %v508 = vpack.c.b16 %v476, %v476
        %v509 = vpack.c.b16 %v477, %v477
        %v510 = vpack.c.b16 %v478, %v478
        %v511 = vpack.c.b16 %v479, %v479
        %v512 = vpack.c.b16 %v480, %v480
        %v513 = vpack.c.b16 %v481, %v481
        %v514 = vpack.c.b16 %v482, %v482
        %v515 = vpack.c.b16 %v483, %v483
        %v516 = vpack.c.b16 %v484, %v484
        %v517 = vpack.c.b16 %v485, %v485
        %v518 = vpack.c.b16 %v486, %v486
        %v519 = vpack.c.b16 %v487, %v487
        %v520 = vpack.c.b16 %v488, %v488
        %v521 = vpack.c.b16 %v489, %v489
        %v522 = vpack.c.b16 %v490, %v490
        %v523 = vpack.c.b16 %v491, %v491
        %v524 = vpack.c.b16 %v492, %v492
        %v525 = vpack.c.b16 %v493, %v493
        %v526 = vpack.c.b16 %v494, %v494
        %v527 = vpack.c.b16 %v495, %v495
        %v528 = vpack.c.b16 %v496, %v496
        %v529 = vpack.c.b16 %v497, %v497
        %v530 = vpack.c.b16 %v498, %v498
        %v531 = vpack.c.b16 %v499, %v499
        %v532 = vpack.c.b16 %v500, %v500
        %v533 = vpack.c.b16 %v501, %v501
        %v534 = vpack.c.b16 %v502, %v502
        %v535 = vpack.c.b16 %v503, %v503
        %v536 = vpack.c.b16 %v504, %v504
        %v537 = vpack.c.b16 %v505, %v505
        %vm538 = vsmask.f32 256
        %vm539 = vsmask.f32 4368
        %vm540 = vmor %vm538, %vm539
        %v542 = vshrl.u32 %v506, 16
        %v544 = vrot.slane %v542, 7
        %v545 = vshll.u32 %v506, 16
        %v547 = vor.u32 %v544, %v545
        %v548 = vrot.slane %v544, 4
        %v550 = vshrl.u32 %v507, 16
        %v552 = vrot.slane %v550, 7
        %v553 = vshll.u32 %v507, 16
        %v555 = vor.u32 %v552, %v553
        %v556 = vsel %vm540, %v548, %v555
        %v557 = vrot.slane %v552, 4
        %v559 = vshrl.u32 %v508, 16
        %v561 = vrot.slane %v559, 7
        %v562 = vshll.u32 %v508, 16
        %v564 = vor.u32 %v561, %v562
        %v565 = vrot.slane %v561, 4
        %v567 = vshrl.u32 %v509, 16
        %v569 = vrot.slane %v567, 7
        %v570 = vshll.u32 %v509, 16
        %v572 = vor.u32 %v569, %v570
        %v573 = vsel %vm540, %v565, %v572
        %v574 = vrot.slane %v569, 4
        %v576 = vshrl.u32 %v510, 16
        %v578 = vrot.slane %v576, 7
        %v579 = vshll.u32 %v510, 16
        %v581 = vor.u32 %v578, %v579
        %v582 = vrot.slane %v578, 4
        %v584 = vshrl.u32 %v511, 16
        %v586 = vrot.slane %v584, 7
        %v587 = vshll.u32 %v511, 16
        %v589 = vor.u32 %v586, %v587
        %v590 = vsel %vm540, %v582, %v589
        %v591 = vrot.slane %v586, 4
        %v593 = vshrl.u32 %v512, 16
        %v595 = vrot.slane %v593, 7
        %v596 = vshll.u32 %v512, 16
        %v598 = vor.u32 %v595, %v596
        %v599 = vrot.slane %v595, 4
        %v601 = vshrl.u32 %v513, 16
        %v603 = vrot.slane %v601, 7
        %v604 = vshll.u32 %v513, 16
        %v606 = vor.u32 %v603, %v604
        %v607 = vsel %vm540, %v599, %v606
        %v608 = vrot.slane %v603, 4
        %v610 = vshrl.u32 %v514, 16
        %v612 = vrot.slane %v610, 7
        %v613 = vshll.u32 %v514, 16
        %v615 = vor.u32 %v612, %v613
        %v616 = vrot.slane %v612, 4
        %v618 = vshrl.u32 %v515, 16
        %v620 = vrot.slane %v618, 7
        %v621 = vshll.u32 %v515, 16
        %v623 = vor.u32 %v620, %v621
        %v624 = vsel %vm540, %v616, %v623
        %v625 = vrot.slane %v620, 4
        %v627 = vshrl.u32 %v516, 16
        %v629 = vrot.slane %v627, 7
        %v630 = vshll.u32 %v516, 16
        %v632 = vor.u32 %v629, %v630
        %v633 = vrot.slane %v629, 4
        %v635 = vshrl.u32 %v517, 16
        %v637 = vrot.slane %v635, 7
        %v638 = vshll.u32 %v517, 16
        %v640 = vor.u32 %v637, %v638
        %v641 = vsel %vm540, %v633, %v640
        %v642 = vrot.slane %v637, 4
        %v644 = vshrl.u32 %v518, 16
        %v646 = vrot.slane %v644, 7
        %v647 = vshll.u32 %v518, 16
        %v649 = vor.u32 %v646, %v647
        %v650 = vrot.slane %v646, 4
        %v652 = vshrl.u32 %v519, 16
        %v654 = vrot.slane %v652, 7
        %v655 = vshll.u32 %v519, 16
        %v657 = vor.u32 %v654, %v655
        %v658 = vsel %vm540, %v650, %v657
        %v659 = vrot.slane %v654, 4
        %v661 = vshrl.u32 %v520, 16
        %v663 = vrot.slane %v661, 7
        %v664 = vshll.u32 %v520, 16
        %v666 = vor.u32 %v663, %v664
        %v667 = vrot.slane %v663, 4
        %v669 = vshrl.u32 %v521, 16
        %v671 = vrot.slane %v669, 7
        %v672 = vshll.u32 %v521, 16
        %v674 = vor.u32 %v671, %v672
        %v675 = vsel %vm540, %v667, %v674
        %v676 = vrot.slane %v671, 4
        %v678 = vshrl.u32 %v522, 16
        %v680 = vrot.slane %v678, 7
        %v681 = vshll.u32 %v522, 16
        %v683 = vor.u32 %v680, %v681
        %v684 = vrot.slane %v680, 4
        %v686 = vshrl.u32 %v523, 16
        %v688 = vrot.slane %v686, 7
        %v689 = vshll.u32 %v523, 16
        %v691 = vor.u32 %v688, %v689
        %v692 = vsel %vm540, %v684, %v691
        %v693 = vrot.slane %v688, 4
        %v695 = vshrl.u32 %v524, 16
        %v697 = vrot.slane %v695, 7
        %v698 = vshll.u32 %v524, 16
        %v700 = vor.u32 %v697, %v698
        %v701 = vrot.slane %v697, 4
        %v703 = vshrl.u32 %v525, 16
        %v705 = vrot.slane %v703, 7
        %v706 = vshll.u32 %v525, 16
        %v708 = vor.u32 %v705, %v706
        %v709 = vsel %vm540, %v701, %v708
        %v710 = vrot.slane %v705, 4
        %v712 = vshrl.u32 %v526, 16
        %v714 = vrot.slane %v712, 7
        %v715 = vshll.u32 %v526, 16
        %v717 = vor.u32 %v714, %v715
        %v718 = vrot.slane %v714, 4
        %v720 = vshrl.u32 %v527, 16
        %v722 = vrot.slane %v720, 7
        %v723 = vshll.u32 %v527, 16
        %v725 = vor.u32 %v722, %v723
        %v726 = vsel %vm540, %v718, %v725
        %v727 = vrot.slane %v722, 4
        %v729 = vshrl.u32 %v528, 16
        %v731 = vrot.slane %v729, 7
        %v732 = vshll.u32 %v528, 16
        %v734 = vor.u32 %v731, %v732
        %v735 = vrot.slane %v731, 4
        %v737 = vshrl.u32 %v529, 16
        %v739 = vrot.slane %v737, 7
        %v740 = vshll.u32 %v529, 16
        %v742 = vor.u32 %v739, %v740
        %v743 = vsel %vm540, %v735, %v742
        %v744 = vrot.slane %v739, 4
        %v746 = vshrl.u32 %v530, 16
        %v748 = vrot.slane %v746, 7
        %v749 = vshll.u32 %v530, 16
        %v751 = vor.u32 %v748, %v749
        %v752 = vrot.slane %v748, 4
        %v754 = vshrl.u32 %v531, 16
        %v756 = vrot.slane %v754, 7
        %v757 = vshll.u32 %v531, 16
        %v759 = vor.u32 %v756, %v757
        %v760 = vsel %vm540, %v752, %v759
        %v761 = vrot.slane %v756, 4
        %v763 = vshrl.u32 %v532, 16
        %v765 = vrot.slane %v763, 7
        %v766 = vshll.u32 %v532, 16
        %v768 = vor.u32 %v765, %v766
        %v769 = vrot.slane %v765, 4
        %v771 = vshrl.u32 %v533, 16
        %v773 = vrot.slane %v771, 7
        %v774 = vshll.u32 %v533, 16
        %v776 = vor.u32 %v773, %v774
        %v777 = vsel %vm540, %v769, %v776
        %v778 = vrot.slane %v773, 4
        %v780 = vshrl.u32 %v534, 16
        %v782 = vrot.slane %v780, 7
        %v783 = vshll.u32 %v534, 16
        %v785 = vor.u32 %v782, %v783
        %v786 = vrot.slane %v782, 4
        %v788 = vshrl.u32 %v535, 16
        %v790 = vrot.slane %v788, 7
        %v791 = vshll.u32 %v535, 16
        %v793 = vor.u32 %v790, %v791
        %v794 = vsel %vm540, %v786, %v793
        %v795 = vrot.slane %v790, 4
        %v797 = vshrl.u32 %v536, 16
        %v799 = vrot.slane %v797, 7
        %v800 = vshll.u32 %v536, 16
        %v802 = vor.u32 %v799, %v800
        %v803 = vrot.slane %v799, 4
        %v805 = vshrl.u32 %v537, 16
        %v807 = vrot.slane %v805, 7
        %v808 = vshll.u32 %v537, 16
        %v810 = vor.u32 %v807, %v808
        %v811 = vsel %vm540, %v803, %v810
        %v812 = vrot.slane %v807, 4
        %s861 = scalar_lea.vmem [#allocation2], 12
        %vm862 = vcmask 19456
        %vm863 = vsmask.f32 7938
        %vm864 = vmand %vm862, %vm863
        %v865 = vld [vmem:[%s861] sm:$0xf]
        %v866 = vsel %vm864, %v547, %v865
        %867 = vst [vmem:[%s861] sm:$0xf] %v866
        %868 = vst.msk [vmem:[%s861 + $0x4] sm:$0xf] %vm386, %v556
        %vm869 = vcmask 16384
        %vm870 = vmand %vm869, %vm538
        %v871 = vld [vmem:[%s861 + $0x8] sm:$0x1]
        %v872 = vsel %vm870, %v557, %v871
        %873 = vst [vmem:[%s861 + $0x8] sm:$0x1] %v872
        %v874 = vld [vmem:[%s861 + $0xc] sm:$0xf]
        %v875 = vsel %vm864, %v564, %v874
        %876 = vst [vmem:[%s861 + $0xc] sm:$0xf] %v875
        %877 = vst.msk [vmem:[%s861 + $0x10] sm:$0xf] %vm386, %v573
        %v878 = vld [vmem:[%s861 + $0x14] sm:$0x1]
        %v879 = vsel %vm870, %v574, %v878
        %880 = vst [vmem:[%s861 + $0x14] sm:$0x1] %v879
        %v881 = vld [vmem:[%s861 + $0x18] sm:$0xf]
        %v882 = vsel %vm864, %v581, %v881
        %883 = vst [vmem:[%s861 + $0x18] sm:$0xf] %v882
        %884 = vst.msk [vmem:[%s861 + $0x1c] sm:$0xf] %vm386, %v590
        %v885 = vld [vmem:[%s861 + $0x20] sm:$0x1]
        %v886 = vsel %vm870, %v591, %v885
        %887 = vst [vmem:[%s861 + $0x20] sm:$0x1] %v886
        %v888 = vld [vmem:[%s861 + $0x24] sm:$0xf]
        %v889 = vsel %vm864, %v598, %v888
        %890 = vst [vmem:[%s861 + $0x24] sm:$0xf] %v889
        %891 = vst.msk [vmem:[%s861 + $0x28] sm:$0xf] %vm386, %v607
        %v892 = vld [vmem:[%s861 + $0x2c] sm:$0x1]
        %v893 = vsel %vm870, %v608, %v892
        %894 = vst [vmem:[%s861 + $0x2c] sm:$0x1] %v893
        %v895 = vld [vmem:[%s861 + $0x30] sm:$0xf]
        %v896 = vsel %vm864, %v615, %v895
        %897 = vst [vmem:[%s861 + $0x30] sm:$0xf] %v896
        %898 = vst.msk [vmem:[%s861 + $0x34] sm:$0xf] %vm386, %v624
        %v899 = vld [vmem:[%s861 + $0x38] sm:$0x1]
        %v900 = vsel %vm870, %v625, %v899
        %901 = vst [vmem:[%s861 + $0x38] sm:$0x1] %v900
        %v902 = vld [vmem:[%s861 + $0x3c] sm:$0xf]
        %v903 = vsel %vm864, %v632, %v902
        %904 = vst [vmem:[%s861 + $0x3c] sm:$0xf] %v903
        %905 = vst.msk [vmem:[%s861 + $0x40] sm:$0xf] %vm386, %v641
        %v906 = vld [vmem:[%s861 + $0x44] sm:$0x1]
        %v907 = vsel %vm870, %v642, %v906
        %908 = vst [vmem:[%s861 + $0x44] sm:$0x1] %v907
        %v909 = vld [vmem:[%s861 + $0x48] sm:$0xf]
        %v910 = vsel %vm864, %v649, %v909
        %911 = vst [vmem:[%s861 + $0x48] sm:$0xf] %v910
        %912 = vst.msk [vmem:[%s861 + $0x4c] sm:$0xf] %vm386, %v658
        %v913 = vld [vmem:[%s861 + $0x50] sm:$0x1]
        %v914 = vsel %vm870, %v659, %v913
        %915 = vst [vmem:[%s861 + $0x50] sm:$0x1] %v914
        %v916 = vld [vmem:[%s861 + $0x54] sm:$0xf]
        %v917 = vsel %vm864, %v666, %v916
        %918 = vst [vmem:[%s861 + $0x54] sm:$0xf] %v917
        %919 = vst.msk [vmem:[%s861 + $0x58] sm:$0xf] %vm386, %v675
        %v920 = vld [vmem:[%s861 + $0x5c] sm:$0x1]
        %v921 = vsel %vm870, %v676, %v920
        %922 = vst [vmem:[%s861 + $0x5c] sm:$0x1] %v921
        %v923 = vld [vmem:[%s861 + $0x60] sm:$0xf]
        %v924 = vsel %vm864, %v683, %v923
        %925 = vst [vmem:[%s861 + $0x60] sm:$0xf] %v924
        %926 = vst.msk [vmem:[%s861 + $0x64] sm:$0xf] %vm386, %v692
        %v927 = vld [vmem:[%s861 + $0x68] sm:$0x1]
        %v928 = vsel %vm870, %v693, %v927
        %929 = vst [vmem:[%s861 + $0x68] sm:$0x1] %v928
        %v930 = vld [vmem:[%s861 + $0x6c] sm:$0xf]
        %v931 = vsel %vm864, %v700, %v930
        %932 = vst [vmem:[%s861 + $0x6c] sm:$0xf] %v931
        %933 = vst.msk [vmem:[%s861 + $0x70] sm:$0xf] %vm386, %v709
        %v934 = vld [vmem:[%s861 + $0x74] sm:$0x1]
        %v935 = vsel %vm870, %v710, %v934
        %936 = vst [vmem:[%s861 + $0x74] sm:$0x1] %v935
        %v937 = vld [vmem:[%s861 + $0x78] sm:$0xf]
        %v938 = vsel %vm864, %v717, %v937
        %939 = vst [vmem:[%s861 + $0x78] sm:$0xf] %v938
        %940 = vst.msk [vmem:[%s861 + $0x7c] sm:$0xf] %vm386, %v726
        %v941 = vld [vmem:[%s861 + $0x80] sm:$0x1]
        %v942 = vsel %vm870, %v727, %v941
        %943 = vst [vmem:[%s861 + $0x80] sm:$0x1] %v942
        %v944 = vld [vmem:[%s861 + $0x84] sm:$0xf]
        %v945 = vsel %vm864, %v734, %v944
        %946 = vst [vmem:[%s861 + $0x84] sm:$0xf] %v945
        %947 = vst.msk [vmem:[%s861 + $0x88] sm:$0xf] %vm386, %v743
        %v948 = vld [vmem:[%s861 + $0x8c] sm:$0x1]
        %v949 = vsel %vm870, %v744, %v948
        %950 = vst [vmem:[%s861 + $0x8c] sm:$0x1] %v949
        %v951 = vld [vmem:[%s861 + $0x90] sm:$0xf]
        %v952 = vsel %vm864, %v751, %v951
        %953 = vst [vmem:[%s861 + $0x90] sm:$0xf] %v952
        %954 = vst.msk [vmem:[%s861 + $0x94] sm:$0xf] %vm386, %v760
        %v955 = vld [vmem:[%s861 + $0x98] sm:$0x1]
        %v956 = vsel %vm870, %v761, %v955
        %957 = vst [vmem:[%s861 + $0x98] sm:$0x1] %v956
        %v958 = vld [vmem:[%s861 + $0x9c] sm:$0xf]
        %v959 = vsel %vm864, %v768, %v958
        %960 = vst [vmem:[%s861 + $0x9c] sm:$0xf] %v959
        %961 = vst.msk [vmem:[%s861 + $0xa0] sm:$0xf] %vm386, %v777
        %v962 = vld [vmem:[%s861 + $0xa4] sm:$0x1]
        %v963 = vsel %vm870, %v778, %v962
        %964 = vst [vmem:[%s861 + $0xa4] sm:$0x1] %v963
        %v965 = vld [vmem:[%s861 + $0xa8] sm:$0xf]
        %v966 = vsel %vm864, %v785, %v965
        %967 = vst [vmem:[%s861 + $0xa8] sm:$0xf] %v966
        %968 = vst.msk [vmem:[%s861 + $0xac] sm:$0xf] %vm386, %v794
        %v969 = vld [vmem:[%s861 + $0xb0] sm:$0x1]
        %v970 = vsel %vm870, %v795, %v969
        %971 = vst [vmem:[%s861 + $0xb0] sm:$0x1] %v970
        %v972 = vld [vmem:[%s861 + $0xb4] sm:$0xf]
        %v973 = vsel %vm864, %v802, %v972
        %974 = vst [vmem:[%s861 + $0xb4] sm:$0xf] %v973
        %975 = vst.msk [vmem:[%s861 + $0xb8] sm:$0xf] %vm386, %v811
        %v976 = vld [vmem:[%s861 + $0xbc] sm:$0x1]
        %v977 = vsel %vm870, %v812, %v976
        %978 = vst [vmem:[%s861 + $0xbc] sm:$0x1] %v977
        %v979 = vld [vmem:[#allocation2] sm:$0xf]
        %v980 = vld [vmem:[#allocation2 + $0x4] sm:$0xf]
        %v981 = vld [vmem:[#allocation2 + $0xc] sm:$0xf]
        %v982 = vld [vmem:[#allocation2 + $0x10] sm:$0xf]
        %v983 = vld [vmem:[#allocation2 + $0x18] sm:$0xf]
        %v984 = vld [vmem:[#allocation2 + $0x1c] sm:$0xf]
        %v985 = vld [vmem:[#allocation2 + $0x24] sm:$0xf]
        %v986 = vld [vmem:[#allocation2 + $0x28] sm:$0xf]
        %v987 = vld [vmem:[#allocation2 + $0x30] sm:$0xf]
        %v988 = vld [vmem:[#allocation2 + $0x34] sm:$0xf]
        %v989 = vld [vmem:[#allocation2 + $0x3c] sm:$0xf]
        %v990 = vld [vmem:[#allocation2 + $0x40] sm:$0xf]
        %v991 = vld [vmem:[#allocation2 + $0x48] sm:$0xf]
        %v992 = vld [vmem:[#allocation2 + $0x4c] sm:$0xf]
        %v993 = vld [vmem:[#allocation2 + $0x54] sm:$0xf]
        %v994 = vld [vmem:[#allocation2 + $0x58] sm:$0xf]
        %v995 = vld [vmem:[#allocation2 + $0x60] sm:$0xf]
        %v996 = vld [vmem:[#allocation2 + $0x64] sm:$0xf]
        %v997 = vld [vmem:[#allocation2 + $0x6c] sm:$0xf]
        %v998 = vld [vmem:[#allocation2 + $0x70] sm:$0xf]
        %v999 = vld [vmem:[#allocation2 + $0x78] sm:$0xf]
        %v1000 = vld [vmem:[#allocation2 + $0x7c] sm:$0xf]
        %v1001 = vld [vmem:[#allocation2 + $0x84] sm:$0xf]
        %v1002 = vld [vmem:[#allocation2 + $0x88] sm:$0xf]
        %v1003 = vld [vmem:[#allocation2 + $0x90] sm:$0xf]
        %v1004 = vld [vmem:[#allocation2 + $0x94] sm:$0xf]
        %v1005 = vld [vmem:[#allocation2 + $0x9c] sm:$0xf]
        %v1006 = vld [vmem:[#allocation2 + $0xa0] sm:$0xf]
        %v1007 = vld [vmem:[#allocation2 + $0xa8] sm:$0xf]
        %v1008 = vld [vmem:[#allocation2 + $0xac] sm:$0xf]
        %v1009 = vld [vmem:[#allocation2 + $0xb4] sm:$0xf]
        %v1010 = vld [vmem:[#allocation2 + $0xb8] sm:$0xf]
        %v1011 = vld [vmem:[%s1] sm:$0x3]
        %v1012 = vld [vmem:[#allocation2 + $0x8] sm:$0x1]
        %v1013 = vld [vmem:[#allocation2 + $0x14] sm:$0x1]
        %v1014 = vld [vmem:[#allocation2 + $0x20] sm:$0x1]
        %v1015 = vld [vmem:[#allocation2 + $0x2c] sm:$0x1]
        %v1016 = vld [vmem:[#allocation2 + $0x38] sm:$0x1]
        %v1017 = vld [vmem:[#allocation2 + $0x44] sm:$0x1]
        %v1018 = vld [vmem:[#allocation2 + $0x50] sm:$0x1]
        %v1019 = vld [vmem:[#allocation2 + $0x5c] sm:$0x1]
        %v1020 = vld [vmem:[#allocation2 + $0x68] sm:$0x1]
        %v1021 = vld [vmem:[#allocation2 + $0x74] sm:$0x1]
        %v1022 = vld [vmem:[#allocation2 + $0x80] sm:$0x1]
        %v1023 = vld [vmem:[#allocation2 + $0x8c] sm:$0x1]
        %v1024 = vld [vmem:[#allocation2 + $0x98] sm:$0x1]
        %v1025 = vld [vmem:[#allocation2 + $0xa4] sm:$0x1]
        %v1026 = vld [vmem:[#allocation2 + $0xb0] sm:$0x1]
        %v1027 = vld [vmem:[#allocation2 + $0xbc] sm:$0x1]
        %vm1028 = vsmask.f32 3328
        %vm1029 = vsmask.f32 7440
        %vm1030 = vmor %vm1028, %vm1029
        %v1032 = vshrl.u32 %v979, 16
        %v1034 = vrot.slane %v1032, 4
        %v1035 = vshll.u32 %v979, 16
        %v1037 = vrot.slane %v1035, 5
        %v1038 = vor.u32 %v1034, %v1037
        %v1039 = vrot.slane %v1038, 4
        %v1041 = vshll.u32 %v980, 16
        %v1043 = vrot.slane %v1041, 5
        %v1044 = vsel %vm1030, %v1039, %v1043
        %v1045 = vshrl.u32 %v980, 16
        %v1047 = vrot.slane %v1045, 4
        %v1048 = vor.u32 %v1047, %v1043
        %v1049 = vrot.slane %v1048, 4
        %v1051 = vshll.u32 %v1012, 16
        %v1053 = vrot.slane %v1051, 5
        %v1054 = vsel %vm1030, %v1049, %v1053
        %v1056 = vshrl.u32 %v981, 16
        %v1058 = vrot.slane %v1056, 4
        %v1059 = vshll.u32 %v981, 16
        %v1061 = vrot.slane %v1059, 5
        %v1062 = vor.u32 %v1058, %v1061
        %v1063 = vrot.slane %v1062, 4
        %v1065 = vshll.u32 %v982, 16
        %v1067 = vrot.slane %v1065, 5
        %v1068 = vsel %vm1030, %v1063, %v1067
        %v1069 = vshrl.u32 %v982, 16
        %v1071 = vrot.slane %v1069, 4
        %v1072 = vor.u32 %v1071, %v1067
        %v1073 = vrot.slane %v1072, 4
        %v1075 = vshll.u32 %v1013, 16
        %v1077 = vrot.slane %v1075, 5
        %v1078 = vsel %vm1030, %v1073, %v1077
        %v1080 = vshrl.u32 %v983, 16
        %v1082 = vrot.slane %v1080, 4
        %v1083 = vshll.u32 %v983, 16
        %v1085 = vrot.slane %v1083, 5
        %v1086 = vor.u32 %v1082, %v1085
        %v1087 = vrot.slane %v1086, 4
        %v1089 = vshll.u32 %v984, 16
        %v1091 = vrot.slane %v1089, 5
        %v1092 = vsel %vm1030, %v1087, %v1091
        %v1093 = vshrl.u32 %v984, 16
        %v1095 = vrot.slane %v1093, 4
        %v1096 = vor.u32 %v1095, %v1091
        %v1097 = vrot.slane %v1096, 4
        %v1099 = vshll.u32 %v1014, 16
        %v1101 = vrot.slane %v1099, 5
        %v1102 = vsel %vm1030, %v1097, %v1101
        %v1104 = vshrl.u32 %v985, 16
        %v1106 = vrot.slane %v1104, 4
        %v1107 = vshll.u32 %v985, 16
        %v1109 = vrot.slane %v1107, 5
        %v1110 = vor.u32 %v1106, %v1109
        %v1111 = vrot.slane %v1110, 4
        %v1113 = vshll.u32 %v986, 16
        %v1115 = vrot.slane %v1113, 5
        %v1116 = vsel %vm1030, %v1111, %v1115
        %v1117 = vshrl.u32 %v986, 16
        %v1119 = vrot.slane %v1117, 4
        %v1120 = vor.u32 %v1119, %v1115
        %v1121 = vrot.slane %v1120, 4
        %v1123 = vshll.u32 %v1015, 16
        %v1125 = vrot.slane %v1123, 5
        %v1126 = vsel %vm1030, %v1121, %v1125
        %v1128 = vshrl.u32 %v987, 16
        %v1130 = vrot.slane %v1128, 4
        %v1131 = vshll.u32 %v987, 16
        %v1133 = vrot.slane %v1131, 5
        %v1134 = vor.u32 %v1130, %v1133
        %v1135 = vrot.slane %v1134, 4
        %v1137 = vshll.u32 %v988, 16
        %v1139 = vrot.slane %v1137, 5
        %v1140 = vsel %vm1030, %v1135, %v1139
        %v1141 = vshrl.u32 %v988, 16
        %v1143 = vrot.slane %v1141, 4
        %v1144 = vor.u32 %v1143, %v1139
        %v1145 = vrot.slane %v1144, 4
        %v1147 = vshll.u32 %v1016, 16
        %v1149 = vrot.slane %v1147, 5
        %v1150 = vsel %vm1030, %v1145, %v1149
        %v1152 = vshrl.u32 %v989, 16
        %v1154 = vrot.slane %v1152, 4
        %v1155 = vshll.u32 %v989, 16
        %v1157 = vrot.slane %v1155, 5
        %v1158 = vor.u32 %v1154, %v1157
        %v1159 = vrot.slane %v1158, 4
        %v1161 = vshll.u32 %v990, 16
        %v1163 = vrot.slane %v1161, 5
        %v1164 = vsel %vm1030, %v1159, %v1163
        %v1165 = vshrl.u32 %v990, 16
        %v1167 = vrot.slane %v1165, 4
        %v1168 = vor.u32 %v1167, %v1163
        %v1169 = vrot.slane %v1168, 4
        %v1171 = vshll.u32 %v1017, 16
        %v1173 = vrot.slane %v1171, 5
        %v1174 = vsel %vm1030, %v1169, %v1173
        %v1176 = vshrl.u32 %v991, 16
        %v1178 = vrot.slane %v1176, 4
        %v1179 = vshll.u32 %v991, 16
        %v1181 = vrot.slane %v1179, 5
        %v1182 = vor.u32 %v1178, %v1181
        %v1183 = vrot.slane %v1182, 4
        %v1185 = vshll.u32 %v992, 16
        %v1187 = vrot.slane %v1185, 5
        %v1188 = vsel %vm1030, %v1183, %v1187
        %v1189 = vshrl.u32 %v992, 16
        %v1191 = vrot.slane %v1189, 4
        %v1192 = vor.u32 %v1191, %v1187
        %v1193 = vrot.slane %v1192, 4
        %v1195 = vshll.u32 %v1018, 16
        %v1197 = vrot.slane %v1195, 5
        %v1198 = vsel %vm1030, %v1193, %v1197
        %v1200 = vshrl.u32 %v993, 16
        %v1202 = vrot.slane %v1200, 4
        %v1203 = vshll.u32 %v993, 16
        %v1205 = vrot.slane %v1203, 5
        %v1206 = vor.u32 %v1202, %v1205
        %v1207 = vrot.slane %v1206, 4
        %v1209 = vshll.u32 %v994, 16
        %v1211 = vrot.slane %v1209, 5
        %v1212 = vsel %vm1030, %v1207, %v1211
        %v1213 = vshrl.u32 %v994, 16
        %v1215 = vrot.slane %v1213, 4
        %v1216 = vor.u32 %v1215, %v1211
        %v1217 = vrot.slane %v1216, 4
        %v1219 = vshll.u32 %v1019, 16
        %v1221 = vrot.slane %v1219, 5
        %v1222 = vsel %vm1030, %v1217, %v1221
        %v1224 = vshrl.u32 %v995, 16
        %v1226 = vrot.slane %v1224, 4
        %v1227 = vshll.u32 %v995, 16
        %v1229 = vrot.slane %v1227, 5
        %v1230 = vor.u32 %v1226, %v1229
        %v1231 = vrot.slane %v1230, 4
        %v1233 = vshll.u32 %v996, 16
        %v1235 = vrot.slane %v1233, 5
        %v1236 = vsel %vm1030, %v1231, %v1235
        %v1237 = vshrl.u32 %v996, 16
        %v1239 = vrot.slane %v1237, 4
        %v1240 = vor.u32 %v1239, %v1235
        %v1241 = vrot.slane %v1240, 4
        %v1243 = vshll.u32 %v1020, 16
        %v1245 = vrot.slane %v1243, 5
        %v1246 = vsel %vm1030, %v1241, %v1245
        %v1248 = vshrl.u32 %v997, 16
        %v1250 = vrot.slane %v1248, 4
        %v1251 = vshll.u32 %v997, 16
        %v1253 = vrot.slane %v1251, 5
        %v1254 = vor.u32 %v1250, %v1253
        %v1255 = vrot.slane %v1254, 4
        %v1257 = vshll.u32 %v998, 16
        %v1259 = vrot.slane %v1257, 5
        %v1260 = vsel %vm1030, %v1255, %v1259
        %v1261 = vshrl.u32 %v998, 16
        %v1263 = vrot.slane %v1261, 4
        %v1264 = vor.u32 %v1263, %v1259
        %v1265 = vrot.slane %v1264, 4
        %v1267 = vshll.u32 %v1021, 16
        %v1269 = vrot.slane %v1267, 5
        %v1270 = vsel %vm1030, %v1265, %v1269
        %v1272 = vshrl.u32 %v999, 16
        %v1274 = vrot.slane %v1272, 4
        %v1275 = vshll.u32 %v999, 16
        %v1277 = vrot.slane %v1275, 5
        %v1278 = vor.u32 %v1274, %v1277
        %v1279 = vrot.slane %v1278, 4
        %v1281 = vshll.u32 %v1000, 16
        %v1283 = vrot.slane %v1281, 5
        %v1284 = vsel %vm1030, %v1279, %v1283
        %v1285 = vshrl.u32 %v1000, 16
        %v1287 = vrot.slane %v1285, 4
        %v1288 = vor.u32 %v1287, %v1283
        %v1289 = vrot.slane %v1288, 4
        %v1291 = vshll.u32 %v1022, 16
        %v1293 = vrot.slane %v1291, 5
        %v1294 = vsel %vm1030, %v1289, %v1293
        %v1296 = vshrl.u32 %v1001, 16
        %v1298 = vrot.slane %v1296, 4
        %v1299 = vshll.u32 %v1001, 16
        %v1301 = vrot.slane %v1299, 5
        %v1302 = vor.u32 %v1298, %v1301
        %v1303 = vrot.slane %v1302, 4
        %v1305 = vshll.u32 %v1002, 16
        %v1307 = vrot.slane %v1305, 5
        %v1308 = vsel %vm1030, %v1303, %v1307
        %v1309 = vshrl.u32 %v1002, 16
        %v1311 = vrot.slane %v1309, 4
        %v1312 = vor.u32 %v1311, %v1307
        %v1313 = vrot.slane %v1312, 4
        %v1315 = vshll.u32 %v1023, 16
        %v1317 = vrot.slane %v1315, 5
        %v1318 = vsel %vm1030, %v1313, %v1317
        %v1320 = vshrl.u32 %v1003, 16
        %v1322 = vrot.slane %v1320, 4
        %v1323 = vshll.u32 %v1003, 16
        %v1325 = vrot.slane %v1323, 5
        %v1326 = vor.u32 %v1322, %v1325
        %v1327 = vrot.slane %v1326, 4
        %v1329 = vshll.u32 %v1004, 16
        %v1331 = vrot.slane %v1329, 5
        %v1332 = vsel %vm1030, %v1327, %v1331
        %v1333 = vshrl.u32 %v1004, 16
        %v1335 = vrot.slane %v1333, 4
        %v1336 = vor.u32 %v1335, %v1331
        %v1337 = vrot.slane %v1336, 4
        %v1339 = vshll.u32 %v1024, 16
        %v1341 = vrot.slane %v1339, 5
        %v1342 = vsel %vm1030, %v1337, %v1341
        %v1344 = vshrl.u32 %v1005, 16
        %v1346 = vrot.slane %v1344, 4
        %v1347 = vshll.u32 %v1005, 16
        %v1349 = vrot.slane %v1347, 5
        %v1350 = vor.u32 %v1346, %v1349
        %v1351 = vrot.slane %v1350, 4
        %v1353 = vshll.u32 %v1006, 16
        %v1355 = vrot.slane %v1353, 5
        %v1356 = vsel %vm1030, %v1351, %v1355
        %v1357 = vshrl.u32 %v1006, 16
        %v1359 = vrot.slane %v1357, 4
        %v1360 = vor.u32 %v1359, %v1355
        %v1361 = vrot.slane %v1360, 4
        %v1363 = vshll.u32 %v1025, 16
        %v1365 = vrot.slane %v1363, 5
        %v1366 = vsel %vm1030, %v1361, %v1365
        %v1368 = vshrl.u32 %v1007, 16
        %v1370 = vrot.slane %v1368, 4
        %v1371 = vshll.u32 %v1007, 16
        %v1373 = vrot.slane %v1371, 5
        %v1374 = vor.u32 %v1370, %v1373
        %v1375 = vrot.slane %v1374, 4
        %v1377 = vshll.u32 %v1008, 16
        %v1379 = vrot.slane %v1377, 5
        %v1380 = vsel %vm1030, %v1375, %v1379
        %v1381 = vshrl.u32 %v1008, 16
        %v1383 = vrot.slane %v1381, 4
        %v1384 = vor.u32 %v1383, %v1379
        %v1385 = vrot.slane %v1384, 4
        %v1387 = vshll.u32 %v1026, 16
        %v1389 = vrot.slane %v1387, 5
        %v1390 = vsel %vm1030, %v1385, %v1389
        %v1392 = vshrl.u32 %v1009, 16
        %v1394 = vrot.slane %v1392, 4
        %v1395 = vshll.u32 %v1009, 16
        %v1397 = vrot.slane %v1395, 5
        %v1398 = vor.u32 %v1394, %v1397
        %v1399 = vrot.slane %v1398, 4
        %v1401 = vshll.u32 %v1010, 16
        %v1403 = vrot.slane %v1401, 5
        %v1404 = vsel %vm1030, %v1399, %v1403
        %v1405 = vshrl.u32 %v1010, 16
        %v1407 = vrot.slane %v1405, 4
        %v1408 = vor.u32 %v1407, %v1403
        %v1409 = vrot.slane %v1408, 4
        %v1411 = vshll.u32 %v1027, 16
        %v1413 = vrot.slane %v1411, 5
        %v1414 = vsel %vm1030, %v1409, %v1413
        %s1415 = scalar_lea.vmem %s1, 2
        %v1416 = vld [vmem:[%s1415] sm:$0x3]
        %v1417 = vunpack.c.l.b16 %v1044
        %v1418 = vunpack.c.l.b16 %v1054
        %v1419 = vunpack.c.l.b16 %v1068
        %v1420 = vunpack.c.l.b16 %v1078
        %v1421 = vunpack.c.l.b16 %v1092
        %v1422 = vunpack.c.l.b16 %v1102
        %v1423 = vunpack.c.l.b16 %v1116
        %v1424 = vunpack.c.l.b16 %v1126
        %v1425 = vunpack.c.l.b16 %v1140
        %v1426 = vunpack.c.l.b16 %v1150
        %v1427 = vunpack.c.l.b16 %v1164
        %v1428 = vunpack.c.l.b16 %v1174
        %v1429 = vunpack.c.l.b16 %v1188
        %v1430 = vunpack.c.l.b16 %v1198
        %v1431 = vunpack.c.l.b16 %v1212
        %v1432 = vunpack.c.l.b16 %v1222
        %v1433 = vunpack.c.l.b16 %v1236
        %v1434 = vunpack.c.l.b16 %v1246
        %v1435 = vunpack.c.l.b16 %v1260
        %v1436 = vunpack.c.l.b16 %v1270
        %v1437 = vunpack.c.l.b16 %v1284
        %v1438 = vunpack.c.l.b16 %v1294
        %v1439 = vunpack.c.l.b16 %v1308
        %v1440 = vunpack.c.l.b16 %v1318
        %v1441 = vunpack.c.l.b16 %v1332
        %v1442 = vunpack.c.l.b16 %v1342
        %v1443 = vunpack.c.l.b16 %v1356
        %v1444 = vunpack.c.l.b16 %v1366
        %v1445 = vunpack.c.l.b16 %v1380
        %v1446 = vunpack.c.l.b16 %v1390
        %v1447 = vunpack.c.l.b16 %v1404
        %v1448 = vunpack.c.l.b16 %v1414
        %v1449 = vpack.c.b16 %v1418, %v1417
        %v1450 = vpack.c.b16 %v1420, %v1419
        %v1451 = vpack.c.b16 %v1422, %v1421
        %v1452 = vpack.c.b16 %v1424, %v1423
        %v1453 = vpack.c.b16 %v1426, %v1425
        %v1454 = vpack.c.b16 %v1428, %v1427
        %v1455 = vpack.c.b16 %v1430, %v1429
        %v1456 = vpack.c.b16 %v1432, %v1431
        %v1457 = vpack.c.b16 %v1434, %v1433
        %v1458 = vpack.c.b16 %v1436, %v1435
        %v1459 = vpack.c.b16 %v1438, %v1437
        %v1460 = vpack.c.b16 %v1440, %v1439
        %v1461 = vpack.c.b16 %v1442, %v1441
        %v1462 = vpack.c.b16 %v1444, %v1443
        %v1463 = vpack.c.b16 %v1446, %v1445
        %v1464 = vpack.c.b16 %v1448, %v1447
        %vm1465 = vcmask 23552
        %v1467 = vsel %vm1465, %v1449, 0
        %v1470 = vsel %vm1465, %v1450, 0
        %v1473 = vsel %vm1465, %v1451, 0
        %v1476 = vsel %vm1465, %v1452, 0
        %v1479 = vsel %vm1465, %v1453, 0
        %v1482 = vsel %vm1465, %v1454, 0
        %v1485 = vsel %vm1465, %v1455, 0
        %v1488 = vsel %vm1465, %v1456, 0
        %v1491 = vsel %vm1465, %v1457, 0
        %v1494 = vsel %vm1465, %v1458, 0
        %v1497 = vsel %vm1465, %v1459, 0
        %v1500 = vsel %vm1465, %v1460, 0
        %v1503 = vsel %vm1465, %v1461, 0
        %v1506 = vsel %vm1465, %v1462, 0
        %v1509 = vsel %vm1465, %v1463, 0
        %v1512 = vsel %vm1465, %v1464, 0
        %vm1514 = vcmask 1040384
        %vm1515 = vcmask 1041408
        %v1516 = vsel %vm1514, 4294967295, 65535
        %v1517 = vsel %vm1515, %v1516, 0
        %v1519 = vand.u32 %v1416, %v1517
        %1521 = vmatprep.subr.bf16.mxu0 0
        %1522 = vmatpush1.bf16.msra.mxu0 %v1519
        %1523 = vmatprep.subr.bf16.mxu0 0
        %1524 = vmatpush1.bf16.msra.mxu0 0
        %1525 = vmatprep.subr.bf16.mxu0 0
        %1526 = vmatpush1.bf16.msra.mxu0 0
        %1527 = vmatprep.subr.bf16.mxu0 0
        %1528 = vmatpush1.bf16.msra.mxu0 0
        %1529 = vmatprep.subr.bf16.mxu0 0
        %1530 = vmatpush1.bf16.msra.mxu0 0
        %1531 = vmatprep.subr.bf16.mxu0 0
        %1532 = vmatpush1.bf16.msra.mxu0 0
        %1533 = vmatprep.subr.bf16.mxu0 0
        %1534 = vmatpush1.bf16.msra.mxu0 0
        %1535 = vmatprep.subr.bf16.mxu0 0
        %1536 = vmatpush1.bf16.msra.mxu0 0
        %1537 = vmatprep.subr.bf16.mxu0 0
        %1538 = vmatpush1.bf16.msra.mxu0 0
        %1539 = vmatprep.subr.bf16.mxu0 0
        %1540 = vmatpush1.bf16.msra.mxu0 0
        %1541 = vmatprep.subr.bf16.mxu0 0
        %1542 = vmatpush1.bf16.msra.mxu0 0
        %1543 = vmatprep.subr.bf16.mxu0 0
        %1544 = vmatpush1.bf16.msra.mxu0 0
        %1545 = vmatprep.subr.bf16.mxu0 0
        %1546 = vmatpush1.bf16.msra.mxu0 0
        %1547 = vmatprep.subr.bf16.mxu0 0
        %1548 = vmatpush1.bf16.msra.mxu0 0
        %1549 = vmatprep.subr.bf16.mxu0 0
        %1550 = vmatpush1.bf16.msra.mxu0 0
        %1551 = vmatprep.subr.bf16.mxu0 0
        %1552 = vmatpush1.bf16.msra.mxu0 0
        %1553 = vmatprep.mubr.bf16.mxu0 0
        %1554 = vmatmul.mubr.bf16.gmra.mrb[0].mxu0 %v1467
        %v1555 = vpop.f32.mrb[0].mxu0
        %v1556 = vadd.f32 0.0, %v1555
        %v1557 = vpop.f32.mrb[0].mxu0
        %v1558 = vpop.f32.mrb[0].mxu0
        %v1559 = vadd.f32 0.0, %v1558
        %v1560 = vpop.f32.mrb[0].mxu0
        %1561 = vmatprep.mubr.bf16.mxu0 0
        %1562 = vmatmul.mubr.bf16.gmra.mrb[0].mxu0 %v1470
        %v1563 = vpop.f32.mrb[0].mxu0
        %v1564 = vadd.f32 0.0, %v1563
        %v1565 = vpop.f32.mrb[0].mxu0
        %v1566 = vpop.f32.mrb[0].mxu0
        %v1567 = vadd.f32 0.0, %v1566
        %v1568 = vpop.f32.mrb[0].mxu0
        %1569 = vmatprep.mubr.bf16.mxu0 0
        %1570 = vmatmul.mubr.bf16.gmra.mrb[0].mxu0 %v1473
        %v1571 = vpop.f32.mrb[0].mxu0
        %v1572 = vadd.f32 0.0, %v1571
        %v1573 = vpop.f32.mrb[0].mxu0
        %v1574 = vpop.f32.mrb[0].mxu0
        %v1575 = vadd.f32 0.0, %v1574
        %v1576 = vpop.f32.mrb[0].mxu0
        %1577 = vmatprep.mubr.bf16.mxu0 0
        %1578 = vmatmul.mubr.bf16.gmra.mrb[0].mxu0 %v1476
        %v1579 = vpop.f32.mrb[0].mxu0
        %v1580 = vadd.f32 0.0, %v1579
        %v1581 = vpop.f32.mrb[0].mxu0
        %v1582 = vpop.f32.mrb[0].mxu0
        %v1583 = vadd.f32 0.0, %v1582
        %v1584 = vpop.f32.mrb[0].mxu0
        %1585 = vmatprep.mubr.bf16.mxu0 0
        %1586 = vmatmul.mubr.bf16.gmra.mrb[0].mxu0 %v1479
        %v1587 = vpop.f32.mrb[0].mxu0
        %v1588 = vadd.f32 0.0, %v1587
        %v1589 = vpop.f32.mrb[0].mxu0
        %v1590 = vpop.f32.mrb[0].mxu0
        %v1591 = vadd.f32 0.0, %v1590
        %v1592 = vpop.f32.mrb[0].mxu0
        %1593 = vmatprep.mubr.bf16.mxu0 0
        %1594 = vmatmul.mubr.bf16.gmra.mrb[0].mxu0 %v1482
        %v1595 = vpop.f32.mrb[0].mxu0
        %v1596 = vadd.f32 0.0, %v1595
        %v1597 = vpop.f32.mrb[0].mxu0
        %v1598 = vpop.f32.mrb[0].mxu0
        %v1599 = vadd.f32 0.0, %v1598
        %v1600 = vpop.f32.mrb[0].mxu0
        %1601 = vmatprep.mubr.bf16.mxu0 0
        %1602 = vmatmul.mubr.bf16.gmra.mrb[0].mxu0 %v1485
        %v1603 = vpop.f32.mrb[0].mxu0
        %v1604 = vadd.f32 0.0, %v1603
        %v1605 = vpop.f32.mrb[0].mxu0
        %v1606 = vpop.f32.mrb[0].mxu0
        %v1607 = vadd.f32 0.0, %v1606
        %v1608 = vpop.f32.mrb[0].mxu0
        %1609 = vmatprep.mubr.bf16.mxu0 0
        %1610 = vmatmul.mubr.bf16.gmra.mrb[0].mxu0 %v1488
        %v1611 = vpop.f32.mrb[0].mxu0
        %v1612 = vadd.f32 0.0, %v1611
        %v1613 = vpop.f32.mrb[0].mxu0
        %v1614 = vpop.f32.mrb[0].mxu0
        %v1615 = vadd.f32 0.0, %v1614
        %v1616 = vpop.f32.mrb[0].mxu0
        %1617 = vmatprep.mubr.bf16.mxu0 0
        %1618 = vmatmul.mubr.bf16.gmra.mrb[0].mxu0 %v1491
        %v1619 = vpop.f32.mrb[0].mxu0
        %v1620 = vadd.f32 0.0, %v1619
        %v1621 = vpop.f32.mrb[0].mxu0
        %v1622 = vpop.f32.mrb[0].mxu0
        %v1623 = vadd.f32 0.0, %v1622
        %v1624 = vpop.f32.mrb[0].mxu0
        %1625 = vmatprep.mubr.bf16.mxu0 0
        %1626 = vmatmul.mubr.bf16.gmra.mrb[0].mxu0 %v1494
        %v1627 = vpop.f32.mrb[0].mxu0
        %v1628 = vadd.f32 0.0, %v1627
        %v1629 = vpop.f32.mrb[0].mxu0
        %v1630 = vpop.f32.mrb[0].mxu0
        %v1631 = vadd.f32 0.0, %v1630
        %v1632 = vpop.f32.mrb[0].mxu0
        %1633 = vmatprep.mubr.bf16.mxu0 0
        %1634 = vmatmul.mubr.bf16.gmra.mrb[0].mxu0 %v1497
        %v1635 = vpop.f32.mrb[0].mxu0
        %v1636 = vadd.f32 0.0, %v1635
        %v1637 = vpop.f32.mrb[0].mxu0
        %v1638 = vpop.f32.mrb[0].mxu0
        %v1639 = vadd.f32 0.0, %v1638
        %v1640 = vpop.f32.mrb[0].mxu0
        %1641 = vmatprep.mubr.bf16.mxu0 0
        %1642 = vmatmul.mubr.bf16.gmra.mrb[0].mxu0 %v1500
        %v1643 = vpop.f32.mrb[0].mxu0
        %v1644 = vadd.f32 0.0, %v1643
        %v1645 = vpop.f32.mrb[0].mxu0
        %v1646 = vpop.f32.mrb[0].mxu0
        %v1647 = vadd.f32 0.0, %v1646
        %v1648 = vpop.f32.mrb[0].mxu0
        %1649 = vmatprep.mubr.bf16.mxu0 0
        %1650 = vmatmul.mubr.bf16.gmra.mrb[0].mxu0 %v1503
        %v1651 = vpop.f32.mrb[0].mxu0
        %v1652 = vadd.f32 0.0, %v1651
        %v1653 = vpop.f32.mrb[0].mxu0
        %v1654 = vpop.f32.mrb[0].mxu0
        %v1655 = vadd.f32 0.0, %v1654
        %v1656 = vpop.f32.mrb[0].mxu0
        %1657 = vmatprep.mubr.bf16.mxu0 0
        %1658 = vmatmul.mubr.bf16.gmra.mrb[0].mxu0 %v1506
        %v1659 = vpop.f32.mrb[0].mxu0
        %v1660 = vadd.f32 0.0, %v1659
        %v1661 = vpop.f32.mrb[0].mxu0
        %v1662 = vpop.f32.mrb[0].mxu0
        %v1663 = vadd.f32 0.0, %v1662
        %v1664 = vpop.f32.mrb[0].mxu0
        %1665 = vmatprep.mubr.bf16.mxu0 0
        %1666 = vmatmul.mubr.bf16.gmra.mrb[0].mxu0 %v1509
        %v1667 = vpop.f32.mrb[0].mxu0
        %v1668 = vadd.f32 0.0, %v1667
        %v1669 = vpop.f32.mrb[0].mxu0
        %v1670 = vpop.f32.mrb[0].mxu0
        %v1671 = vadd.f32 0.0, %v1670
        %v1672 = vpop.f32.mrb[0].mxu0
        %1673 = vmatprep.mubr.bf16.mxu0 0
        %1674 = vmatmul.mubr.bf16.gmra.mrb[0].mxu0 %v1512
        %v1675 = vpop.f32.mrb[0].mxu0
        %v1676 = vadd.f32 0.0, %v1675
        %v1677 = vpop.f32.mrb[0].mxu0
        %v1678 = vpop.f32.mrb[0].mxu0
        %v1679 = vadd.f32 0.0, %v1678
        %v1680 = vpop.f32.mrb[0].mxu0
        %1681 = vdwg.mxu0
        %v1714 = vunpack.c.l.b16 %v979
        %v1715 = vunpack.c.l.b16 %v980
        %v1716 = vunpack.c.l.b16 %v981
        %v1717 = vunpack.c.l.b16 %v982
        %v1718 = vunpack.c.l.b16 %v983
        %v1719 = vunpack.c.l.b16 %v984
        %v1720 = vunpack.c.l.b16 %v985
        %v1721 = vunpack.c.l.b16 %v986
        %v1722 = vunpack.c.l.b16 %v987
        %v1723 = vunpack.c.l.b16 %v988
        %v1724 = vunpack.c.l.b16 %v989
        %v1725 = vunpack.c.l.b16 %v990
        %v1726 = vunpack.c.l.b16 %v991
        %v1727 = vunpack.c.l.b16 %v992
        %v1728 = vunpack.c.l.b16 %v993
        %v1729 = vunpack.c.l.b16 %v994
        %v1730 = vunpack.c.l.b16 %v995
        %v1731 = vunpack.c.l.b16 %v996
        %v1732 = vunpack.c.l.b16 %v997
        %v1733 = vunpack.c.l.b16 %v998
        %v1734 = vunpack.c.l.b16 %v999
        %v1735 = vunpack.c.l.b16 %v1000
        %v1736 = vunpack.c.l.b16 %v1001
        %v1737 = vunpack.c.l.b16 %v1002
        %v1738 = vunpack.c.l.b16 %v1003
        %v1739 = vunpack.c.l.b16 %v1004
        %v1740 = vunpack.c.l.b16 %v1005
        %v1741 = vunpack.c.l.b16 %v1006
        %v1742 = vunpack.c.l.b16 %v1007
        %v1743 = vunpack.c.l.b16 %v1008
        %v1744 = vunpack.c.l.b16 %v1009
        %v1745 = vunpack.c.l.b16 %v1010
        %v1746 = vpack.c.b16 %v1715, %v1714
        %v1747 = vpack.c.b16 %v1717, %v1716
        %v1748 = vpack.c.b16 %v1719, %v1718
        %v1749 = vpack.c.b16 %v1721, %v1720
        %v1750 = vpack.c.b16 %v1723, %v1722
        %v1751 = vpack.c.b16 %v1725, %v1724
        %v1752 = vpack.c.b16 %v1727, %v1726
        %v1753 = vpack.c.b16 %v1729, %v1728
        %v1754 = vpack.c.b16 %v1731, %v1730
        %v1755 = vpack.c.b16 %v1733, %v1732
        %v1756 = vpack.c.b16 %v1735, %v1734
        %v1757 = vpack.c.b16 %v1737, %v1736
        %v1758 = vpack.c.b16 %v1739, %v1738
        %v1759 = vpack.c.b16 %v1741, %v1740
        %v1760 = vpack.c.b16 %v1743, %v1742
        %v1761 = vpack.c.b16 %v1745, %v1744
        %v1763 = vsel %vm1465, %v1746, 0
        %v1766 = vsel %vm1465, %v1747, 0
        %v1769 = vsel %vm1465, %v1748, 0
        %v1772 = vsel %vm1465, %v1749, 0
        %v1775 = vsel %vm1465, %v1750, 0
        %v1778 = vsel %vm1465, %v1751, 0
        %v1781 = vsel %vm1465, %v1752, 0
        %v1784 = vsel %vm1465, %v1753, 0
        %v1787 = vsel %vm1465, %v1754, 0
        %v1790 = vsel %vm1465, %v1755, 0
        %v1793 = vsel %vm1465, %v1756, 0
        %v1796 = vsel %vm1465, %v1757, 0
        %v1799 = vsel %vm1465, %v1758, 0
        %v1802 = vsel %vm1465, %v1759, 0
        %v1805 = vsel %vm1465, %v1760, 0
        %v1808 = vsel %vm1465, %v1761, 0
        %v1811 = vand.u32 %v1011, %v1517
        %1813 = vmatprep.subr.bf16.mxu0 0
        %1814 = vmatpush1.bf16.msra.mxu0 %v1811
        %1815 = vmatprep.subr.bf16.mxu0 0
        %1816 = vmatpush1.bf16.msra.mxu0 0
        %1817 = vmatprep.subr.bf16.mxu0 0
        %1818 = vmatpush1.bf16.msra.mxu0 0
        %1819 = vmatprep.subr.bf16.mxu0 0
        %1820 = vmatpush1.bf16.msra.mxu0 0
        %1821 = vmatprep.subr.bf16.mxu0 0
        %1822 = vmatpush1.bf16.msra.mxu0 0
        %1823 = vmatprep.subr.bf16.mxu0 0
        %1824 = vmatpush1.bf16.msra.mxu0 0
        %1825 = vmatprep.subr.bf16.mxu0 0
        %1826 = vmatpush1.bf16.msra.mxu0 0
        %1827 = vmatprep.subr.bf16.mxu0 0
        %1828 = vmatpush1.bf16.msra.mxu0 0
        %1829 = vmatprep.subr.bf16.mxu0 0
        %1830 = vmatpush1.bf16.msra.mxu0 0
        %1831 = vmatprep.subr.bf16.mxu0 0
        %1832 = vmatpush1.bf16.msra.mxu0 0
        %1833 = vmatprep.subr.bf16.mxu0 0
        %1834 = vmatpush1.bf16.msra.mxu0 0
        %1835 = vmatprep.subr.bf16.mxu0 0
        %1836 = vmatpush1.bf16.msra.mxu0 0
        %1837 = vmatprep.subr.bf16.mxu0 0
        %1838 = vmatpush1.bf16.msra.mxu0 0
        %1839 = vmatprep.subr.bf16.mxu0 0
        %1840 = vmatpush1.bf16.msra.mxu0 0
        %1841 = vmatprep.subr.bf16.mxu0 0
        %1842 = vmatpush1.bf16.msra.mxu0 0
        %1843 = vmatprep.subr.bf16.mxu0 0
        %1844 = vmatpush1.bf16.msra.mxu0 0
        %1845 = vmatprep.mubr.bf16.mxu0 0
        %1846 = vmatmul.mubr.bf16.gmra.mrb[0].mxu0 %v1763
        %v1847 = vpop.f32.mrb[0].mxu0
        %v1848 = vadd.f32 %v1556, %v1847
        %v1849 = vpop.f32.mrb[0].mxu0
        %v1850 = vpop.f32.mrb[0].mxu0
        %v1851 = vadd.f32 %v1559, %v1850
        %v1852 = vpop.f32.mrb[0].mxu0
        %1853 = vmatprep.mubr.bf16.mxu0 0
        %1854 = vmatmul.mubr.bf16.gmra.mrb[0].mxu0 %v1766
        %v1855 = vpop.f32.mrb[0].mxu0
        %v1856 = vadd.f32 %v1564, %v1855
        %v1857 = vpop.f32.mrb[0].mxu0
        %v1858 = vpop.f32.mrb[0].mxu0
        %v1859 = vadd.f32 %v1567, %v1858
        %v1860 = vpop.f32.mrb[0].mxu0
        %1861 = vmatprep.mubr.bf16.mxu0 0
        %1862 = vmatmul.mubr.bf16.gmra.mrb[0].mxu0 %v1769
        %v1863 = vpop.f32.mrb[0].mxu0
        %v1864 = vadd.f32 %v1572, %v1863
        %v1865 = vpop.f32.mrb[0].mxu0
        %v1866 = vpop.f32.mrb[0].mxu0
        %v1867 = vadd.f32 %v1575, %v1866
        %v1868 = vpop.f32.mrb[0].mxu0
        %1869 = vmatprep.mubr.bf16.mxu0 0
        %1870 = vmatmul.mubr.bf16.gmra.mrb[0].mxu0 %v1772
        %v1871 = vpop.f32.mrb[0].mxu0
        %v1872 = vadd.f32 %v1580, %v1871
        %v1873 = vpop.f32.mrb[0].mxu0
        %v1874 = vpop.f32.mrb[0].mxu0
        %v1875 = vadd.f32 %v1583, %v1874
        %v1876 = vpop.f32.mrb[0].mxu0
        %1877 = vmatprep.mubr.bf16.mxu0 0
        %1878 = vmatmul.mubr.bf16.gmra.mrb[0].mxu0 %v1775
        %v1879 = vpop.f32.mrb[0].mxu0
        %v1880 = vadd.f32 %v1588, %v1879
        %v1881 = vpop.f32.mrb[0].mxu0
        %v1882 = vpop.f32.mrb[0].mxu0
        %v1883 = vadd.f32 %v1591, %v1882
        %v1884 = vpop.f32.mrb[0].mxu0
        %1885 = vmatprep.mubr.bf16.mxu0 0
        %1886 = vmatmul.mubr.bf16.gmra.mrb[0].mxu0 %v1778
        %v1887 = vpop.f32.mrb[0].mxu0
        %v1888 = vadd.f32 %v1596, %v1887
        %v1889 = vpop.f32.mrb[0].mxu0
        %v1890 = vpop.f32.mrb[0].mxu0
        %v1891 = vadd.f32 %v1599, %v1890
        %v1892 = vpop.f32.mrb[0].mxu0
        %1893 = vmatprep.mubr.bf16.mxu0 0
        %1894 = vmatmul.mubr.bf16.gmra.mrb[0].mxu0 %v1781
        %v1895 = vpop.f32.mrb[0].mxu0
        %v1896 = vadd.f32 %v1604, %v1895
        %v1897 = vpop.f32.mrb[0].mxu0
        %v1898 = vpop.f32.mrb[0].mxu0
        %v1899 = vadd.f32 %v1607, %v1898
        %v1900 = vpop.f32.mrb[0].mxu0
        %1901 = vmatprep.mubr.bf16.mxu0 0
        %1902 = vmatmul.mubr.bf16.gmra.mrb[0].mxu0 %v1784
        %v1903 = vpop.f32.mrb[0].mxu0
        %v1904 = vadd.f32 %v1612, %v1903
        %v1905 = vpop.f32.mrb[0].mxu0
        %v1906 = vpop.f32.mrb[0].mxu0
        %v1907 = vadd.f32 %v1615, %v1906
        %v1908 = vpop.f32.mrb[0].mxu0
        %1909 = vmatprep.mubr.bf16.mxu0 0
        %1910 = vmatmul.mubr.bf16.gmra.mrb[0].mxu0 %v1787
        %v1911 = vpop.f32.mrb[0].mxu0
        %v1912 = vadd.f32 %v1620, %v1911
        %v1913 = vpop.f32.mrb[0].mxu0
        %v1914 = vpop.f32.mrb[0].mxu0
        %v1915 = vadd.f32 %v1623, %v1914
        %v1916 = vpop.f32.mrb[0].mxu0
        %1917 = vmatprep.mubr.bf16.mxu0 0
        %1918 = vmatmul.mubr.bf16.gmra.mrb[0].mxu0 %v1790
        %v1919 = vpop.f32.mrb[0].mxu0
        %v1920 = vadd.f32 %v1628, %v1919
        %v1921 = vpop.f32.mrb[0].mxu0
        %v1922 = vpop.f32.mrb[0].mxu0
        %v1923 = vadd.f32 %v1631, %v1922
        %v1924 = vpop.f32.mrb[0].mxu0
        %1925 = vmatprep.mubr.bf16.mxu0 0
        %1926 = vmatmul.mubr.bf16.gmra.mrb[0].mxu0 %v1793
        %v1927 = vpop.f32.mrb[0].mxu0
        %v1928 = vadd.f32 %v1636, %v1927
        %v1929 = vpop.f32.mrb[0].mxu0
        %v1930 = vpop.f32.mrb[0].mxu0
        %v1931 = vadd.f32 %v1639, %v1930
        %v1932 = vpop.f32.mrb[0].mxu0
        %1933 = vmatprep.mubr.bf16.mxu0 0
        %1934 = vmatmul.mubr.bf16.gmra.mrb[0].mxu0 %v1796
        %v1935 = vpop.f32.mrb[0].mxu0
        %v1936 = vadd.f32 %v1644, %v1935
        %v1937 = vpop.f32.mrb[0].mxu0
        %v1938 = vpop.f32.mrb[0].mxu0
        %v1939 = vadd.f32 %v1647, %v1938
        %v1940 = vpop.f32.mrb[0].mxu0
        %1941 = vmatprep.mubr.bf16.mxu0 0
        %1942 = vmatmul.mubr.bf16.gmra.mrb[0].mxu0 %v1799
        %v1943 = vpop.f32.mrb[0].mxu0
        %v1944 = vadd.f32 %v1652, %v1943
        %v1945 = vpop.f32.mrb[0].mxu0
        %v1946 = vpop.f32.mrb[0].mxu0
        %v1947 = vadd.f32 %v1655, %v1946
        %v1948 = vpop.f32.mrb[0].mxu0
        %1949 = vmatprep.mubr.bf16.mxu0 0
        %1950 = vmatmul.mubr.bf16.gmra.mrb[0].mxu0 %v1802
        %v1951 = vpop.f32.mrb[0].mxu0
        %v1952 = vadd.f32 %v1660, %v1951
        %v1953 = vpop.f32.mrb[0].mxu0
        %v1954 = vpop.f32.mrb[0].mxu0
        %v1955 = vadd.f32 %v1663, %v1954
        %v1956 = vpop.f32.mrb[0].mxu0
        %1957 = vmatprep.mubr.bf16.mxu0 0
        %1958 = vmatmul.mubr.bf16.gmra.mrb[0].mxu0 %v1805
        %v1959 = vpop.f32.mrb[0].mxu0
        %v1960 = vadd.f32 %v1668, %v1959
        %v1961 = vpop.f32.mrb[0].mxu0
        %v1962 = vpop.f32.mrb[0].mxu0
        %v1963 = vadd.f32 %v1671, %v1962
        %v1964 = vpop.f32.mrb[0].mxu0
        %1965 = vmatprep.mubr.bf16.mxu0 0
        %1966 = vmatmul.mubr.bf16.gmra.mrb[0].mxu0 %v1808
        %v1967 = vpop.f32.mrb[0].mxu0
        %v1968 = vadd.f32 %v1676, %v1967
        %v1969 = vpop.f32.mrb[0].mxu0
        %v1970 = vpop.f32.mrb[0].mxu0
        %v1971 = vadd.f32 %v1679, %v1970
        %v1972 = vpop.f32.mrb[0].mxu0
        %1973 = vdwg.mxu0
        %v1974 = vld [vmem:[#allocation2] sm:$0xe]
        %v1975 = vld [vmem:[#allocation2 + $0xc] sm:$0xe]
        %v1976 = vld [vmem:[#allocation2 + $0x18] sm:$0xe]
        %v1977 = vld [vmem:[#allocation2 + $0x24] sm:$0xe]
        %v1978 = vld [vmem:[#allocation2 + $0x30] sm:$0xe]
        %v1979 = vld [vmem:[#allocation2 + $0x3c] sm:$0xe]
        %v1980 = vld [vmem:[#allocation2 + $0x48] sm:$0xe]
        %v1981 = vld [vmem:[#allocation2 + $0x54] sm:$0xe]
        %v1982 = vld [vmem:[#allocation2 + $0x60] sm:$0xe]
        %v1983 = vld [vmem:[#allocation2 + $0x6c] sm:$0xe]
        %v1984 = vld [vmem:[#allocation2 + $0x78] sm:$0xe]
        %v1985 = vld [vmem:[#allocation2 + $0x84] sm:$0xe]
        %v1986 = vld [vmem:[#allocation2 + $0x90] sm:$0xe]
        %v1987 = vld [vmem:[#allocation2 + $0x9c] sm:$0xe]
        %v1988 = vld [vmem:[#allocation2 + $0xa8] sm:$0xe]
        %v1989 = vld [vmem:[#allocation2 + $0xb4] sm:$0xe]
        %vm2022 = vcmask 1042432
        %vm2023 = vcmask 1046532
        %vm2024 = vmor %vm2022, %vm2023
        %v2025 = vrot.slane %v1974, 5
        %v2026 = vrot.slane %v2025, 4
        %v2027 = vrot.slane %v980, 5
        %v2028 = vsel %vm2024, %v2026, %v2027
        %v2029 = vrot.slane %v2027, 4
        %v2030 = vrot.slane %v1012, 5
        %v2031 = vsel %vm2024, %v2029, %v2030
        %v2032 = vrot.slane %v1975, 5
        %v2033 = vrot.slane %v2032, 4
        %v2034 = vrot.slane %v982, 5
        %v2035 = vsel %vm2024, %v2033, %v2034
        %v2036 = vrot.slane %v2034, 4
        %v2037 = vrot.slane %v1013, 5
        %v2038 = vsel %vm2024, %v2036, %v2037
        %v2039 = vrot.slane %v1976, 5
        %v2040 = vrot.slane %v2039, 4
        %v2041 = vrot.slane %v984, 5
        %v2042 = vsel %vm2024, %v2040, %v2041
        %v2043 = vrot.slane %v2041, 4
        %v2044 = vrot.slane %v1014, 5
        %v2045 = vsel %vm2024, %v2043, %v2044
        %v2046 = vrot.slane %v1977, 5
        %v2047 = vrot.slane %v2046, 4
        %v2048 = vrot.slane %v986, 5
        %v2049 = vsel %vm2024, %v2047, %v2048
        %v2050 = vrot.slane %v2048, 4
        %v2051 = vrot.slane %v1015, 5
        %v2052 = vsel %vm2024, %v2050, %v2051
        %v2053 = vrot.slane %v1978, 5
        %v2054 = vrot.slane %v2053, 4
        %v2055 = vrot.slane %v988, 5
        %v2056 = vsel %vm2024, %v2054, %v2055
        %v2057 = vrot.slane %v2055, 4
        %v2058 = vrot.slane %v1016, 5
        %v2059 = vsel %vm2024, %v2057, %v2058
        %v2060 = vrot.slane %v1979, 5
        %v2061 = vrot.slane %v2060, 4
        %v2062 = vrot.slane %v990, 5
        %v2063 = vsel %vm2024, %v2061, %v2062
        %v2064 = vrot.slane %v2062, 4
        %v2065 = vrot.slane %v1017, 5
        %v2066 = vsel %vm2024, %v2064, %v2065
        %v2067 = vrot.slane %v1980, 5
        %v2068 = vrot.slane %v2067, 4
        %v2069 = vrot.slane %v992, 5
        %v2070 = vsel %vm2024, %v2068, %v2069
        %v2071 = vrot.slane %v2069, 4
        %v2072 = vrot.slane %v1018, 5
        %v2073 = vsel %vm2024, %v2071, %v2072
        %v2074 = vrot.slane %v1981, 5
        %v2075 = vrot.slane %v2074, 4
        %v2076 = vrot.slane %v994, 5
        %v2077 = vsel %vm2024, %v2075, %v2076
        %v2078 = vrot.slane %v2076, 4
        %v2079 = vrot.slane %v1019, 5
        %v2080 = vsel %vm2024, %v2078, %v2079
        %v2081 = vrot.slane %v1982, 5
        %v2082 = vrot.slane %v2081, 4
        %v2083 = vrot.slane %v996, 5
        %v2084 = vsel %vm2024, %v2082, %v2083
        %v2085 = vrot.slane %v2083, 4
        %v2086 = vrot.slane %v1020, 5
        %v2087 = vsel %vm2024, %v2085, %v2086
        %v2088 = vrot.slane %v1983, 5
        %v2089 = vrot.slane %v2088, 4
        %v2090 = vrot.slane %v998, 5
        %v2091 = vsel %vm2024, %v2089, %v2090
        %v2092 = vrot.slane %v2090, 4
        %v2093 = vrot.slane %v1021, 5
        %v2094 = vsel %vm2024, %v2092, %v2093
        %v2095 = vrot.slane %v1984, 5
        %v2096 = vrot.slane %v2095, 4
        %v2097 = vrot.slane %v1000, 5
        %v2098 = vsel %vm2024, %v2096, %v2097
        %v2099 = vrot.slane %v2097, 4
        %v2100 = vrot.slane %v1022, 5
        %v2101 = vsel %vm2024, %v2099, %v2100
        %v2102 = vrot.slane %v1985, 5
        %v2103 = vrot.slane %v2102, 4
        %v2104 = vrot.slane %v1002, 5
        %v2105 = vsel %vm2024, %v2103, %v2104
        %v2106 = vrot.slane %v2104, 4
        %v2107 = vrot.slane %v1023, 5
        %v2108 = vsel %vm2024, %v2106, %v2107
        %v2109 = vrot.slane %v1986, 5
        %v2110 = vrot.slane %v2109, 4
        %v2111 = vrot.slane %v1004, 5
        %v2112 = vsel %vm2024, %v2110, %v2111
        %v2113 = vrot.slane %v2111, 4
        %v2114 = vrot.slane %v1024, 5
        %v2115 = vsel %vm2024, %v2113, %v2114
        %v2116 = vrot.slane %v1987, 5
        %v2117 = vrot.slane %v2116, 4
        %v2118 = vrot.slane %v1006, 5
        %v2119 = vsel %vm2024, %v2117, %v2118
        %v2120 = vrot.slane %v2118, 4
        %v2121 = vrot.slane %v1025, 5
        %v2122 = vsel %vm2024, %v2120, %v2121
        %v2123 = vrot.slane %v1988, 5
        %v2124 = vrot.slane %v2123, 4
        %v2125 = vrot.slane %v1008, 5
        %v2126 = vsel %vm2024, %v2124, %v2125
        %v2127 = vrot.slane %v2125, 4
        %v2128 = vrot.slane %v1026, 5
        %v2129 = vsel %vm2024, %v2127, %v2128
        %v2130 = vrot.slane %v1989, 5
        %v2131 = vrot.slane %v2130, 4
        %v2132 = vrot.slane %v1010, 5
        %v2133 = vsel %vm2024, %v2131, %v2132
        %v2134 = vrot.slane %v2132, 4
        %v2135 = vrot.slane %v1027, 5
        %v2136 = vsel %vm2024, %v2134, %v2135
        %s2137 = scalar_lea.vmem %s1, 4
        %v2138 = vld [vmem:[%s2137] sm:$0x3]
        %v2139 = vunpack.c.l.b16 %v2028
        %v2140 = vunpack.c.l.b16 %v2031
        %v2141 = vunpack.c.l.b16 %v2035
        %v2142 = vunpack.c.l.b16 %v2038
        %v2143 = vunpack.c.l.b16 %v2042
        %v2144 = vunpack.c.l.b16 %v2045
        %v2145 = vunpack.c.l.b16 %v2049
        %v2146 = vunpack.c.l.b16 %v2052
        %v2147 = vunpack.c.l.b16 %v2056
        %v2148 = vunpack.c.l.b16 %v2059
        %v2149 = vunpack.c.l.b16 %v2063
        %v2150 = vunpack.c.l.b16 %v2066
        %v2151 = vunpack.c.l.b16 %v2070
        %v2152 = vunpack.c.l.b16 %v2073
        %v2153 = vunpack.c.l.b16 %v2077
        %v2154 = vunpack.c.l.b16 %v2080
        %v2155 = vunpack.c.l.b16 %v2084
        %v2156 = vunpack.c.l.b16 %v2087
        %v2157 = vunpack.c.l.b16 %v2091
        %v2158 = vunpack.c.l.b16 %v2094
        %v2159 = vunpack.c.l.b16 %v2098
        %v2160 = vunpack.c.l.b16 %v2101
        %v2161 = vunpack.c.l.b16 %v2105
        %v2162 = vunpack.c.l.b16 %v2108
        %v2163 = vunpack.c.l.b16 %v2112
        %v2164 = vunpack.c.l.b16 %v2115
        %v2165 = vunpack.c.l.b16 %v2119
        %v2166 = vunpack.c.l.b16 %v2122
        %v2167 = vunpack.c.l.b16 %v2126
        %v2168 = vunpack.c.l.b16 %v2129
        %v2169 = vunpack.c.l.b16 %v2133
        %v2170 = vunpack.c.l.b16 %v2136
        %v2171 = vpack.c.b16 %v2140, %v2139
        %v2172 = vpack.c.b16 %v2142, %v2141
        %v2173 = vpack.c.b16 %v2144, %v2143
        %v2174 = vpack.c.b16 %v2146, %v2145
        %v2175 = vpack.c.b16 %v2148, %v2147
        %v2176 = vpack.c.b16 %v2150, %v2149
        %v2177 = vpack.c.b16 %v2152, %v2151
        %v2178 = vpack.c.b16 %v2154, %v2153
        %v2179 = vpack.c.b16 %v2156, %v2155
        %v2180 = vpack.c.b16 %v2158, %v2157
        %v2181 = vpack.c.b16 %v2160, %v2159
        %v2182 = vpack.c.b16 %v2162, %v2161
        %v2183 = vpack.c.b16 %v2164, %v2163
        %v2184 = vpack.c.b16 %v2166, %v2165
        %v2185 = vpack.c.b16 %v2168, %v2167
        %v2186 = vpack.c.b16 %v2170, %v2169
        %v2188 = vsel %vm1465, %v2171, 0
        %v2191 = vsel %vm1465, %v2172, 0
        %v2194 = vsel %vm1465, %v2173, 0
        %v2197 = vsel %vm1465, %v2174, 0
        %v2200 = vsel %vm1465, %v2175, 0
        %v2203 = vsel %vm1465, %v2176, 0
        %v2206 = vsel %vm1465, %v2177, 0
        %v2209 = vsel %vm1465, %v2178, 0
        %v2212 = vsel %vm1465, %v2179, 0
        %v2215 = vsel %vm1465, %v2180, 0
        %v2218 = vsel %vm1465, %v2181, 0
        %v2221 = vsel %vm1465, %v2182, 0
        %v2224 = vsel %vm1465, %v2183, 0
        %v2227 = vsel %vm1465, %v2184, 0
        %v2230 = vsel %vm1465, %v2185, 0
        %v2233 = vsel %vm1465, %v2186, 0
        %v2236 = vand.u32 %v2138, %v1517
        %2238 = vmatprep.subr.bf16.mxu0 0
        %2239 = vmatpush1.bf16.msra.mxu0 %v2236
        %2240 = vmatprep.subr.bf16.mxu0 0
        %2241 = vmatpush1.bf16.msra.mxu0 0
        %2242 = vmatprep.subr.bf16.mxu0 0
        %2243 = vmatpush1.bf16.msra.mxu0 0
        %2244 = vmatprep.subr.bf16.mxu0 0
        %2245 = vmatpush1.bf16.msra.mxu0 0
        %2246 = vmatprep.subr.bf16.mxu0 0
        %2247 = vmatpush1.bf16.msra.mxu0 0
        %2248 = vmatprep.subr.bf16.mxu0 0
        %2249 = vmatpush1.bf16.msra.mxu0 0
        %2250 = vmatprep.subr.bf16.mxu0 0
        %2251 = vmatpush1.bf16.msra.mxu0 0
        %2252 = vmatprep.subr.bf16.mxu0 0
        %2253 = vmatpush1.bf16.msra.mxu0 0
        %2254 = vmatprep.subr.bf16.mxu0 0
        %2255 = vmatpush1.bf16.msra.mxu0 0
        %2256 = vmatprep.subr.bf16.mxu0 0
        %2257 = vmatpush1.bf16.msra.mxu0 0
        %2258 = vmatprep.subr.bf16.mxu0 0
        %2259 = vmatpush1.bf16.msra.mxu0 0
        %2260 = vmatprep.subr.bf16.mxu0 0
        %2261 = vmatpush1.bf16.msra.mxu0 0
        %2262 = vmatprep.subr.bf16.mxu0 0
        %2263 = vmatpush1.bf16.msra.mxu0 0
        %2264 = vmatprep.subr.bf16.mxu0 0
        %2265 = vmatpush1.bf16.msra.mxu0 0
        %2266 = vmatprep.subr.bf16.mxu0 0
        %2267 = vmatpush1.bf16.msra.mxu0 0
        %2268 = vmatprep.subr.bf16.mxu0 0
        %2269 = vmatpush1.bf16.msra.mxu0 0
        %2270 = vmatprep.mubr.bf16.mxu0 0
        %2271 = vmatmul.mubr.bf16.gmra.mrb[0].mxu0 %v2188
        %v2272 = vpop.f32.mrb[0].mxu0
        %v2273 = vadd.f32 0.0, %v2272
        %v2274 = vpop.f32.mrb[0].mxu0
        %v2275 = vpop.f32.mrb[0].mxu0
        %v2276 = vadd.f32 0.0, %v2275
        %v2277 = vpop.f32.mrb[0].mxu0
        %2278 = vmatprep.mubr.bf16.mxu0 0
        %2279 = vmatmul.mubr.bf16.gmra.mrb[0].mxu0 %v2191
        %v2280 = vpop.f32.mrb[0].mxu0
        %v2281 = vadd.f32 0.0, %v2280
        %v2282 = vpop.f32.mrb[0].mxu0
        %v2283 = vpop.f32.mrb[0].mxu0
        %v2284 = vadd.f32 0.0, %v2283
        %v2285 = vpop.f32.mrb[0].mxu0
        %2286 = vmatprep.mubr.bf16.mxu0 0
        %2287 = vmatmul.mubr.bf16.gmra.mrb[0].mxu0 %v2194
        %v2288 = vpop.f32.mrb[0].mxu0
        %v2289 = vadd.f32 0.0, %v2288
        %v2290 = vpop.f32.mrb[0].mxu0
        %v2291 = vpop.f32.mrb[0].mxu0
        %v2292 = vadd.f32 0.0, %v2291
        %v2293 = vpop.f32.mrb[0].mxu0
        %2294 = vmatprep.mubr.bf16.mxu0 0
        %2295 = vmatmul.mubr.bf16.gmra.mrb[0].mxu0 %v2197
        %v2296 = vpop.f32.mrb[0].mxu0
        %v2297 = vadd.f32 0.0, %v2296
        %v2298 = vpop.f32.mrb[0].mxu0
        %v2299 = vpop.f32.mrb[0].mxu0
        %v2300 = vadd.f32 0.0, %v2299
        %v2301 = vpop.f32.mrb[0].mxu0
        %2302 = vmatprep.mubr.bf16.mxu0 0
        %2303 = vmatmul.mubr.bf16.gmra.mrb[0].mxu0 %v2200
        %v2304 = vpop.f32.mrb[0].mxu0
        %v2305 = vadd.f32 0.0, %v2304
        %v2306 = vpop.f32.mrb[0].mxu0
        %v2307 = vpop.f32.mrb[0].mxu0
        %v2308 = vadd.f32 0.0, %v2307
        %v2309 = vpop.f32.mrb[0].mxu0
        %2310 = vmatprep.mubr.bf16.mxu0 0
        %2311 = vmatmul.mubr.bf16.gmra.mrb[0].mxu0 %v2203
        %v2312 = vpop.f32.mrb[0].mxu0
        %v2313 = vadd.f32 0.0, %v2312
        %v2314 = vpop.f32.mrb[0].mxu0
        %v2315 = vpop.f32.mrb[0].mxu0
        %v2316 = vadd.f32 0.0, %v2315
        %v2317 = vpop.f32.mrb[0].mxu0
        %2318 = vmatprep.mubr.bf16.mxu0 0
        %2319 = vmatmul.mubr.bf16.gmra.mrb[0].mxu0 %v2206
        %v2320 = vpop.f32.mrb[0].mxu0
        %v2321 = vadd.f32 0.0, %v2320
        %v2322 = vpop.f32.mrb[0].mxu0
        %v2323 = vpop.f32.mrb[0].mxu0
        %v2324 = vadd.f32 0.0, %v2323
        %v2325 = vpop.f32.mrb[0].mxu0
        %2326 = vmatprep.mubr.bf16.mxu0 0
        %2327 = vmatmul.mubr.bf16.gmra.mrb[0].mxu0 %v2209
        %v2328 = vpop.f32.mrb[0].mxu0
        %v2329 = vadd.f32 0.0, %v2328
        %v2330 = vpop.f32.mrb[0].mxu0
        %v2331 = vpop.f32.mrb[0].mxu0
        %v2332 = vadd.f32 0.0, %v2331
        %v2333 = vpop.f32.mrb[0].mxu0
        %2334 = vmatprep.mubr.bf16.mxu0 0
        %2335 = vmatmul.mubr.bf16.gmra.mrb[0].mxu0 %v2212
        %v2336 = vpop.f32.mrb[0].mxu0
        %v2337 = vadd.f32 0.0, %v2336
        %v2338 = vpop.f32.mrb[0].mxu0
        %v2339 = vpop.f32.mrb[0].mxu0
        %v2340 = vadd.f32 0.0, %v2339
        %v2341 = vpop.f32.mrb[0].mxu0
        %2342 = vmatprep.mubr.bf16.mxu0 0
        %2343 = vmatmul.mubr.bf16.gmra.mrb[0].mxu0 %v2215
        %v2344 = vpop.f32.mrb[0].mxu0
        %v2345 = vadd.f32 0.0, %v2344
        %v2346 = vpop.f32.mrb[0].mxu0
        %v2347 = vpop.f32.mrb[0].mxu0
        %v2348 = vadd.f32 0.0, %v2347
        %v2349 = vpop.f32.mrb[0].mxu0
        %2350 = vmatprep.mubr.bf16.mxu0 0
        %2351 = vmatmul.mubr.bf16.gmra.mrb[0].mxu0 %v2218
        %v2352 = vpop.f32.mrb[0].mxu0
        %v2353 = vadd.f32 0.0, %v2352
        %v2354 = vpop.f32.mrb[0].mxu0
        %v2355 = vpop.f32.mrb[0].mxu0
        %v2356 = vadd.f32 0.0, %v2355
        %v2357 = vpop.f32.mrb[0].mxu0
        %2358 = vmatprep.mubr.bf16.mxu0 0
        %2359 = vmatmul.mubr.bf16.gmra.mrb[0].mxu0 %v2221
        %v2360 = vpop.f32.mrb[0].mxu0
        %v2361 = vadd.f32 0.0, %v2360
        %v2362 = vpop.f32.mrb[0].mxu0
        %v2363 = vpop.f32.mrb[0].mxu0
        %v2364 = vadd.f32 0.0, %v2363
        %v2365 = vpop.f32.mrb[0].mxu0
        %2366 = vmatprep.mubr.bf16.mxu0 0
        %2367 = vmatmul.mubr.bf16.gmra.mrb[0].mxu0 %v2224
        %v2368 = vpop.f32.mrb[0].mxu0
        %v2369 = vadd.f32 0.0, %v2368
        %v2370 = vpop.f32.mrb[0].mxu0
        %v2371 = vpop.f32.mrb[0].mxu0
        %v2372 = vadd.f32 0.0, %v2371
        %v2373 = vpop.f32.mrb[0].mxu0
        %2374 = vmatprep.mubr.bf16.mxu0 0
        %2375 = vmatmul.mubr.bf16.gmra.mrb[0].mxu0 %v2227
        %v2376 = vpop.f32.mrb[0].mxu0
        %v2377 = vadd.f32 0.0, %v2376
        %v2378 = vpop.f32.mrb[0].mxu0
        %v2379 = vpop.f32.mrb[0].mxu0
        %v2380 = vadd.f32 0.0, %v2379
        %v2381 = vpop.f32.mrb[0].mxu0
        %2382 = vmatprep.mubr.bf16.mxu0 0
        %2383 = vmatmul.mubr.bf16.gmra.mrb[0].mxu0 %v2230
        %v2384 = vpop.f32.mrb[0].mxu0
        %v2385 = vadd.f32 0.0, %v2384
        %v2386 = vpop.f32.mrb[0].mxu0
        %v2387 = vpop.f32.mrb[0].mxu0
        %v2388 = vadd.f32 0.0, %v2387
        %v2389 = vpop.f32.mrb[0].mxu0
        %2390 = vmatprep.mubr.bf16.mxu0 0
        %2391 = vmatmul.mubr.bf16.gmra.mrb[0].mxu0 %v2233
        %v2392 = vpop.f32.mrb[0].mxu0
        %v2393 = vadd.f32 0.0, %v2392
        %v2394 = vpop.f32.mrb[0].mxu0
        %v2395 = vpop.f32.mrb[0].mxu0
        %v2396 = vadd.f32 0.0, %v2395
        %v2397 = vpop.f32.mrb[0].mxu0
        %2398 = vdwg.mxu0
        %v2399 = vadd.f32 %v1848, %v2273
        %v2400 = vadd.f32 %v1851, %v2276
        %v2401 = vadd.f32 %v1856, %v2281
        %v2402 = vadd.f32 %v1859, %v2284
        %v2403 = vadd.f32 %v1864, %v2289
        %v2404 = vadd.f32 %v1867, %v2292
        %v2405 = vadd.f32 %v1872, %v2297
        %v2406 = vadd.f32 %v1875, %v2300
        %v2407 = vadd.f32 %v1880, %v2305
        %v2408 = vadd.f32 %v1883, %v2308
        %v2409 = vadd.f32 %v1888, %v2313
        %v2410 = vadd.f32 %v1891, %v2316
        %v2411 = vadd.f32 %v1896, %v2321
        %v2412 = vadd.f32 %v1899, %v2324
        %v2413 = vadd.f32 %v1904, %v2329
        %v2414 = vadd.f32 %v1907, %v2332
        %v2415 = vadd.f32 %v1912, %v2337
        %v2416 = vadd.f32 %v1915, %v2340
        %v2417 = vadd.f32 %v1920, %v2345
        %v2418 = vadd.f32 %v1923, %v2348
        %v2419 = vadd.f32 %v1928, %v2353
        %v2420 = vadd.f32 %v1931, %v2356
        %v2421 = vadd.f32 %v1936, %v2361
        %v2422 = vadd.f32 %v1939, %v2364
        %v2423 = vadd.f32 %v1944, %v2369
        %v2424 = vadd.f32 %v1947, %v2372
        %v2425 = vadd.f32 %v1952, %v2377
        %v2426 = vadd.f32 %v1955, %v2380
        %v2427 = vadd.f32 %v1960, %v2385
        %v2428 = vadd.f32 %v1963, %v2388
        %v2429 = vadd.f32 %v1968, %v2393
        %v2430 = vadd.f32 %v1971, %v2396
        %v2431 = vld [vmem:[%s861] sm:$0xf]
        %v2432 = vld [vmem:[%s861 + $0x4] sm:$0xf]
        %v2433 = vld [vmem:[%s861 + $0xc] sm:$0xf]
        %v2434 = vld [vmem:[%s861 + $0x10] sm:$0xf]
        %v2435 = vld [vmem:[%s861 + $0x18] sm:$0xf]
        %v2436 = vld [vmem:[%s861 + $0x1c] sm:$0xf]
        %v2437 = vld [vmem:[%s861 + $0x24] sm:$0xf]
        %v2438 = vld [vmem:[%s861 + $0x28] sm:$0xf]
        %v2439 = vld [vmem:[%s861 + $0x30] sm:$0xf]
        %v2440 = vld [vmem:[%s861 + $0x34] sm:$0xf]
        %v2441 = vld [vmem:[%s861 + $0x3c] sm:$0xf]
        %v2442 = vld [vmem:[%s861 + $0x40] sm:$0xf]
        %v2443 = vld [vmem:[%s861 + $0x48] sm:$0xf]
        %v2444 = vld [vmem:[%s861 + $0x4c] sm:$0xf]
        %v2445 = vld [vmem:[%s861 + $0x54] sm:$0xf]
        %v2446 = vld [vmem:[%s861 + $0x58] sm:$0xf]
        %v2447 = vld [vmem:[%s861 + $0x60] sm:$0xf]
        %v2448 = vld [vmem:[%s861 + $0x64] sm:$0xf]
        %v2449 = vld [vmem:[%s861 + $0x6c] sm:$0xf]
        %v2450 = vld [vmem:[%s861 + $0x70] sm:$0xf]
        %v2451 = vld [vmem:[%s861 + $0x78] sm:$0xf]
        %v2452 = vld [vmem:[%s861 + $0x7c] sm:$0xf]
        %v2453 = vld [vmem:[%s861 + $0x84] sm:$0xf]
        %v2454 = vld [vmem:[%s861 + $0x88] sm:$0xf]
        %v2455 = vld [vmem:[%s861 + $0x90] sm:$0xf]
        %v2456 = vld [vmem:[%s861 + $0x94] sm:$0xf]
        %v2457 = vld [vmem:[%s861 + $0x9c] sm:$0xf]
        %v2458 = vld [vmem:[%s861 + $0xa0] sm:$0xf]
        %v2459 = vld [vmem:[%s861 + $0xa8] sm:$0xf]
        %v2460 = vld [vmem:[%s861 + $0xac] sm:$0xf]
        %v2461 = vld [vmem:[%s861 + $0xb4] sm:$0xf]
        %v2462 = vld [vmem:[%s861 + $0xb8] sm:$0xf]
        %s2463 = scalar_lea.vmem %s1, 6
        %v2464 = vld [vmem:[%s2463] sm:$0x3]
        %v2497 = vunpack.c.l.b16 %v2431
        %v2498 = vunpack.c.l.b16 %v2432
        %v2499 = vunpack.c.l.b16 %v2433
        %v2500 = vunpack.c.l.b16 %v2434
        %v2501 = vunpack.c.l.b16 %v2435
        %v2502 = vunpack.c.l.b16 %v2436
        %v2503 = vunpack.c.l.b16 %v2437
        %v2504 = vunpack.c.l.b16 %v2438
        %v2505 = vunpack.c.l.b16 %v2439
        %v2506 = vunpack.c.l.b16 %v2440
        %v2507 = vunpack.c.l.b16 %v2441
        %v2508 = vunpack.c.l.b16 %v2442
        %v2509 = vunpack.c.l.b16 %v2443
        %v2510 = vunpack.c.l.b16 %v2444
        %v2511 = vunpack.c.l.b16 %v2445
        %v2512 = vunpack.c.l.b16 %v2446
        %v2513 = vunpack.c.l.b16 %v2447
        %v2514 = vunpack.c.l.b16 %v2448
        %v2515 = vunpack.c.l.b16 %v2449
        %v2516 = vunpack.c.l.b16 %v2450
        %v2517 = vunpack.c.l.b16 %v2451
        %v2518 = vunpack.c.l.b16 %v2452
        %v2519 = vunpack.c.l.b16 %v2453
        %v2520 = vunpack.c.l.b16 %v2454
        %v2521 = vunpack.c.l.b16 %v2455
        %v2522 = vunpack.c.l.b16 %v2456
        %v2523 = vunpack.c.l.b16 %v2457
        %v2524 = vunpack.c.l.b16 %v2458
        %v2525 = vunpack.c.l.b16 %v2459
        %v2526 = vunpack.c.l.b16 %v2460
        %v2527 = vunpack.c.l.b16 %v2461
        %v2528 = vunpack.c.l.b16 %v2462
        %v2529 = vpack.c.b16 %v2498, %v2497
        %v2530 = vpack.c.b16 %v2500, %v2499
        %v2531 = vpack.c.b16 %v2502, %v2501
        %v2532 = vpack.c.b16 %v2504, %v2503
        %v2533 = vpack.c.b16 %v2506, %v2505
        %v2534 = vpack.c.b16 %v2508, %v2507
        %v2535 = vpack.c.b16 %v2510, %v2509
        %v2536 = vpack.c.b16 %v2512, %v2511
        %v2537 = vpack.c.b16 %v2514, %v2513
        %v2538 = vpack.c.b16 %v2516, %v2515
        %v2539 = vpack.c.b16 %v2518, %v2517
        %v2540 = vpack.c.b16 %v2520, %v2519
        %v2541 = vpack.c.b16 %v2522, %v2521
        %v2542 = vpack.c.b16 %v2524, %v2523
        %v2543 = vpack.c.b16 %v2526, %v2525
        %v2544 = vpack.c.b16 %v2528, %v2527
        %v2546 = vsel %vm1465, %v2529, 0
        %v2549 = vsel %vm1465, %v2530, 0
        %v2552 = vsel %vm1465, %v2531, 0
        %v2555 = vsel %vm1465, %v2532, 0
        %v2558 = vsel %vm1465, %v2533, 0
        %v2561 = vsel %vm1465, %v2534, 0
        %v2564 = vsel %vm1465, %v2535, 0
        %v2567 = vsel %vm1465, %v2536, 0
        %v2570 = vsel %vm1465, %v2537, 0
        %v2573 = vsel %vm1465, %v2538, 0
        %v2576 = vsel %vm1465, %v2539, 0
        %v2579 = vsel %vm1465, %v2540, 0
        %v2582 = vsel %vm1465, %v2541, 0
        %v2585 = vsel %vm1465, %v2542, 0
        %v2588 = vsel %vm1465, %v2543, 0
        %v2591 = vsel %vm1465, %v2544, 0
        %v2594 = vand.u32 %v2464, %v1517
        %2596 = vmatprep.subr.bf16.mxu0 0
        %2597 = vmatpush1.bf16.msra.mxu0 %v2594
        %2598 = vmatprep.subr.bf16.mxu0 0
        %2599 = vmatpush1.bf16.msra.mxu0 0
        %2600 = vmatprep.subr.bf16.mxu0 0
        %2601 = vmatpush1.bf16.msra.mxu0 0
        %2602 = vmatprep.subr.bf16.mxu0 0
        %2603 = vmatpush1.bf16.msra.mxu0 0
        %2604 = vmatprep.subr.bf16.mxu0 0
        %2605 = vmatpush1.bf16.msra.mxu0 0
        %2606 = vmatprep.subr.bf16.mxu0 0
        %2607 = vmatpush1.bf16.msra.mxu0 0
        %2608 = vmatprep.subr.bf16.mxu0 0
        %2609 = vmatpush1.bf16.msra.mxu0 0
        %2610 = vmatprep.subr.bf16.mxu0 0
        %2611 = vmatpush1.bf16.msra.mxu0 0
        %2612 = vmatprep.subr.bf16.mxu0 0
        %2613 = vmatpush1.bf16.msra.mxu0 0
        %2614 = vmatprep.subr.bf16.mxu0 0
        %2615 = vmatpush1.bf16.msra.mxu0 0
        %2616 = vmatprep.subr.bf16.mxu0 0
        %2617 = vmatpush1.bf16.msra.mxu0 0
        %2618 = vmatprep.subr.bf16.mxu0 0
        %2619 = vmatpush1.bf16.msra.mxu0 0
        %2620 = vmatprep.subr.bf16.mxu0 0
        %2621 = vmatpush1.bf16.msra.mxu0 0
        %2622 = vmatprep.subr.bf16.mxu0 0
        %2623 = vmatpush1.bf16.msra.mxu0 0
        %2624 = vmatprep.subr.bf16.mxu0 0
        %2625 = vmatpush1.bf16.msra.mxu0 0
        %2626 = vmatprep.subr.bf16.mxu0 0
        %2627 = vmatpush1.bf16.msra.mxu0 0
        %2628 = vmatprep.mubr.bf16.mxu0 0
        %2629 = vmatmul.mubr.bf16.gmra.mrb[0].mxu0 %v2546
        %v2630 = vpop.f32.mrb[0].mxu0
        %v2631 = vadd.f32 0.0, %v2630
        %v2632 = vpop.f32.mrb[0].mxu0
        %v2633 = vpop.f32.mrb[0].mxu0
        %v2634 = vadd.f32 0.0, %v2633
        %v2635 = vpop.f32.mrb[0].mxu0
        %2636 = vmatprep.mubr.bf16.mxu0 0
        %2637 = vmatmul.mubr.bf16.gmra.mrb[0].mxu0 %v2549
        %v2638 = vpop.f32.mrb[0].mxu0
        %v2639 = vadd.f32 0.0, %v2638
        %v2640 = vpop.f32.mrb[0].mxu0
        %v2641 = vpop.f32.mrb[0].mxu0
        %v2642 = vadd.f32 0.0, %v2641
        %v2643 = vpop.f32.mrb[0].mxu0
        %2644 = vmatprep.mubr.bf16.mxu0 0
        %2645 = vmatmul.mubr.bf16.gmra.mrb[0].mxu0 %v2552
        %v2646 = vpop.f32.mrb[0].mxu0
        %v2647 = vadd.f32 0.0, %v2646
        %v2648 = vpop.f32.mrb[0].mxu0
        %v2649 = vpop.f32.mrb[0].mxu0
        %v2650 = vadd.f32 0.0, %v2649
        %v2651 = vpop.f32.mrb[0].mxu0
        %2652 = vmatprep.mubr.bf16.mxu0 0
        %2653 = vmatmul.mubr.bf16.gmra.mrb[0].mxu0 %v2555
        %v2654 = vpop.f32.mrb[0].mxu0
        %v2655 = vadd.f32 0.0, %v2654
        %v2656 = vpop.f32.mrb[0].mxu0
        %v2657 = vpop.f32.mrb[0].mxu0
        %v2658 = vadd.f32 0.0, %v2657
        %v2659 = vpop.f32.mrb[0].mxu0
        %2660 = vmatprep.mubr.bf16.mxu0 0
        %2661 = vmatmul.mubr.bf16.gmra.mrb[0].mxu0 %v2558
        %v2662 = vpop.f32.mrb[0].mxu0
        %v2663 = vadd.f32 0.0, %v2662
        %v2664 = vpop.f32.mrb[0].mxu0
        %v2665 = vpop.f32.mrb[0].mxu0
        %v2666 = vadd.f32 0.0, %v2665
        %v2667 = vpop.f32.mrb[0].mxu0
        %2668 = vmatprep.mubr.bf16.mxu0 0
        %2669 = vmatmul.mubr.bf16.gmra.mrb[0].mxu0 %v2561
        %v2670 = vpop.f32.mrb[0].mxu0
        %v2671 = vadd.f32 0.0, %v2670
        %v2672 = vpop.f32.mrb[0].mxu0
        %v2673 = vpop.f32.mrb[0].mxu0
        %v2674 = vadd.f32 0.0, %v2673
        %v2675 = vpop.f32.mrb[0].mxu0
        %2676 = vmatprep.mubr.bf16.mxu0 0
        %2677 = vmatmul.mubr.bf16.gmra.mrb[0].mxu0 %v2564
        %v2678 = vpop.f32.mrb[0].mxu0
        %v2679 = vadd.f32 0.0, %v2678
        %v2680 = vpop.f32.mrb[0].mxu0
        %v2681 = vpop.f32.mrb[0].mxu0
        %v2682 = vadd.f32 0.0, %v2681
        %v2683 = vpop.f32.mrb[0].mxu0
        %2684 = vmatprep.mubr.bf16.mxu0 0
        %2685 = vmatmul.mubr.bf16.gmra.mrb[0].mxu0 %v2567
        %v2686 = vpop.f32.mrb[0].mxu0
        %v2687 = vadd.f32 0.0, %v2686
        %v2688 = vpop.f32.mrb[0].mxu0
        %v2689 = vpop.f32.mrb[0].mxu0
        %v2690 = vadd.f32 0.0, %v2689
        %v2691 = vpop.f32.mrb[0].mxu0
        %2692 = vmatprep.mubr.bf16.mxu0 0
        %2693 = vmatmul.mubr.bf16.gmra.mrb[0].mxu0 %v2570
        %v2694 = vpop.f32.mrb[0].mxu0
        %v2695 = vadd.f32 0.0, %v2694
        %v2696 = vpop.f32.mrb[0].mxu0
        %v2697 = vpop.f32.mrb[0].mxu0
        %v2698 = vadd.f32 0.0, %v2697
        %v2699 = vpop.f32.mrb[0].mxu0
        %2700 = vmatprep.mubr.bf16.mxu0 0
        %2701 = vmatmul.mubr.bf16.gmra.mrb[0].mxu0 %v2573
        %v2702 = vpop.f32.mrb[0].mxu0
        %v2703 = vadd.f32 0.0, %v2702
        %v2704 = vpop.f32.mrb[0].mxu0
        %v2705 = vpop.f32.mrb[0].mxu0
        %v2706 = vadd.f32 0.0, %v2705
        %v2707 = vpop.f32.mrb[0].mxu0
        %2708 = vmatprep.mubr.bf16.mxu0 0
        %2709 = vmatmul.mubr.bf16.gmra.mrb[0].mxu0 %v2576
        %v2710 = vpop.f32.mrb[0].mxu0
        %v2711 = vadd.f32 0.0, %v2710
        %v2712 = vpop.f32.mrb[0].mxu0
        %v2713 = vpop.f32.mrb[0].mxu0
        %v2714 = vadd.f32 0.0, %v2713
        %v2715 = vpop.f32.mrb[0].mxu0
        %2716 = vmatprep.mubr.bf16.mxu0 0
        %2717 = vmatmul.mubr.bf16.gmra.mrb[0].mxu0 %v2579
        %v2718 = vpop.f32.mrb[0].mxu0
        %v2719 = vadd.f32 0.0, %v2718
        %v2720 = vpop.f32.mrb[0].mxu0
        %v2721 = vpop.f32.mrb[0].mxu0
        %v2722 = vadd.f32 0.0, %v2721
        %v2723 = vpop.f32.mrb[0].mxu0
        %2724 = vmatprep.mubr.bf16.mxu0 0
        %2725 = vmatmul.mubr.bf16.gmra.mrb[0].mxu0 %v2582
        %v2726 = vpop.f32.mrb[0].mxu0
        %v2727 = vadd.f32 0.0, %v2726
        %v2728 = vpop.f32.mrb[0].mxu0
        %v2729 = vpop.f32.mrb[0].mxu0
        %v2730 = vadd.f32 0.0, %v2729
        %v2731 = vpop.f32.mrb[0].mxu0
        %2732 = vmatprep.mubr.bf16.mxu0 0
        %2733 = vmatmul.mubr.bf16.gmra.mrb[0].mxu0 %v2585
        %v2734 = vpop.f32.mrb[0].mxu0
        %v2735 = vadd.f32 0.0, %v2734
        %v2736 = vpop.f32.mrb[0].mxu0
        %v2737 = vpop.f32.mrb[0].mxu0
        %v2738 = vadd.f32 0.0, %v2737
        %v2739 = vpop.f32.mrb[0].mxu0
        %2740 = vmatprep.mubr.bf16.mxu0 0
        %2741 = vmatmul.mubr.bf16.gmra.mrb[0].mxu0 %v2588
        %v2742 = vpop.f32.mrb[0].mxu0
        %v2743 = vadd.f32 0.0, %v2742
        %v2744 = vpop.f32.mrb[0].mxu0
        %v2745 = vpop.f32.mrb[0].mxu0
        %v2746 = vadd.f32 0.0, %v2745
        %v2747 = vpop.f32.mrb[0].mxu0
        %2748 = vmatprep.mubr.bf16.mxu0 0
        %2749 = vmatmul.mubr.bf16.gmra.mrb[0].mxu0 %v2591
        %v2750 = vpop.f32.mrb[0].mxu0
        %v2751 = vadd.f32 0.0, %v2750
        %v2752 = vpop.f32.mrb[0].mxu0
        %v2753 = vpop.f32.mrb[0].mxu0
        %v2754 = vadd.f32 0.0, %v2753
        %v2755 = vpop.f32.mrb[0].mxu0
        %2756 = vdwg.mxu0
        %v2757 = vadd.f32 %v2399, %v2631
        %v2758 = vadd.f32 %v2400, %v2634
        %v2759 = vadd.f32 %v2401, %v2639
        %v2760 = vadd.f32 %v2402, %v2642
        %v2761 = vadd.f32 %v2403, %v2647
        %v2762 = vadd.f32 %v2404, %v2650
        %v2763 = vadd.f32 %v2405, %v2655
        %v2764 = vadd.f32 %v2406, %v2658
        %v2765 = vadd.f32 %v2407, %v2663
        %v2766 = vadd.f32 %v2408, %v2666
        %v2767 = vadd.f32 %v2409, %v2671
        %v2768 = vadd.f32 %v2410, %v2674
        %v2769 = vadd.f32 %v2411, %v2679
        %v2770 = vadd.f32 %v2412, %v2682
        %v2771 = vadd.f32 %v2413, %v2687
        %v2772 = vadd.f32 %v2414, %v2690
        %v2773 = vadd.f32 %v2415, %v2695
        %v2774 = vadd.f32 %v2416, %v2698
        %v2775 = vadd.f32 %v2417, %v2703
        %v2776 = vadd.f32 %v2418, %v2706
        %v2777 = vadd.f32 %v2419, %v2711
        %v2778 = vadd.f32 %v2420, %v2714
        %v2779 = vadd.f32 %v2421, %v2719
        %v2780 = vadd.f32 %v2422, %v2722
        %v2781 = vadd.f32 %v2423, %v2727
        %v2782 = vadd.f32 %v2424, %v2730
        %v2783 = vadd.f32 %v2425, %v2735
        %v2784 = vadd.f32 %v2426, %v2738
        %v2785 = vadd.f32 %v2427, %v2743
        %v2786 = vadd.f32 %v2428, %v2746
        %v2787 = vadd.f32 %v2429, %v2751
        %v2788 = vadd.f32 %v2430, %v2754
        %v2789 = vld [vmem:[%s861] sm:$0xf]
        %v2790 = vld [vmem:[%s861 + $0x4] sm:$0xf]
        %v2791 = vld [vmem:[%s861 + $0x8] sm:$0x1]
        %v2792 = vld [vmem:[%s861 + $0xc] sm:$0xf]
        %v2793 = vld [vmem:[%s861 + $0x10] sm:$0xf]
        %v2794 = vld [vmem:[%s861 + $0x14] sm:$0x1]
        %v2795 = vld [vmem:[%s861 + $0x18] sm:$0xf]
        %v2796 = vld [vmem:[%s861 + $0x1c] sm:$0xf]
        %v2797 = vld [vmem:[%s861 + $0x20] sm:$0x1]
        %v2798 = vld [vmem:[%s861 + $0x24] sm:$0xf]
        %v2799 = vld [vmem:[%s861 + $0x28] sm:$0xf]
        %v2800 = vld [vmem:[%s861 + $0x2c] sm:$0x1]
        %v2801 = vld [vmem:[%s861 + $0x30] sm:$0xf]
        %v2802 = vld [vmem:[%s861 + $0x34] sm:$0xf]
        %v2803 = vld [vmem:[%s861 + $0x38] sm:$0x1]
        %v2804 = vld [vmem:[%s861 + $0x3c] sm:$0xf]
        %v2805 = vld [vmem:[%s861 + $0x40] sm:$0xf]
        %v2806 = vld [vmem:[%s861 + $0x44] sm:$0x1]
        %v2807 = vld [vmem:[%s861 + $0x48] sm:$0xf]
        %v2808 = vld [vmem:[%s861 + $0x4c] sm:$0xf]
        %v2809 = vld [vmem:[%s861 + $0x50] sm:$0x1]
        %v2810 = vld [vmem:[%s861 + $0x54] sm:$0xf]
        %v2811 = vld [vmem:[%s861 + $0x58] sm:$0xf]
        %v2812 = vld [vmem:[%s861 + $0x5c] sm:$0x1]
        %v2813 = vld [vmem:[%s861 + $0x60] sm:$0xf]
        %v2814 = vld [vmem:[%s861 + $0x64] sm:$0xf]
        %v2815 = vld [vmem:[%s861 + $0x68] sm:$0x1]
        %v2816 = vld [vmem:[%s861 + $0x6c] sm:$0xf]
        %v2817 = vld [vmem:[%s861 + $0x70] sm:$0xf]
        %v2818 = vld [vmem:[%s861 + $0x74] sm:$0x1]
        %v2819 = vld [vmem:[%s861 + $0x78] sm:$0xf]
        %v2820 = vld [vmem:[%s861 + $0x7c] sm:$0xf]
        %v2821 = vld [vmem:[%s861 + $0x80] sm:$0x1]
        %v2822 = vld [vmem:[%s861 + $0x84] sm:$0xf]
        %v2823 = vld [vmem:[%s861 + $0x88] sm:$0xf]
        %v2824 = vld [vmem:[%s861 + $0x8c] sm:$0x1]
        %v2825 = vld [vmem:[%s861 + $0x90] sm:$0xf]
        %v2826 = vld [vmem:[%s861 + $0x94] sm:$0xf]
        %v2827 = vld [vmem:[%s861 + $0x98] sm:$0x1]
        %v2828 = vld [vmem:[%s861 + $0x9c] sm:$0xf]
        %v2829 = vld [vmem:[%s861 + $0xa0] sm:$0xf]
        %v2830 = vld [vmem:[%s861 + $0xa4] sm:$0x1]
        %v2831 = vld [vmem:[%s861 + $0xa8] sm:$0xf]
        %v2832 = vld [vmem:[%s861 + $0xac] sm:$0xf]
        %v2833 = vld [vmem:[%s861 + $0xb0] sm:$0x1]
        %v2834 = vld [vmem:[%s861 + $0xb4] sm:$0xf]
        %v2835 = vld [vmem:[%s861 + $0xb8] sm:$0xf]
        %v2836 = vld [vmem:[%s861 + $0xbc] sm:$0x1]
        %v2838 = vshrl.u32 %v2789, 16
        %v2840 = vrot.slane %v2838, 4
        %v2841 = vshll.u32 %v2789, 16
        %v2843 = vrot.slane %v2841, 5
        %v2844 = vor.u32 %v2840, %v2843
        %v2845 = vrot.slane %v2844, 4
        %v2847 = vshll.u32 %v2790, 16
        %v2849 = vrot.slane %v2847, 5
        %v2850 = vsel %vm1030, %v2845, %v2849
        %v2851 = vshrl.u32 %v2790, 16
        %v2853 = vrot.slane %v2851, 4
        %v2854 = vor.u32 %v2853, %v2849
        %v2855 = vrot.slane %v2854, 4
        %v2857 = vshll.u32 %v2791, 16
        %v2859 = vrot.slane %v2857, 5
        %v2860 = vsel %vm1030, %v2855, %v2859
        %v2862 = vshrl.u32 %v2792, 16
        %v2864 = vrot.slane %v2862, 4
        %v2865 = vshll.u32 %v2792, 16
        %v2867 = vrot.slane %v2865, 5
        %v2868 = vor.u32 %v2864, %v2867
        %v2869 = vrot.slane %v2868, 4
        %v2871 = vshll.u32 %v2793, 16
        %v2873 = vrot.slane %v2871, 5
        %v2874 = vsel %vm1030, %v2869, %v2873
        %v2875 = vshrl.u32 %v2793, 16
        %v2877 = vrot.slane %v2875, 4
        %v2878 = vor.u32 %v2877, %v2873
        %v2879 = vrot.slane %v2878, 4
        %v2881 = vshll.u32 %v2794, 16
        %v2883 = vrot.slane %v2881, 5
        %v2884 = vsel %vm1030, %v2879, %v2883
        %v2886 = vshrl.u32 %v2795, 16
        %v2888 = vrot.slane %v2886, 4
        %v2889 = vshll.u32 %v2795, 16
        %v2891 = vrot.slane %v2889, 5
        %v2892 = vor.u32 %v2888, %v2891
        %v2893 = vrot.slane %v2892, 4
        %v2895 = vshll.u32 %v2796, 16
        %v2897 = vrot.slane %v2895, 5
        %v2898 = vsel %vm1030, %v2893, %v2897
        %v2899 = vshrl.u32 %v2796, 16
        %v2901 = vrot.slane %v2899, 4
        %v2902 = vor.u32 %v2901, %v2897
        %v2903 = vrot.slane %v2902, 4
        %v2905 = vshll.u32 %v2797, 16
        %v2907 = vrot.slane %v2905, 5
        %v2908 = vsel %vm1030, %v2903, %v2907
        %v2910 = vshrl.u32 %v2798, 16
        %v2912 = vrot.slane %v2910, 4
        %v2913 = vshll.u32 %v2798, 16
        %v2915 = vrot.slane %v2913, 5
        %v2916 = vor.u32 %v2912, %v2915
        %v2917 = vrot.slane %v2916, 4
        %v2919 = vshll.u32 %v2799, 16
        %v2921 = vrot.slane %v2919, 5
        %v2922 = vsel %vm1030, %v2917, %v2921
        %v2923 = vshrl.u32 %v2799, 16
        %v2925 = vrot.slane %v2923, 4
        %v2926 = vor.u32 %v2925, %v2921
        %v2927 = vrot.slane %v2926, 4
        %v2929 = vshll.u32 %v2800, 16
        %v2931 = vrot.slane %v2929, 5
        %v2932 = vsel %vm1030, %v2927, %v2931
        %v2934 = vshrl.u32 %v2801, 16
        %v2936 = vrot.slane %v2934, 4
        %v2937 = vshll.u32 %v2801, 16
        %v2939 = vrot.slane %v2937, 5
        %v2940 = vor.u32 %v2936, %v2939
        %v2941 = vrot.slane %v2940, 4
        %v2943 = vshll.u32 %v2802, 16
        %v2945 = vrot.slane %v2943, 5
        %v2946 = vsel %vm1030, %v2941, %v2945
        %v2947 = vshrl.u32 %v2802, 16
        %v2949 = vrot.slane %v2947, 4
        %v2950 = vor.u32 %v2949, %v2945
        %v2951 = vrot.slane %v2950, 4
        %v2953 = vshll.u32 %v2803, 16
        %v2955 = vrot.slane %v2953, 5
        %v2956 = vsel %vm1030, %v2951, %v2955
        %v2958 = vshrl.u32 %v2804, 16
        %v2960 = vrot.slane %v2958, 4
        %v2961 = vshll.u32 %v2804, 16
        %v2963 = vrot.slane %v2961, 5
        %v2964 = vor.u32 %v2960, %v2963
        %v2965 = vrot.slane %v2964, 4
        %v2967 = vshll.u32 %v2805, 16
        %v2969 = vrot.slane %v2967, 5
        %v2970 = vsel %vm1030, %v2965, %v2969
        %v2971 = vshrl.u32 %v2805, 16
        %v2973 = vrot.slane %v2971, 4
        %v2974 = vor.u32 %v2973, %v2969
        %v2975 = vrot.slane %v2974, 4
        %v2977 = vshll.u32 %v2806, 16
        %v2979 = vrot.slane %v2977, 5
        %v2980 = vsel %vm1030, %v2975, %v2979
        %v2982 = vshrl.u32 %v2807, 16
        %v2984 = vrot.slane %v2982, 4
        %v2985 = vshll.u32 %v2807, 16
        %v2987 = vrot.slane %v2985, 5
        %v2988 = vor.u32 %v2984, %v2987
        %v2989 = vrot.slane %v2988, 4
        %v2991 = vshll.u32 %v2808, 16
        %v2993 = vrot.slane %v2991, 5
        %v2994 = vsel %vm1030, %v2989, %v2993
        %v2995 = vshrl.u32 %v2808, 16
        %v2997 = vrot.slane %v2995, 4
        %v2998 = vor.u32 %v2997, %v2993
        %v2999 = vrot.slane %v2998, 4
        %v3001 = vshll.u32 %v2809, 16
        %v3003 = vrot.slane %v3001, 5
        %v3004 = vsel %vm1030, %v2999, %v3003
        %v3006 = vshrl.u32 %v2810, 16
        %v3008 = vrot.slane %v3006, 4
        %v3009 = vshll.u32 %v2810, 16
        %v3011 = vrot.slane %v3009, 5
        %v3012 = vor.u32 %v3008, %v3011
        %v3013 = vrot.slane %v3012, 4
        %v3015 = vshll.u32 %v2811, 16
        %v3017 = vrot.slane %v3015, 5
        %v3018 = vsel %vm1030, %v3013, %v3017
        %v3019 = vshrl.u32 %v2811, 16
        %v3021 = vrot.slane %v3019, 4
        %v3022 = vor.u32 %v3021, %v3017
        %v3023 = vrot.slane %v3022, 4
        %v3025 = vshll.u32 %v2812, 16
        %v3027 = vrot.slane %v3025, 5
        %v3028 = vsel %vm1030, %v3023, %v3027
        %v3030 = vshrl.u32 %v2813, 16
        %v3032 = vrot.slane %v3030, 4
        %v3033 = vshll.u32 %v2813, 16
        %v3035 = vrot.slane %v3033, 5
        %v3036 = vor.u32 %v3032, %v3035
        %v3037 = vrot.slane %v3036, 4
        %v3039 = vshll.u32 %v2814, 16
        %v3041 = vrot.slane %v3039, 5
        %v3042 = vsel %vm1030, %v3037, %v3041
        %v3043 = vshrl.u32 %v2814, 16
        %v3045 = vrot.slane %v3043, 4
        %v3046 = vor.u32 %v3045, %v3041
        %v3047 = vrot.slane %v3046, 4
        %v3049 = vshll.u32 %v2815, 16
        %v3051 = vrot.slane %v3049, 5
        %v3052 = vsel %vm1030, %v3047, %v3051
        %v3054 = vshrl.u32 %v2816, 16
        %v3056 = vrot.slane %v3054, 4
        %v3057 = vshll.u32 %v2816, 16
        %v3059 = vrot.slane %v3057, 5
        %v3060 = vor.u32 %v3056, %v3059
        %v3061 = vrot.slane %v3060, 4
        %v3063 = vshll.u32 %v2817, 16
        %v3065 = vrot.slane %v3063, 5
        %v3066 = vsel %vm1030, %v3061, %v3065
        %v3067 = vshrl.u32 %v2817, 16
        %v3069 = vrot.slane %v3067, 4
        %v3070 = vor.u32 %v3069, %v3065
        %v3071 = vrot.slane %v3070, 4
        %v3073 = vshll.u32 %v2818, 16
        %v3075 = vrot.slane %v3073, 5
        %v3076 = vsel %vm1030, %v3071, %v3075
        %v3078 = vshrl.u32 %v2819, 16
        %v3080 = vrot.slane %v3078, 4
        %v3081 = vshll.u32 %v2819, 16
        %v3083 = vrot.slane %v3081, 5
        %v3084 = vor.u32 %v3080, %v3083
        %v3085 = vrot.slane %v3084, 4
        %v3087 = vshll.u32 %v2820, 16
        %v3089 = vrot.slane %v3087, 5
        %v3090 = vsel %vm1030, %v3085, %v3089
        %v3091 = vshrl.u32 %v2820, 16
        %v3093 = vrot.slane %v3091, 4
        %v3094 = vor.u32 %v3093, %v3089
        %v3095 = vrot.slane %v3094, 4
        %v3097 = vshll.u32 %v2821, 16
        %v3099 = vrot.slane %v3097, 5
        %v3100 = vsel %vm1030, %v3095, %v3099
        %v3102 = vshrl.u32 %v2822, 16
        %v3104 = vrot.slane %v3102, 4
        %v3105 = vshll.u32 %v2822, 16
        %v3107 = vrot.slane %v3105, 5
        %v3108 = vor.u32 %v3104, %v3107
        %v3109 = vrot.slane %v3108, 4
        %v3111 = vshll.u32 %v2823, 16
        %v3113 = vrot.slane %v3111, 5
        %v3114 = vsel %vm1030, %v3109, %v3113
        %v3115 = vshrl.u32 %v2823, 16
        %v3117 = vrot.slane %v3115, 4
        %v3118 = vor.u32 %v3117, %v3113
        %v3119 = vrot.slane %v3118, 4
        %v3121 = vshll.u32 %v2824, 16
        %v3123 = vrot.slane %v3121, 5
        %v3124 = vsel %vm1030, %v3119, %v3123
        %v3126 = vshrl.u32 %v2825, 16
        %v3128 = vrot.slane %v3126, 4
        %v3129 = vshll.u32 %v2825, 16
        %v3131 = vrot.slane %v3129, 5
        %v3132 = vor.u32 %v3128, %v3131
        %v3133 = vrot.slane %v3132, 4
        %v3135 = vshll.u32 %v2826, 16
        %v3137 = vrot.slane %v3135, 5
        %v3138 = vsel %vm1030, %v3133, %v3137
        %v3139 = vshrl.u32 %v2826, 16
        %v3141 = vrot.slane %v3139, 4
        %v3142 = vor.u32 %v3141, %v3137
        %v3143 = vrot.slane %v3142, 4
        %v3145 = vshll.u32 %v2827, 16
        %v3147 = vrot.slane %v3145, 5
        %v3148 = vsel %vm1030, %v3143, %v3147
        %v3150 = vshrl.u32 %v2828, 16
        %v3152 = vrot.slane %v3150, 4
        %v3153 = vshll.u32 %v2828, 16
        %v3155 = vrot.slane %v3153, 5
        %v3156 = vor.u32 %v3152, %v3155
        %v3157 = vrot.slane %v3156, 4
        %v3159 = vshll.u32 %v2829, 16
        %v3161 = vrot.slane %v3159, 5
        %v3162 = vsel %vm1030, %v3157, %v3161
        %v3163 = vshrl.u32 %v2829, 16
        %v3165 = vrot.slane %v3163, 4
        %v3166 = vor.u32 %v3165, %v3161
        %v3167 = vrot.slane %v3166, 4
        %v3169 = vshll.u32 %v2830, 16
        %v3171 = vrot.slane %v3169, 5
        %v3172 = vsel %vm1030, %v3167, %v3171
        %v3174 = vshrl.u32 %v2831, 16
        %v3176 = vrot.slane %v3174, 4
        %v3177 = vshll.u32 %v2831, 16
        %v3179 = vrot.slane %v3177, 5
        %v3180 = vor.u32 %v3176, %v3179
        %v3181 = vrot.slane %v3180, 4
        %v3183 = vshll.u32 %v2832, 16
        %v3185 = vrot.slane %v3183, 5
        %v3186 = vsel %vm1030, %v3181, %v3185
        %v3187 = vshrl.u32 %v2832, 16
        %v3189 = vrot.slane %v3187, 4
        %v3190 = vor.u32 %v3189, %v3185
        %v3191 = vrot.slane %v3190, 4
        %v3193 = vshll.u32 %v2833, 16
        %v3195 = vrot.slane %v3193, 5
        %v3196 = vsel %vm1030, %v3191, %v3195
        %v3198 = vshrl.u32 %v2834, 16
        %v3200 = vrot.slane %v3198, 4
        %v3201 = vshll.u32 %v2834, 16
        %v3203 = vrot.slane %v3201, 5
        %v3204 = vor.u32 %v3200, %v3203
        %v3205 = vrot.slane %v3204, 4
        %v3207 = vshll.u32 %v2835, 16
        %v3209 = vrot.slane %v3207, 5
        %v3210 = vsel %vm1030, %v3205, %v3209
        %v3211 = vshrl.u32 %v2835, 16
        %v3213 = vrot.slane %v3211, 4
        %v3214 = vor.u32 %v3213, %v3209
        %v3215 = vrot.slane %v3214, 4
        %v3217 = vshll.u32 %v2836, 16
        %v3219 = vrot.slane %v3217, 5
        %v3220 = vsel %vm1030, %v3215, %v3219
        %s3221 = scalar_lea.vmem %s1, 8
        %v3222 = vld [vmem:[%s3221] sm:$0x3]
        %v3223 = vunpack.c.l.b16 %v2850
        %v3224 = vunpack.c.l.b16 %v2860
        %v3225 = vunpack.c.l.b16 %v2874
        %v3226 = vunpack.c.l.b16 %v2884
        %v3227 = vunpack.c.l.b16 %v2898
        %v3228 = vunpack.c.l.b16 %v2908
        %v3229 = vunpack.c.l.b16 %v2922
        %v3230 = vunpack.c.l.b16 %v2932
        %v3231 = vunpack.c.l.b16 %v2946
        %v3232 = vunpack.c.l.b16 %v2956
        %v3233 = vunpack.c.l.b16 %v2970
        %v3234 = vunpack.c.l.b16 %v2980
        %v3235 = vunpack.c.l.b16 %v2994
        %v3236 = vunpack.c.l.b16 %v3004
        %v3237 = vunpack.c.l.b16 %v3018
        %v3238 = vunpack.c.l.b16 %v3028
        %v3239 = vunpack.c.l.b16 %v3042
        %v3240 = vunpack.c.l.b16 %v3052
        %v3241 = vunpack.c.l.b16 %v3066
        %v3242 = vunpack.c.l.b16 %v3076
        %v3243 = vunpack.c.l.b16 %v3090
        %v3244 = vunpack.c.l.b16 %v3100
        %v3245 = vunpack.c.l.b16 %v3114
        %v3246 = vunpack.c.l.b16 %v3124
        %v3247 = vunpack.c.l.b16 %v3138
        %v3248 = vunpack.c.l.b16 %v3148
        %v3249 = vunpack.c.l.b16 %v3162
        %v3250 = vunpack.c.l.b16 %v3172
        %v3251 = vunpack.c.l.b16 %v3186
        %v3252 = vunpack.c.l.b16 %v3196
        %v3253 = vunpack.c.l.b16 %v3210
        %v3254 = vunpack.c.l.b16 %v3220
        %v3255 = vpack.c.b16 %v3224, %v3223
        %v3256 = vpack.c.b16 %v3226, %v3225
        %v3257 = vpack.c.b16 %v3228, %v3227
        %v3258 = vpack.c.b16 %v3230, %v3229
        %v3259 = vpack.c.b16 %v3232, %v3231
        %v3260 = vpack.c.b16 %v3234, %v3233
        %v3261 = vpack.c.b16 %v3236, %v3235
        %v3262 = vpack.c.b16 %v3238, %v3237
        %v3263 = vpack.c.b16 %v3240, %v3239
        %v3264 = vpack.c.b16 %v3242, %v3241
        %v3265 = vpack.c.b16 %v3244, %v3243
        %v3266 = vpack.c.b16 %v3246, %v3245
        %v3267 = vpack.c.b16 %v3248, %v3247
        %v3268 = vpack.c.b16 %v3250, %v3249
        %v3269 = vpack.c.b16 %v3252, %v3251
        %v3270 = vpack.c.b16 %v3254, %v3253
        %v3272 = vsel %vm1465, %v3255, 0
        %v3275 = vsel %vm1465, %v3256, 0
        %v3278 = vsel %vm1465, %v3257, 0
        %v3281 = vsel %vm1465, %v3258, 0
        %v3284 = vsel %vm1465, %v3259, 0
        %v3287 = vsel %vm1465, %v3260, 0
        %v3290 = vsel %vm1465, %v3261, 0
        %v3293 = vsel %vm1465, %v3262, 0
        %v3296 = vsel %vm1465, %v3263, 0
        %v3299 = vsel %vm1465, %v3264, 0
        %v3302 = vsel %vm1465, %v3265, 0
        %v3305 = vsel %vm1465, %v3266, 0
        %v3308 = vsel %vm1465, %v3267, 0
        %v3311 = vsel %vm1465, %v3268, 0
        %v3314 = vsel %vm1465, %v3269, 0
        %v3317 = vsel %vm1465, %v3270, 0
        %v3320 = vand.u32 %v3222, %v1517
        %3322 = vmatprep.subr.bf16.mxu0 0
        %3323 = vmatpush1.bf16.msra.mxu0 %v3320
        %3324 = vmatprep.subr.bf16.mxu0 0
        %3325 = vmatpush1.bf16.msra.mxu0 0
        %3326 = vmatprep.subr.bf16.mxu0 0
        %3327 = vmatpush1.bf16.msra.mxu0 0
        %3328 = vmatprep.subr.bf16.mxu0 0
        %3329 = vmatpush1.bf16.msra.mxu0 0
        %3330 = vmatprep.subr.bf16.mxu0 0
        %3331 = vmatpush1.bf16.msra.mxu0 0
        %3332 = vmatprep.subr.bf16.mxu0 0
        %3333 = vmatpush1.bf16.msra.mxu0 0
        %3334 = vmatprep.subr.bf16.mxu0 0
        %3335 = vmatpush1.bf16.msra.mxu0 0
        %3336 = vmatprep.subr.bf16.mxu0 0
        %3337 = vmatpush1.bf16.msra.mxu0 0
        %3338 = vmatprep.subr.bf16.mxu0 0
        %3339 = vmatpush1.bf16.msra.mxu0 0
        %3340 = vmatprep.subr.bf16.mxu0 0
        %3341 = vmatpush1.bf16.msra.mxu0 0
        %3342 = vmatprep.subr.bf16.mxu0 0
        %3343 = vmatpush1.bf16.msra.mxu0 0
        %3344 = vmatprep.subr.bf16.mxu0 0
        %3345 = vmatpush1.bf16.msra.mxu0 0
        %3346 = vmatprep.subr.bf16.mxu0 0
        %3347 = vmatpush1.bf16.msra.mxu0 0
        %3348 = vmatprep.subr.bf16.mxu0 0
        %3349 = vmatpush1.bf16.msra.mxu0 0
        %3350 = vmatprep.subr.bf16.mxu0 0
        %3351 = vmatpush1.bf16.msra.mxu0 0
        %3352 = vmatprep.subr.bf16.mxu0 0
        %3353 = vmatpush1.bf16.msra.mxu0 0
        %3354 = vmatprep.mubr.bf16.mxu0 0
        %3355 = vmatmul.mubr.bf16.gmra.mrb[0].mxu0 %v3272
        %v3356 = vpop.f32.mrb[0].mxu0
        %v3357 = vadd.f32 0.0, %v3356
        %v3358 = vpop.f32.mrb[0].mxu0
        %v3359 = vpop.f32.mrb[0].mxu0
        %v3360 = vadd.f32 0.0, %v3359
        %v3361 = vpop.f32.mrb[0].mxu0
        %3362 = vmatprep.mubr.bf16.mxu0 0
        %3363 = vmatmul.mubr.bf16.gmra.mrb[0].mxu0 %v3275
        %v3364 = vpop.f32.mrb[0].mxu0
        %v3365 = vadd.f32 0.0, %v3364
        %v3366 = vpop.f32.mrb[0].mxu0
        %v3367 = vpop.f32.mrb[0].mxu0
        %v3368 = vadd.f32 0.0, %v3367
        %v3369 = vpop.f32.mrb[0].mxu0
        %3370 = vmatprep.mubr.bf16.mxu0 0
        %3371 = vmatmul.mubr.bf16.gmra.mrb[0].mxu0 %v3278
        %v3372 = vpop.f32.mrb[0].mxu0
        %v3373 = vadd.f32 0.0, %v3372
        %v3374 = vpop.f32.mrb[0].mxu0
        %v3375 = vpop.f32.mrb[0].mxu0
        %v3376 = vadd.f32 0.0, %v3375
        %v3377 = vpop.f32.mrb[0].mxu0
        %3378 = vmatprep.mubr.bf16.mxu0 0
        %3379 = vmatmul.mubr.bf16.gmra.mrb[0].mxu0 %v3281
        %v3380 = vpop.f32.mrb[0].mxu0
        %v3381 = vadd.f32 0.0, %v3380
        %v3382 = vpop.f32.mrb[0].mxu0
        %v3383 = vpop.f32.mrb[0].mxu0
        %v3384 = vadd.f32 0.0, %v3383
        %v3385 = vpop.f32.mrb[0].mxu0
        %3386 = vmatprep.mubr.bf16.mxu0 0
        %3387 = vmatmul.mubr.bf16.gmra.mrb[0].mxu0 %v3284
        %v3388 = vpop.f32.mrb[0].mxu0
        %v3389 = vadd.f32 0.0, %v3388
        %v3390 = vpop.f32.mrb[0].mxu0
        %v3391 = vpop.f32.mrb[0].mxu0
        %v3392 = vadd.f32 0.0, %v3391
        %v3393 = vpop.f32.mrb[0].mxu0
        %3394 = vmatprep.mubr.bf16.mxu0 0
        %3395 = vmatmul.mubr.bf16.gmra.mrb[0].mxu0 %v3287
        %v3396 = vpop.f32.mrb[0].mxu0
        %v3397 = vadd.f32 0.0, %v3396
        %v3398 = vpop.f32.mrb[0].mxu0
        %v3399 = vpop.f32.mrb[0].mxu0
        %v3400 = vadd.f32 0.0, %v3399
        %v3401 = vpop.f32.mrb[0].mxu0
        %3402 = vmatprep.mubr.bf16.mxu0 0
        %3403 = vmatmul.mubr.bf16.gmra.mrb[0].mxu0 %v3290
        %v3404 = vpop.f32.mrb[0].mxu0
        %v3405 = vadd.f32 0.0, %v3404
        %v3406 = vpop.f32.mrb[0].mxu0
        %v3407 = vpop.f32.mrb[0].mxu0
        %v3408 = vadd.f32 0.0, %v3407
        %v3409 = vpop.f32.mrb[0].mxu0
        %3410 = vmatprep.mubr.bf16.mxu0 0
        %3411 = vmatmul.mubr.bf16.gmra.mrb[0].mxu0 %v3293
        %v3412 = vpop.f32.mrb[0].mxu0
        %v3413 = vadd.f32 0.0, %v3412
        %v3414 = vpop.f32.mrb[0].mxu0
        %v3415 = vpop.f32.mrb[0].mxu0
        %v3416 = vadd.f32 0.0, %v3415
        %v3417 = vpop.f32.mrb[0].mxu0
        %3418 = vmatprep.mubr.bf16.mxu0 0
        %3419 = vmatmul.mubr.bf16.gmra.mrb[0].mxu0 %v3296
        %v3420 = vpop.f32.mrb[0].mxu0
        %v3421 = vadd.f32 0.0, %v3420
        %v3422 = vpop.f32.mrb[0].mxu0
        %v3423 = vpop.f32.mrb[0].mxu0
        %v3424 = vadd.f32 0.0, %v3423
        %v3425 = vpop.f32.mrb[0].mxu0
        %3426 = vmatprep.mubr.bf16.mxu0 0
        %3427 = vmatmul.mubr.bf16.gmra.mrb[0].mxu0 %v3299
        %v3428 = vpop.f32.mrb[0].mxu0
        %v3429 = vadd.f32 0.0, %v3428
        %v3430 = vpop.f32.mrb[0].mxu0
        %v3431 = vpop.f32.mrb[0].mxu0
        %v3432 = vadd.f32 0.0, %v3431
        %v3433 = vpop.f32.mrb[0].mxu0
        %3434 = vmatprep.mubr.bf16.mxu0 0
        %3435 = vmatmul.mubr.bf16.gmra.mrb[0].mxu0 %v3302
        %v3436 = vpop.f32.mrb[0].mxu0
        %v3437 = vadd.f32 0.0, %v3436
        %v3438 = vpop.f32.mrb[0].mxu0
        %v3439 = vpop.f32.mrb[0].mxu0
        %v3440 = vadd.f32 0.0, %v3439
        %v3441 = vpop.f32.mrb[0].mxu0
        %3442 = vmatprep.mubr.bf16.mxu0 0
        %3443 = vmatmul.mubr.bf16.gmra.mrb[0].mxu0 %v3305
        %v3444 = vpop.f32.mrb[0].mxu0
        %v3445 = vadd.f32 0.0, %v3444
        %v3446 = vpop.f32.mrb[0].mxu0
        %v3447 = vpop.f32.mrb[0].mxu0
        %v3448 = vadd.f32 0.0, %v3447
        %v3449 = vpop.f32.mrb[0].mxu0
        %3450 = vmatprep.mubr.bf16.mxu0 0
        %3451 = vmatmul.mubr.bf16.gmra.mrb[0].mxu0 %v3308
        %v3452 = vpop.f32.mrb[0].mxu0
        %v3453 = vadd.f32 0.0, %v3452
        %v3454 = vpop.f32.mrb[0].mxu0
        %v3455 = vpop.f32.mrb[0].mxu0
        %v3456 = vadd.f32 0.0, %v3455
        %v3457 = vpop.f32.mrb[0].mxu0
        %3458 = vmatprep.mubr.bf16.mxu0 0
        %3459 = vmatmul.mubr.bf16.gmra.mrb[0].mxu0 %v3311
        %v3460 = vpop.f32.mrb[0].mxu0
        %v3461 = vadd.f32 0.0, %v3460
        %v3462 = vpop.f32.mrb[0].mxu0
        %v3463 = vpop.f32.mrb[0].mxu0
        %v3464 = vadd.f32 0.0, %v3463
        %v3465 = vpop.f32.mrb[0].mxu0
        %3466 = vmatprep.mubr.bf16.mxu0 0
        %3467 = vmatmul.mubr.bf16.gmra.mrb[0].mxu0 %v3314
        %v3468 = vpop.f32.mrb[0].mxu0
        %v3469 = vadd.f32 0.0, %v3468
        %v3470 = vpop.f32.mrb[0].mxu0
        %v3471 = vpop.f32.mrb[0].mxu0
        %v3472 = vadd.f32 0.0, %v3471
        %v3473 = vpop.f32.mrb[0].mxu0
        %3474 = vmatprep.mubr.bf16.mxu0 0
        %3475 = vmatmul.mubr.bf16.gmra.mrb[0].mxu0 %v3317
        %v3476 = vpop.f32.mrb[0].mxu0
        %v3477 = vadd.f32 0.0, %v3476
        %v3478 = vpop.f32.mrb[0].mxu0
        %v3479 = vpop.f32.mrb[0].mxu0
        %v3480 = vadd.f32 0.0, %v3479
        %v3481 = vpop.f32.mrb[0].mxu0
        %3482 = vdwg.mxu0
        %v3483 = vadd.f32 %v2757, %v3357
        %v3484 = vadd.f32 %v2758, %v3360
        %v3485 = vadd.f32 %v2759, %v3365
        %v3486 = vadd.f32 %v2760, %v3368
        %v3487 = vadd.f32 %v2761, %v3373
        %v3488 = vadd.f32 %v2762, %v3376
        %v3489 = vadd.f32 %v2763, %v3381
        %v3490 = vadd.f32 %v2764, %v3384
        %v3491 = vadd.f32 %v2765, %v3389
        %v3492 = vadd.f32 %v2766, %v3392
        %v3493 = vadd.f32 %v2767, %v3397
        %v3494 = vadd.f32 %v2768, %v3400
        %v3495 = vadd.f32 %v2769, %v3405
        %v3496 = vadd.f32 %v2770, %v3408
        %v3497 = vadd.f32 %v2771, %v3413
        %v3498 = vadd.f32 %v2772, %v3416
        %v3499 = vadd.f32 %v2773, %v3421
        %v3500 = vadd.f32 %v2774, %v3424
        %v3501 = vadd.f32 %v2775, %v3429
        %v3502 = vadd.f32 %v2776, %v3432
        %v3503 = vadd.f32 %v2777, %v3437
        %v3504 = vadd.f32 %v2778, %v3440
        %v3505 = vadd.f32 %v2779, %v3445
        %v3506 = vadd.f32 %v2780, %v3448
        %v3507 = vadd.f32 %v2781, %v3453
        %v3508 = vadd.f32 %v2782, %v3456
        %v3509 = vadd.f32 %v2783, %v3461
        %v3510 = vadd.f32 %v2784, %v3464
        %v3511 = vadd.f32 %v2785, %v3469
        %v3512 = vadd.f32 %v2786, %v3472
        %v3513 = vadd.f32 %v2787, %v3477
        %v3514 = vadd.f32 %v2788, %v3480
        %v3515 = vld [vmem:[%s861] sm:$0xe]
        %v3516 = vld [vmem:[%s861 + $0xc] sm:$0xe]
        %v3517 = vld [vmem:[%s861 + $0x18] sm:$0xe]
        %v3518 = vld [vmem:[%s861 + $0x24] sm:$0xe]
        %v3519 = vld [vmem:[%s861 + $0x30] sm:$0xe]
        %v3520 = vld [vmem:[%s861 + $0x3c] sm:$0xe]
        %v3521 = vld [vmem:[%s861 + $0x48] sm:$0xe]
        %v3522 = vld [vmem:[%s861 + $0x54] sm:$0xe]
        %v3523 = vld [vmem:[%s861 + $0x60] sm:$0xe]
        %v3524 = vld [vmem:[%s861 + $0x6c] sm:$0xe]
        %v3525 = vld [vmem:[%s861 + $0x78] sm:$0xe]
        %v3526 = vld [vmem:[%s861 + $0x84] sm:$0xe]
        %v3527 = vld [vmem:[%s861 + $0x90] sm:$0xe]
        %v3528 = vld [vmem:[%s861 + $0x9c] sm:$0xe]
        %v3529 = vld [vmem:[%s861 + $0xa8] sm:$0xe]
        %v3530 = vld [vmem:[%s861 + $0xb4] sm:$0xe]
        %v3579 = vrot.slane %v3515, 5
        %v3580 = vrot.slane %v3579, 4
        %v3581 = vrot.slane %v2790, 5
        %v3582 = vsel %vm2024, %v3580, %v3581
        %v3583 = vrot.slane %v3581, 4
        %v3584 = vrot.slane %v2791, 5
        %v3585 = vsel %vm2024, %v3583, %v3584
        %v3586 = vrot.slane %v3516, 5
        %v3587 = vrot.slane %v3586, 4
        %v3588 = vrot.slane %v2793, 5
        %v3589 = vsel %vm2024, %v3587, %v3588
        %v3590 = vrot.slane %v3588, 4
        %v3591 = vrot.slane %v2794, 5
        %v3592 = vsel %vm2024, %v3590, %v3591
        %v3593 = vrot.slane %v3517, 5
        %v3594 = vrot.slane %v3593, 4
        %v3595 = vrot.slane %v2796, 5
        %v3596 = vsel %vm2024, %v3594, %v3595
        %v3597 = vrot.slane %v3595, 4
        %v3598 = vrot.slane %v2797, 5
        %v3599 = vsel %vm2024, %v3597, %v3598
        %v3600 = vrot.slane %v3518, 5
        %v3601 = vrot.slane %v3600, 4
        %v3602 = vrot.slane %v2799, 5
        %v3603 = vsel %vm2024, %v3601, %v3602
        %v3604 = vrot.slane %v3602, 4
        %v3605 = vrot.slane %v2800, 5
        %v3606 = vsel %vm2024, %v3604, %v3605
        %v3607 = vrot.slane %v3519, 5
        %v3608 = vrot.slane %v3607, 4
        %v3609 = vrot.slane %v2802, 5
        %v3610 = vsel %vm2024, %v3608, %v3609
        %v3611 = vrot.slane %v3609, 4
        %v3612 = vrot.slane %v2803, 5
        %v3613 = vsel %vm2024, %v3611, %v3612
        %v3614 = vrot.slane %v3520, 5
        %v3615 = vrot.slane %v3614, 4
        %v3616 = vrot.slane %v2805, 5
        %v3617 = vsel %vm2024, %v3615, %v3616
        %v3618 = vrot.slane %v3616, 4
        %v3619 = vrot.slane %v2806, 5
        %v3620 = vsel %vm2024, %v3618, %v3619
        %v3621 = vrot.slane %v3521, 5
        %v3622 = vrot.slane %v3621, 4
        %v3623 = vrot.slane %v2808, 5
        %v3624 = vsel %vm2024, %v3622, %v3623
        %v3625 = vrot.slane %v3623, 4
        %v3626 = vrot.slane %v2809, 5
        %v3627 = vsel %vm2024, %v3625, %v3626
        %v3628 = vrot.slane %v3522, 5
        %v3629 = vrot.slane %v3628, 4
        %v3630 = vrot.slane %v2811, 5
        %v3631 = vsel %vm2024, %v3629, %v3630
        %v3632 = vrot.slane %v3630, 4
        %v3633 = vrot.slane %v2812, 5
        %v3634 = vsel %vm2024, %v3632, %v3633
        %v3635 = vrot.slane %v3523, 5
        %v3636 = vrot.slane %v3635, 4
        %v3637 = vrot.slane %v2814, 5
        %v3638 = vsel %vm2024, %v3636, %v3637
        %v3639 = vrot.slane %v3637, 4
        %v3640 = vrot.slane %v2815, 5
        %v3641 = vsel %vm2024, %v3639, %v3640
        %v3642 = vrot.slane %v3524, 5
        %v3643 = vrot.slane %v3642, 4
        %v3644 = vrot.slane %v2817, 5
        %v3645 = vsel %vm2024, %v3643, %v3644
        %v3646 = vrot.slane %v3644, 4
        %v3647 = vrot.slane %v2818, 5
        %v3648 = vsel %vm2024, %v3646, %v3647
        %v3649 = vrot.slane %v3525, 5
        %v3650 = vrot.slane %v3649, 4
        %v3651 = vrot.slane %v2820, 5
        %v3652 = vsel %vm2024, %v3650, %v3651
        %v3653 = vrot.slane %v3651, 4
        %v3654 = vrot.slane %v2821, 5
        %v3655 = vsel %vm2024, %v3653, %v3654
        %v3656 = vrot.slane %v3526, 5
        %v3657 = vrot.slane %v3656, 4
        %v3658 = vrot.slane %v2823, 5
        %v3659 = vsel %vm2024, %v3657, %v3658
        %v3660 = vrot.slane %v3658, 4
        %v3661 = vrot.slane %v2824, 5
        %v3662 = vsel %vm2024, %v3660, %v3661
        %v3663 = vrot.slane %v3527, 5
        %v3664 = vrot.slane %v3663, 4
        %v3665 = vrot.slane %v2826, 5
        %v3666 = vsel %vm2024, %v3664, %v3665
        %v3667 = vrot.slane %v3665, 4
        %v3668 = vrot.slane %v2827, 5
        %v3669 = vsel %vm2024, %v3667, %v3668
        %v3670 = vrot.slane %v3528, 5
        %v3671 = vrot.slane %v3670, 4
        %v3672 = vrot.slane %v2829, 5
        %v3673 = vsel %vm2024, %v3671, %v3672
        %v3674 = vrot.slane %v3672, 4
        %v3675 = vrot.slane %v2830, 5
        %v3676 = vsel %vm2024, %v3674, %v3675
        %v3677 = vrot.slane %v3529, 5
        %v3678 = vrot.slane %v3677, 4
        %v3679 = vrot.slane %v2832, 5
        %v3680 = vsel %vm2024, %v3678, %v3679
        %v3681 = vrot.slane %v3679, 4
        %v3682 = vrot.slane %v2833, 5
        %v3683 = vsel %vm2024, %v3681, %v3682
        %v3684 = vrot.slane %v3530, 5
        %v3685 = vrot.slane %v3684, 4
        %v3686 = vrot.slane %v2835, 5
        %v3687 = vsel %vm2024, %v3685, %v3686
        %v3688 = vrot.slane %v3686, 4
        %v3689 = vrot.slane %v2836, 5
        %v3690 = vsel %vm2024, %v3688, %v3689
        %s3691 = scalar_lea.vmem %s1, 10
        %v3692 = vld [vmem:[%s3691] sm:$0x3]
        %v3693 = vunpack.c.l.b16 %v3582
        %v3694 = vunpack.c.l.b16 %v3585
        %v3695 = vunpack.c.l.b16 %v3589
        %v3696 = vunpack.c.l.b16 %v3592
        %v3697 = vunpack.c.l.b16 %v3596
        %v3698 = vunpack.c.l.b16 %v3599
        %v3699 = vunpack.c.l.b16 %v3603
        %v3700 = vunpack.c.l.b16 %v3606
        %v3701 = vunpack.c.l.b16 %v3610
        %v3702 = vunpack.c.l.b16 %v3613
        %v3703 = vunpack.c.l.b16 %v3617
        %v3704 = vunpack.c.l.b16 %v3620
        %v3705 = vunpack.c.l.b16 %v3624
        %v3706 = vunpack.c.l.b16 %v3627
        %v3707 = vunpack.c.l.b16 %v3631
        %v3708 = vunpack.c.l.b16 %v3634
        %v3709 = vunpack.c.l.b16 %v3638
        %v3710 = vunpack.c.l.b16 %v3641
        %v3711 = vunpack.c.l.b16 %v3645
        %v3712 = vunpack.c.l.b16 %v3648
        %v3713 = vunpack.c.l.b16 %v3652
        %v3714 = vunpack.c.l.b16 %v3655
        %v3715 = vunpack.c.l.b16 %v3659
        %v3716 = vunpack.c.l.b16 %v3662
        %v3717 = vunpack.c.l.b16 %v3666
        %v3718 = vunpack.c.l.b16 %v3669
        %v3719 = vunpack.c.l.b16 %v3673
        %v3720 = vunpack.c.l.b16 %v3676
        %v3721 = vunpack.c.l.b16 %v3680
        %v3722 = vunpack.c.l.b16 %v3683
        %v3723 = vunpack.c.l.b16 %v3687
        %v3724 = vunpack.c.l.b16 %v3690
        %v3725 = vpack.c.b16 %v3694, %v3693
        %v3726 = vpack.c.b16 %v3696, %v3695
        %v3727 = vpack.c.b16 %v3698, %v3697
        %v3728 = vpack.c.b16 %v3700, %v3699
        %v3729 = vpack.c.b16 %v3702, %v3701
        %v3730 = vpack.c.b16 %v3704, %v3703
        %v3731 = vpack.c.b16 %v3706, %v3705
        %v3732 = vpack.c.b16 %v3708, %v3707
        %v3733 = vpack.c.b16 %v3710, %v3709
        %v3734 = vpack.c.b16 %v3712, %v3711
        %v3735 = vpack.c.b16 %v3714, %v3713
        %v3736 = vpack.c.b16 %v3716, %v3715
        %v3737 = vpack.c.b16 %v3718, %v3717
        %v3738 = vpack.c.b16 %v3720, %v3719
        %v3739 = vpack.c.b16 %v3722, %v3721
        %v3740 = vpack.c.b16 %v3724, %v3723
        %v3742 = vsel %vm1465, %v3725, 0
        %v3745 = vsel %vm1465, %v3726, 0
        %v3748 = vsel %vm1465, %v3727, 0
        %v3751 = vsel %vm1465, %v3728, 0
        %v3754 = vsel %vm1465, %v3729, 0
        %v3757 = vsel %vm1465, %v3730, 0
        %v3760 = vsel %vm1465, %v3731, 0
        %v3763 = vsel %vm1465, %v3732, 0
        %v3766 = vsel %vm1465, %v3733, 0
        %v3769 = vsel %vm1465, %v3734, 0
        %v3772 = vsel %vm1465, %v3735, 0
        %v3775 = vsel %vm1465, %v3736, 0
        %v3778 = vsel %vm1465, %v3737, 0
        %v3781 = vsel %vm1465, %v3738, 0
        %v3784 = vsel %vm1465, %v3739, 0
        %v3787 = vsel %vm1465, %v3740, 0
        %v3790 = vand.u32 %v3692, %v1517
        %3792 = vmatprep.subr.bf16.mxu0 0
        %3793 = vmatpush1.bf16.msra.mxu0 %v3790
        %3794 = vmatprep.subr.bf16.mxu0 0
        %3795 = vmatpush1.bf16.msra.mxu0 0
        %3796 = vmatprep.subr.bf16.mxu0 0
        %3797 = vmatpush1.bf16.msra.mxu0 0
        %3798 = vmatprep.subr.bf16.mxu0 0
        %3799 = vmatpush1.bf16.msra.mxu0 0
        %3800 = vmatprep.subr.bf16.mxu0 0
        %3801 = vmatpush1.bf16.msra.mxu0 0
        %3802 = vmatprep.subr.bf16.mxu0 0
        %3803 = vmatpush1.bf16.msra.mxu0 0
        %3804 = vmatprep.subr.bf16.mxu0 0
        %3805 = vmatpush1.bf16.msra.mxu0 0
        %3806 = vmatprep.subr.bf16.mxu0 0
        %3807 = vmatpush1.bf16.msra.mxu0 0
        %3808 = vmatprep.subr.bf16.mxu0 0
        %3809 = vmatpush1.bf16.msra.mxu0 0
        %3810 = vmatprep.subr.bf16.mxu0 0
        %3811 = vmatpush1.bf16.msra.mxu0 0
        %3812 = vmatprep.subr.bf16.mxu0 0
        %3813 = vmatpush1.bf16.msra.mxu0 0
        %3814 = vmatprep.subr.bf16.mxu0 0
        %3815 = vmatpush1.bf16.msra.mxu0 0
        %3816 = vmatprep.subr.bf16.mxu0 0
        %3817 = vmatpush1.bf16.msra.mxu0 0
        %3818 = vmatprep.subr.bf16.mxu0 0
        %3819 = vmatpush1.bf16.msra.mxu0 0
        %3820 = vmatprep.subr.bf16.mxu0 0
        %3821 = vmatpush1.bf16.msra.mxu0 0
        %3822 = vmatprep.subr.bf16.mxu0 0
        %3823 = vmatpush1.bf16.msra.mxu0 0
        %3824 = vmatprep.mubr.bf16.mxu0 0
        %3825 = vmatmul.mubr.bf16.gmra.mrb[0].mxu0 %v3742
        %v3826 = vpop.f32.mrb[0].mxu0
        %v3827 = vadd.f32 0.0, %v3826
        %v3828 = vpop.f32.mrb[0].mxu0
        %v3829 = vpop.f32.mrb[0].mxu0
        %v3830 = vadd.f32 0.0, %v3829
        %v3831 = vpop.f32.mrb[0].mxu0
        %3832 = vmatprep.mubr.bf16.mxu0 0
        %3833 = vmatmul.mubr.bf16.gmra.mrb[0].mxu0 %v3745
        %v3834 = vpop.f32.mrb[0].mxu0
        %v3835 = vadd.f32 0.0, %v3834
        %v3836 = vpop.f32.mrb[0].mxu0
        %v3837 = vpop.f32.mrb[0].mxu0
        %v3838 = vadd.f32 0.0, %v3837
        %v3839 = vpop.f32.mrb[0].mxu0
        %3840 = vmatprep.mubr.bf16.mxu0 0
        %3841 = vmatmul.mubr.bf16.gmra.mrb[0].mxu0 %v3748
        %v3842 = vpop.f32.mrb[0].mxu0
        %v3843 = vadd.f32 0.0, %v3842
        %v3844 = vpop.f32.mrb[0].mxu0
        %v3845 = vpop.f32.mrb[0].mxu0
        %v3846 = vadd.f32 0.0, %v3845
        %v3847 = vpop.f32.mrb[0].mxu0
        %3848 = vmatprep.mubr.bf16.mxu0 0
        %3849 = vmatmul.mubr.bf16.gmra.mrb[0].mxu0 %v3751
        %v3850 = vpop.f32.mrb[0].mxu0
        %v3851 = vadd.f32 0.0, %v3850
        %v3852 = vpop.f32.mrb[0].mxu0
        %v3853 = vpop.f32.mrb[0].mxu0
        %v3854 = vadd.f32 0.0, %v3853
        %v3855 = vpop.f32.mrb[0].mxu0
        %3856 = vmatprep.mubr.bf16.mxu0 0
        %3857 = vmatmul.mubr.bf16.gmra.mrb[0].mxu0 %v3754
        %v3858 = vpop.f32.mrb[0].mxu0
        %v3859 = vadd.f32 0.0, %v3858
        %v3860 = vpop.f32.mrb[0].mxu0
        %v3861 = vpop.f32.mrb[0].mxu0
        %v3862 = vadd.f32 0.0, %v3861
        %v3863 = vpop.f32.mrb[0].mxu0
        %3864 = vmatprep.mubr.bf16.mxu0 0
        %3865 = vmatmul.mubr.bf16.gmra.mrb[0].mxu0 %v3757
        %v3866 = vpop.f32.mrb[0].mxu0
        %v3867 = vadd.f32 0.0, %v3866
        %v3868 = vpop.f32.mrb[0].mxu0
        %v3869 = vpop.f32.mrb[0].mxu0
        %v3870 = vadd.f32 0.0, %v3869
        %v3871 = vpop.f32.mrb[0].mxu0
        %3872 = vmatprep.mubr.bf16.mxu0 0
        %3873 = vmatmul.mubr.bf16.gmra.mrb[0].mxu0 %v3760
        %v3874 = vpop.f32.mrb[0].mxu0
        %v3875 = vadd.f32 0.0, %v3874
        %v3876 = vpop.f32.mrb[0].mxu0
        %v3877 = vpop.f32.mrb[0].mxu0
        %v3878 = vadd.f32 0.0, %v3877
        %v3879 = vpop.f32.mrb[0].mxu0
        %3880 = vmatprep.mubr.bf16.mxu0 0
        %3881 = vmatmul.mubr.bf16.gmra.mrb[0].mxu0 %v3763
        %v3882 = vpop.f32.mrb[0].mxu0
        %v3883 = vadd.f32 0.0, %v3882
        %v3884 = vpop.f32.mrb[0].mxu0
        %v3885 = vpop.f32.mrb[0].mxu0
        %v3886 = vadd.f32 0.0, %v3885
        %v3887 = vpop.f32.mrb[0].mxu0
        %3888 = vmatprep.mubr.bf16.mxu0 0
        %3889 = vmatmul.mubr.bf16.gmra.mrb[0].mxu0 %v3766
        %v3890 = vpop.f32.mrb[0].mxu0
        %v3891 = vadd.f32 0.0, %v3890
        %v3892 = vpop.f32.mrb[0].mxu0
        %v3893 = vpop.f32.mrb[0].mxu0
        %v3894 = vadd.f32 0.0, %v3893
        %v3895 = vpop.f32.mrb[0].mxu0
        %3896 = vmatprep.mubr.bf16.mxu0 0
        %3897 = vmatmul.mubr.bf16.gmra.mrb[0].mxu0 %v3769
        %v3898 = vpop.f32.mrb[0].mxu0
        %v3899 = vadd.f32 0.0, %v3898
        %v3900 = vpop.f32.mrb[0].mxu0
        %v3901 = vpop.f32.mrb[0].mxu0
        %v3902 = vadd.f32 0.0, %v3901
        %v3903 = vpop.f32.mrb[0].mxu0
        %3904 = vmatprep.mubr.bf16.mxu0 0
        %3905 = vmatmul.mubr.bf16.gmra.mrb[0].mxu0 %v3772
        %v3906 = vpop.f32.mrb[0].mxu0
        %v3907 = vadd.f32 0.0, %v3906
        %v3908 = vpop.f32.mrb[0].mxu0
        %v3909 = vpop.f32.mrb[0].mxu0
        %v3910 = vadd.f32 0.0, %v3909
        %v3911 = vpop.f32.mrb[0].mxu0
        %3912 = vmatprep.mubr.bf16.mxu0 0
        %3913 = vmatmul.mubr.bf16.gmra.mrb[0].mxu0 %v3775
        %v3914 = vpop.f32.mrb[0].mxu0
        %v3915 = vadd.f32 0.0, %v3914
        %v3916 = vpop.f32.mrb[0].mxu0
        %v3917 = vpop.f32.mrb[0].mxu0
        %v3918 = vadd.f32 0.0, %v3917
        %v3919 = vpop.f32.mrb[0].mxu0
        %3920 = vmatprep.mubr.bf16.mxu0 0
        %3921 = vmatmul.mubr.bf16.gmra.mrb[0].mxu0 %v3778
        %v3922 = vpop.f32.mrb[0].mxu0
        %v3923 = vadd.f32 0.0, %v3922
        %v3924 = vpop.f32.mrb[0].mxu0
        %v3925 = vpop.f32.mrb[0].mxu0
        %v3926 = vadd.f32 0.0, %v3925
        %v3927 = vpop.f32.mrb[0].mxu0
        %3928 = vmatprep.mubr.bf16.mxu0 0
        %3929 = vmatmul.mubr.bf16.gmra.mrb[0].mxu0 %v3781
        %v3930 = vpop.f32.mrb[0].mxu0
        %v3931 = vadd.f32 0.0, %v3930
        %v3932 = vpop.f32.mrb[0].mxu0
        %v3933 = vpop.f32.mrb[0].mxu0
        %v3934 = vadd.f32 0.0, %v3933
        %v3935 = vpop.f32.mrb[0].mxu0
        %3936 = vmatprep.mubr.bf16.mxu0 0
        %3937 = vmatmul.mubr.bf16.gmra.mrb[0].mxu0 %v3784
        %v3938 = vpop.f32.mrb[0].mxu0
        %v3939 = vadd.f32 0.0, %v3938
        %v3940 = vpop.f32.mrb[0].mxu0
        %v3941 = vpop.f32.mrb[0].mxu0
        %v3942 = vadd.f32 0.0, %v3941
        %v3943 = vpop.f32.mrb[0].mxu0
        %3944 = vmatprep.mubr.bf16.mxu0 0
        %3945 = vmatmul.mubr.bf16.gmra.mrb[0].mxu0 %v3787
        %v3946 = vpop.f32.mrb[0].mxu0
        %v3947 = vadd.f32 0.0, %v3946
        %v3948 = vpop.f32.mrb[0].mxu0
        %v3949 = vpop.f32.mrb[0].mxu0
        %v3950 = vadd.f32 0.0, %v3949
        %v3951 = vpop.f32.mrb[0].mxu0
        %3952 = vdwg.mxu0
        %v3953 = vadd.f32 %v3483, %v3827
        %v3954 = vadd.f32 %v3484, %v3830
        %v3955 = vadd.f32 %v3485, %v3835
        %v3956 = vadd.f32 %v3486, %v3838
        %v3957 = vadd.f32 %v3487, %v3843
        %v3958 = vadd.f32 %v3488, %v3846
        %v3959 = vadd.f32 %v3489, %v3851
        %v3960 = vadd.f32 %v3490, %v3854
        %v3961 = vadd.f32 %v3491, %v3859
        %v3962 = vadd.f32 %v3492, %v3862
        %v3963 = vadd.f32 %v3493, %v3867
        %v3964 = vadd.f32 %v3494, %v3870
        %v3965 = vadd.f32 %v3495, %v3875
        %v3966 = vadd.f32 %v3496, %v3878
        %v3967 = vadd.f32 %v3497, %v3883
        %v3968 = vadd.f32 %v3498, %v3886
        %v3969 = vadd.f32 %v3499, %v3891
        %v3970 = vadd.f32 %v3500, %v3894
        %v3971 = vadd.f32 %v3501, %v3899
        %v3972 = vadd.f32 %v3502, %v3902
        %v3973 = vadd.f32 %v3503, %v3907
        %v3974 = vadd.f32 %v3504, %v3910
        %v3975 = vadd.f32 %v3505, %v3915
        %v3976 = vadd.f32 %v3506, %v3918
        %v3977 = vadd.f32 %v3507, %v3923
        %v3978 = vadd.f32 %v3508, %v3926
        %v3979 = vadd.f32 %v3509, %v3931
        %v3980 = vadd.f32 %v3510, %v3934
        %v3981 = vadd.f32 %v3511, %v3939
        %v3982 = vadd.f32 %v3512, %v3942
        %v3983 = vadd.f32 %v3513, %v3947
        %v3984 = vadd.f32 %v3514, %v3950
        %s3985 = scalar_lea.vmem [#allocation2], 24
        %v3986 = vld [vmem:[%s3985] sm:$0xf]
        %v3987 = vld [vmem:[%s3985 + $0x4] sm:$0xf]
        %v3988 = vld [vmem:[%s3985 + $0xc] sm:$0xf]
        %v3989 = vld [vmem:[%s3985 + $0x10] sm:$0xf]
        %v3990 = vld [vmem:[%s3985 + $0x18] sm:$0xf]
        %v3991 = vld [vmem:[%s3985 + $0x1c] sm:$0xf]
        %v3992 = vld [vmem:[%s3985 + $0x24] sm:$0xf]
        %v3993 = vld [vmem:[%s3985 + $0x28] sm:$0xf]
        %v3994 = vld [vmem:[%s3985 + $0x30] sm:$0xf]
        %v3995 = vld [vmem:[%s3985 + $0x34] sm:$0xf]
        %v3996 = vld [vmem:[%s3985 + $0x3c] sm:$0xf]
        %v3997 = vld [vmem:[%s3985 + $0x40] sm:$0xf]
        %v3998 = vld [vmem:[%s3985 + $0x48] sm:$0xf]
        %v3999 = vld [vmem:[%s3985 + $0x4c] sm:$0xf]
        %v4000 = vld [vmem:[%s3985 + $0x54] sm:$0xf]
        %v4001 = vld [vmem:[%s3985 + $0x58] sm:$0xf]
        %v4002 = vld [vmem:[%s3985 + $0x60] sm:$0xf]
        %v4003 = vld [vmem:[%s3985 + $0x64] sm:$0xf]
        %v4004 = vld [vmem:[%s3985 + $0x6c] sm:$0xf]
        %v4005 = vld [vmem:[%s3985 + $0x70] sm:$0xf]
        %v4006 = vld [vmem:[%s3985 + $0x78] sm:$0xf]
        %v4007 = vld [vmem:[%s3985 + $0x7c] sm:$0xf]
        %v4008 = vld [vmem:[%s3985 + $0x84] sm:$0xf]
        %v4009 = vld [vmem:[%s3985 + $0x88] sm:$0xf]
        %v4010 = vld [vmem:[%s3985 + $0x90] sm:$0xf]
        %v4011 = vld [vmem:[%s3985 + $0x94] sm:$0xf]
        %v4012 = vld [vmem:[%s3985 + $0x9c] sm:$0xf]
        %v4013 = vld [vmem:[%s3985 + $0xa0] sm:$0xf]
        %v4014 = vld [vmem:[%s3985 + $0xa8] sm:$0xf]
        %v4015 = vld [vmem:[%s3985 + $0xac] sm:$0xf]
        %v4016 = vld [vmem:[%s3985 + $0xb4] sm:$0xf]
        %v4017 = vld [vmem:[%s3985 + $0xb8] sm:$0xf]
        %s4018 = scalar_lea.vmem %s1, 12
        %v4019 = vld [vmem:[%s4018] sm:$0x3]
        %v4052 = vunpack.c.l.b16 %v3986
        %v4053 = vunpack.c.l.b16 %v3987
        %v4054 = vunpack.c.l.b16 %v3988
        %v4055 = vunpack.c.l.b16 %v3989
        %v4056 = vunpack.c.l.b16 %v3990
        %v4057 = vunpack.c.l.b16 %v3991
        %v4058 = vunpack.c.l.b16 %v3992
        %v4059 = vunpack.c.l.b16 %v3993
        %v4060 = vunpack.c.l.b16 %v3994
        %v4061 = vunpack.c.l.b16 %v3995
        %v4062 = vunpack.c.l.b16 %v3996
        %v4063 = vunpack.c.l.b16 %v3997
        %v4064 = vunpack.c.l.b16 %v3998
        %v4065 = vunpack.c.l.b16 %v3999
        %v4066 = vunpack.c.l.b16 %v4000
        %v4067 = vunpack.c.l.b16 %v4001
        %v4068 = vunpack.c.l.b16 %v4002
        %v4069 = vunpack.c.l.b16 %v4003
        %v4070 = vunpack.c.l.b16 %v4004
        %v4071 = vunpack.c.l.b16 %v4005
        %v4072 = vunpack.c.l.b16 %v4006
        %v4073 = vunpack.c.l.b16 %v4007
        %v4074 = vunpack.c.l.b16 %v4008
        %v4075 = vunpack.c.l.b16 %v4009
        %v4076 = vunpack.c.l.b16 %v4010
        %v4077 = vunpack.c.l.b16 %v4011
        %v4078 = vunpack.c.l.b16 %v4012
        %v4079 = vunpack.c.l.b16 %v4013
        %v4080 = vunpack.c.l.b16 %v4014
        %v4081 = vunpack.c.l.b16 %v4015
        %v4082 = vunpack.c.l.b16 %v4016
        %v4083 = vunpack.c.l.b16 %v4017
        %v4084 = vpack.c.b16 %v4053, %v4052
        %v4085 = vpack.c.b16 %v4055, %v4054
        %v4086 = vpack.c.b16 %v4057, %v4056
        %v4087 = vpack.c.b16 %v4059, %v4058
        %v4088 = vpack.c.b16 %v4061, %v4060
        %v4089 = vpack.c.b16 %v4063, %v4062
        %v4090 = vpack.c.b16 %v4065, %v4064
        %v4091 = vpack.c.b16 %v4067, %v4066
        %v4092 = vpack.c.b16 %v4069, %v4068
        %v4093 = vpack.c.b16 %v4071, %v4070
        %v4094 = vpack.c.b16 %v4073, %v4072
        %v4095 = vpack.c.b16 %v4075, %v4074
        %v4096 = vpack.c.b16 %v4077, %v4076
        %v4097 = vpack.c.b16 %v4079, %v4078
        %v4098 = vpack.c.b16 %v4081, %v4080
        %v4099 = vpack.c.b16 %v4083, %v4082
        %v4101 = vsel %vm1465, %v4084, 0
        %v4104 = vsel %vm1465, %v4085, 0
        %v4107 = vsel %vm1465, %v4086, 0
        %v4110 = vsel %vm1465, %v4087, 0
        %v4113 = vsel %vm1465, %v4088, 0
        %v4116 = vsel %vm1465, %v4089, 0
        %v4119 = vsel %vm1465, %v4090, 0
        %v4122 = vsel %vm1465, %v4091, 0
        %v4125 = vsel %vm1465, %v4092, 0
        %v4128 = vsel %vm1465, %v4093, 0
        %v4131 = vsel %vm1465, %v4094, 0
        %v4134 = vsel %vm1465, %v4095, 0
        %v4137 = vsel %vm1465, %v4096, 0
        %v4140 = vsel %vm1465, %v4097, 0
        %v4143 = vsel %vm1465, %v4098, 0
        %v4146 = vsel %vm1465, %v4099, 0
        %v4149 = vand.u32 %v4019, %v1517
        %4151 = vmatprep.subr.bf16.mxu0 0
        %4152 = vmatpush1.bf16.msra.mxu0 %v4149
        %4153 = vmatprep.subr.bf16.mxu0 0
        %4154 = vmatpush1.bf16.msra.mxu0 0
        %4155 = vmatprep.subr.bf16.mxu0 0
        %4156 = vmatpush1.bf16.msra.mxu0 0
        %4157 = vmatprep.subr.bf16.mxu0 0
        %4158 = vmatpush1.bf16.msra.mxu0 0
        %4159 = vmatprep.subr.bf16.mxu0 0
        %4160 = vmatpush1.bf16.msra.mxu0 0
        %4161 = vmatprep.subr.bf16.mxu0 0
        %4162 = vmatpush1.bf16.msra.mxu0 0
        %4163 = vmatprep.subr.bf16.mxu0 0
        %4164 = vmatpush1.bf16.msra.mxu0 0
        %4165 = vmatprep.subr.bf16.mxu0 0
        %4166 = vmatpush1.bf16.msra.mxu0 0
        %4167 = vmatprep.subr.bf16.mxu0 0
        %4168 = vmatpush1.bf16.msra.mxu0 0
        %4169 = vmatprep.subr.bf16.mxu0 0
        %4170 = vmatpush1.bf16.msra.mxu0 0
        %4171 = vmatprep.subr.bf16.mxu0 0
        %4172 = vmatpush1.bf16.msra.mxu0 0
        %4173 = vmatprep.subr.bf16.mxu0 0
        %4174 = vmatpush1.bf16.msra.mxu0 0
        %4175 = vmatprep.subr.bf16.mxu0 0
        %4176 = vmatpush1.bf16.msra.mxu0 0
        %4177 = vmatprep.subr.bf16.mxu0 0
        %4178 = vmatpush1.bf16.msra.mxu0 0
        %4179 = vmatprep.subr.bf16.mxu0 0
        %4180 = vmatpush1.bf16.msra.mxu0 0
        %4181 = vmatprep.subr.bf16.mxu0 0
        %4182 = vmatpush1.bf16.msra.mxu0 0
        %4183 = vmatprep.mubr.bf16.mxu0 0
        %4184 = vmatmul.mubr.bf16.gmra.mrb[0].mxu0 %v4101
        %v4185 = vpop.f32.mrb[0].mxu0
        %v4186 = vadd.f32 0.0, %v4185
        %v4187 = vpop.f32.mrb[0].mxu0
        %v4188 = vpop.f32.mrb[0].mxu0
        %v4189 = vadd.f32 0.0, %v4188
        %v4190 = vpop.f32.mrb[0].mxu0
        %4191 = vmatprep.mubr.bf16.mxu0 0
        %4192 = vmatmul.mubr.bf16.gmra.mrb[0].mxu0 %v4104
        %v4193 = vpop.f32.mrb[0].mxu0
        %v4194 = vadd.f32 0.0, %v4193
        %v4195 = vpop.f32.mrb[0].mxu0
        %v4196 = vpop.f32.mrb[0].mxu0
        %v4197 = vadd.f32 0.0, %v4196
        %v4198 = vpop.f32.mrb[0].mxu0
        %4199 = vmatprep.mubr.bf16.mxu0 0
        %4200 = vmatmul.mubr.bf16.gmra.mrb[0].mxu0 %v4107
        %v4201 = vpop.f32.mrb[0].mxu0
        %v4202 = vadd.f32 0.0, %v4201
        %v4203 = vpop.f32.mrb[0].mxu0
        %v4204 = vpop.f32.mrb[0].mxu0
        %v4205 = vadd.f32 0.0, %v4204
        %v4206 = vpop.f32.mrb[0].mxu0
        %4207 = vmatprep.mubr.bf16.mxu0 0
        %4208 = vmatmul.mubr.bf16.gmra.mrb[0].mxu0 %v4110
        %v4209 = vpop.f32.mrb[0].mxu0
        %v4210 = vadd.f32 0.0, %v4209
        %v4211 = vpop.f32.mrb[0].mxu0
        %v4212 = vpop.f32.mrb[0].mxu0
        %v4213 = vadd.f32 0.0, %v4212
        %v4214 = vpop.f32.mrb[0].mxu0
        %4215 = vmatprep.mubr.bf16.mxu0 0
        %4216 = vmatmul.mubr.bf16.gmra.mrb[0].mxu0 %v4113
        %v4217 = vpop.f32.mrb[0].mxu0
        %v4218 = vadd.f32 0.0, %v4217
        %v4219 = vpop.f32.mrb[0].mxu0
        %v4220 = vpop.f32.mrb[0].mxu0
        %v4221 = vadd.f32 0.0, %v4220
        %v4222 = vpop.f32.mrb[0].mxu0
        %4223 = vmatprep.mubr.bf16.mxu0 0
        %4224 = vmatmul.mubr.bf16.gmra.mrb[0].mxu0 %v4116
        %v4225 = vpop.f32.mrb[0].mxu0
        %v4226 = vadd.f32 0.0, %v4225
        %v4227 = vpop.f32.mrb[0].mxu0
        %v4228 = vpop.f32.mrb[0].mxu0
        %v4229 = vadd.f32 0.0, %v4228
        %v4230 = vpop.f32.mrb[0].mxu0
        %4231 = vmatprep.mubr.bf16.mxu0 0
        %4232 = vmatmul.mubr.bf16.gmra.mrb[0].mxu0 %v4119
        %v4233 = vpop.f32.mrb[0].mxu0
        %v4234 = vadd.f32 0.0, %v4233
        %v4235 = vpop.f32.mrb[0].mxu0
        %v4236 = vpop.f32.mrb[0].mxu0
        %v4237 = vadd.f32 0.0, %v4236
        %v4238 = vpop.f32.mrb[0].mxu0
        %4239 = vmatprep.mubr.bf16.mxu0 0
        %4240 = vmatmul.mubr.bf16.gmra.mrb[0].mxu0 %v4122
        %v4241 = vpop.f32.mrb[0].mxu0
        %v4242 = vadd.f32 0.0, %v4241
        %v4243 = vpop.f32.mrb[0].mxu0
        %v4244 = vpop.f32.mrb[0].mxu0
        %v4245 = vadd.f32 0.0, %v4244
        %v4246 = vpop.f32.mrb[0].mxu0
        %4247 = vmatprep.mubr.bf16.mxu0 0
        %4248 = vmatmul.mubr.bf16.gmra.mrb[0].mxu0 %v4125
        %v4249 = vpop.f32.mrb[0].mxu0
        %v4250 = vadd.f32 0.0, %v4249
        %v4251 = vpop.f32.mrb[0].mxu0
        %v4252 = vpop.f32.mrb[0].mxu0
        %v4253 = vadd.f32 0.0, %v4252
        %v4254 = vpop.f32.mrb[0].mxu0
        %4255 = vmatprep.mubr.bf16.mxu0 0
        %4256 = vmatmul.mubr.bf16.gmra.mrb[0].mxu0 %v4128
        %v4257 = vpop.f32.mrb[0].mxu0
        %v4258 = vadd.f32 0.0, %v4257
        %v4259 = vpop.f32.mrb[0].mxu0
        %v4260 = vpop.f32.mrb[0].mxu0
        %v4261 = vadd.f32 0.0, %v4260
        %v4262 = vpop.f32.mrb[0].mxu0
        %4263 = vmatprep.mubr.bf16.mxu0 0
        %4264 = vmatmul.mubr.bf16.gmra.mrb[0].mxu0 %v4131
        %v4265 = vpop.f32.mrb[0].mxu0
        %v4266 = vadd.f32 0.0, %v4265
        %v4267 = vpop.f32.mrb[0].mxu0
        %v4268 = vpop.f32.mrb[0].mxu0
        %v4269 = vadd.f32 0.0, %v4268
        %v4270 = vpop.f32.mrb[0].mxu0
        %4271 = vmatprep.mubr.bf16.mxu0 0
        %4272 = vmatmul.mubr.bf16.gmra.mrb[0].mxu0 %v4134
        %v4273 = vpop.f32.mrb[0].mxu0
        %v4274 = vadd.f32 0.0, %v4273
        %v4275 = vpop.f32.mrb[0].mxu0
        %v4276 = vpop.f32.mrb[0].mxu0
        %v4277 = vadd.f32 0.0, %v4276
        %v4278 = vpop.f32.mrb[0].mxu0
        %4279 = vmatprep.mubr.bf16.mxu0 0
        %4280 = vmatmul.mubr.bf16.gmra.mrb[0].mxu0 %v4137
        %v4281 = vpop.f32.mrb[0].mxu0
        %v4282 = vadd.f32 0.0, %v4281
        %v4283 = vpop.f32.mrb[0].mxu0
        %v4284 = vpop.f32.mrb[0].mxu0
        %v4285 = vadd.f32 0.0, %v4284
        %v4286 = vpop.f32.mrb[0].mxu0
        %4287 = vmatprep.mubr.bf16.mxu0 0
        %4288 = vmatmul.mubr.bf16.gmra.mrb[0].mxu0 %v4140
        %v4289 = vpop.f32.mrb[0].mxu0
        %v4290 = vadd.f32 0.0, %v4289
        %v4291 = vpop.f32.mrb[0].mxu0
        %v4292 = vpop.f32.mrb[0].mxu0
        %v4293 = vadd.f32 0.0, %v4292
        %v4294 = vpop.f32.mrb[0].mxu0
        %4295 = vmatprep.mubr.bf16.mxu0 0
        %4296 = vmatmul.mubr.bf16.gmra.mrb[0].mxu0 %v4143
        %v4297 = vpop.f32.mrb[0].mxu0
        %v4298 = vadd.f32 0.0, %v4297
        %v4299 = vpop.f32.mrb[0].mxu0
        %v4300 = vpop.f32.mrb[0].mxu0
        %v4301 = vadd.f32 0.0, %v4300
        %v4302 = vpop.f32.mrb[0].mxu0
        %4303 = vmatprep.mubr.bf16.mxu0 0
        %4304 = vmatmul.mubr.bf16.gmra.mrb[0].mxu0 %v4146
        %v4305 = vpop.f32.mrb[0].mxu0
        %v4306 = vadd.f32 0.0, %v4305
        %v4307 = vpop.f32.mrb[0].mxu0
        %v4308 = vpop.f32.mrb[0].mxu0
        %v4309 = vadd.f32 0.0, %v4308
        %v4310 = vpop.f32.mrb[0].mxu0
        %4311 = vdwg.mxu0
        %v4312 = vadd.f32 %v3953, %v4186
        %v4313 = vadd.f32 %v3954, %v4189
        %v4314 = vadd.f32 %v3955, %v4194
        %v4315 = vadd.f32 %v3956, %v4197
        %v4316 = vadd.f32 %v3957, %v4202
        %v4317 = vadd.f32 %v3958, %v4205
        %v4318 = vadd.f32 %v3959, %v4210
        %v4319 = vadd.f32 %v3960, %v4213
        %v4320 = vadd.f32 %v3961, %v4218
        %v4321 = vadd.f32 %v3962, %v4221
        %v4322 = vadd.f32 %v3963, %v4226
        %v4323 = vadd.f32 %v3964, %v4229
        %v4324 = vadd.f32 %v3965, %v4234
        %v4325 = vadd.f32 %v3966, %v4237
        %v4326 = vadd.f32 %v3967, %v4242
        %v4327 = vadd.f32 %v3968, %v4245
        %v4328 = vadd.f32 %v3969, %v4250
        %v4329 = vadd.f32 %v3970, %v4253
        %v4330 = vadd.f32 %v3971, %v4258
        %v4331 = vadd.f32 %v3972, %v4261
        %v4332 = vadd.f32 %v3973, %v4266
        %v4333 = vadd.f32 %v3974, %v4269
        %v4334 = vadd.f32 %v3975, %v4274
        %v4335 = vadd.f32 %v3976, %v4277
        %v4336 = vadd.f32 %v3977, %v4282
        %v4337 = vadd.f32 %v3978, %v4285
        %v4338 = vadd.f32 %v3979, %v4290
        %v4339 = vadd.f32 %v3980, %v4293
        %v4340 = vadd.f32 %v3981, %v4298
        %v4341 = vadd.f32 %v3982, %v4301
        %v4342 = vadd.f32 %v3983, %v4306
        %v4343 = vadd.f32 %v3984, %v4309
        %v4344 = vld [vmem:[%s3985] sm:$0xf]
        %v4345 = vld [vmem:[%s3985 + $0x4] sm:$0xf]
        %v4346 = vld [vmem:[%s3985 + $0x8] sm:$0x1]
        %v4347 = vld [vmem:[%s3985 + $0xc] sm:$0xf]
        %v4348 = vld [vmem:[%s3985 + $0x10] sm:$0xf]
        %v4349 = vld [vmem:[%s3985 + $0x14] sm:$0x1]
        %v4350 = vld [vmem:[%s3985 + $0x18] sm:$0xf]
        %v4351 = vld [vmem:[%s3985 + $0x1c] sm:$0xf]
        %v4352 = vld [vmem:[%s3985 + $0x20] sm:$0x1]
        %v4353 = vld [vmem:[%s3985 + $0x24] sm:$0xf]
        %v4354 = vld [vmem:[%s3985 + $0x28] sm:$0xf]
        %v4355 = vld [vmem:[%s3985 + $0x2c] sm:$0x1]
        %v4356 = vld [vmem:[%s3985 + $0x30] sm:$0xf]
        %v4357 = vld [vmem:[%s3985 + $0x34] sm:$0xf]
        %v4358 = vld [vmem:[%s3985 + $0x38] sm:$0x1]
        %v4359 = vld [vmem:[%s3985 + $0x3c] sm:$0xf]
        %v4360 = vld [vmem:[%s3985 + $0x40] sm:$0xf]
        %v4361 = vld [vmem:[%s3985 + $0x44] sm:$0x1]
        %v4362 = vld [vmem:[%s3985 + $0x48] sm:$0xf]
        %v4363 = vld [vmem:[%s3985 + $0x4c] sm:$0xf]
        %v4364 = vld [vmem:[%s3985 + $0x50] sm:$0x1]
        %v4365 = vld [vmem:[%s3985 + $0x54] sm:$0xf]
        %v4366 = vld [vmem:[%s3985 + $0x58] sm:$0xf]
        %v4367 = vld [vmem:[%s3985 + $0x5c] sm:$0x1]
        %v4368 = vld [vmem:[%s3985 + $0x60] sm:$0xf]
        %v4369 = vld [vmem:[%s3985 + $0x64] sm:$0xf]
        %v4370 = vld [vmem:[%s3985 + $0x68] sm:$0x1]
        %v4371 = vld [vmem:[%s3985 + $0x6c] sm:$0xf]
        %v4372 = vld [vmem:[%s3985 + $0x70] sm:$0xf]
        %v4373 = vld [vmem:[%s3985 + $0x74] sm:$0x1]
        %v4374 = vld [vmem:[%s3985 + $0x78] sm:$0xf]
        %v4375 = vld [vmem:[%s3985 + $0x7c] sm:$0xf]
        %v4376 = vld [vmem:[%s3985 + $0x80] sm:$0x1]
        %v4377 = vld [vmem:[%s3985 + $0x84] sm:$0xf]
        %v4378 = vld [vmem:[%s3985 + $0x88] sm:$0xf]
        %v4379 = vld [vmem:[%s3985 + $0x8c] sm:$0x1]
        %v4380 = vld [vmem:[%s3985 + $0x90] sm:$0xf]
        %v4381 = vld [vmem:[%s3985 + $0x94] sm:$0xf]
        %v4382 = vld [vmem:[%s3985 + $0x98] sm:$0x1]
        %v4383 = vld [vmem:[%s3985 + $0x9c] sm:$0xf]
        %v4384 = vld [vmem:[%s3985 + $0xa0] sm:$0xf]
        %v4385 = vld [vmem:[%s3985 + $0xa4] sm:$0x1]
        %v4386 = vld [vmem:[%s3985 + $0xa8] sm:$0xf]
        %v4387 = vld [vmem:[%s3985 + $0xac] sm:$0xf]
        %v4388 = vld [vmem:[%s3985 + $0xb0] sm:$0x1]
        %v4389 = vld [vmem:[%s3985 + $0xb4] sm:$0xf]
        %v4390 = vld [vmem:[%s3985 + $0xb8] sm:$0xf]
        %v4391 = vld [vmem:[%s3985 + $0xbc] sm:$0x1]
        %v4393 = vshrl.u32 %v4344, 16
        %v4395 = vrot.slane %v4393, 4
        %v4396 = vshll.u32 %v4344, 16
        %v4398 = vrot.slane %v4396, 5
        %v4399 = vor.u32 %v4395, %v4398
        %v4400 = vrot.slane %v4399, 4
        %v4402 = vshll.u32 %v4345, 16
        %v4404 = vrot.slane %v4402, 5
        %v4405 = vsel %vm1030, %v4400, %v4404
        %v4406 = vshrl.u32 %v4345, 16
        %v4408 = vrot.slane %v4406, 4
        %v4409 = vor.u32 %v4408, %v4404
        %v4410 = vrot.slane %v4409, 4
        %v4412 = vshll.u32 %v4346, 16
        %v4414 = vrot.slane %v4412, 5
        %v4415 = vsel %vm1030, %v4410, %v4414
        %v4417 = vshrl.u32 %v4347, 16
        %v4419 = vrot.slane %v4417, 4
        %v4420 = vshll.u32 %v4347, 16
        %v4422 = vrot.slane %v4420, 5
        %v4423 = vor.u32 %v4419, %v4422
        %v4424 = vrot.slane %v4423, 4
        %v4426 = vshll.u32 %v4348, 16
        %v4428 = vrot.slane %v4426, 5
        %v4429 = vsel %vm1030, %v4424, %v4428
        %v4430 = vshrl.u32 %v4348, 16
        %v4432 = vrot.slane %v4430, 4
        %v4433 = vor.u32 %v4432, %v4428
        %v4434 = vrot.slane %v4433, 4
        %v4436 = vshll.u32 %v4349, 16
        %v4438 = vrot.slane %v4436, 5
        %v4439 = vsel %vm1030, %v4434, %v4438
        %v4441 = vshrl.u32 %v4350, 16
        %v4443 = vrot.slane %v4441, 4
        %v4444 = vshll.u32 %v4350, 16
        %v4446 = vrot.slane %v4444, 5
        %v4447 = vor.u32 %v4443, %v4446
        %v4448 = vrot.slane %v4447, 4
        %v4450 = vshll.u32 %v4351, 16
        %v4452 = vrot.slane %v4450, 5
        %v4453 = vsel %vm1030, %v4448, %v4452
        %v4454 = vshrl.u32 %v4351, 16
        %v4456 = vrot.slane %v4454, 4
        %v4457 = vor.u32 %v4456, %v4452
        %v4458 = vrot.slane %v4457, 4
        %v4460 = vshll.u32 %v4352, 16
        %v4462 = vrot.slane %v4460, 5
        %v4463 = vsel %vm1030, %v4458, %v4462
        %v4465 = vshrl.u32 %v4353, 16
        %v4467 = vrot.slane %v4465, 4
        %v4468 = vshll.u32 %v4353, 16
        %v4470 = vrot.slane %v4468, 5
        %v4471 = vor.u32 %v4467, %v4470
        %v4472 = vrot.slane %v4471, 4
        %v4474 = vshll.u32 %v4354, 16
        %v4476 = vrot.slane %v4474, 5
        %v4477 = vsel %vm1030, %v4472, %v4476
        %v4478 = vshrl.u32 %v4354, 16
        %v4480 = vrot.slane %v4478, 4
        %v4481 = vor.u32 %v4480, %v4476
        %v4482 = vrot.slane %v4481, 4
        %v4484 = vshll.u32 %v4355, 16
        %v4486 = vrot.slane %v4484, 5
        %v4487 = vsel %vm1030, %v4482, %v4486
        %v4489 = vshrl.u32 %v4356, 16
        %v4491 = vrot.slane %v4489, 4
        %v4492 = vshll.u32 %v4356, 16
        %v4494 = vrot.slane %v4492, 5
        %v4495 = vor.u32 %v4491, %v4494
        %v4496 = vrot.slane %v4495, 4
        %v4498 = vshll.u32 %v4357, 16
        %v4500 = vrot.slane %v4498, 5
        %v4501 = vsel %vm1030, %v4496, %v4500
        %v4502 = vshrl.u32 %v4357, 16
        %v4504 = vrot.slane %v4502, 4
        %v4505 = vor.u32 %v4504, %v4500
        %v4506 = vrot.slane %v4505, 4
        %v4508 = vshll.u32 %v4358, 16
        %v4510 = vrot.slane %v4508, 5
        %v4511 = vsel %vm1030, %v4506, %v4510
        %v4513 = vshrl.u32 %v4359, 16
        %v4515 = vrot.slane %v4513, 4
        %v4516 = vshll.u32 %v4359, 16
        %v4518 = vrot.slane %v4516, 5
        %v4519 = vor.u32 %v4515, %v4518
        %v4520 = vrot.slane %v4519, 4
        %v4522 = vshll.u32 %v4360, 16
        %v4524 = vrot.slane %v4522, 5
        %v4525 = vsel %vm1030, %v4520, %v4524
        %v4526 = vshrl.u32 %v4360, 16
        %v4528 = vrot.slane %v4526, 4
        %v4529 = vor.u32 %v4528, %v4524
        %v4530 = vrot.slane %v4529, 4
        %v4532 = vshll.u32 %v4361, 16
        %v4534 = vrot.slane %v4532, 5
        %v4535 = vsel %vm1030, %v4530, %v4534
        %v4537 = vshrl.u32 %v4362, 16
        %v4539 = vrot.slane %v4537, 4
        %v4540 = vshll.u32 %v4362, 16
        %v4542 = vrot.slane %v4540, 5
        %v4543 = vor.u32 %v4539, %v4542
        %v4544 = vrot.slane %v4543, 4
        %v4546 = vshll.u32 %v4363, 16
        %v4548 = vrot.slane %v4546, 5
        %v4549 = vsel %vm1030, %v4544, %v4548
        %v4550 = vshrl.u32 %v4363, 16
        %v4552 = vrot.slane %v4550, 4
        %v4553 = vor.u32 %v4552, %v4548
        %v4554 = vrot.slane %v4553, 4
        %v4556 = vshll.u32 %v4364, 16
        %v4558 = vrot.slane %v4556, 5
        %v4559 = vsel %vm1030, %v4554, %v4558
        %v4561 = vshrl.u32 %v4365, 16
        %v4563 = vrot.slane %v4561, 4
        %v4564 = vshll.u32 %v4365, 16
        %v4566 = vrot.slane %v4564, 5
        %v4567 = vor.u32 %v4563, %v4566
        %v4568 = vrot.slane %v4567, 4
        %v4570 = vshll.u32 %v4366, 16
        %v4572 = vrot.slane %v4570, 5
        %v4573 = vsel %vm1030, %v4568, %v4572
        %v4574 = vshrl.u32 %v4366, 16
        %v4576 = vrot.slane %v4574, 4
        %v4577 = vor.u32 %v4576, %v4572
        %v4578 = vrot.slane %v4577, 4
        %v4580 = vshll.u32 %v4367, 16
        %v4582 = vrot.slane %v4580, 5
        %v4583 = vsel %vm1030, %v4578, %v4582
        %v4585 = vshrl.u32 %v4368, 16
        %v4587 = vrot.slane %v4585, 4
        %v4588 = vshll.u32 %v4368, 16
        %v4590 = vrot.slane %v4588, 5
        %v4591 = vor.u32 %v4587, %v4590
        %v4592 = vrot.slane %v4591, 4
        %v4594 = vshll.u32 %v4369, 16
        %v4596 = vrot.slane %v4594, 5
        %v4597 = vsel %vm1030, %v4592, %v4596
        %v4598 = vshrl.u32 %v4369, 16
        %v4600 = vrot.slane %v4598, 4
        %v4601 = vor.u32 %v4600, %v4596
        %v4602 = vrot.slane %v4601, 4
        %v4604 = vshll.u32 %v4370, 16
        %v4606 = vrot.slane %v4604, 5
        %v4607 = vsel %vm1030, %v4602, %v4606
        %v4609 = vshrl.u32 %v4371, 16
        %v4611 = vrot.slane %v4609, 4
        %v4612 = vshll.u32 %v4371, 16
        %v4614 = vrot.slane %v4612, 5
        %v4615 = vor.u32 %v4611, %v4614
        %v4616 = vrot.slane %v4615, 4
        %v4618 = vshll.u32 %v4372, 16
        %v4620 = vrot.slane %v4618, 5
        %v4621 = vsel %vm1030, %v4616, %v4620
        %v4622 = vshrl.u32 %v4372, 16
        %v4624 = vrot.slane %v4622, 4
        %v4625 = vor.u32 %v4624, %v4620
        %v4626 = vrot.slane %v4625, 4
        %v4628 = vshll.u32 %v4373, 16
        %v4630 = vrot.slane %v4628, 5
        %v4631 = vsel %vm1030, %v4626, %v4630
        %v4633 = vshrl.u32 %v4374, 16
        %v4635 = vrot.slane %v4633, 4
        %v4636 = vshll.u32 %v4374, 16
        %v4638 = vrot.slane %v4636, 5
        %v4639 = vor.u32 %v4635, %v4638
        %v4640 = vrot.slane %v4639, 4
        %v4642 = vshll.u32 %v4375, 16
        %v4644 = vrot.slane %v4642, 5
        %v4645 = vsel %vm1030, %v4640, %v4644
        %v4646 = vshrl.u32 %v4375, 16
        %v4648 = vrot.slane %v4646, 4
        %v4649 = vor.u32 %v4648, %v4644
        %v4650 = vrot.slane %v4649, 4
        %v4652 = vshll.u32 %v4376, 16
        %v4654 = vrot.slane %v4652, 5
        %v4655 = vsel %vm1030, %v4650, %v4654
        %v4657 = vshrl.u32 %v4377, 16
        %v4659 = vrot.slane %v4657, 4
        %v4660 = vshll.u32 %v4377, 16
        %v4662 = vrot.slane %v4660, 5
        %v4663 = vor.u32 %v4659, %v4662
        %v4664 = vrot.slane %v4663, 4
        %v4666 = vshll.u32 %v4378, 16
        %v4668 = vrot.slane %v4666, 5
        %v4669 = vsel %vm1030, %v4664, %v4668
        %v4670 = vshrl.u32 %v4378, 16
        %v4672 = vrot.slane %v4670, 4
        %v4673 = vor.u32 %v4672, %v4668
        %v4674 = vrot.slane %v4673, 4
        %v4676 = vshll.u32 %v4379, 16
        %v4678 = vrot.slane %v4676, 5
        %v4679 = vsel %vm1030, %v4674, %v4678
        %v4681 = vshrl.u32 %v4380, 16
        %v4683 = vrot.slane %v4681, 4
        %v4684 = vshll.u32 %v4380, 16
        %v4686 = vrot.slane %v4684, 5
        %v4687 = vor.u32 %v4683, %v4686
        %v4688 = vrot.slane %v4687, 4
        %v4690 = vshll.u32 %v4381, 16
        %v4692 = vrot.slane %v4690, 5
        %v4693 = vsel %vm1030, %v4688, %v4692
        %v4694 = vshrl.u32 %v4381, 16
        %v4696 = vrot.slane %v4694, 4
        %v4697 = vor.u32 %v4696, %v4692
        %v4698 = vrot.slane %v4697, 4
        %v4700 = vshll.u32 %v4382, 16
        %v4702 = vrot.slane %v4700, 5
        %v4703 = vsel %vm1030, %v4698, %v4702
        %v4705 = vshrl.u32 %v4383, 16
        %v4707 = vrot.slane %v4705, 4
        %v4708 = vshll.u32 %v4383, 16
        %v4710 = vrot.slane %v4708, 5
        %v4711 = vor.u32 %v4707, %v4710
        %v4712 = vrot.slane %v4711, 4
        %v4714 = vshll.u32 %v4384, 16
        %v4716 = vrot.slane %v4714, 5
        %v4717 = vsel %vm1030, %v4712, %v4716
        %v4718 = vshrl.u32 %v4384, 16
        %v4720 = vrot.slane %v4718, 4
        %v4721 = vor.u32 %v4720, %v4716
        %v4722 = vrot.slane %v4721, 4
        %v4724 = vshll.u32 %v4385, 16
        %v4726 = vrot.slane %v4724, 5
        %v4727 = vsel %vm1030, %v4722, %v4726
        %v4729 = vshrl.u32 %v4386, 16
        %v4731 = vrot.slane %v4729, 4
        %v4732 = vshll.u32 %v4386, 16
        %v4734 = vrot.slane %v4732, 5
        %v4735 = vor.u32 %v4731, %v4734
        %v4736 = vrot.slane %v4735, 4
        %v4738 = vshll.u32 %v4387, 16
        %v4740 = vrot.slane %v4738, 5
        %v4741 = vsel %vm1030, %v4736, %v4740
        %v4742 = vshrl.u32 %v4387, 16
        %v4744 = vrot.slane %v4742, 4
        %v4745 = vor.u32 %v4744, %v4740
        %v4746 = vrot.slane %v4745, 4
        %v4748 = vshll.u32 %v4388, 16
        %v4750 = vrot.slane %v4748, 5
        %v4751 = vsel %vm1030, %v4746, %v4750
        %v4753 = vshrl.u32 %v4389, 16
        %v4755 = vrot.slane %v4753, 4
        %v4756 = vshll.u32 %v4389, 16
        %v4758 = vrot.slane %v4756, 5
        %v4759 = vor.u32 %v4755, %v4758
        %v4760 = vrot.slane %v4759, 4
        %v4762 = vshll.u32 %v4390, 16
        %v4764 = vrot.slane %v4762, 5
        %v4765 = vsel %vm1030, %v4760, %v4764
        %v4766 = vshrl.u32 %v4390, 16
        %v4768 = vrot.slane %v4766, 4
        %v4769 = vor.u32 %v4768, %v4764
        %v4770 = vrot.slane %v4769, 4
        %v4772 = vshll.u32 %v4391, 16
        %v4774 = vrot.slane %v4772, 5
        %v4775 = vsel %vm1030, %v4770, %v4774
        %s4776 = scalar_lea.vmem %s1, 14
        %v4777 = vld [vmem:[%s4776] sm:$0x3]
        %v4778 = vunpack.c.l.b16 %v4405
        %v4779 = vunpack.c.l.b16 %v4415
        %v4780 = vunpack.c.l.b16 %v4429
        %v4781 = vunpack.c.l.b16 %v4439
        %v4782 = vunpack.c.l.b16 %v4453
        %v4783 = vunpack.c.l.b16 %v4463
        %v4784 = vunpack.c.l.b16 %v4477
        %v4785 = vunpack.c.l.b16 %v4487
        %v4786 = vunpack.c.l.b16 %v4501
        %v4787 = vunpack.c.l.b16 %v4511
        %v4788 = vunpack.c.l.b16 %v4525
        %v4789 = vunpack.c.l.b16 %v4535
        %v4790 = vunpack.c.l.b16 %v4549
        %v4791 = vunpack.c.l.b16 %v4559
        %v4792 = vunpack.c.l.b16 %v4573
        %v4793 = vunpack.c.l.b16 %v4583
        %v4794 = vunpack.c.l.b16 %v4597
        %v4795 = vunpack.c.l.b16 %v4607
        %v4796 = vunpack.c.l.b16 %v4621
        %v4797 = vunpack.c.l.b16 %v4631
        %v4798 = vunpack.c.l.b16 %v4645
        %v4799 = vunpack.c.l.b16 %v4655
        %v4800 = vunpack.c.l.b16 %v4669
        %v4801 = vunpack.c.l.b16 %v4679
        %v4802 = vunpack.c.l.b16 %v4693
        %v4803 = vunpack.c.l.b16 %v4703
        %v4804 = vunpack.c.l.b16 %v4717
        %v4805 = vunpack.c.l.b16 %v4727
        %v4806 = vunpack.c.l.b16 %v4741
        %v4807 = vunpack.c.l.b16 %v4751
        %v4808 = vunpack.c.l.b16 %v4765
        %v4809 = vunpack.c.l.b16 %v4775
        %v4810 = vpack.c.b16 %v4779, %v4778
        %v4811 = vpack.c.b16 %v4781, %v4780
        %v4812 = vpack.c.b16 %v4783, %v4782
        %v4813 = vpack.c.b16 %v4785, %v4784
        %v4814 = vpack.c.b16 %v4787, %v4786
        %v4815 = vpack.c.b16 %v4789, %v4788
        %v4816 = vpack.c.b16 %v4791, %v4790
        %v4817 = vpack.c.b16 %v4793, %v4792
        %v4818 = vpack.c.b16 %v4795, %v4794
        %v4819 = vpack.c.b16 %v4797, %v4796
        %v4820 = vpack.c.b16 %v4799, %v4798
        %v4821 = vpack.c.b16 %v4801, %v4800
        %v4822 = vpack.c.b16 %v4803, %v4802
        %v4823 = vpack.c.b16 %v4805, %v4804
        %v4824 = vpack.c.b16 %v4807, %v4806
        %v4825 = vpack.c.b16 %v4809, %v4808
        %v4827 = vsel %vm1465, %v4810, 0
        %v4830 = vsel %vm1465, %v4811, 0
        %v4833 = vsel %vm1465, %v4812, 0
        %v4836 = vsel %vm1465, %v4813, 0
        %v4839 = vsel %vm1465, %v4814, 0
        %v4842 = vsel %vm1465, %v4815, 0
        %v4845 = vsel %vm1465, %v4816, 0
        %v4848 = vsel %vm1465, %v4817, 0
        %v4851 = vsel %vm1465, %v4818, 0
        %v4854 = vsel %vm1465, %v4819, 0
        %v4857 = vsel %vm1465, %v4820, 0
        %v4860 = vsel %vm1465, %v4821, 0
        %v4863 = vsel %vm1465, %v4822, 0
        %v4866 = vsel %vm1465, %v4823, 0
        %v4869 = vsel %vm1465, %v4824, 0
        %v4872 = vsel %vm1465, %v4825, 0
        %v4875 = vand.u32 %v4777, %v1517
        %4877 = vmatprep.subr.bf16.mxu0 0
        %4878 = vmatpush1.bf16.msra.mxu0 %v4875
        %4879 = vmatprep.subr.bf16.mxu0 0
        %4880 = vmatpush1.bf16.msra.mxu0 0
        %4881 = vmatprep.subr.bf16.mxu0 0
        %4882 = vmatpush1.bf16.msra.mxu0 0
        %4883 = vmatprep.subr.bf16.mxu0 0
        %4884 = vmatpush1.bf16.msra.mxu0 0
        %4885 = vmatprep.subr.bf16.mxu0 0
        %4886 = vmatpush1.bf16.msra.mxu0 0
        %4887 = vmatprep.subr.bf16.mxu0 0
        %4888 = vmatpush1.bf16.msra.mxu0 0
        %4889 = vmatprep.subr.bf16.mxu0 0
        %4890 = vmatpush1.bf16.msra.mxu0 0
        %4891 = vmatprep.subr.bf16.mxu0 0
        %4892 = vmatpush1.bf16.msra.mxu0 0
        %4893 = vmatprep.subr.bf16.mxu0 0
        %4894 = vmatpush1.bf16.msra.mxu0 0
        %4895 = vmatprep.subr.bf16.mxu0 0
        %4896 = vmatpush1.bf16.msra.mxu0 0
        %4897 = vmatprep.subr.bf16.mxu0 0
        %4898 = vmatpush1.bf16.msra.mxu0 0
        %4899 = vmatprep.subr.bf16.mxu0 0
        %4900 = vmatpush1.bf16.msra.mxu0 0
        %4901 = vmatprep.subr.bf16.mxu0 0
        %4902 = vmatpush1.bf16.msra.mxu0 0
        %4903 = vmatprep.subr.bf16.mxu0 0
        %4904 = vmatpush1.bf16.msra.mxu0 0
        %4905 = vmatprep.subr.bf16.mxu0 0
        %4906 = vmatpush1.bf16.msra.mxu0 0
        %4907 = vmatprep.subr.bf16.mxu0 0
        %4908 = vmatpush1.bf16.msra.mxu0 0
        %4909 = vmatprep.mubr.bf16.mxu0 0
        %4910 = vmatmul.mubr.bf16.gmra.mrb[0].mxu0 %v4827
        %v4911 = vpop.f32.mrb[0].mxu0
        %v4912 = vadd.f32 0.0, %v4911
        %v4913 = vpop.f32.mrb[0].mxu0
        %v4914 = vpop.f32.mrb[0].mxu0
        %v4915 = vadd.f32 0.0, %v4914
        %v4916 = vpop.f32.mrb[0].mxu0
        %4917 = vmatprep.mubr.bf16.mxu0 0
        %4918 = vmatmul.mubr.bf16.gmra.mrb[0].mxu0 %v4830
        %v4919 = vpop.f32.mrb[0].mxu0
        %v4920 = vadd.f32 0.0, %v4919
        %v4921 = vpop.f32.mrb[0].mxu0
        %v4922 = vpop.f32.mrb[0].mxu0
        %v4923 = vadd.f32 0.0, %v4922
        %v4924 = vpop.f32.mrb[0].mxu0
        %4925 = vmatprep.mubr.bf16.mxu0 0
        %4926 = vmatmul.mubr.bf16.gmra.mrb[0].mxu0 %v4833
        %v4927 = vpop.f32.mrb[0].mxu0
        %v4928 = vadd.f32 0.0, %v4927
        %v4929 = vpop.f32.mrb[0].mxu0
        %v4930 = vpop.f32.mrb[0].mxu0
        %v4931 = vadd.f32 0.0, %v4930
        %v4932 = vpop.f32.mrb[0].mxu0
        %4933 = vmatprep.mubr.bf16.mxu0 0
        %4934 = vmatmul.mubr.bf16.gmra.mrb[0].mxu0 %v4836
        %v4935 = vpop.f32.mrb[0].mxu0
        %v4936 = vadd.f32 0.0, %v4935
        %v4937 = vpop.f32.mrb[0].mxu0
        %v4938 = vpop.f32.mrb[0].mxu0
        %v4939 = vadd.f32 0.0, %v4938
        %v4940 = vpop.f32.mrb[0].mxu0
        %4941 = vmatprep.mubr.bf16.mxu0 0
        %4942 = vmatmul.mubr.bf16.gmra.mrb[0].mxu0 %v4839
        %v4943 = vpop.f32.mrb[0].mxu0
        %v4944 = vadd.f32 0.0, %v4943
        %v4945 = vpop.f32.mrb[0].mxu0
        %v4946 = vpop.f32.mrb[0].mxu0
        %v4947 = vadd.f32 0.0, %v4946
        %v4948 = vpop.f32.mrb[0].mxu0
        %4949 = vmatprep.mubr.bf16.mxu0 0
        %4950 = vmatmul.mubr.bf16.gmra.mrb[0].mxu0 %v4842
        %v4951 = vpop.f32.mrb[0].mxu0
        %v4952 = vadd.f32 0.0, %v4951
        %v4953 = vpop.f32.mrb[0].mxu0
        %v4954 = vpop.f32.mrb[0].mxu0
        %v4955 = vadd.f32 0.0, %v4954
        %v4956 = vpop.f32.mrb[0].mxu0
        %4957 = vmatprep.mubr.bf16.mxu0 0
        %4958 = vmatmul.mubr.bf16.gmra.mrb[0].mxu0 %v4845
        %v4959 = vpop.f32.mrb[0].mxu0
        %v4960 = vadd.f32 0.0, %v4959
        %v4961 = vpop.f32.mrb[0].mxu0
        %v4962 = vpop.f32.mrb[0].mxu0
        %v4963 = vadd.f32 0.0, %v4962
        %v4964 = vpop.f32.mrb[0].mxu0
        %4965 = vmatprep.mubr.bf16.mxu0 0
        %4966 = vmatmul.mubr.bf16.gmra.mrb[0].mxu0 %v4848
        %v4967 = vpop.f32.mrb[0].mxu0
        %v4968 = vadd.f32 0.0, %v4967
        %v4969 = vpop.f32.mrb[0].mxu0
        %v4970 = vpop.f32.mrb[0].mxu0
        %v4971 = vadd.f32 0.0, %v4970
        %v4972 = vpop.f32.mrb[0].mxu0
        %4973 = vmatprep.mubr.bf16.mxu0 0
        %4974 = vmatmul.mubr.bf16.gmra.mrb[0].mxu0 %v4851
        %v4975 = vpop.f32.mrb[0].mxu0
        %v4976 = vadd.f32 0.0, %v4975
        %v4977 = vpop.f32.mrb[0].mxu0
        %v4978 = vpop.f32.mrb[0].mxu0
        %v4979 = vadd.f32 0.0, %v4978
        %v4980 = vpop.f32.mrb[0].mxu0
        %4981 = vmatprep.mubr.bf16.mxu0 0
        %4982 = vmatmul.mubr.bf16.gmra.mrb[0].mxu0 %v4854
        %v4983 = vpop.f32.mrb[0].mxu0
        %v4984 = vadd.f32 0.0, %v4983
        %v4985 = vpop.f32.mrb[0].mxu0
        %v4986 = vpop.f32.mrb[0].mxu0
        %v4987 = vadd.f32 0.0, %v4986
        %v4988 = vpop.f32.mrb[0].mxu0
        %4989 = vmatprep.mubr.bf16.mxu0 0
        %4990 = vmatmul.mubr.bf16.gmra.mrb[0].mxu0 %v4857
        %v4991 = vpop.f32.mrb[0].mxu0
        %v4992 = vadd.f32 0.0, %v4991
        %v4993 = vpop.f32.mrb[0].mxu0
        %v4994 = vpop.f32.mrb[0].mxu0
        %v4995 = vadd.f32 0.0, %v4994
        %v4996 = vpop.f32.mrb[0].mxu0
        %4997 = vmatprep.mubr.bf16.mxu0 0
        %4998 = vmatmul.mubr.bf16.gmra.mrb[0].mxu0 %v4860
        %v4999 = vpop.f32.mrb[0].mxu0
        %v5000 = vadd.f32 0.0, %v4999
        %v5001 = vpop.f32.mrb[0].mxu0
        %v5002 = vpop.f32.mrb[0].mxu0
        %v5003 = vadd.f32 0.0, %v5002
        %v5004 = vpop.f32.mrb[0].mxu0
        %5005 = vmatprep.mubr.bf16.mxu0 0
        %5006 = vmatmul.mubr.bf16.gmra.mrb[0].mxu0 %v4863
        %v5007 = vpop.f32.mrb[0].mxu0
        %v5008 = vadd.f32 0.0, %v5007
        %v5009 = vpop.f32.mrb[0].mxu0
        %v5010 = vpop.f32.mrb[0].mxu0
        %v5011 = vadd.f32 0.0, %v5010
        %v5012 = vpop.f32.mrb[0].mxu0
        %5013 = vmatprep.mubr.bf16.mxu0 0
        %5014 = vmatmul.mubr.bf16.gmra.mrb[0].mxu0 %v4866
        %v5015 = vpop.f32.mrb[0].mxu0
        %v5016 = vadd.f32 0.0, %v5015
        %v5017 = vpop.f32.mrb[0].mxu0
        %v5018 = vpop.f32.mrb[0].mxu0
        %v5019 = vadd.f32 0.0, %v5018
        %v5020 = vpop.f32.mrb[0].mxu0
        %5021 = vmatprep.mubr.bf16.mxu0 0
        %5022 = vmatmul.mubr.bf16.gmra.mrb[0].mxu0 %v4869
        %v5023 = vpop.f32.mrb[0].mxu0
        %v5024 = vadd.f32 0.0, %v5023
        %v5025 = vpop.f32.mrb[0].mxu0
        %v5026 = vpop.f32.mrb[0].mxu0
        %v5027 = vadd.f32 0.0, %v5026
        %v5028 = vpop.f32.mrb[0].mxu0
        %5029 = vmatprep.mubr.bf16.mxu0 0
        %5030 = vmatmul.mubr.bf16.gmra.mrb[0].mxu0 %v4872
        %v5031 = vpop.f32.mrb[0].mxu0
        %v5032 = vadd.f32 0.0, %v5031
        %v5033 = vpop.f32.mrb[0].mxu0
        %v5034 = vpop.f32.mrb[0].mxu0
        %v5035 = vadd.f32 0.0, %v5034
        %v5036 = vpop.f32.mrb[0].mxu0
        %5037 = vdwg.mxu0
        %v5038 = vadd.f32 %v4312, %v4912
        %v5039 = vadd.f32 %v4313, %v4915
        %v5040 = vadd.f32 %v4314, %v4920
        %v5041 = vadd.f32 %v4315, %v4923
        %v5042 = vadd.f32 %v4316, %v4928
        %v5043 = vadd.f32 %v4317, %v4931
        %v5044 = vadd.f32 %v4318, %v4936
        %v5045 = vadd.f32 %v4319, %v4939
        %v5046 = vadd.f32 %v4320, %v4944
        %v5047 = vadd.f32 %v4321, %v4947
        %v5048 = vadd.f32 %v4322, %v4952
        %v5049 = vadd.f32 %v4323, %v4955
        %v5050 = vadd.f32 %v4324, %v4960
        %v5051 = vadd.f32 %v4325, %v4963
        %v5052 = vadd.f32 %v4326, %v4968
        %v5053 = vadd.f32 %v4327, %v4971
        %v5054 = vadd.f32 %v4328, %v4976
        %v5055 = vadd.f32 %v4329, %v4979
        %v5056 = vadd.f32 %v4330, %v4984
        %v5057 = vadd.f32 %v4331, %v4987
        %v5058 = vadd.f32 %v4332, %v4992
        %v5059 = vadd.f32 %v4333, %v4995
        %v5060 = vadd.f32 %v4334, %v5000
        %v5061 = vadd.f32 %v4335, %v5003
        %v5062 = vadd.f32 %v4336, %v5008
        %v5063 = vadd.f32 %v4337, %v5011
        %v5064 = vadd.f32 %v4338, %v5016
        %v5065 = vadd.f32 %v4339, %v5019
        %v5066 = vadd.f32 %v4340, %v5024
        %v5067 = vadd.f32 %v4341, %v5027
        %v5068 = vadd.f32 %v4342, %v5032
        %v5069 = vadd.f32 %v4343, %v5035
        %v5070 = vld [vmem:[%s3985] sm:$0xe]
        %v5071 = vld [vmem:[%s3985 + $0xc] sm:$0xe]
        %v5072 = vld [vmem:[%s3985 + $0x18] sm:$0xe]
        %v5073 = vld [vmem:[%s3985 + $0x24] sm:$0xe]
        %v5074 = vld [vmem:[%s3985 + $0x30] sm:$0xe]
        %v5075 = vld [vmem:[%s3985 + $0x3c] sm:$0xe]
        %v5076 = vld [vmem:[%s3985 + $0x48] sm:$0xe]
        %v5077 = vld [vmem:[%s3985 + $0x54] sm:$0xe]
        %v5078 = vld [vmem:[%s3985 + $0x60] sm:$0xe]
        %v5079 = vld [vmem:[%s3985 + $0x6c] sm:$0xe]
        %v5080 = vld [vmem:[%s3985 + $0x78] sm:$0xe]
        %v5081 = vld [vmem:[%s3985 + $0x84] sm:$0xe]
        %v5082 = vld [vmem:[%s3985 + $0x90] sm:$0xe]
        %v5083 = vld [vmem:[%s3985 + $0x9c] sm:$0xe]
        %v5084 = vld [vmem:[%s3985 + $0xa8] sm:$0xe]
        %v5085 = vld [vmem:[%s3985 + $0xb4] sm:$0xe]
        %v5134 = vrot.slane %v5070, 5
        %v5135 = vrot.slane %v5134, 4
        %v5136 = vrot.slane %v4345, 5
        %v5137 = vsel %vm2024, %v5135, %v5136
        %v5138 = vrot.slane %v5136, 4
        %v5139 = vrot.slane %v4346, 5
        %v5140 = vsel %vm2024, %v5138, %v5139
        %v5141 = vrot.slane %v5071, 5
        %v5142 = vrot.slane %v5141, 4
        %v5143 = vrot.slane %v4348, 5
        %v5144 = vsel %vm2024, %v5142, %v5143
        %v5145 = vrot.slane %v5143, 4
        %v5146 = vrot.slane %v4349, 5
        %v5147 = vsel %vm2024, %v5145, %v5146
        %v5148 = vrot.slane %v5072, 5
        %v5149 = vrot.slane %v5148, 4
        %v5150 = vrot.slane %v4351, 5
        %v5151 = vsel %vm2024, %v5149, %v5150
        %v5152 = vrot.slane %v5150, 4
        %v5153 = vrot.slane %v4352, 5
        %v5154 = vsel %vm2024, %v5152, %v5153
        %v5155 = vrot.slane %v5073, 5
        %v5156 = vrot.slane %v5155, 4
        %v5157 = vrot.slane %v4354, 5
        %v5158 = vsel %vm2024, %v5156, %v5157
        %v5159 = vrot.slane %v5157, 4
        %v5160 = vrot.slane %v4355, 5
        %v5161 = vsel %vm2024, %v5159, %v5160
        %v5162 = vrot.slane %v5074, 5
        %v5163 = vrot.slane %v5162, 4
        %v5164 = vrot.slane %v4357, 5
        %v5165 = vsel %vm2024, %v5163, %v5164
        %v5166 = vrot.slane %v5164, 4
        %v5167 = vrot.slane %v4358, 5
        %v5168 = vsel %vm2024, %v5166, %v5167
        %v5169 = vrot.slane %v5075, 5
        %v5170 = vrot.slane %v5169, 4
        %v5171 = vrot.slane %v4360, 5
        %v5172 = vsel %vm2024, %v5170, %v5171
        %v5173 = vrot.slane %v5171, 4
        %v5174 = vrot.slane %v4361, 5
        %v5175 = vsel %vm2024, %v5173, %v5174
        %v5176 = vrot.slane %v5076, 5
        %v5177 = vrot.slane %v5176, 4
        %v5178 = vrot.slane %v4363, 5
        %v5179 = vsel %vm2024, %v5177, %v5178
        %v5180 = vrot.slane %v5178, 4
        %v5181 = vrot.slane %v4364, 5
        %v5182 = vsel %vm2024, %v5180, %v5181
        %v5183 = vrot.slane %v5077, 5
        %v5184 = vrot.slane %v5183, 4
        %v5185 = vrot.slane %v4366, 5
        %v5186 = vsel %vm2024, %v5184, %v5185
        %v5187 = vrot.slane %v5185, 4
        %v5188 = vrot.slane %v4367, 5
        %v5189 = vsel %vm2024, %v5187, %v5188
        %v5190 = vrot.slane %v5078, 5
        %v5191 = vrot.slane %v5190, 4
        %v5192 = vrot.slane %v4369, 5
        %v5193 = vsel %vm2024, %v5191, %v5192
        %v5194 = vrot.slane %v5192, 4
        %v5195 = vrot.slane %v4370, 5
        %v5196 = vsel %vm2024, %v5194, %v5195
        %v5197 = vrot.slane %v5079, 5
        %v5198 = vrot.slane %v5197, 4
        %v5199 = vrot.slane %v4372, 5
        %v5200 = vsel %vm2024, %v5198, %v5199
        %v5201 = vrot.slane %v5199, 4
        %v5202 = vrot.slane %v4373, 5
        %v5203 = vsel %vm2024, %v5201, %v5202
        %v5204 = vrot.slane %v5080, 5
        %v5205 = vrot.slane %v5204, 4
        %v5206 = vrot.slane %v4375, 5
        %v5207 = vsel %vm2024, %v5205, %v5206
        %v5208 = vrot.slane %v5206, 4
        %v5209 = vrot.slane %v4376, 5
        %v5210 = vsel %vm2024, %v5208, %v5209
        %v5211 = vrot.slane %v5081, 5
        %v5212 = vrot.slane %v5211, 4
        %v5213 = vrot.slane %v4378, 5
        %v5214 = vsel %vm2024, %v5212, %v5213
        %v5215 = vrot.slane %v5213, 4
        %v5216 = vrot.slane %v4379, 5
        %v5217 = vsel %vm2024, %v5215, %v5216
        %v5218 = vrot.slane %v5082, 5
        %v5219 = vrot.slane %v5218, 4
        %v5220 = vrot.slane %v4381, 5
        %v5221 = vsel %vm2024, %v5219, %v5220
        %v5222 = vrot.slane %v5220, 4
        %v5223 = vrot.slane %v4382, 5
        %v5224 = vsel %vm2024, %v5222, %v5223
        %v5225 = vrot.slane %v5083, 5
        %v5226 = vrot.slane %v5225, 4
        %v5227 = vrot.slane %v4384, 5
        %v5228 = vsel %vm2024, %v5226, %v5227
        %v5229 = vrot.slane %v5227, 4
        %v5230 = vrot.slane %v4385, 5
        %v5231 = vsel %vm2024, %v5229, %v5230
        %v5232 = vrot.slane %v5084, 5
        %v5233 = vrot.slane %v5232, 4
        %v5234 = vrot.slane %v4387, 5
        %v5235 = vsel %vm2024, %v5233, %v5234
        %v5236 = vrot.slane %v5234, 4
        %v5237 = vrot.slane %v4388, 5
        %v5238 = vsel %vm2024, %v5236, %v5237
        %v5239 = vrot.slane %v5085, 5
        %v5240 = vrot.slane %v5239, 4
        %v5241 = vrot.slane %v4390, 5
        %v5242 = vsel %vm2024, %v5240, %v5241
        %v5243 = vrot.slane %v5241, 4
        %v5244 = vrot.slane %v4391, 5
        %v5245 = vsel %vm2024, %v5243, %v5244
        %s5246 = scalar_lea.vmem %s1, 16
        %v5247 = vld [vmem:[%s5246] sm:$0x3]
        %v5248 = vunpack.c.l.b16 %v5137
        %v5249 = vunpack.c.l.b16 %v5140
        %v5250 = vunpack.c.l.b16 %v5144
        %v5251 = vunpack.c.l.b16 %v5147
        %v5252 = vunpack.c.l.b16 %v5151
        %v5253 = vunpack.c.l.b16 %v5154
        %v5254 = vunpack.c.l.b16 %v5158
        %v5255 = vunpack.c.l.b16 %v5161
        %v5256 = vunpack.c.l.b16 %v5165
        %v5257 = vunpack.c.l.b16 %v5168
        %v5258 = vunpack.c.l.b16 %v5172
        %v5259 = vunpack.c.l.b16 %v5175
        %v5260 = vunpack.c.l.b16 %v5179
        %v5261 = vunpack.c.l.b16 %v5182
        %v5262 = vunpack.c.l.b16 %v5186
        %v5263 = vunpack.c.l.b16 %v5189
        %v5264 = vunpack.c.l.b16 %v5193
        %v5265 = vunpack.c.l.b16 %v5196
        %v5266 = vunpack.c.l.b16 %v5200
        %v5267 = vunpack.c.l.b16 %v5203
        %v5268 = vunpack.c.l.b16 %v5207
        %v5269 = vunpack.c.l.b16 %v5210
        %v5270 = vunpack.c.l.b16 %v5214
        %v5271 = vunpack.c.l.b16 %v5217
        %v5272 = vunpack.c.l.b16 %v5221
        %v5273 = vunpack.c.l.b16 %v5224
        %v5274 = vunpack.c.l.b16 %v5228
        %v5275 = vunpack.c.l.b16 %v5231
        %v5276 = vunpack.c.l.b16 %v5235
        %v5277 = vunpack.c.l.b16 %v5238
        %v5278 = vunpack.c.l.b16 %v5242
        %v5279 = vunpack.c.l.b16 %v5245
        %v5280 = vpack.c.b16 %v5249, %v5248
        %v5281 = vpack.c.b16 %v5251, %v5250
        %v5282 = vpack.c.b16 %v5253, %v5252
        %v5283 = vpack.c.b16 %v5255, %v5254
        %v5284 = vpack.c.b16 %v5257, %v5256
        %v5285 = vpack.c.b16 %v5259, %v5258
        %v5286 = vpack.c.b16 %v5261, %v5260
        %v5287 = vpack.c.b16 %v5263, %v5262
        %v5288 = vpack.c.b16 %v5265, %v5264
        %v5289 = vpack.c.b16 %v5267, %v5266
        %v5290 = vpack.c.b16 %v5269, %v5268
        %v5291 = vpack.c.b16 %v5271, %v5270
        %v5292 = vpack.c.b16 %v5273, %v5272
        %v5293 = vpack.c.b16 %v5275, %v5274
        %v5294 = vpack.c.b16 %v5277, %v5276
        %v5295 = vpack.c.b16 %v5279, %v5278
        %v5297 = vsel %vm1465, %v5280, 0
        %v5300 = vsel %vm1465, %v5281, 0
        %v5303 = vsel %vm1465, %v5282, 0
        %v5306 = vsel %vm1465, %v5283, 0
        %v5309 = vsel %vm1465, %v5284, 0
        %v5312 = vsel %vm1465, %v5285, 0
        %v5315 = vsel %vm1465, %v5286, 0
        %v5318 = vsel %vm1465, %v5287, 0
        %v5321 = vsel %vm1465, %v5288, 0
        %v5324 = vsel %vm1465, %v5289, 0
        %v5327 = vsel %vm1465, %v5290, 0
        %v5330 = vsel %vm1465, %v5291, 0
        %v5333 = vsel %vm1465, %v5292, 0
        %v5336 = vsel %vm1465, %v5293, 0
        %v5339 = vsel %vm1465, %v5294, 0
        %v5342 = vsel %vm1465, %v5295, 0
        %v5345 = vand.u32 %v5247, %v1517
        %5347 = vmatprep.subr.bf16.mxu0 0
        %5348 = vmatpush1.bf16.msra.mxu0 %v5345
        %5349 = vmatprep.subr.bf16.mxu0 0
        %5350 = vmatpush1.bf16.msra.mxu0 0
        %5351 = vmatprep.subr.bf16.mxu0 0
        %5352 = vmatpush1.bf16.msra.mxu0 0
        %5353 = vmatprep.subr.bf16.mxu0 0
        %5354 = vmatpush1.bf16.msra.mxu0 0
        %5355 = vmatprep.subr.bf16.mxu0 0
        %5356 = vmatpush1.bf16.msra.mxu0 0
        %5357 = vmatprep.subr.bf16.mxu0 0
        %5358 = vmatpush1.bf16.msra.mxu0 0
        %5359 = vmatprep.subr.bf16.mxu0 0
        %5360 = vmatpush1.bf16.msra.mxu0 0
        %5361 = vmatprep.subr.bf16.mxu0 0
        %5362 = vmatpush1.bf16.msra.mxu0 0
        %5363 = vmatprep.subr.bf16.mxu0 0
        %5364 = vmatpush1.bf16.msra.mxu0 0
        %5365 = vmatprep.subr.bf16.mxu0 0
        %5366 = vmatpush1.bf16.msra.mxu0 0
        %5367 = vmatprep.subr.bf16.mxu0 0
        %5368 = vmatpush1.bf16.msra.mxu0 0
        %5369 = vmatprep.subr.bf16.mxu0 0
        %5370 = vmatpush1.bf16.msra.mxu0 0
        %5371 = vmatprep.subr.bf16.mxu0 0
        %5372 = vmatpush1.bf16.msra.mxu0 0
        %5373 = vmatprep.subr.bf16.mxu0 0
        %5374 = vmatpush1.bf16.msra.mxu0 0
        %5375 = vmatprep.subr.bf16.mxu0 0
        %5376 = vmatpush1.bf16.msra.mxu0 0
        %5377 = vmatprep.subr.bf16.mxu0 0
        %5378 = vmatpush1.bf16.msra.mxu0 0
        %5379 = vmatprep.mubr.bf16.mxu0 0
        %5380 = vmatmul.mubr.bf16.gmra.mrb[0].mxu0 %v5297
        %v5381 = vpop.f32.mrb[0].mxu0
        %v5382 = vadd.f32 0.0, %v5381
        %v5383 = vpop.f32.mrb[0].mxu0
        %v5384 = vpop.f32.mrb[0].mxu0
        %v5385 = vadd.f32 0.0, %v5384
        %v5386 = vpop.f32.mrb[0].mxu0
        %5387 = vmatprep.mubr.bf16.mxu0 0
        %5388 = vmatmul.mubr.bf16.gmra.mrb[0].mxu0 %v5300
        %v5389 = vpop.f32.mrb[0].mxu0
        %v5390 = vadd.f32 0.0, %v5389
        %v5391 = vpop.f32.mrb[0].mxu0
        %v5392 = vpop.f32.mrb[0].mxu0
        %v5393 = vadd.f32 0.0, %v5392
        %v5394 = vpop.f32.mrb[0].mxu0
        %5395 = vmatprep.mubr.bf16.mxu0 0
        %5396 = vmatmul.mubr.bf16.gmra.mrb[0].mxu0 %v5303
        %v5397 = vpop.f32.mrb[0].mxu0
        %v5398 = vadd.f32 0.0, %v5397
        %v5399 = vpop.f32.mrb[0].mxu0
        %v5400 = vpop.f32.mrb[0].mxu0
        %v5401 = vadd.f32 0.0, %v5400
        %v5402 = vpop.f32.mrb[0].mxu0
        %5403 = vmatprep.mubr.bf16.mxu0 0
        %5404 = vmatmul.mubr.bf16.gmra.mrb[0].mxu0 %v5306
        %v5405 = vpop.f32.mrb[0].mxu0
        %v5406 = vadd.f32 0.0, %v5405
        %v5407 = vpop.f32.mrb[0].mxu0
        %v5408 = vpop.f32.mrb[0].mxu0
        %v5409 = vadd.f32 0.0, %v5408
        %v5410 = vpop.f32.mrb[0].mxu0
        %5411 = vmatprep.mubr.bf16.mxu0 0
        %5412 = vmatmul.mubr.bf16.gmra.mrb[0].mxu0 %v5309
        %v5413 = vpop.f32.mrb[0].mxu0
        %v5414 = vadd.f32 0.0, %v5413
        %v5415 = vpop.f32.mrb[0].mxu0
        %v5416 = vpop.f32.mrb[0].mxu0
        %v5417 = vadd.f32 0.0, %v5416
        %v5418 = vpop.f32.mrb[0].mxu0
        %5419 = vmatprep.mubr.bf16.mxu0 0
        %5420 = vmatmul.mubr.bf16.gmra.mrb[0].mxu0 %v5312
        %v5421 = vpop.f32.mrb[0].mxu0
        %v5422 = vadd.f32 0.0, %v5421
        %v5423 = vpop.f32.mrb[0].mxu0
        %v5424 = vpop.f32.mrb[0].mxu0
        %v5425 = vadd.f32 0.0, %v5424
        %v5426 = vpop.f32.mrb[0].mxu0
        %5427 = vmatprep.mubr.bf16.mxu0 0
        %5428 = vmatmul.mubr.bf16.gmra.mrb[0].mxu0 %v5315
        %v5429 = vpop.f32.mrb[0].mxu0
        %v5430 = vadd.f32 0.0, %v5429
        %v5431 = vpop.f32.mrb[0].mxu0
        %v5432 = vpop.f32.mrb[0].mxu0
        %v5433 = vadd.f32 0.0, %v5432
        %v5434 = vpop.f32.mrb[0].mxu0
        %5435 = vmatprep.mubr.bf16.mxu0 0
        %5436 = vmatmul.mubr.bf16.gmra.mrb[0].mxu0 %v5318
        %v5437 = vpop.f32.mrb[0].mxu0
        %v5438 = vadd.f32 0.0, %v5437
        %v5439 = vpop.f32.mrb[0].mxu0
        %v5440 = vpop.f32.mrb[0].mxu0
        %v5441 = vadd.f32 0.0, %v5440
        %v5442 = vpop.f32.mrb[0].mxu0
        %5443 = vmatprep.mubr.bf16.mxu0 0
        %5444 = vmatmul.mubr.bf16.gmra.mrb[0].mxu0 %v5321
        %v5445 = vpop.f32.mrb[0].mxu0
        %v5446 = vadd.f32 0.0, %v5445
        %v5447 = vpop.f32.mrb[0].mxu0
        %v5448 = vpop.f32.mrb[0].mxu0
        %v5449 = vadd.f32 0.0, %v5448
        %v5450 = vpop.f32.mrb[0].mxu0
        %5451 = vmatprep.mubr.bf16.mxu0 0
        %5452 = vmatmul.mubr.bf16.gmra.mrb[0].mxu0 %v5324
        %v5453 = vpop.f32.mrb[0].mxu0
        %v5454 = vadd.f32 0.0, %v5453
        %v5455 = vpop.f32.mrb[0].mxu0
        %v5456 = vpop.f32.mrb[0].mxu0
        %v5457 = vadd.f32 0.0, %v5456
        %v5458 = vpop.f32.mrb[0].mxu0
        %5459 = vmatprep.mubr.bf16.mxu0 0
        %5460 = vmatmul.mubr.bf16.gmra.mrb[0].mxu0 %v5327
        %v5461 = vpop.f32.mrb[0].mxu0
        %v5462 = vadd.f32 0.0, %v5461
        %v5463 = vpop.f32.mrb[0].mxu0
        %v5464 = vpop.f32.mrb[0].mxu0
        %v5465 = vadd.f32 0.0, %v5464
        %v5466 = vpop.f32.mrb[0].mxu0
        %5467 = vmatprep.mubr.bf16.mxu0 0
        %5468 = vmatmul.mubr.bf16.gmra.mrb[0].mxu0 %v5330
        %v5469 = vpop.f32.mrb[0].mxu0
        %v5470 = vadd.f32 0.0, %v5469
        %v5471 = vpop.f32.mrb[0].mxu0
        %v5472 = vpop.f32.mrb[0].mxu0
        %v5473 = vadd.f32 0.0, %v5472
        %v5474 = vpop.f32.mrb[0].mxu0
        %5475 = vmatprep.mubr.bf16.mxu0 0
        %5476 = vmatmul.mubr.bf16.gmra.mrb[0].mxu0 %v5333
        %v5477 = vpop.f32.mrb[0].mxu0
        %v5478 = vadd.f32 0.0, %v5477
        %v5479 = vpop.f32.mrb[0].mxu0
        %v5480 = vpop.f32.mrb[0].mxu0
        %v5481 = vadd.f32 0.0, %v5480
        %v5482 = vpop.f32.mrb[0].mxu0
        %5483 = vmatprep.mubr.bf16.mxu0 0
        %5484 = vmatmul.mubr.bf16.gmra.mrb[0].mxu0 %v5336
        %v5485 = vpop.f32.mrb[0].mxu0
        %v5486 = vadd.f32 0.0, %v5485
        %v5487 = vpop.f32.mrb[0].mxu0
        %v5488 = vpop.f32.mrb[0].mxu0
        %v5489 = vadd.f32 0.0, %v5488
        %v5490 = vpop.f32.mrb[0].mxu0
        %5491 = vmatprep.mubr.bf16.mxu0 0
        %5492 = vmatmul.mubr.bf16.gmra.mrb[0].mxu0 %v5339
        %v5493 = vpop.f32.mrb[0].mxu0
        %v5494 = vadd.f32 0.0, %v5493
        %v5495 = vpop.f32.mrb[0].mxu0
        %v5496 = vpop.f32.mrb[0].mxu0
        %v5497 = vadd.f32 0.0, %v5496
        %v5498 = vpop.f32.mrb[0].mxu0
        %5499 = vmatprep.mubr.bf16.mxu0 0
        %5500 = vmatmul.mubr.bf16.gmra.mrb[0].mxu0 %v5342
        %v5501 = vpop.f32.mrb[0].mxu0
        %v5502 = vadd.f32 0.0, %v5501
        %v5503 = vpop.f32.mrb[0].mxu0
        %v5504 = vpop.f32.mrb[0].mxu0
        %v5505 = vadd.f32 0.0, %v5504
        %v5506 = vpop.f32.mrb[0].mxu0
        %5507 = vdwg.mxu0
        %v5508 = vadd.f32 %v5038, %v5382
        %v5509 = vadd.f32 %v5039, %v5385
        %v5510 = vadd.f32 %v5040, %v5390
        %v5511 = vadd.f32 %v5041, %v5393
        %v5512 = vadd.f32 %v5042, %v5398
        %v5513 = vadd.f32 %v5043, %v5401
        %v5514 = vadd.f32 %v5044, %v5406
        %v5515 = vadd.f32 %v5045, %v5409
        %v5516 = vadd.f32 %v5046, %v5414
        %v5517 = vadd.f32 %v5047, %v5417
        %v5518 = vadd.f32 %v5048, %v5422
        %v5519 = vadd.f32 %v5049, %v5425
        %v5520 = vadd.f32 %v5050, %v5430
        %v5521 = vadd.f32 %v5051, %v5433
        %v5522 = vadd.f32 %v5052, %v5438
        %v5523 = vadd.f32 %v5053, %v5441
        %v5524 = vadd.f32 %v5054, %v5446
        %v5525 = vadd.f32 %v5055, %v5449
        %v5526 = vadd.f32 %v5056, %v5454
        %v5527 = vadd.f32 %v5057, %v5457
        %v5528 = vadd.f32 %v5058, %v5462
        %v5529 = vadd.f32 %v5059, %v5465
        %v5530 = vadd.f32 %v5060, %v5470
        %v5531 = vadd.f32 %v5061, %v5473
        %v5532 = vadd.f32 %v5062, %v5478
        %v5533 = vadd.f32 %v5063, %v5481
        %v5534 = vadd.f32 %v5064, %v5486
        %v5535 = vadd.f32 %v5065, %v5489
        %v5536 = vadd.f32 %v5066, %v5494
        %v5537 = vadd.f32 %v5067, %v5497
        %v5538 = vadd.f32 %v5068, %v5502
        %v5539 = vadd.f32 %v5069, %v5505
        %v5541 = vlaneseq
        %v5542 = vshrl.u32 %v5541, 7
        %v5543 = vsub.s32 0, %v5542
        %v5544 = vrot.slane %v224, %v5543
        %v5546 = vadd.f32 %v5508, %v5544
        %v5547 = vadd.f32 %v5509, %v5544
        %v5548 = vadd.f32 %v5510, %v5544
        %v5549 = vadd.f32 %v5511, %v5544
        %v5550 = vadd.f32 %v5512, %v5544
        %v5551 = vadd.f32 %v5513, %v5544
        %v5552 = vadd.f32 %v5514, %v5544
        %v5553 = vadd.f32 %v5515, %v5544
        %v5554 = vadd.f32 %v5516, %v5544
        %v5555 = vadd.f32 %v5517, %v5544
        %v5556 = vadd.f32 %v5518, %v5544
        %v5557 = vadd.f32 %v5519, %v5544
        %v5558 = vadd.f32 %v5520, %v5544
        %v5559 = vadd.f32 %v5521, %v5544
        %v5560 = vadd.f32 %v5522, %v5544
        %v5561 = vadd.f32 %v5523, %v5544
        %v5562 = vadd.f32 %v5524, %v5544
        %v5563 = vadd.f32 %v5525, %v5544
        %v5564 = vadd.f32 %v5526, %v5544
        %v5565 = vadd.f32 %v5527, %v5544
        %v5566 = vadd.f32 %v5528, %v5544
        %v5567 = vadd.f32 %v5529, %v5544
        %v5568 = vadd.f32 %v5530, %v5544
        %v5569 = vadd.f32 %v5531, %v5544
        %v5570 = vadd.f32 %v5532, %v5544
        %v5571 = vadd.f32 %v5533, %v5544
        %v5572 = vadd.f32 %v5534, %v5544
        %v5573 = vadd.f32 %v5535, %v5544
        %v5574 = vadd.f32 %v5536, %v5544
        %v5575 = vadd.f32 %v5537, %v5544
        %v5576 = vadd.f32 %v5538, %v5544
        %v5577 = vadd.f32 %v5539, %v5544
        %v5578 = vmax.f32 %v5546, 0.0
        %v5579 = vmax.f32 %v5547, 0.0
        %v5580 = vmax.f32 %v5548, 0.0
        %v5581 = vmax.f32 %v5549, 0.0
        %v5582 = vmax.f32 %v5550, 0.0
        %v5583 = vmax.f32 %v5551, 0.0
        %v5584 = vmax.f32 %v5552, 0.0
        %v5585 = vmax.f32 %v5553, 0.0
        %v5586 = vmax.f32 %v5554, 0.0
        %v5587 = vmax.f32 %v5555, 0.0
        %v5588 = vmax.f32 %v5556, 0.0
        %v5589 = vmax.f32 %v5557, 0.0
        %v5590 = vmax.f32 %v5558, 0.0
        %v5591 = vmax.f32 %v5559, 0.0
        %v5592 = vmax.f32 %v5560, 0.0
        %v5593 = vmax.f32 %v5561, 0.0
        %v5594 = vmax.f32 %v5562, 0.0
        %v5595 = vmax.f32 %v5563, 0.0
        %v5596 = vmax.f32 %v5564, 0.0
        %v5597 = vmax.f32 %v5565, 0.0
        %v5598 = vmax.f32 %v5566, 0.0
        %v5599 = vmax.f32 %v5567, 0.0
        %v5600 = vmax.f32 %v5568, 0.0
        %v5601 = vmax.f32 %v5569, 0.0
        %v5602 = vmax.f32 %v5570, 0.0
        %v5603 = vmax.f32 %v5571, 0.0
        %v5604 = vmax.f32 %v5572, 0.0
        %v5605 = vmax.f32 %v5573, 0.0
        %v5606 = vmax.f32 %v5574, 0.0
        %v5607 = vmax.f32 %v5575, 0.0
        %v5608 = vmax.f32 %v5576, 0.0
        %v5609 = vmax.f32 %v5577, 0.0
        %5610 = vst [vmem:[#allocation3] sm:$0xf] 0
        %5611 = vst [vmem:[#allocation3 + $0x4] sm:$0xf] 0
        %5612 = vst [vmem:[#allocation3 + $0x8] sm:$0x1] 0
        %5613 = vst [vmem:[#allocation3 + $0xc] sm:$0xf] 0
        %5614 = vst [vmem:[#allocation3 + $0x10] sm:$0xf] 0
        %5615 = vst [vmem:[#allocation3 + $0x14] sm:$0x1] 0
        %5616 = vst [vmem:[#allocation3 + $0x18] sm:$0xf] 0
        %5617 = vst [vmem:[#allocation3 + $0x1c] sm:$0xf] 0
        %5618 = vst [vmem:[#allocation3 + $0x20] sm:$0x1] 0
        %5619 = vst [vmem:[#allocation3 + $0x24] sm:$0xf] 0
        %5620 = vst [vmem:[#allocation3 + $0x28] sm:$0xf] 0
        %5621 = vst [vmem:[#allocation3 + $0x2c] sm:$0x1] 0
        %5622 = vst [vmem:[#allocation3 + $0x30] sm:$0xf] 0
        %5623 = vst [vmem:[#allocation3 + $0x34] sm:$0xf] 0
        %5624 = vst [vmem:[#allocation3 + $0x38] sm:$0x1] 0
        %5625 = vst [vmem:[#allocation3 + $0x3c] sm:$0xf] 0
        %5626 = vst [vmem:[#allocation3 + $0x40] sm:$0xf] 0
        %5627 = vst [vmem:[#allocation3 + $0x44] sm:$0x1] 0
        %5628 = vst [vmem:[#allocation3 + $0x48] sm:$0xf] 0
        %5629 = vst [vmem:[#allocation3 + $0x4c] sm:$0xf] 0
        %5630 = vst [vmem:[#allocation3 + $0x50] sm:$0x1] 0
        %5631 = vst [vmem:[#allocation3 + $0x54] sm:$0xf] 0
        %5632 = vst [vmem:[#allocation3 + $0x58] sm:$0xf] 0
        %5633 = vst [vmem:[#allocation3 + $0x5c] sm:$0x1] 0
        %5634 = vst [vmem:[#allocation3 + $0x60] sm:$0xf] 0
        %5635 = vst [vmem:[#allocation3 + $0x64] sm:$0xf] 0
        %5636 = vst [vmem:[#allocation3 + $0x68] sm:$0x1] 0
        %5637 = vst [vmem:[#allocation3 + $0x6c] sm:$0xf] 0
        %5638 = vst [vmem:[#allocation3 + $0x70] sm:$0xf] 0
        %5639 = vst [vmem:[#allocation3 + $0x74] sm:$0x1] 0
        %5640 = vst [vmem:[#allocation3 + $0x78] sm:$0xf] 0
        %5641 = vst [vmem:[#allocation3 + $0x7c] sm:$0xf] 0
        %5642 = vst [vmem:[#allocation3 + $0x80] sm:$0x1] 0
        %5643 = vst [vmem:[#allocation3 + $0x84] sm:$0xf] 0
        %5644 = vst [vmem:[#allocation3 + $0x88] sm:$0xf] 0
        %5645 = vst [vmem:[#allocation3 + $0x8c] sm:$0x1] 0
        %5646 = vst [vmem:[#allocation3 + $0x90] sm:$0xf] 0
        %5647 = vst [vmem:[#allocation3 + $0x94] sm:$0xf] 0
        %5648 = vst [vmem:[#allocation3 + $0x98] sm:$0x1] 0
        %5649 = vst [vmem:[#allocation3 + $0x9c] sm:$0xf] 0
        %5650 = vst [vmem:[#allocation3 + $0xa0] sm:$0xf] 0
        %5651 = vst [vmem:[#allocation3 + $0xa4] sm:$0x1] 0
        %5652 = vst [vmem:[#allocation3 + $0xa8] sm:$0xf] 0
        %5653 = vst [vmem:[#allocation3 + $0xac] sm:$0xf] 0
        %5654 = vst [vmem:[#allocation3 + $0xb0] sm:$0x1] 0
        %5655 = vst [vmem:[#allocation3 + $0xb4] sm:$0xf] 0
        %5656 = vst [vmem:[#allocation3 + $0xb8] sm:$0xf] 0
        %5657 = vst [vmem:[#allocation3 + $0xbc] sm:$0x1] 0
        %5658 = vst [vmem:[#allocation3 + $0xc0] sm:$0xf] 0
        %5659 = vst [vmem:[#allocation3 + $0xc4] sm:$0xf] 0
        %5660 = vst [vmem:[#allocation3 + $0xc8] sm:$0x1] 0
        %5661 = vst [vmem:[#allocation3 + $0xcc] sm:$0xf] 0
        %5662 = vst [vmem:[#allocation3 + $0xd0] sm:$0xf] 0
        %5663 = vst [vmem:[#allocation3 + $0xd4] sm:$0x1] 0
        %v5664 = vpack.c.bf16 %v5579, %v5578
        %v5665 = vpack.c.bf16 %v5581, %v5580
        %v5666 = vpack.c.bf16 %v5583, %v5582
        %v5667 = vpack.c.bf16 %v5585, %v5584
        %v5668 = vpack.c.bf16 %v5587, %v5586
        %v5669 = vpack.c.bf16 %v5589, %v5588
        %v5670 = vpack.c.bf16 %v5591, %v5590
        %v5671 = vpack.c.bf16 %v5593, %v5592
        %v5672 = vpack.c.bf16 %v5595, %v5594
        %v5673 = vpack.c.bf16 %v5597, %v5596
        %v5674 = vpack.c.bf16 %v5599, %v5598
        %v5675 = vpack.c.bf16 %v5601, %v5600
        %v5676 = vpack.c.bf16 %v5603, %v5602
        %v5677 = vpack.c.bf16 %v5605, %v5604
        %v5678 = vpack.c.bf16 %v5607, %v5606
        %v5679 = vpack.c.bf16 %v5609, %v5608
        %v5696 = vunpack.c.l.b16 %v5664
        %v5697 = vunpack.c.h.b16 %v5664
        %v5698 = vunpack.c.l.b16 %v5665
        %v5699 = vunpack.c.h.b16 %v5665
        %v5700 = vunpack.c.l.b16 %v5666
        %v5701 = vunpack.c.h.b16 %v5666
        %v5702 = vunpack.c.l.b16 %v5667
        %v5703 = vunpack.c.h.b16 %v5667
        %v5704 = vunpack.c.l.b16 %v5668
        %v5705 = vunpack.c.h.b16 %v5668
        %v5706 = vunpack.c.l.b16 %v5669
        %v5707 = vunpack.c.h.b16 %v5669
        %v5708 = vunpack.c.l.b16 %v5670
        %v5709 = vunpack.c.h.b16 %v5670
        %v5710 = vunpack.c.l.b16 %v5671
        %v5711 = vunpack.c.h.b16 %v5671
        %v5712 = vunpack.c.l.b16 %v5672
        %v5713 = vunpack.c.h.b16 %v5672
        %v5714 = vunpack.c.l.b16 %v5673
        %v5715 = vunpack.c.h.b16 %v5673
        %v5716 = vunpack.c.l.b16 %v5674
        %v5717 = vunpack.c.h.b16 %v5674
        %v5718 = vunpack.c.l.b16 %v5675
        %v5719 = vunpack.c.h.b16 %v5675
        %v5720 = vunpack.c.l.b16 %v5676
        %v5721 = vunpack.c.h.b16 %v5676
        %v5722 = vunpack.c.l.b16 %v5677
        %v5723 = vunpack.c.h.b16 %v5677
        %v5724 = vunpack.c.l.b16 %v5678
        %v5725 = vunpack.c.h.b16 %v5678
        %v5726 = vunpack.c.l.b16 %v5679
        %v5727 = vunpack.c.h.b16 %v5679
        %v5728 = vpack.c.b16 %v5696, %v5696
        %v5729 = vpack.c.b16 %v5697, %v5697
        %v5730 = vpack.c.b16 %v5698, %v5698
        %v5731 = vpack.c.b16 %v5699, %v5699
        %v5732 = vpack.c.b16 %v5700, %v5700
        %v5733 = vpack.c.b16 %v5701, %v5701
        %v5734 = vpack.c.b16 %v5702, %v5702
        %v5735 = vpack.c.b16 %v5703, %v5703
        %v5736 = vpack.c.b16 %v5704, %v5704
        %v5737 = vpack.c.b16 %v5705, %v5705
        %v5738 = vpack.c.b16 %v5706, %v5706
        %v5739 = vpack.c.b16 %v5707, %v5707
        %v5740 = vpack.c.b16 %v5708, %v5708
        %v5741 = vpack.c.b16 %v5709, %v5709
        %v5742 = vpack.c.b16 %v5710, %v5710
        %v5743 = vpack.c.b16 %v5711, %v5711
        %v5744 = vpack.c.b16 %v5712, %v5712
        %v5745 = vpack.c.b16 %v5713, %v5713
        %v5746 = vpack.c.b16 %v5714, %v5714
        %v5747 = vpack.c.b16 %v5715, %v5715
        %v5748 = vpack.c.b16 %v5716, %v5716
        %v5749 = vpack.c.b16 %v5717, %v5717
        %v5750 = vpack.c.b16 %v5718, %v5718
        %v5751 = vpack.c.b16 %v5719, %v5719
        %v5752 = vpack.c.b16 %v5720, %v5720
        %v5753 = vpack.c.b16 %v5721, %v5721
        %v5754 = vpack.c.b16 %v5722, %v5722
        %v5755 = vpack.c.b16 %v5723, %v5723
        %v5756 = vpack.c.b16 %v5724, %v5724
        %v5757 = vpack.c.b16 %v5725, %v5725
        %v5758 = vpack.c.b16 %v5726, %v5726
        %v5759 = vpack.c.b16 %v5727, %v5727
        %v5761 = vshrl.u32 %v5728, 16
        %v5763 = vrot.slane %v5761, 7
        %v5764 = vshll.u32 %v5728, 16
        %v5766 = vor.u32 %v5763, %v5764
        %v5767 = vrot.slane %v5763, 4
        %v5769 = vshrl.u32 %v5729, 16
        %v5771 = vrot.slane %v5769, 7
        %v5772 = vshll.u32 %v5729, 16
        %v5774 = vor.u32 %v5771, %v5772
        %v5775 = vsel %vm540, %v5767, %v5774
        %v5776 = vrot.slane %v5771, 4
        %v5778 = vshrl.u32 %v5730, 16
        %v5780 = vrot.slane %v5778, 7
        %v5781 = vshll.u32 %v5730, 16
        %v5783 = vor.u32 %v5780, %v5781
        %v5784 = vrot.slane %v5780, 4
        %v5786 = vshrl.u32 %v5731, 16
        %v5788 = vrot.slane %v5786, 7
        %v5789 = vshll.u32 %v5731, 16
        %v5791 = vor.u32 %v5788, %v5789
        %v5792 = vsel %vm540, %v5784, %v5791
        %v5793 = vrot.slane %v5788, 4
        %v5795 = vshrl.u32 %v5732, 16
        %v5797 = vrot.slane %v5795, 7
        %v5798 = vshll.u32 %v5732, 16
        %v5800 = vor.u32 %v5797, %v5798
        %v5801 = vrot.slane %v5797, 4
        %v5803 = vshrl.u32 %v5733, 16
        %v5805 = vrot.slane %v5803, 7
        %v5806 = vshll.u32 %v5733, 16
        %v5808 = vor.u32 %v5805, %v5806
        %v5809 = vsel %vm540, %v5801, %v5808
        %v5810 = vrot.slane %v5805, 4
        %v5812 = vshrl.u32 %v5734, 16
        %v5814 = vrot.slane %v5812, 7
        %v5815 = vshll.u32 %v5734, 16
        %v5817 = vor.u32 %v5814, %v5815
        %v5818 = vrot.slane %v5814, 4
        %v5820 = vshrl.u32 %v5735, 16
        %v5822 = vrot.slane %v5820, 7
        %v5823 = vshll.u32 %v5735, 16
        %v5825 = vor.u32 %v5822, %v5823
        %v5826 = vsel %vm540, %v5818, %v5825
        %v5827 = vrot.slane %v5822, 4
        %v5829 = vshrl.u32 %v5736, 16
        %v5831 = vrot.slane %v5829, 7
        %v5832 = vshll.u32 %v5736, 16
        %v5834 = vor.u32 %v5831, %v5832
        %v5835 = vrot.slane %v5831, 4
        %v5837 = vshrl.u32 %v5737, 16
        %v5839 = vrot.slane %v5837, 7
        %v5840 = vshll.u32 %v5737, 16
        %v5842 = vor.u32 %v5839, %v5840
        %v5843 = vsel %vm540, %v5835, %v5842
        %v5844 = vrot.slane %v5839, 4
        %v5846 = vshrl.u32 %v5738, 16
        %v5848 = vrot.slane %v5846, 7
        %v5849 = vshll.u32 %v5738, 16
        %v5851 = vor.u32 %v5848, %v5849
        %v5852 = vrot.slane %v5848, 4
        %v5854 = vshrl.u32 %v5739, 16
        %v5856 = vrot.slane %v5854, 7
        %v5857 = vshll.u32 %v5739, 16
        %v5859 = vor.u32 %v5856, %v5857
        %v5860 = vsel %vm540, %v5852, %v5859
        %v5861 = vrot.slane %v5856, 4
        %v5863 = vshrl.u32 %v5740, 16
        %v5865 = vrot.slane %v5863, 7
        %v5866 = vshll.u32 %v5740, 16
        %v5868 = vor.u32 %v5865, %v5866
        %v5869 = vrot.slane %v5865, 4
        %v5871 = vshrl.u32 %v5741, 16
        %v5873 = vrot.slane %v5871, 7
        %v5874 = vshll.u32 %v5741, 16
        %v5876 = vor.u32 %v5873, %v5874
        %v5877 = vsel %vm540, %v5869, %v5876
        %v5878 = vrot.slane %v5873, 4
        %v5880 = vshrl.u32 %v5742, 16
        %v5882 = vrot.slane %v5880, 7
        %v5883 = vshll.u32 %v5742, 16
        %v5885 = vor.u32 %v5882, %v5883
        %v5886 = vrot.slane %v5882, 4
        %v5888 = vshrl.u32 %v5743, 16
        %v5890 = vrot.slane %v5888, 7
        %v5891 = vshll.u32 %v5743, 16
        %v5893 = vor.u32 %v5890, %v5891
        %v5894 = vsel %vm540, %v5886, %v5893
        %v5895 = vrot.slane %v5890, 4
        %v5897 = vshrl.u32 %v5744, 16
        %v5899 = vrot.slane %v5897, 7
        %v5900 = vshll.u32 %v5744, 16
        %v5902 = vor.u32 %v5899, %v5900
        %v5903 = vrot.slane %v5899, 4
        %v5905 = vshrl.u32 %v5745, 16
        %v5907 = vrot.slane %v5905, 7
        %v5908 = vshll.u32 %v5745, 16
        %v5910 = vor.u32 %v5907, %v5908
        %v5911 = vsel %vm540, %v5903, %v5910
        %v5912 = vrot.slane %v5907, 4
        %v5914 = vshrl.u32 %v5746, 16
        %v5916 = vrot.slane %v5914, 7
        %v5917 = vshll.u32 %v5746, 16
        %v5919 = vor.u32 %v5916, %v5917
        %v5920 = vrot.slane %v5916, 4
        %v5922 = vshrl.u32 %v5747, 16
        %v5924 = vrot.slane %v5922, 7
        %v5925 = vshll.u32 %v5747, 16
        %v5927 = vor.u32 %v5924, %v5925
        %v5928 = vsel %vm540, %v5920, %v5927
        %v5929 = vrot.slane %v5924, 4
        %v5931 = vshrl.u32 %v5748, 16
        %v5933 = vrot.slane %v5931, 7
        %v5934 = vshll.u32 %v5748, 16
        %v5936 = vor.u32 %v5933, %v5934
        %v5937 = vrot.slane %v5933, 4
        %v5939 = vshrl.u32 %v5749, 16
        %v5941 = vrot.slane %v5939, 7
        %v5942 = vshll.u32 %v5749, 16
        %v5944 = vor.u32 %v5941, %v5942
        %v5945 = vsel %vm540, %v5937, %v5944
        %v5946 = vrot.slane %v5941, 4
        %v5948 = vshrl.u32 %v5750, 16
        %v5950 = vrot.slane %v5948, 7
        %v5951 = vshll.u32 %v5750, 16
        %v5953 = vor.u32 %v5950, %v5951
        %v5954 = vrot.slane %v5950, 4
        %v5956 = vshrl.u32 %v5751, 16
        %v5958 = vrot.slane %v5956, 7
        %v5959 = vshll.u32 %v5751, 16
        %v5961 = vor.u32 %v5958, %v5959
        %v5962 = vsel %vm540, %v5954, %v5961
        %v5963 = vrot.slane %v5958, 4
        %v5965 = vshrl.u32 %v5752, 16
        %v5967 = vrot.slane %v5965, 7
        %v5968 = vshll.u32 %v5752, 16
        %v5970 = vor.u32 %v5967, %v5968
        %v5971 = vrot.slane %v5967, 4
        %v5973 = vshrl.u32 %v5753, 16
        %v5975 = vrot.slane %v5973, 7
        %v5976 = vshll.u32 %v5753, 16
        %v5978 = vor.u32 %v5975, %v5976
        %v5979 = vsel %vm540, %v5971, %v5978
        %v5980 = vrot.slane %v5975, 4
        %v5982 = vshrl.u32 %v5754, 16
        %v5984 = vrot.slane %v5982, 7
        %v5985 = vshll.u32 %v5754, 16
        %v5987 = vor.u32 %v5984, %v5985
        %v5988 = vrot.slane %v5984, 4
        %v5990 = vshrl.u32 %v5755, 16
        %v5992 = vrot.slane %v5990, 7
        %v5993 = vshll.u32 %v5755, 16
        %v5995 = vor.u32 %v5992, %v5993
        %v5996 = vsel %vm540, %v5988, %v5995
        %v5997 = vrot.slane %v5992, 4
        %v5999 = vshrl.u32 %v5756, 16
        %v6001 = vrot.slane %v5999, 7
        %v6002 = vshll.u32 %v5756, 16
        %v6004 = vor.u32 %v6001, %v6002
        %v6005 = vrot.slane %v6001, 4
        %v6007 = vshrl.u32 %v5757, 16
        %v6009 = vrot.slane %v6007, 7
        %v6010 = vshll.u32 %v5757, 16
        %v6012 = vor.u32 %v6009, %v6010
        %v6013 = vsel %vm540, %v6005, %v6012
        %v6014 = vrot.slane %v6009, 4
        %v6016 = vshrl.u32 %v5758, 16
        %v6018 = vrot.slane %v6016, 7
        %v6019 = vshll.u32 %v5758, 16
        %v6021 = vor.u32 %v6018, %v6019
        %v6022 = vrot.slane %v6018, 4
        %v6024 = vshrl.u32 %v5759, 16
        %v6026 = vrot.slane %v6024, 7
        %v6027 = vshll.u32 %v5759, 16
        %v6029 = vor.u32 %v6026, %v6027
        %v6030 = vsel %vm540, %v6022, %v6029
        %v6031 = vrot.slane %v6026, 4
        %s6080 = scalar_lea.vmem [#allocation3], 12
        %vm6081 = vcmask 1043456
        %vm6082 = vmand %vm6081, %vm863
        %v6083 = vld [vmem:[%s6080] sm:$0xf]
        %v6084 = vsel %vm6082, %v5766, %v6083
        %6085 = vst [vmem:[%s6080] sm:$0xf] %v6084
        %6086 = vst [vmem:[%s6080 + $0x4] sm:$0xf] %v5775
        %vm6087 = vcmask 1040384
        %vm6088 = vmand %vm6087, %vm538
        %v6089 = vld [vmem:[%s6080 + $0x8] sm:$0x1]
        %v6090 = vsel %vm6088, %v5776, %v6089
        %6091 = vst [vmem:[%s6080 + $0x8] sm:$0x1] %v6090
        %v6092 = vld [vmem:[%s6080 + $0xc] sm:$0xf]
        %v6093 = vsel %vm6082, %v5783, %v6092
        %6094 = vst [vmem:[%s6080 + $0xc] sm:$0xf] %v6093
        %6095 = vst [vmem:[%s6080 + $0x10] sm:$0xf] %v5792
        %v6096 = vld [vmem:[%s6080 + $0x14] sm:$0x1]
        %v6097 = vsel %vm6088, %v5793, %v6096
        %6098 = vst [vmem:[%s6080 + $0x14] sm:$0x1] %v6097
        %v6099 = vld [vmem:[%s6080 + $0x18] sm:$0xf]
        %v6100 = vsel %vm6082, %v5800, %v6099
        %6101 = vst [vmem:[%s6080 + $0x18] sm:$0xf] %v6100
        %6102 = vst [vmem:[%s6080 + $0x1c] sm:$0xf] %v5809
        %v6103 = vld [vmem:[%s6080 + $0x20] sm:$0x1]
        %v6104 = vsel %vm6088, %v5810, %v6103
        %6105 = vst [vmem:[%s6080 + $0x20] sm:$0x1] %v6104
        %v6106 = vld [vmem:[%s6080 + $0x24] sm:$0xf]
        %v6107 = vsel %vm6082, %v5817, %v6106
        %6108 = vst [vmem:[%s6080 + $0x24] sm:$0xf] %v6107
        %6109 = vst [vmem:[%s6080 + $0x28] sm:$0xf] %v5826
        %v6110 = vld [vmem:[%s6080 + $0x2c] sm:$0x1]
        %v6111 = vsel %vm6088, %v5827, %v6110
        %6112 = vst [vmem:[%s6080 + $0x2c] sm:$0x1] %v6111
        %v6113 = vld [vmem:[%s6080 + $0x30] sm:$0xf]
        %v6114 = vsel %vm6082, %v5834, %v6113
        %6115 = vst [vmem:[%s6080 + $0x30] sm:$0xf] %v6114
        %6116 = vst [vmem:[%s6080 + $0x34] sm:$0xf] %v5843
        %v6117 = vld [vmem:[%s6080 + $0x38] sm:$0x1]
        %v6118 = vsel %vm6088, %v5844, %v6117
        %6119 = vst [vmem:[%s6080 + $0x38] sm:$0x1] %v6118
        %v6120 = vld [vmem:[%s6080 + $0x3c] sm:$0xf]
        %v6121 = vsel %vm6082, %v5851, %v6120
        %6122 = vst [vmem:[%s6080 + $0x3c] sm:$0xf] %v6121
        %6123 = vst [vmem:[%s6080 + $0x40] sm:$0xf] %v5860
        %v6124 = vld [vmem:[%s6080 + $0x44] sm:$0x1]
        %v6125 = vsel %vm6088, %v5861, %v6124
        %6126 = vst [vmem:[%s6080 + $0x44] sm:$0x1] %v6125
        %v6127 = vld [vmem:[%s6080 + $0x48] sm:$0xf]
        %v6128 = vsel %vm6082, %v5868, %v6127
        %6129 = vst [vmem:[%s6080 + $0x48] sm:$0xf] %v6128
        %6130 = vst [vmem:[%s6080 + $0x4c] sm:$0xf] %v5877
        %v6131 = vld [vmem:[%s6080 + $0x50] sm:$0x1]
        %v6132 = vsel %vm6088, %v5878, %v6131
        %6133 = vst [vmem:[%s6080 + $0x50] sm:$0x1] %v6132
        %v6134 = vld [vmem:[%s6080 + $0x54] sm:$0xf]
        %v6135 = vsel %vm6082, %v5885, %v6134
        %6136 = vst [vmem:[%s6080 + $0x54] sm:$0xf] %v6135
        %6137 = vst [vmem:[%s6080 + $0x58] sm:$0xf] %v5894
        %v6138 = vld [vmem:[%s6080 + $0x5c] sm:$0x1]
        %v6139 = vsel %vm6088, %v5895, %v6138
        %6140 = vst [vmem:[%s6080 + $0x5c] sm:$0x1] %v6139
        %v6141 = vld [vmem:[%s6080 + $0x60] sm:$0xf]
        %v6142 = vsel %vm6082, %v5902, %v6141
        %6143 = vst [vmem:[%s6080 + $0x60] sm:$0xf] %v6142
        %6144 = vst [vmem:[%s6080 + $0x64] sm:$0xf] %v5911
        %v6145 = vld [vmem:[%s6080 + $0x68] sm:$0x1]
        %v6146 = vsel %vm6088, %v5912, %v6145
        %6147 = vst [vmem:[%s6080 + $0x68] sm:$0x1] %v6146
        %v6148 = vld [vmem:[%s6080 + $0x6c] sm:$0xf]
        %v6149 = vsel %vm6082, %v5919, %v6148
        %6150 = vst [vmem:[%s6080 + $0x6c] sm:$0xf] %v6149
        %6151 = vst [vmem:[%s6080 + $0x70] sm:$0xf] %v5928
        %v6152 = vld [vmem:[%s6080 + $0x74] sm:$0x1]
        %v6153 = vsel %vm6088, %v5929, %v6152
        %6154 = vst [vmem:[%s6080 + $0x74] sm:$0x1] %v6153
        %v6155 = vld [vmem:[%s6080 + $0x78] sm:$0xf]
        %v6156 = vsel %vm6082, %v5936, %v6155
        %6157 = vst [vmem:[%s6080 + $0x78] sm:$0xf] %v6156
        %6158 = vst [vmem:[%s6080 + $0x7c] sm:$0xf] %v5945
        %v6159 = vld [vmem:[%s6080 + $0x80] sm:$0x1]
        %v6160 = vsel %vm6088, %v5946, %v6159
        %6161 = vst [vmem:[%s6080 + $0x80] sm:$0x1] %v6160
        %v6162 = vld [vmem:[%s6080 + $0x84] sm:$0xf]
        %v6163 = vsel %vm6082, %v5953, %v6162
        %6164 = vst [vmem:[%s6080 + $0x84] sm:$0xf] %v6163
        %6165 = vst [vmem:[%s6080 + $0x88] sm:$0xf] %v5962
        %v6166 = vld [vmem:[%s6080 + $0x8c] sm:$0x1]
        %v6167 = vsel %vm6088, %v5963, %v6166
        %6168 = vst [vmem:[%s6080 + $0x8c] sm:$0x1] %v6167
        %v6169 = vld [vmem:[%s6080 + $0x90] sm:$0xf]
        %v6170 = vsel %vm6082, %v5970, %v6169
        %6171 = vst [vmem:[%s6080 + $0x90] sm:$0xf] %v6170
        %6172 = vst [vmem:[%s6080 + $0x94] sm:$0xf] %v5979
        %v6173 = vld [vmem:[%s6080 + $0x98] sm:$0x1]
        %v6174 = vsel %vm6088, %v5980, %v6173
        %6175 = vst [vmem:[%s6080 + $0x98] sm:$0x1] %v6174
        %v6176 = vld [vmem:[%s6080 + $0x9c] sm:$0xf]
        %v6177 = vsel %vm6082, %v5987, %v6176
        %6178 = vst [vmem:[%s6080 + $0x9c] sm:$0xf] %v6177
        %6179 = vst [vmem:[%s6080 + $0xa0] sm:$0xf] %v5996
        %v6180 = vld [vmem:[%s6080 + $0xa4] sm:$0x1]
        %v6181 = vsel %vm6088, %v5997, %v6180
        %6182 = vst [vmem:[%s6080 + $0xa4] sm:$0x1] %v6181
        %v6183 = vld [vmem:[%s6080 + $0xa8] sm:$0xf]
        %v6184 = vsel %vm6082, %v6004, %v6183
        %6185 = vst [vmem:[%s6080 + $0xa8] sm:$0xf] %v6184
        %6186 = vst [vmem:[%s6080 + $0xac] sm:$0xf] %v6013
        %v6187 = vld [vmem:[%s6080 + $0xb0] sm:$0x1]
        %v6188 = vsel %vm6088, %v6014, %v6187
        %6189 = vst [vmem:[%s6080 + $0xb0] sm:$0x1] %v6188
        %v6190 = vld [vmem:[%s6080 + $0xb4] sm:$0xf]
        %v6191 = vsel %vm6082, %v6021, %v6190
        %6192 = vst [vmem:[%s6080 + $0xb4] sm:$0xf] %v6191
        %6193 = vst [vmem:[%s6080 + $0xb8] sm:$0xf] %v6030
        %v6194 = vld [vmem:[%s6080 + $0xbc] sm:$0x1]
        %v6195 = vsel %vm6088, %v6031, %v6194
        %6196 = vst [vmem:[%s6080 + $0xbc] sm:$0x1] %v6195
        %v6197 = vld [vmem:[#allocation3] sm:$0xf]
        %v6198 = vld [vmem:[#allocation3 + $0x4] sm:$0xf]
        %v6199 = vld [vmem:[#allocation3 + $0xc] sm:$0xf]
        %v6200 = vld [vmem:[#allocation3 + $0x10] sm:$0xf]
        %v6201 = vld [vmem:[#allocation3 + $0x18] sm:$0xf]
        %v6202 = vld [vmem:[#allocation3 + $0x1c] sm:$0xf]
        %v6203 = vld [vmem:[#allocation3 + $0x24] sm:$0xf]
        %v6204 = vld [vmem:[#allocation3 + $0x28] sm:$0xf]
        %v6205 = vld [vmem:[#allocation3 + $0x30] sm:$0xf]
        %v6206 = vld [vmem:[#allocation3 + $0x34] sm:$0xf]
        %v6207 = vld [vmem:[#allocation3 + $0x3c] sm:$0xf]
        %v6208 = vld [vmem:[#allocation3 + $0x40] sm:$0xf]
        %v6209 = vld [vmem:[#allocation3 + $0x48] sm:$0xf]
        %v6210 = vld [vmem:[#allocation3 + $0x4c] sm:$0xf]
        %v6211 = vld [vmem:[#allocation3 + $0x54] sm:$0xf]
        %v6212 = vld [vmem:[#allocation3 + $0x58] sm:$0xf]
        %v6213 = vld [vmem:[#allocation3 + $0x60] sm:$0xf]
        %v6214 = vld [vmem:[#allocation3 + $0x64] sm:$0xf]
        %v6215 = vld [vmem:[#allocation3 + $0x6c] sm:$0xf]
        %v6216 = vld [vmem:[#allocation3 + $0x70] sm:$0xf]
        %v6217 = vld [vmem:[#allocation3 + $0x78] sm:$0xf]
        %v6218 = vld [vmem:[#allocation3 + $0x7c] sm:$0xf]
        %v6219 = vld [vmem:[#allocation3 + $0x84] sm:$0xf]
        %v6220 = vld [vmem:[#allocation3 + $0x88] sm:$0xf]
        %v6221 = vld [vmem:[#allocation3 + $0x90] sm:$0xf]
        %v6222 = vld [vmem:[#allocation3 + $0x94] sm:$0xf]
        %v6223 = vld [vmem:[#allocation3 + $0x9c] sm:$0xf]
        %v6224 = vld [vmem:[#allocation3 + $0xa0] sm:$0xf]
        %v6225 = vld [vmem:[#allocation3 + $0xa8] sm:$0xf]
        %v6226 = vld [vmem:[#allocation3 + $0xac] sm:$0xf]
        %v6227 = vld [vmem:[#allocation3 + $0xb4] sm:$0xf]
        %v6228 = vld [vmem:[#allocation3 + $0xb8] sm:$0xf]
        %v6229 = vld [vmem:[#allocation3 + $0x8] sm:$0x1]
        %v6230 = vld [vmem:[#allocation3 + $0x14] sm:$0x1]
        %v6231 = vld [vmem:[#allocation3 + $0x20] sm:$0x1]
        %v6232 = vld [vmem:[#allocation3 + $0x2c] sm:$0x1]
        %v6233 = vld [vmem:[#allocation3 + $0x38] sm:$0x1]
        %v6234 = vld [vmem:[#allocation3 + $0x44] sm:$0x1]
        %v6235 = vld [vmem:[#allocation3 + $0x50] sm:$0x1]
        %v6236 = vld [vmem:[#allocation3 + $0x5c] sm:$0x1]
        %v6237 = vld [vmem:[#allocation3 + $0x68] sm:$0x1]
        %v6238 = vld [vmem:[#allocation3 + $0x74] sm:$0x1]
        %v6239 = vld [vmem:[#allocation3 + $0x80] sm:$0x1]
        %v6240 = vld [vmem:[#allocation3 + $0x8c] sm:$0x1]
        %v6241 = vld [vmem:[#allocation3 + $0x98] sm:$0x1]
        %v6242 = vld [vmem:[#allocation3 + $0xa4] sm:$0x1]
        %v6243 = vld [vmem:[#allocation3 + $0xb0] sm:$0x1]
        %v6244 = vld [vmem:[#allocation3 + $0xbc] sm:$0x1]
        %v6246 = vshrl.u32 %v6197, 16
        %v6248 = vrot.slane %v6246, 4
        %v6249 = vshll.u32 %v6197, 16
        %v6251 = vrot.slane %v6249, 5
        %v6252 = vor.u32 %v6248, %v6251
        %v6253 = vrot.slane %v6252, 4
        %v6255 = vshll.u32 %v6198, 16
        %v6257 = vrot.slane %v6255, 5
        %v6258 = vsel %vm1030, %v6253, %v6257
        %v6259 = vshrl.u32 %v6198, 16
        %v6261 = vrot.slane %v6259, 4
        %v6262 = vor.u32 %v6261, %v6257
        %v6263 = vrot.slane %v6262, 4
        %v6265 = vshll.u32 %v6229, 16
        %v6267 = vrot.slane %v6265, 5
        %v6268 = vsel %vm1030, %v6263, %v6267
        %v6270 = vshrl.u32 %v6199, 16
        %v6272 = vrot.slane %v6270, 4
        %v6273 = vshll.u32 %v6199, 16
        %v6275 = vrot.slane %v6273, 5
        %v6276 = vor.u32 %v6272, %v6275
        %v6277 = vrot.slane %v6276, 4
        %v6279 = vshll.u32 %v6200, 16
        %v6281 = vrot.slane %v6279, 5
        %v6282 = vsel %vm1030, %v6277, %v6281
        %v6283 = vshrl.u32 %v6200, 16
        %v6285 = vrot.slane %v6283, 4
        %v6286 = vor.u32 %v6285, %v6281
        %v6287 = vrot.slane %v6286, 4
        %v6289 = vshll.u32 %v6230, 16
        %v6291 = vrot.slane %v6289, 5
        %v6292 = vsel %vm1030, %v6287, %v6291
        %v6294 = vshrl.u32 %v6201, 16
        %v6296 = vrot.slane %v6294, 4
        %v6297 = vshll.u32 %v6201, 16
        %v6299 = vrot.slane %v6297, 5
        %v6300 = vor.u32 %v6296, %v6299
        %v6301 = vrot.slane %v6300, 4
        %v6303 = vshll.u32 %v6202, 16
        %v6305 = vrot.slane %v6303, 5
        %v6306 = vsel %vm1030, %v6301, %v6305
        %v6307 = vshrl.u32 %v6202, 16
        %v6309 = vrot.slane %v6307, 4
        %v6310 = vor.u32 %v6309, %v6305
        %v6311 = vrot.slane %v6310, 4
        %v6313 = vshll.u32 %v6231, 16
        %v6315 = vrot.slane %v6313, 5
        %v6316 = vsel %vm1030, %v6311, %v6315
        %v6318 = vshrl.u32 %v6203, 16
        %v6320 = vrot.slane %v6318, 4
        %v6321 = vshll.u32 %v6203, 16
        %v6323 = vrot.slane %v6321, 5
        %v6324 = vor.u32 %v6320, %v6323
        %v6325 = vrot.slane %v6324, 4
        %v6327 = vshll.u32 %v6204, 16
        %v6329 = vrot.slane %v6327, 5
        %v6330 = vsel %vm1030, %v6325, %v6329
        %v6331 = vshrl.u32 %v6204, 16
        %v6333 = vrot.slane %v6331, 4
        %v6334 = vor.u32 %v6333, %v6329
        %v6335 = vrot.slane %v6334, 4
        %v6337 = vshll.u32 %v6232, 16
        %v6339 = vrot.slane %v6337, 5
        %v6340 = vsel %vm1030, %v6335, %v6339
        %v6342 = vshrl.u32 %v6205, 16
        %v6344 = vrot.slane %v6342, 4
        %v6345 = vshll.u32 %v6205, 16
        %v6347 = vrot.slane %v6345, 5
        %v6348 = vor.u32 %v6344, %v6347
        %v6349 = vrot.slane %v6348, 4
        %v6351 = vshll.u32 %v6206, 16
        %v6353 = vrot.slane %v6351, 5
        %v6354 = vsel %vm1030, %v6349, %v6353
        %v6355 = vshrl.u32 %v6206, 16
        %v6357 = vrot.slane %v6355, 4
        %v6358 = vor.u32 %v6357, %v6353
        %v6359 = vrot.slane %v6358, 4
        %v6361 = vshll.u32 %v6233, 16
        %v6363 = vrot.slane %v6361, 5
        %v6364 = vsel %vm1030, %v6359, %v6363
        %v6366 = vshrl.u32 %v6207, 16
        %v6368 = vrot.slane %v6366, 4
        %v6369 = vshll.u32 %v6207, 16
        %v6371 = vrot.slane %v6369, 5
        %v6372 = vor.u32 %v6368, %v6371
        %v6373 = vrot.slane %v6372, 4
        %v6375 = vshll.u32 %v6208, 16
        %v6377 = vrot.slane %v6375, 5
        %v6378 = vsel %vm1030, %v6373, %v6377
        %v6379 = vshrl.u32 %v6208, 16
        %v6381 = vrot.slane %v6379, 4
        %v6382 = vor.u32 %v6381, %v6377
        %v6383 = vrot.slane %v6382, 4
        %v6385 = vshll.u32 %v6234, 16
        %v6387 = vrot.slane %v6385, 5
        %v6388 = vsel %vm1030, %v6383, %v6387
        %v6390 = vshrl.u32 %v6209, 16
        %v6392 = vrot.slane %v6390, 4
        %v6393 = vshll.u32 %v6209, 16
        %v6395 = vrot.slane %v6393, 5
        %v6396 = vor.u32 %v6392, %v6395
        %v6397 = vrot.slane %v6396, 4
        %v6399 = vshll.u32 %v6210, 16
        %v6401 = vrot.slane %v6399, 5
        %v6402 = vsel %vm1030, %v6397, %v6401
        %v6403 = vshrl.u32 %v6210, 16
        %v6405 = vrot.slane %v6403, 4
        %v6406 = vor.u32 %v6405, %v6401
        %v6407 = vrot.slane %v6406, 4
        %v6409 = vshll.u32 %v6235, 16
        %v6411 = vrot.slane %v6409, 5
        %v6412 = vsel %vm1030, %v6407, %v6411
        %v6414 = vshrl.u32 %v6211, 16
        %v6416 = vrot.slane %v6414, 4
        %v6417 = vshll.u32 %v6211, 16
        %v6419 = vrot.slane %v6417, 5
        %v6420 = vor.u32 %v6416, %v6419
        %v6421 = vrot.slane %v6420, 4
        %v6423 = vshll.u32 %v6212, 16
        %v6425 = vrot.slane %v6423, 5
        %v6426 = vsel %vm1030, %v6421, %v6425
        %v6427 = vshrl.u32 %v6212, 16
        %v6429 = vrot.slane %v6427, 4
        %v6430 = vor.u32 %v6429, %v6425
        %v6431 = vrot.slane %v6430, 4
        %v6433 = vshll.u32 %v6236, 16
        %v6435 = vrot.slane %v6433, 5
        %v6436 = vsel %vm1030, %v6431, %v6435
        %v6438 = vshrl.u32 %v6213, 16
        %v6440 = vrot.slane %v6438, 4
        %v6441 = vshll.u32 %v6213, 16
        %v6443 = vrot.slane %v6441, 5
        %v6444 = vor.u32 %v6440, %v6443
        %v6445 = vrot.slane %v6444, 4
        %v6447 = vshll.u32 %v6214, 16
        %v6449 = vrot.slane %v6447, 5
        %v6450 = vsel %vm1030, %v6445, %v6449
        %v6451 = vshrl.u32 %v6214, 16
        %v6453 = vrot.slane %v6451, 4
        %v6454 = vor.u32 %v6453, %v6449
        %v6455 = vrot.slane %v6454, 4
        %v6457 = vshll.u32 %v6237, 16
        %v6459 = vrot.slane %v6457, 5
        %v6460 = vsel %vm1030, %v6455, %v6459
        %v6462 = vshrl.u32 %v6215, 16
        %v6464 = vrot.slane %v6462, 4
        %v6465 = vshll.u32 %v6215, 16
        %v6467 = vrot.slane %v6465, 5
        %v6468 = vor.u32 %v6464, %v6467
        %v6469 = vrot.slane %v6468, 4
        %v6471 = vshll.u32 %v6216, 16
        %v6473 = vrot.slane %v6471, 5
        %v6474 = vsel %vm1030, %v6469, %v6473
        %v6475 = vshrl.u32 %v6216, 16
        %v6477 = vrot.slane %v6475, 4
        %v6478 = vor.u32 %v6477, %v6473
        %v6479 = vrot.slane %v6478, 4
        %v6481 = vshll.u32 %v6238, 16
        %v6483 = vrot.slane %v6481, 5
        %v6484 = vsel %vm1030, %v6479, %v6483
        %v6486 = vshrl.u32 %v6217, 16
        %v6488 = vrot.slane %v6486, 4
        %v6489 = vshll.u32 %v6217, 16
        %v6491 = vrot.slane %v6489, 5
        %v6492 = vor.u32 %v6488, %v6491
        %v6493 = vrot.slane %v6492, 4
        %v6495 = vshll.u32 %v6218, 16
        %v6497 = vrot.slane %v6495, 5
        %v6498 = vsel %vm1030, %v6493, %v6497
        %v6499 = vshrl.u32 %v6218, 16
        %v6501 = vrot.slane %v6499, 4
        %v6502 = vor.u32 %v6501, %v6497
        %v6503 = vrot.slane %v6502, 4
        %v6505 = vshll.u32 %v6239, 16
        %v6507 = vrot.slane %v6505, 5
        %v6508 = vsel %vm1030, %v6503, %v6507
        %v6510 = vshrl.u32 %v6219, 16
        %v6512 = vrot.slane %v6510, 4
        %v6513 = vshll.u32 %v6219, 16
        %v6515 = vrot.slane %v6513, 5
        %v6516 = vor.u32 %v6512, %v6515
        %v6517 = vrot.slane %v6516, 4
        %v6519 = vshll.u32 %v6220, 16
        %v6521 = vrot.slane %v6519, 5
        %v6522 = vsel %vm1030, %v6517, %v6521
        %v6523 = vshrl.u32 %v6220, 16
        %v6525 = vrot.slane %v6523, 4
        %v6526 = vor.u32 %v6525, %v6521
        %v6527 = vrot.slane %v6526, 4
        %v6529 = vshll.u32 %v6240, 16
        %v6531 = vrot.slane %v6529, 5
        %v6532 = vsel %vm1030, %v6527, %v6531
        %v6534 = vshrl.u32 %v6221, 16
        %v6536 = vrot.slane %v6534, 4
        %v6537 = vshll.u32 %v6221, 16
        %v6539 = vrot.slane %v6537, 5
        %v6540 = vor.u32 %v6536, %v6539
        %v6541 = vrot.slane %v6540, 4
        %v6543 = vshll.u32 %v6222, 16
        %v6545 = vrot.slane %v6543, 5
        %v6546 = vsel %vm1030, %v6541, %v6545
        %v6547 = vshrl.u32 %v6222, 16
        %v6549 = vrot.slane %v6547, 4
        %v6550 = vor.u32 %v6549, %v6545
        %v6551 = vrot.slane %v6550, 4
        %v6553 = vshll.u32 %v6241, 16
        %v6555 = vrot.slane %v6553, 5
        %v6556 = vsel %vm1030, %v6551, %v6555
        %v6558 = vshrl.u32 %v6223, 16
        %v6560 = vrot.slane %v6558, 4
        %v6561 = vshll.u32 %v6223, 16
        %v6563 = vrot.slane %v6561, 5
        %v6564 = vor.u32 %v6560, %v6563
        %v6565 = vrot.slane %v6564, 4
        %v6567 = vshll.u32 %v6224, 16
        %v6569 = vrot.slane %v6567, 5
        %v6570 = vsel %vm1030, %v6565, %v6569
        %v6571 = vshrl.u32 %v6224, 16
        %v6573 = vrot.slane %v6571, 4
        %v6574 = vor.u32 %v6573, %v6569
        %v6575 = vrot.slane %v6574, 4
        %v6577 = vshll.u32 %v6242, 16
        %v6579 = vrot.slane %v6577, 5
        %v6580 = vsel %vm1030, %v6575, %v6579
        %v6582 = vshrl.u32 %v6225, 16
        %v6584 = vrot.slane %v6582, 4
        %v6585 = vshll.u32 %v6225, 16
        %v6587 = vrot.slane %v6585, 5
        %v6588 = vor.u32 %v6584, %v6587
        %v6589 = vrot.slane %v6588, 4
        %v6591 = vshll.u32 %v6226, 16
        %v6593 = vrot.slane %v6591, 5
        %v6594 = vsel %vm1030, %v6589, %v6593
        %v6595 = vshrl.u32 %v6226, 16
        %v6597 = vrot.slane %v6595, 4
        %v6598 = vor.u32 %v6597, %v6593
        %v6599 = vrot.slane %v6598, 4
        %v6601 = vshll.u32 %v6243, 16
        %v6603 = vrot.slane %v6601, 5
        %v6604 = vsel %vm1030, %v6599, %v6603
        %v6606 = vshrl.u32 %v6227, 16
        %v6608 = vrot.slane %v6606, 4
        %v6609 = vshll.u32 %v6227, 16
        %v6611 = vrot.slane %v6609, 5
        %v6612 = vor.u32 %v6608, %v6611
        %v6613 = vrot.slane %v6612, 4
        %v6615 = vshll.u32 %v6228, 16
        %v6617 = vrot.slane %v6615, 5
        %v6618 = vsel %vm1030, %v6613, %v6617
        %v6619 = vshrl.u32 %v6228, 16
        %v6621 = vrot.slane %v6619, 4
        %v6622 = vor.u32 %v6621, %v6617
        %v6623 = vrot.slane %v6622, 4
        %v6625 = vshll.u32 %v6244, 16
        %v6627 = vrot.slane %v6625, 5
        %v6628 = vsel %vm1030, %v6623, %v6627
        %v6629 = vld [vmem:[#allocation3] sm:$0xe]
        %v6630 = vld [vmem:[#allocation3 + $0xc] sm:$0xe]
        %v6631 = vld [vmem:[#allocation3 + $0x18] sm:$0xe]
        %v6632 = vld [vmem:[#allocation3 + $0x24] sm:$0xe]
        %v6633 = vld [vmem:[#allocation3 + $0x30] sm:$0xe]
        %v6634 = vld [vmem:[#allocation3 + $0x3c] sm:$0xe]
        %v6635 = vld [vmem:[#allocation3 + $0x48] sm:$0xe]
        %v6636 = vld [vmem:[#allocation3 + $0x54] sm:$0xe]
        %v6637 = vld [vmem:[#allocation3 + $0x60] sm:$0xe]
        %v6638 = vld [vmem:[#allocation3 + $0x6c] sm:$0xe]
        %v6639 = vld [vmem:[#allocation3 + $0x78] sm:$0xe]
        %v6640 = vld [vmem:[#allocation3 + $0x84] sm:$0xe]
        %v6641 = vld [vmem:[#allocation3 + $0x90] sm:$0xe]
        %v6642 = vld [vmem:[#allocation3 + $0x9c] sm:$0xe]
        %v6643 = vld [vmem:[#allocation3 + $0xa8] sm:$0xe]
        %v6644 = vld [vmem:[#allocation3 + $0xb4] sm:$0xe]
        %v6693 = vrot.slane %v6629, 5
        %v6694 = vrot.slane %v6693, 4
        %v6695 = vrot.slane %v6198, 5
        %v6696 = vsel %vm2024, %v6694, %v6695
        %v6697 = vrot.slane %v6695, 4
        %v6698 = vrot.slane %v6229, 5
        %v6699 = vsel %vm2024, %v6697, %v6698
        %v6700 = vrot.slane %v6630, 5
        %v6701 = vrot.slane %v6700, 4
        %v6702 = vrot.slane %v6200, 5
        %v6703 = vsel %vm2024, %v6701, %v6702
        %v6704 = vrot.slane %v6702, 4
        %v6705 = vrot.slane %v6230, 5
        %v6706 = vsel %vm2024, %v6704, %v6705
        %v6707 = vrot.slane %v6631, 5
        %v6708 = vrot.slane %v6707, 4
        %v6709 = vrot.slane %v6202, 5
        %v6710 = vsel %vm2024, %v6708, %v6709
        %v6711 = vrot.slane %v6709, 4
        %v6712 = vrot.slane %v6231, 5
        %v6713 = vsel %vm2024, %v6711, %v6712
        %v6714 = vrot.slane %v6632, 5
        %v6715 = vrot.slane %v6714, 4
        %v6716 = vrot.slane %v6204, 5
        %v6717 = vsel %vm2024, %v6715, %v6716
        %v6718 = vrot.slane %v6716, 4
        %v6719 = vrot.slane %v6232, 5
        %v6720 = vsel %vm2024, %v6718, %v6719
        %v6721 = vrot.slane %v6633, 5
        %v6722 = vrot.slane %v6721, 4
        %v6723 = vrot.slane %v6206, 5
        %v6724 = vsel %vm2024, %v6722, %v6723
        %v6725 = vrot.slane %v6723, 4
        %v6726 = vrot.slane %v6233, 5
        %v6727 = vsel %vm2024, %v6725, %v6726
        %v6728 = vrot.slane %v6634, 5
        %v6729 = vrot.slane %v6728, 4
        %v6730 = vrot.slane %v6208, 5
        %v6731 = vsel %vm2024, %v6729, %v6730
        %v6732 = vrot.slane %v6730, 4
        %v6733 = vrot.slane %v6234, 5
        %v6734 = vsel %vm2024, %v6732, %v6733
        %v6735 = vrot.slane %v6635, 5
        %v6736 = vrot.slane %v6735, 4
        %v6737 = vrot.slane %v6210, 5
        %v6738 = vsel %vm2024, %v6736, %v6737
        %v6739 = vrot.slane %v6737, 4
        %v6740 = vrot.slane %v6235, 5
        %v6741 = vsel %vm2024, %v6739, %v6740
        %v6742 = vrot.slane %v6636, 5
        %v6743 = vrot.slane %v6742, 4
        %v6744 = vrot.slane %v6212, 5
        %v6745 = vsel %vm2024, %v6743, %v6744
        %v6746 = vrot.slane %v6744, 4
        %v6747 = vrot.slane %v6236, 5
        %v6748 = vsel %vm2024, %v6746, %v6747
        %v6749 = vrot.slane %v6637, 5
        %v6750 = vrot.slane %v6749, 4
        %v6751 = vrot.slane %v6214, 5
        %v6752 = vsel %vm2024, %v6750, %v6751
        %v6753 = vrot.slane %v6751, 4
        %v6754 = vrot.slane %v6237, 5
        %v6755 = vsel %vm2024, %v6753, %v6754
        %v6756 = vrot.slane %v6638, 5
        %v6757 = vrot.slane %v6756, 4
        %v6758 = vrot.slane %v6216, 5
        %v6759 = vsel %vm2024, %v6757, %v6758
        %v6760 = vrot.slane %v6758, 4
        %v6761 = vrot.slane %v6238, 5
        %v6762 = vsel %vm2024, %v6760, %v6761
        %v6763 = vrot.slane %v6639, 5
        %v6764 = vrot.slane %v6763, 4
        %v6765 = vrot.slane %v6218, 5
        %v6766 = vsel %vm2024, %v6764, %v6765
        %v6767 = vrot.slane %v6765, 4
        %v6768 = vrot.slane %v6239, 5
        %v6769 = vsel %vm2024, %v6767, %v6768
        %v6770 = vrot.slane %v6640, 5
        %v6771 = vrot.slane %v6770, 4
        %v6772 = vrot.slane %v6220, 5
        %v6773 = vsel %vm2024, %v6771, %v6772
        %v6774 = vrot.slane %v6772, 4
        %v6775 = vrot.slane %v6240, 5
        %v6776 = vsel %vm2024, %v6774, %v6775
        %v6777 = vrot.slane %v6641, 5
        %v6778 = vrot.slane %v6777, 4
        %v6779 = vrot.slane %v6222, 5
        %v6780 = vsel %vm2024, %v6778, %v6779
        %v6781 = vrot.slane %v6779, 4
        %v6782 = vrot.slane %v6241, 5
        %v6783 = vsel %vm2024, %v6781, %v6782
        %v6784 = vrot.slane %v6642, 5
        %v6785 = vrot.slane %v6784, 4
        %v6786 = vrot.slane %v6224, 5
        %v6787 = vsel %vm2024, %v6785, %v6786
        %v6788 = vrot.slane %v6786, 4
        %v6789 = vrot.slane %v6242, 5
        %v6790 = vsel %vm2024, %v6788, %v6789
        %v6791 = vrot.slane %v6643, 5
        %v6792 = vrot.slane %v6791, 4
        %v6793 = vrot.slane %v6226, 5
        %v6794 = vsel %vm2024, %v6792, %v6793
        %v6795 = vrot.slane %v6793, 4
        %v6796 = vrot.slane %v6243, 5
        %v6797 = vsel %vm2024, %v6795, %v6796
        %v6798 = vrot.slane %v6644, 5
        %v6799 = vrot.slane %v6798, 4
        %v6800 = vrot.slane %v6228, 5
        %v6801 = vsel %vm2024, %v6799, %v6800
        %v6802 = vrot.slane %v6800, 4
        %v6803 = vrot.slane %v6244, 5
        %v6804 = vsel %vm2024, %v6802, %v6803
        %v6805 = vld [vmem:[%s6080] sm:$0xf]
        %v6806 = vld [vmem:[%s6080 + $0x4] sm:$0xf]
        %v6807 = vld [vmem:[%s6080 + $0xc] sm:$0xf]
        %v6808 = vld [vmem:[%s6080 + $0x10] sm:$0xf]
        %v6809 = vld [vmem:[%s6080 + $0x18] sm:$0xf]
        %v6810 = vld [vmem:[%s6080 + $0x1c] sm:$0xf]
        %v6811 = vld [vmem:[%s6080 + $0x24] sm:$0xf]
        %v6812 = vld [vmem:[%s6080 + $0x28] sm:$0xf]
        %v6813 = vld [vmem:[%s6080 + $0x30] sm:$0xf]
        %v6814 = vld [vmem:[%s6080 + $0x34] sm:$0xf]
        %v6815 = vld [vmem:[%s6080 + $0x3c] sm:$0xf]
        %v6816 = vld [vmem:[%s6080 + $0x40] sm:$0xf]
        %v6817 = vld [vmem:[%s6080 + $0x48] sm:$0xf]
        %v6818 = vld [vmem:[%s6080 + $0x4c] sm:$0xf]
        %v6819 = vld [vmem:[%s6080 + $0x54] sm:$0xf]
        %v6820 = vld [vmem:[%s6080 + $0x58] sm:$0xf]
        %v6821 = vld [vmem:[%s6080 + $0x60] sm:$0xf]
        %v6822 = vld [vmem:[%s6080 + $0x64] sm:$0xf]
        %v6823 = vld [vmem:[%s6080 + $0x6c] sm:$0xf]
        %v6824 = vld [vmem:[%s6080 + $0x70] sm:$0xf]
        %v6825 = vld [vmem:[%s6080 + $0x78] sm:$0xf]
        %v6826 = vld [vmem:[%s6080 + $0x7c] sm:$0xf]
        %v6827 = vld [vmem:[%s6080 + $0x84] sm:$0xf]
        %v6828 = vld [vmem:[%s6080 + $0x88] sm:$0xf]
        %v6829 = vld [vmem:[%s6080 + $0x90] sm:$0xf]
        %v6830 = vld [vmem:[%s6080 + $0x94] sm:$0xf]
        %v6831 = vld [vmem:[%s6080 + $0x9c] sm:$0xf]
        %v6832 = vld [vmem:[%s6080 + $0xa0] sm:$0xf]
        %v6833 = vld [vmem:[%s6080 + $0xa8] sm:$0xf]
        %v6834 = vld [vmem:[%s6080 + $0xac] sm:$0xf]
        %v6835 = vld [vmem:[%s6080 + $0xb4] sm:$0xf]
        %v6836 = vld [vmem:[%s6080 + $0xb8] sm:$0xf]
        %v6837 = vld [vmem:[%s6080 + $0x8] sm:$0x1]
        %v6838 = vld [vmem:[%s6080 + $0x14] sm:$0x1]
        %v6839 = vld [vmem:[%s6080 + $0x20] sm:$0x1]
        %v6840 = vld [vmem:[%s6080 + $0x2c] sm:$0x1]
        %v6841 = vld [vmem:[%s6080 + $0x38] sm:$0x1]
        %v6842 = vld [vmem:[%s6080 + $0x44] sm:$0x1]
        %v6843 = vld [vmem:[%s6080 + $0x50] sm:$0x1]
        %v6844 = vld [vmem:[%s6080 + $0x5c] sm:$0x1]
        %v6845 = vld [vmem:[%s6080 + $0x68] sm:$0x1]
        %v6846 = vld [vmem:[%s6080 + $0x74] sm:$0x1]
        %v6847 = vld [vmem:[%s6080 + $0x80] sm:$0x1]
        %v6848 = vld [vmem:[%s6080 + $0x8c] sm:$0x1]
        %v6849 = vld [vmem:[%s6080 + $0x98] sm:$0x1]
        %v6850 = vld [vmem:[%s6080 + $0xa4] sm:$0x1]
        %v6851 = vld [vmem:[%s6080 + $0xb0] sm:$0x1]
        %v6852 = vld [vmem:[%s6080 + $0xbc] sm:$0x1]
        %v6854 = vshrl.u32 %v6805, 16
        %v6856 = vrot.slane %v6854, 4
        %v6857 = vshll.u32 %v6805, 16
        %v6859 = vrot.slane %v6857, 5
        %v6860 = vor.u32 %v6856, %v6859
        %v6861 = vrot.slane %v6860, 4
        %v6863 = vshll.u32 %v6806, 16
        %v6865 = vrot.slane %v6863, 5
        %v6866 = vsel %vm1030, %v6861, %v6865
        %v6867 = vshrl.u32 %v6806, 16
        %v6869 = vrot.slane %v6867, 4
        %v6870 = vor.u32 %v6869, %v6865
        %v6871 = vrot.slane %v6870, 4
        %v6873 = vshll.u32 %v6837, 16
        %v6875 = vrot.slane %v6873, 5
        %v6876 = vsel %vm1030, %v6871, %v6875
        %v6878 = vshrl.u32 %v6807, 16
        %v6880 = vrot.slane %v6878, 4
        %v6881 = vshll.u32 %v6807, 16
        %v6883 = vrot.slane %v6881, 5
        %v6884 = vor.u32 %v6880, %v6883
        %v6885 = vrot.slane %v6884, 4
        %v6887 = vshll.u32 %v6808, 16
        %v6889 = vrot.slane %v6887, 5
        %v6890 = vsel %vm1030, %v6885, %v6889
        %v6891 = vshrl.u32 %v6808, 16
        %v6893 = vrot.slane %v6891, 4
        %v6894 = vor.u32 %v6893, %v6889
        %v6895 = vrot.slane %v6894, 4
        %v6897 = vshll.u32 %v6838, 16
        %v6899 = vrot.slane %v6897, 5
        %v6900 = vsel %vm1030, %v6895, %v6899
        %v6902 = vshrl.u32 %v6809, 16
        %v6904 = vrot.slane %v6902, 4
        %v6905 = vshll.u32 %v6809, 16
        %v6907 = vrot.slane %v6905, 5
        %v6908 = vor.u32 %v6904, %v6907
        %v6909 = vrot.slane %v6908, 4
        %v6911 = vshll.u32 %v6810, 16
        %v6913 = vrot.slane %v6911, 5
        %v6914 = vsel %vm1030, %v6909, %v6913
        %v6915 = vshrl.u32 %v6810, 16
        %v6917 = vrot.slane %v6915, 4
        %v6918 = vor.u32 %v6917, %v6913
        %v6919 = vrot.slane %v6918, 4
        %v6921 = vshll.u32 %v6839, 16
        %v6923 = vrot.slane %v6921, 5
        %v6924 = vsel %vm1030, %v6919, %v6923
        %v6926 = vshrl.u32 %v6811, 16
        %v6928 = vrot.slane %v6926, 4
        %v6929 = vshll.u32 %v6811, 16
        %v6931 = vrot.slane %v6929, 5
        %v6932 = vor.u32 %v6928, %v6931
        %v6933 = vrot.slane %v6932, 4
        %v6935 = vshll.u32 %v6812, 16
        %v6937 = vrot.slane %v6935, 5
        %v6938 = vsel %vm1030, %v6933, %v6937
        %v6939 = vshrl.u32 %v6812, 16
        %v6941 = vrot.slane %v6939, 4
        %v6942 = vor.u32 %v6941, %v6937
        %v6943 = vrot.slane %v6942, 4
        %v6945 = vshll.u32 %v6840, 16
        %v6947 = vrot.slane %v6945, 5
        %v6948 = vsel %vm1030, %v6943, %v6947
        %v6950 = vshrl.u32 %v6813, 16
        %v6952 = vrot.slane %v6950, 4
        %v6953 = vshll.u32 %v6813, 16
        %v6955 = vrot.slane %v6953, 5
        %v6956 = vor.u32 %v6952, %v6955
        %v6957 = vrot.slane %v6956, 4
        %v6959 = vshll.u32 %v6814, 16
        %v6961 = vrot.slane %v6959, 5
        %v6962 = vsel %vm1030, %v6957, %v6961
        %v6963 = vshrl.u32 %v6814, 16
        %v6965 = vrot.slane %v6963, 4
        %v6966 = vor.u32 %v6965, %v6961
        %v6967 = vrot.slane %v6966, 4
        %v6969 = vshll.u32 %v6841, 16
        %v6971 = vrot.slane %v6969, 5
        %v6972 = vsel %vm1030, %v6967, %v6971
        %v6974 = vshrl.u32 %v6815, 16
        %v6976 = vrot.slane %v6974, 4
        %v6977 = vshll.u32 %v6815, 16
        %v6979 = vrot.slane %v6977, 5
        %v6980 = vor.u32 %v6976, %v6979
        %v6981 = vrot.slane %v6980, 4
        %v6983 = vshll.u32 %v6816, 16
        %v6985 = vrot.slane %v6983, 5
        %v6986 = vsel %vm1030, %v6981, %v6985
        %v6987 = vshrl.u32 %v6816, 16
        %v6989 = vrot.slane %v6987, 4
        %v6990 = vor.u32 %v6989, %v6985
        %v6991 = vrot.slane %v6990, 4
        %v6993 = vshll.u32 %v6842, 16
        %v6995 = vrot.slane %v6993, 5
        %v6996 = vsel %vm1030, %v6991, %v6995
        %v6998 = vshrl.u32 %v6817, 16
        %v7000 = vrot.slane %v6998, 4
        %v7001 = vshll.u32 %v6817, 16
        %v7003 = vrot.slane %v7001, 5
        %v7004 = vor.u32 %v7000, %v7003
        %v7005 = vrot.slane %v7004, 4
        %v7007 = vshll.u32 %v6818, 16
        %v7009 = vrot.slane %v7007, 5
        %v7010 = vsel %vm1030, %v7005, %v7009
        %v7011 = vshrl.u32 %v6818, 16
        %v7013 = vrot.slane %v7011, 4
        %v7014 = vor.u32 %v7013, %v7009
        %v7015 = vrot.slane %v7014, 4
        %v7017 = vshll.u32 %v6843, 16
        %v7019 = vrot.slane %v7017, 5
        %v7020 = vsel %vm1030, %v7015, %v7019
        %v7022 = vshrl.u32 %v6819, 16
        %v7024 = vrot.slane %v7022, 4
        %v7025 = vshll.u32 %v6819, 16
        %v7027 = vrot.slane %v7025, 5
        %v7028 = vor.u32 %v7024, %v7027
        %v7029 = vrot.slane %v7028, 4
        %v7031 = vshll.u32 %v6820, 16
        %v7033 = vrot.slane %v7031, 5
        %v7034 = vsel %vm1030, %v7029, %v7033
        %v7035 = vshrl.u32 %v6820, 16
        %v7037 = vrot.slane %v7035, 4
        %v7038 = vor.u32 %v7037, %v7033
        %v7039 = vrot.slane %v7038, 4
        %v7041 = vshll.u32 %v6844, 16
        %v7043 = vrot.slane %v7041, 5
        %v7044 = vsel %vm1030, %v7039, %v7043
        %v7046 = vshrl.u32 %v6821, 16
        %v7048 = vrot.slane %v7046, 4
        %v7049 = vshll.u32 %v6821, 16
        %v7051 = vrot.slane %v7049, 5
        %v7052 = vor.u32 %v7048, %v7051
        %v7053 = vrot.slane %v7052, 4
        %v7055 = vshll.u32 %v6822, 16
        %v7057 = vrot.slane %v7055, 5
        %v7058 = vsel %vm1030, %v7053, %v7057
        %v7059 = vshrl.u32 %v6822, 16
        %v7061 = vrot.slane %v7059, 4
        %v7062 = vor.u32 %v7061, %v7057
        %v7063 = vrot.slane %v7062, 4
        %v7065 = vshll.u32 %v6845, 16
        %v7067 = vrot.slane %v7065, 5
        %v7068 = vsel %vm1030, %v7063, %v7067
        %v7070 = vshrl.u32 %v6823, 16
        %v7072 = vrot.slane %v7070, 4
        %v7073 = vshll.u32 %v6823, 16
        %v7075 = vrot.slane %v7073, 5
        %v7076 = vor.u32 %v7072, %v7075
        %v7077 = vrot.slane %v7076, 4
        %v7079 = vshll.u32 %v6824, 16
        %v7081 = vrot.slane %v7079, 5
        %v7082 = vsel %vm1030, %v7077, %v7081
        %v7083 = vshrl.u32 %v6824, 16
        %v7085 = vrot.slane %v7083, 4
        %v7086 = vor.u32 %v7085, %v7081
        %v7087 = vrot.slane %v7086, 4
        %v7089 = vshll.u32 %v6846, 16
        %v7091 = vrot.slane %v7089, 5
        %v7092 = vsel %vm1030, %v7087, %v7091
        %v7094 = vshrl.u32 %v6825, 16
        %v7096 = vrot.slane %v7094, 4
        %v7097 = vshll.u32 %v6825, 16
        %v7099 = vrot.slane %v7097, 5
        %v7100 = vor.u32 %v7096, %v7099
        %v7101 = vrot.slane %v7100, 4
        %v7103 = vshll.u32 %v6826, 16
        %v7105 = vrot.slane %v7103, 5
        %v7106 = vsel %vm1030, %v7101, %v7105
        %v7107 = vshrl.u32 %v6826, 16
        %v7109 = vrot.slane %v7107, 4
        %v7110 = vor.u32 %v7109, %v7105
        %v7111 = vrot.slane %v7110, 4
        %v7113 = vshll.u32 %v6847, 16
        %v7115 = vrot.slane %v7113, 5
        %v7116 = vsel %vm1030, %v7111, %v7115
        %v7118 = vshrl.u32 %v6827, 16
        %v7120 = vrot.slane %v7118, 4
        %v7121 = vshll.u32 %v6827, 16
        %v7123 = vrot.slane %v7121, 5
        %v7124 = vor.u32 %v7120, %v7123
        %v7125 = vrot.slane %v7124, 4
        %v7127 = vshll.u32 %v6828, 16
        %v7129 = vrot.slane %v7127, 5
        %v7130 = vsel %vm1030, %v7125, %v7129
        %v7131 = vshrl.u32 %v6828, 16
        %v7133 = vrot.slane %v7131, 4
        %v7134 = vor.u32 %v7133, %v7129
        %v7135 = vrot.slane %v7134, 4
        %v7137 = vshll.u32 %v6848, 16
        %v7139 = vrot.slane %v7137, 5
        %v7140 = vsel %vm1030, %v7135, %v7139
        %v7142 = vshrl.u32 %v6829, 16
        %v7144 = vrot.slane %v7142, 4
        %v7145 = vshll.u32 %v6829, 16
        %v7147 = vrot.slane %v7145, 5
        %v7148 = vor.u32 %v7144, %v7147
        %v7149 = vrot.slane %v7148, 4
        %v7151 = vshll.u32 %v6830, 16
        %v7153 = vrot.slane %v7151, 5
        %v7154 = vsel %vm1030, %v7149, %v7153
        %v7155 = vshrl.u32 %v6830, 16
        %v7157 = vrot.slane %v7155, 4
        %v7158 = vor.u32 %v7157, %v7153
        %v7159 = vrot.slane %v7158, 4
        %v7161 = vshll.u32 %v6849, 16
        %v7163 = vrot.slane %v7161, 5
        %v7164 = vsel %vm1030, %v7159, %v7163
        %v7166 = vshrl.u32 %v6831, 16
        %v7168 = vrot.slane %v7166, 4
        %v7169 = vshll.u32 %v6831, 16
        %v7171 = vrot.slane %v7169, 5
        %v7172 = vor.u32 %v7168, %v7171
        %v7173 = vrot.slane %v7172, 4
        %v7175 = vshll.u32 %v6832, 16
        %v7177 = vrot.slane %v7175, 5
        %v7178 = vsel %vm1030, %v7173, %v7177
        %v7179 = vshrl.u32 %v6832, 16
        %v7181 = vrot.slane %v7179, 4
        %v7182 = vor.u32 %v7181, %v7177
        %v7183 = vrot.slane %v7182, 4
        %v7185 = vshll.u32 %v6850, 16
        %v7187 = vrot.slane %v7185, 5
        %v7188 = vsel %vm1030, %v7183, %v7187
        %v7190 = vshrl.u32 %v6833, 16
        %v7192 = vrot.slane %v7190, 4
        %v7193 = vshll.u32 %v6833, 16
        %v7195 = vrot.slane %v7193, 5
        %v7196 = vor.u32 %v7192, %v7195
        %v7197 = vrot.slane %v7196, 4
        %v7199 = vshll.u32 %v6834, 16
        %v7201 = vrot.slane %v7199, 5
        %v7202 = vsel %vm1030, %v7197, %v7201
        %v7203 = vshrl.u32 %v6834, 16
        %v7205 = vrot.slane %v7203, 4
        %v7206 = vor.u32 %v7205, %v7201
        %v7207 = vrot.slane %v7206, 4
        %v7209 = vshll.u32 %v6851, 16
        %v7211 = vrot.slane %v7209, 5
        %v7212 = vsel %vm1030, %v7207, %v7211
        %v7214 = vshrl.u32 %v6835, 16
        %v7216 = vrot.slane %v7214, 4
        %v7217 = vshll.u32 %v6835, 16
        %v7219 = vrot.slane %v7217, 5
        %v7220 = vor.u32 %v7216, %v7219
        %v7221 = vrot.slane %v7220, 4
        %v7223 = vshll.u32 %v6836, 16
        %v7225 = vrot.slane %v7223, 5
        %v7226 = vsel %vm1030, %v7221, %v7225
        %v7227 = vshrl.u32 %v6836, 16
        %v7229 = vrot.slane %v7227, 4
        %v7230 = vor.u32 %v7229, %v7225
        %v7231 = vrot.slane %v7230, 4
        %v7233 = vshll.u32 %v6852, 16
        %v7235 = vrot.slane %v7233, 5
        %v7236 = vsel %vm1030, %v7231, %v7235
        %v7237 = vld [vmem:[%s6080] sm:$0xe]
        %v7238 = vld [vmem:[%s6080 + $0xc] sm:$0xe]
        %v7239 = vld [vmem:[%s6080 + $0x18] sm:$0xe]
        %v7240 = vld [vmem:[%s6080 + $0x24] sm:$0xe]
        %v7241 = vld [vmem:[%s6080 + $0x30] sm:$0xe]
        %v7242 = vld [vmem:[%s6080 + $0x3c] sm:$0xe]
        %v7243 = vld [vmem:[%s6080 + $0x48] sm:$0xe]
        %v7244 = vld [vmem:[%s6080 + $0x54] sm:$0xe]
        %v7245 = vld [vmem:[%s6080 + $0x60] sm:$0xe]
        %v7246 = vld [vmem:[%s6080 + $0x6c] sm:$0xe]
        %v7247 = vld [vmem:[%s6080 + $0x78] sm:$0xe]
        %v7248 = vld [vmem:[%s6080 + $0x84] sm:$0xe]
        %v7249 = vld [vmem:[%s6080 + $0x90] sm:$0xe]
        %v7250 = vld [vmem:[%s6080 + $0x9c] sm:$0xe]
        %v7251 = vld [vmem:[%s6080 + $0xa8] sm:$0xe]
        %v7252 = vld [vmem:[%s6080 + $0xb4] sm:$0xe]
        %v7301 = vrot.slane %v7237, 5
        %v7302 = vrot.slane %v7301, 4
        %v7303 = vrot.slane %v6806, 5
        %v7304 = vsel %vm2024, %v7302, %v7303
        %v7305 = vrot.slane %v7303, 4
        %v7306 = vrot.slane %v6837, 5
        %v7307 = vsel %vm2024, %v7305, %v7306
        %v7308 = vrot.slane %v7238, 5
        %v7309 = vrot.slane %v7308, 4
        %v7310 = vrot.slane %v6808, 5
        %v7311 = vsel %vm2024, %v7309, %v7310
        %v7312 = vrot.slane %v7310, 4
        %v7313 = vrot.slane %v6838, 5
        %v7314 = vsel %vm2024, %v7312, %v7313
        %v7315 = vrot.slane %v7239, 5
        %v7316 = vrot.slane %v7315, 4
        %v7317 = vrot.slane %v6810, 5
        %v7318 = vsel %vm2024, %v7316, %v7317
        %v7319 = vrot.slane %v7317, 4
        %v7320 = vrot.slane %v6839, 5
        %v7321 = vsel %vm2024, %v7319, %v7320
        %v7322 = vrot.slane %v7240, 5
        %v7323 = vrot.slane %v7322, 4
        %v7324 = vrot.slane %v6812, 5
        %v7325 = vsel %vm2024, %v7323, %v7324
        %v7326 = vrot.slane %v7324, 4
        %v7327 = vrot.slane %v6840, 5
        %v7328 = vsel %vm2024, %v7326, %v7327
        %v7329 = vrot.slane %v7241, 5
        %v7330 = vrot.slane %v7329, 4
        %v7331 = vrot.slane %v6814, 5
        %v7332 = vsel %vm2024, %v7330, %v7331
        %v7333 = vrot.slane %v7331, 4
        %v7334 = vrot.slane %v6841, 5
        %v7335 = vsel %vm2024, %v7333, %v7334
        %v7336 = vrot.slane %v7242, 5
        %v7337 = vrot.slane %v7336, 4
        %v7338 = vrot.slane %v6816, 5
        %v7339 = vsel %vm2024, %v7337, %v7338
        %v7340 = vrot.slane %v7338, 4
        %v7341 = vrot.slane %v6842, 5
        %v7342 = vsel %vm2024, %v7340, %v7341
        %v7343 = vrot.slane %v7243, 5
        %v7344 = vrot.slane %v7343, 4
        %v7345 = vrot.slane %v6818, 5
        %v7346 = vsel %vm2024, %v7344, %v7345
        %v7347 = vrot.slane %v7345, 4
        %v7348 = vrot.slane %v6843, 5
        %v7349 = vsel %vm2024, %v7347, %v7348
        %v7350 = vrot.slane %v7244, 5
        %v7351 = vrot.slane %v7350, 4
        %v7352 = vrot.slane %v6820, 5
        %v7353 = vsel %vm2024, %v7351, %v7352
        %v7354 = vrot.slane %v7352, 4
        %v7355 = vrot.slane %v6844, 5
        %v7356 = vsel %vm2024, %v7354, %v7355
        %v7357 = vrot.slane %v7245, 5
        %v7358 = vrot.slane %v7357, 4
        %v7359 = vrot.slane %v6822, 5
        %v7360 = vsel %vm2024, %v7358, %v7359
        %v7361 = vrot.slane %v7359, 4
        %v7362 = vrot.slane %v6845, 5
        %v7363 = vsel %vm2024, %v7361, %v7362
        %v7364 = vrot.slane %v7246, 5
        %v7365 = vrot.slane %v7364, 4
        %v7366 = vrot.slane %v6824, 5
        %v7367 = vsel %vm2024, %v7365, %v7366
        %v7368 = vrot.slane %v7366, 4
        %v7369 = vrot.slane %v6846, 5
        %v7370 = vsel %vm2024, %v7368, %v7369
        %v7371 = vrot.slane %v7247, 5
        %v7372 = vrot.slane %v7371, 4
        %v7373 = vrot.slane %v6826, 5
        %v7374 = vsel %vm2024, %v7372, %v7373
        %v7375 = vrot.slane %v7373, 4
        %v7376 = vrot.slane %v6847, 5
        %v7377 = vsel %vm2024, %v7375, %v7376
        %v7378 = vrot.slane %v7248, 5
        %v7379 = vrot.slane %v7378, 4
        %v7380 = vrot.slane %v6828, 5
        %v7381 = vsel %vm2024, %v7379, %v7380
        %v7382 = vrot.slane %v7380, 4
        %v7383 = vrot.slane %v6848, 5
        %v7384 = vsel %vm2024, %v7382, %v7383
        %v7385 = vrot.slane %v7249, 5
        %v7386 = vrot.slane %v7385, 4
        %v7387 = vrot.slane %v6830, 5
        %v7388 = vsel %vm2024, %v7386, %v7387
        %v7389 = vrot.slane %v7387, 4
        %v7390 = vrot.slane %v6849, 5
        %v7391 = vsel %vm2024, %v7389, %v7390
        %v7392 = vrot.slane %v7250, 5
        %v7393 = vrot.slane %v7392, 4
        %v7394 = vrot.slane %v6832, 5
        %v7395 = vsel %vm2024, %v7393, %v7394
        %v7396 = vrot.slane %v7394, 4
        %v7397 = vrot.slane %v6850, 5
        %v7398 = vsel %vm2024, %v7396, %v7397
        %v7399 = vrot.slane %v7251, 5
        %v7400 = vrot.slane %v7399, 4
        %v7401 = vrot.slane %v6834, 5
        %v7402 = vsel %vm2024, %v7400, %v7401
        %v7403 = vrot.slane %v7401, 4
        %v7404 = vrot.slane %v6851, 5
        %v7405 = vsel %vm2024, %v7403, %v7404
        %v7406 = vrot.slane %v7252, 5
        %v7407 = vrot.slane %v7406, 4
        %v7408 = vrot.slane %v6836, 5
        %v7409 = vsel %vm2024, %v7407, %v7408
        %v7410 = vrot.slane %v7408, 4
        %v7411 = vrot.slane %v6852, 5
        %v7412 = vsel %vm2024, %v7410, %v7411
        %s7413 = scalar_lea.vmem [#allocation3], 24
        %v7414 = vld [vmem:[%s7413] sm:$0xf]
        %v7415 = vld [vmem:[%s7413 + $0x4] sm:$0xf]
        %v7416 = vld [vmem:[%s7413 + $0xc] sm:$0xf]
        %v7417 = vld [vmem:[%s7413 + $0x10] sm:$0xf]
        %v7418 = vld [vmem:[%s7413 + $0x18] sm:$0xf]
        %v7419 = vld [vmem:[%s7413 + $0x1c] sm:$0xf]
        %v7420 = vld [vmem:[%s7413 + $0x24] sm:$0xf]
        %v7421 = vld [vmem:[%s7413 + $0x28] sm:$0xf]
        %v7422 = vld [vmem:[%s7413 + $0x30] sm:$0xf]
        %v7423 = vld [vmem:[%s7413 + $0x34] sm:$0xf]
        %v7424 = vld [vmem:[%s7413 + $0x3c] sm:$0xf]
        %v7425 = vld [vmem:[%s7413 + $0x40] sm:$0xf]
        %v7426 = vld [vmem:[%s7413 + $0x48] sm:$0xf]
        %v7427 = vld [vmem:[%s7413 + $0x4c] sm:$0xf]
        %v7428 = vld [vmem:[%s7413 + $0x54] sm:$0xf]
        %v7429 = vld [vmem:[%s7413 + $0x58] sm:$0xf]
        %v7430 = vld [vmem:[%s7413 + $0x60] sm:$0xf]
        %v7431 = vld [vmem:[%s7413 + $0x64] sm:$0xf]
        %v7432 = vld [vmem:[%s7413 + $0x6c] sm:$0xf]
        %v7433 = vld [vmem:[%s7413 + $0x70] sm:$0xf]
        %v7434 = vld [vmem:[%s7413 + $0x78] sm:$0xf]
        %v7435 = vld [vmem:[%s7413 + $0x7c] sm:$0xf]
        %v7436 = vld [vmem:[%s7413 + $0x84] sm:$0xf]
        %v7437 = vld [vmem:[%s7413 + $0x88] sm:$0xf]
        %v7438 = vld [vmem:[%s7413 + $0x90] sm:$0xf]
        %v7439 = vld [vmem:[%s7413 + $0x94] sm:$0xf]
        %v7440 = vld [vmem:[%s7413 + $0x9c] sm:$0xf]
        %v7441 = vld [vmem:[%s7413 + $0xa0] sm:$0xf]
        %v7442 = vld [vmem:[%s7413 + $0xa8] sm:$0xf]
        %v7443 = vld [vmem:[%s7413 + $0xac] sm:$0xf]
        %v7444 = vld [vmem:[%s7413 + $0xb4] sm:$0xf]
        %v7445 = vld [vmem:[%s7413 + $0xb8] sm:$0xf]
        %v7446 = vld [vmem:[%s7413 + $0x8] sm:$0x1]
        %v7447 = vld [vmem:[%s7413 + $0x14] sm:$0x1]
        %v7448 = vld [vmem:[%s7413 + $0x20] sm:$0x1]
        %v7449 = vld [vmem:[%s7413 + $0x2c] sm:$0x1]
        %v7450 = vld [vmem:[%s7413 + $0x38] sm:$0x1]
        %v7451 = vld [vmem:[%s7413 + $0x44] sm:$0x1]
        %v7452 = vld [vmem:[%s7413 + $0x50] sm:$0x1]
        %v7453 = vld [vmem:[%s7413 + $0x5c] sm:$0x1]
        %v7454 = vld [vmem:[%s7413 + $0x68] sm:$0x1]
        %v7455 = vld [vmem:[%s7413 + $0x74] sm:$0x1]
        %v7456 = vld [vmem:[%s7413 + $0x80] sm:$0x1]
        %v7457 = vld [vmem:[%s7413 + $0x8c] sm:$0x1]
        %v7458 = vld [vmem:[%s7413 + $0x98] sm:$0x1]
        %v7459 = vld [vmem:[%s7413 + $0xa4] sm:$0x1]
        %v7460 = vld [vmem:[%s7413 + $0xb0] sm:$0x1]
        %v7461 = vld [vmem:[%s7413 + $0xbc] sm:$0x1]
        %v7463 = vshrl.u32 %v7414, 16
        %v7465 = vrot.slane %v7463, 4
        %v7466 = vshll.u32 %v7414, 16
        %v7468 = vrot.slane %v7466, 5
        %v7469 = vor.u32 %v7465, %v7468
        %v7470 = vrot.slane %v7469, 4
        %v7472 = vshll.u32 %v7415, 16
        %v7474 = vrot.slane %v7472, 5
        %v7475 = vsel %vm1030, %v7470, %v7474
        %v7476 = vshrl.u32 %v7415, 16
        %v7478 = vrot.slane %v7476, 4
        %v7479 = vor.u32 %v7478, %v7474
        %v7480 = vrot.slane %v7479, 4
        %v7482 = vshll.u32 %v7446, 16
        %v7484 = vrot.slane %v7482, 5
        %v7485 = vsel %vm1030, %v7480, %v7484
        %v7487 = vshrl.u32 %v7416, 16
        %v7489 = vrot.slane %v7487, 4
        %v7490 = vshll.u32 %v7416, 16
        %v7492 = vrot.slane %v7490, 5
        %v7493 = vor.u32 %v7489, %v7492
        %v7494 = vrot.slane %v7493, 4
        %v7496 = vshll.u32 %v7417, 16
        %v7498 = vrot.slane %v7496, 5
        %v7499 = vsel %vm1030, %v7494, %v7498
        %v7500 = vshrl.u32 %v7417, 16
        %v7502 = vrot.slane %v7500, 4
        %v7503 = vor.u32 %v7502, %v7498
        %v7504 = vrot.slane %v7503, 4
        %v7506 = vshll.u32 %v7447, 16
        %v7508 = vrot.slane %v7506, 5
        %v7509 = vsel %vm1030, %v7504, %v7508
        %v7511 = vshrl.u32 %v7418, 16
        %v7513 = vrot.slane %v7511, 4
        %v7514 = vshll.u32 %v7418, 16
        %v7516 = vrot.slane %v7514, 5
        %v7517 = vor.u32 %v7513, %v7516
        %v7518 = vrot.slane %v7517, 4
        %v7520 = vshll.u32 %v7419, 16
        %v7522 = vrot.slane %v7520, 5
        %v7523 = vsel %vm1030, %v7518, %v7522
        %v7524 = vshrl.u32 %v7419, 16
        %v7526 = vrot.slane %v7524, 4
        %v7527 = vor.u32 %v7526, %v7522
        %v7528 = vrot.slane %v7527, 4
        %v7530 = vshll.u32 %v7448, 16
        %v7532 = vrot.slane %v7530, 5
        %v7533 = vsel %vm1030, %v7528, %v7532
        %v7535 = vshrl.u32 %v7420, 16
        %v7537 = vrot.slane %v7535, 4
        %v7538 = vshll.u32 %v7420, 16
        %v7540 = vrot.slane %v7538, 5
        %v7541 = vor.u32 %v7537, %v7540
        %v7542 = vrot.slane %v7541, 4
        %v7544 = vshll.u32 %v7421, 16
        %v7546 = vrot.slane %v7544, 5
        %v7547 = vsel %vm1030, %v7542, %v7546
        %v7548 = vshrl.u32 %v7421, 16
        %v7550 = vrot.slane %v7548, 4
        %v7551 = vor.u32 %v7550, %v7546
        %v7552 = vrot.slane %v7551, 4
        %v7554 = vshll.u32 %v7449, 16
        %v7556 = vrot.slane %v7554, 5
        %v7557 = vsel %vm1030, %v7552, %v7556
        %v7559 = vshrl.u32 %v7422, 16
        %v7561 = vrot.slane %v7559, 4
        %v7562 = vshll.u32 %v7422, 16
        %v7564 = vrot.slane %v7562, 5
        %v7565 = vor.u32 %v7561, %v7564
        %v7566 = vrot.slane %v7565, 4
        %v7568 = vshll.u32 %v7423, 16
        %v7570 = vrot.slane %v7568, 5
        %v7571 = vsel %vm1030, %v7566, %v7570
        %v7572 = vshrl.u32 %v7423, 16
        %v7574 = vrot.slane %v7572, 4
        %v7575 = vor.u32 %v7574, %v7570
        %v7576 = vrot.slane %v7575, 4
        %v7578 = vshll.u32 %v7450, 16
        %v7580 = vrot.slane %v7578, 5
        %v7581 = vsel %vm1030, %v7576, %v7580
        %v7583 = vshrl.u32 %v7424, 16
        %v7585 = vrot.slane %v7583, 4
        %v7586 = vshll.u32 %v7424, 16
        %v7588 = vrot.slane %v7586, 5
        %v7589 = vor.u32 %v7585, %v7588
        %v7590 = vrot.slane %v7589, 4
        %v7592 = vshll.u32 %v7425, 16
        %v7594 = vrot.slane %v7592, 5
        %v7595 = vsel %vm1030, %v7590, %v7594
        %v7596 = vshrl.u32 %v7425, 16
        %v7598 = vrot.slane %v7596, 4
        %v7599 = vor.u32 %v7598, %v7594
        %v7600 = vrot.slane %v7599, 4
        %v7602 = vshll.u32 %v7451, 16
        %v7604 = vrot.slane %v7602, 5
        %v7605 = vsel %vm1030, %v7600, %v7604
        %v7607 = vshrl.u32 %v7426, 16
        %v7609 = vrot.slane %v7607, 4
        %v7610 = vshll.u32 %v7426, 16
        %v7612 = vrot.slane %v7610, 5
        %v7613 = vor.u32 %v7609, %v7612
        %v7614 = vrot.slane %v7613, 4
        %v7616 = vshll.u32 %v7427, 16
        %v7618 = vrot.slane %v7616, 5
        %v7619 = vsel %vm1030, %v7614, %v7618
        %v7620 = vshrl.u32 %v7427, 16
        %v7622 = vrot.slane %v7620, 4
        %v7623 = vor.u32 %v7622, %v7618
        %v7624 = vrot.slane %v7623, 4
        %v7626 = vshll.u32 %v7452, 16
        %v7628 = vrot.slane %v7626, 5
        %v7629 = vsel %vm1030, %v7624, %v7628
        %v7631 = vshrl.u32 %v7428, 16
        %v7633 = vrot.slane %v7631, 4
        %v7634 = vshll.u32 %v7428, 16
        %v7636 = vrot.slane %v7634, 5
        %v7637 = vor.u32 %v7633, %v7636
        %v7638 = vrot.slane %v7637, 4
        %v7640 = vshll.u32 %v7429, 16
        %v7642 = vrot.slane %v7640, 5
        %v7643 = vsel %vm1030, %v7638, %v7642
        %v7644 = vshrl.u32 %v7429, 16
        %v7646 = vrot.slane %v7644, 4
        %v7647 = vor.u32 %v7646, %v7642
        %v7648 = vrot.slane %v7647, 4
        %v7650 = vshll.u32 %v7453, 16
        %v7652 = vrot.slane %v7650, 5
        %v7653 = vsel %vm1030, %v7648, %v7652
        %v7655 = vshrl.u32 %v7430, 16
        %v7657 = vrot.slane %v7655, 4
        %v7658 = vshll.u32 %v7430, 16
        %v7660 = vrot.slane %v7658, 5
        %v7661 = vor.u32 %v7657, %v7660
        %v7662 = vrot.slane %v7661, 4
        %v7664 = vshll.u32 %v7431, 16
        %v7666 = vrot.slane %v7664, 5
        %v7667 = vsel %vm1030, %v7662, %v7666
        %v7668 = vshrl.u32 %v7431, 16
        %v7670 = vrot.slane %v7668, 4
        %v7671 = vor.u32 %v7670, %v7666
        %v7672 = vrot.slane %v7671, 4
        %v7674 = vshll.u32 %v7454, 16
        %v7676 = vrot.slane %v7674, 5
        %v7677 = vsel %vm1030, %v7672, %v7676
        %v7679 = vshrl.u32 %v7432, 16
        %v7681 = vrot.slane %v7679, 4
        %v7682 = vshll.u32 %v7432, 16
        %v7684 = vrot.slane %v7682, 5
        %v7685 = vor.u32 %v7681, %v7684
        %v7686 = vrot.slane %v7685, 4
        %v7688 = vshll.u32 %v7433, 16
        %v7690 = vrot.slane %v7688, 5
        %v7691 = vsel %vm1030, %v7686, %v7690
        %v7692 = vshrl.u32 %v7433, 16
        %v7694 = vrot.slane %v7692, 4
        %v7695 = vor.u32 %v7694, %v7690
        %v7696 = vrot.slane %v7695, 4
        %v7698 = vshll.u32 %v7455, 16
        %v7700 = vrot.slane %v7698, 5
        %v7701 = vsel %vm1030, %v7696, %v7700
        %v7703 = vshrl.u32 %v7434, 16
        %v7705 = vrot.slane %v7703, 4
        %v7706 = vshll.u32 %v7434, 16
        %v7708 = vrot.slane %v7706, 5
        %v7709 = vor.u32 %v7705, %v7708
        %v7710 = vrot.slane %v7709, 4
        %v7712 = vshll.u32 %v7435, 16
        %v7714 = vrot.slane %v7712, 5
        %v7715 = vsel %vm1030, %v7710, %v7714
        %v7716 = vshrl.u32 %v7435, 16
        %v7718 = vrot.slane %v7716, 4
        %v7719 = vor.u32 %v7718, %v7714
        %v7720 = vrot.slane %v7719, 4
        %v7722 = vshll.u32 %v7456, 16
        %v7724 = vrot.slane %v7722, 5
        %v7725 = vsel %vm1030, %v7720, %v7724
        %v7727 = vshrl.u32 %v7436, 16
        %v7729 = vrot.slane %v7727, 4
        %v7730 = vshll.u32 %v7436, 16
        %v7732 = vrot.slane %v7730, 5
        %v7733 = vor.u32 %v7729, %v7732
        %v7734 = vrot.slane %v7733, 4
        %v7736 = vshll.u32 %v7437, 16
        %v7738 = vrot.slane %v7736, 5
        %v7739 = vsel %vm1030, %v7734, %v7738
        %v7740 = vshrl.u32 %v7437, 16
        %v7742 = vrot.slane %v7740, 4
        %v7743 = vor.u32 %v7742, %v7738
        %v7744 = vrot.slane %v7743, 4
        %v7746 = vshll.u32 %v7457, 16
        %v7748 = vrot.slane %v7746, 5
        %v7749 = vsel %vm1030, %v7744, %v7748
        %v7751 = vshrl.u32 %v7438, 16
        %v7753 = vrot.slane %v7751, 4
        %v7754 = vshll.u32 %v7438, 16
        %v7756 = vrot.slane %v7754, 5
        %v7757 = vor.u32 %v7753, %v7756
        %v7758 = vrot.slane %v7757, 4
        %v7760 = vshll.u32 %v7439, 16
        %v7762 = vrot.slane %v7760, 5
        %v7763 = vsel %vm1030, %v7758, %v7762
        %v7764 = vshrl.u32 %v7439, 16
        %v7766 = vrot.slane %v7764, 4
        %v7767 = vor.u32 %v7766, %v7762
        %v7768 = vrot.slane %v7767, 4
        %v7770 = vshll.u32 %v7458, 16
        %v7772 = vrot.slane %v7770, 5
        %v7773 = vsel %vm1030, %v7768, %v7772
        %v7775 = vshrl.u32 %v7440, 16
        %v7777 = vrot.slane %v7775, 4
        %v7778 = vshll.u32 %v7440, 16
        %v7780 = vrot.slane %v7778, 5
        %v7781 = vor.u32 %v7777, %v7780
        %v7782 = vrot.slane %v7781, 4
        %v7784 = vshll.u32 %v7441, 16
        %v7786 = vrot.slane %v7784, 5
        %v7787 = vsel %vm1030, %v7782, %v7786
        %v7788 = vshrl.u32 %v7441, 16
        %v7790 = vrot.slane %v7788, 4
        %v7791 = vor.u32 %v7790, %v7786
        %v7792 = vrot.slane %v7791, 4
        %v7794 = vshll.u32 %v7459, 16
        %v7796 = vrot.slane %v7794, 5
        %v7797 = vsel %vm1030, %v7792, %v7796
        %v7799 = vshrl.u32 %v7442, 16
        %v7801 = vrot.slane %v7799, 4
        %v7802 = vshll.u32 %v7442, 16
        %v7804 = vrot.slane %v7802, 5
        %v7805 = vor.u32 %v7801, %v7804
        %v7806 = vrot.slane %v7805, 4
        %v7808 = vshll.u32 %v7443, 16
        %v7810 = vrot.slane %v7808, 5
        %v7811 = vsel %vm1030, %v7806, %v7810
        %v7812 = vshrl.u32 %v7443, 16
        %v7814 = vrot.slane %v7812, 4
        %v7815 = vor.u32 %v7814, %v7810
        %v7816 = vrot.slane %v7815, 4
        %v7818 = vshll.u32 %v7460, 16
        %v7820 = vrot.slane %v7818, 5
        %v7821 = vsel %vm1030, %v7816, %v7820
        %v7823 = vshrl.u32 %v7444, 16
        %v7825 = vrot.slane %v7823, 4
        %v7826 = vshll.u32 %v7444, 16
        %v7828 = vrot.slane %v7826, 5
        %v7829 = vor.u32 %v7825, %v7828
        %v7830 = vrot.slane %v7829, 4
        %v7832 = vshll.u32 %v7445, 16
        %v7834 = vrot.slane %v7832, 5
        %v7835 = vsel %vm1030, %v7830, %v7834
        %v7836 = vshrl.u32 %v7445, 16
        %v7838 = vrot.slane %v7836, 4
        %v7839 = vor.u32 %v7838, %v7834
        %v7840 = vrot.slane %v7839, 4
        %v7842 = vshll.u32 %v7461, 16
        %v7844 = vrot.slane %v7842, 5
        %v7845 = vsel %vm1030, %v7840, %v7844
        %v7846 = vld [vmem:[%s7413] sm:$0xe]
        %v7847 = vld [vmem:[%s7413 + $0xc] sm:$0xe]
        %v7848 = vld [vmem:[%s7413 + $0x18] sm:$0xe]
        %v7849 = vld [vmem:[%s7413 + $0x24] sm:$0xe]
        %v7850 = vld [vmem:[%s7413 + $0x30] sm:$0xe]
        %v7851 = vld [vmem:[%s7413 + $0x3c] sm:$0xe]
        %v7852 = vld [vmem:[%s7413 + $0x48] sm:$0xe]
        %v7853 = vld [vmem:[%s7413 + $0x54] sm:$0xe]
        %v7854 = vld [vmem:[%s7413 + $0x60] sm:$0xe]
        %v7855 = vld [vmem:[%s7413 + $0x6c] sm:$0xe]
        %v7856 = vld [vmem:[%s7413 + $0x78] sm:$0xe]
        %v7857 = vld [vmem:[%s7413 + $0x84] sm:$0xe]
        %v7858 = vld [vmem:[%s7413 + $0x90] sm:$0xe]
        %v7859 = vld [vmem:[%s7413 + $0x9c] sm:$0xe]
        %v7860 = vld [vmem:[%s7413 + $0xa8] sm:$0xe]
        %v7861 = vld [vmem:[%s7413 + $0xb4] sm:$0xe]
        %v7910 = vrot.slane %v7846, 5
        %v7911 = vrot.slane %v7910, 4
        %v7912 = vrot.slane %v7415, 5
        %v7913 = vsel %vm2024, %v7911, %v7912
        %v7914 = vrot.slane %v7912, 4
        %v7915 = vrot.slane %v7446, 5
        %v7916 = vsel %vm2024, %v7914, %v7915
        %v7917 = vrot.slane %v7847, 5
        %v7918 = vrot.slane %v7917, 4
        %v7919 = vrot.slane %v7417, 5
        %v7920 = vsel %vm2024, %v7918, %v7919
        %v7921 = vrot.slane %v7919, 4
        %v7922 = vrot.slane %v7447, 5
        %v7923 = vsel %vm2024, %v7921, %v7922
        %v7924 = vrot.slane %v7848, 5
        %v7925 = vrot.slane %v7924, 4
        %v7926 = vrot.slane %v7419, 5
        %v7927 = vsel %vm2024, %v7925, %v7926
        %v7928 = vrot.slane %v7926, 4
        %v7929 = vrot.slane %v7448, 5
        %v7930 = vsel %vm2024, %v7928, %v7929
        %v7931 = vrot.slane %v7849, 5
        %v7932 = vrot.slane %v7931, 4
        %v7933 = vrot.slane %v7421, 5
        %v7934 = vsel %vm2024, %v7932, %v7933
        %v7935 = vrot.slane %v7933, 4
        %v7936 = vrot.slane %v7449, 5
        %v7937 = vsel %vm2024, %v7935, %v7936
        %v7938 = vrot.slane %v7850, 5
        %v7939 = vrot.slane %v7938, 4
        %v7940 = vrot.slane %v7423, 5
        %v7941 = vsel %vm2024, %v7939, %v7940
        %v7942 = vrot.slane %v7940, 4
        %v7943 = vrot.slane %v7450, 5
        %v7944 = vsel %vm2024, %v7942, %v7943
        %v7945 = vrot.slane %v7851, 5
        %v7946 = vrot.slane %v7945, 4
        %v7947 = vrot.slane %v7425, 5
        %v7948 = vsel %vm2024, %v7946, %v7947
        %v7949 = vrot.slane %v7947, 4
        %v7950 = vrot.slane %v7451, 5
        %v7951 = vsel %vm2024, %v7949, %v7950
        %v7952 = vrot.slane %v7852, 5
        %v7953 = vrot.slane %v7952, 4
        %v7954 = vrot.slane %v7427, 5
        %v7955 = vsel %vm2024, %v7953, %v7954
        %v7956 = vrot.slane %v7954, 4
        %v7957 = vrot.slane %v7452, 5
        %v7958 = vsel %vm2024, %v7956, %v7957
        %v7959 = vrot.slane %v7853, 5
        %v7960 = vrot.slane %v7959, 4
        %v7961 = vrot.slane %v7429, 5
        %v7962 = vsel %vm2024, %v7960, %v7961
        %v7963 = vrot.slane %v7961, 4
        %v7964 = vrot.slane %v7453, 5
        %v7965 = vsel %vm2024, %v7963, %v7964
        %v7966 = vrot.slane %v7854, 5
        %v7967 = vrot.slane %v7966, 4
        %v7968 = vrot.slane %v7431, 5
        %v7969 = vsel %vm2024, %v7967, %v7968
        %v7970 = vrot.slane %v7968, 4
        %v7971 = vrot.slane %v7454, 5
        %v7972 = vsel %vm2024, %v7970, %v7971
        %v7973 = vrot.slane %v7855, 5
        %v7974 = vrot.slane %v7973, 4
        %v7975 = vrot.slane %v7433, 5
        %v7976 = vsel %vm2024, %v7974, %v7975
        %v7977 = vrot.slane %v7975, 4
        %v7978 = vrot.slane %v7455, 5
        %v7979 = vsel %vm2024, %v7977, %v7978
        %v7980 = vrot.slane %v7856, 5
        %v7981 = vrot.slane %v7980, 4
        %v7982 = vrot.slane %v7435, 5
        %v7983 = vsel %vm2024, %v7981, %v7982
        %v7984 = vrot.slane %v7982, 4
        %v7985 = vrot.slane %v7456, 5
        %v7986 = vsel %vm2024, %v7984, %v7985
        %v7987 = vrot.slane %v7857, 5
        %v7988 = vrot.slane %v7987, 4
        %v7989 = vrot.slane %v7437, 5
        %v7990 = vsel %vm2024, %v7988, %v7989
        %v7991 = vrot.slane %v7989, 4
        %v7992 = vrot.slane %v7457, 5
        %v7993 = vsel %vm2024, %v7991, %v7992
        %v7994 = vrot.slane %v7858, 5
        %v7995 = vrot.slane %v7994, 4
        %v7996 = vrot.slane %v7439, 5
        %v7997 = vsel %vm2024, %v7995, %v7996
        %v7998 = vrot.slane %v7996, 4
        %v7999 = vrot.slane %v7458, 5
        %v8000 = vsel %vm2024, %v7998, %v7999
        %v8001 = vrot.slane %v7859, 5
        %v8002 = vrot.slane %v8001, 4
        %v8003 = vrot.slane %v7441, 5
        %v8004 = vsel %vm2024, %v8002, %v8003
        %v8005 = vrot.slane %v8003, 4
        %v8006 = vrot.slane %v7459, 5
        %v8007 = vsel %vm2024, %v8005, %v8006
        %v8008 = vrot.slane %v7860, 5
        %v8009 = vrot.slane %v8008, 4
        %v8010 = vrot.slane %v7443, 5
        %v8011 = vsel %vm2024, %v8009, %v8010
        %v8012 = vrot.slane %v8010, 4
        %v8013 = vrot.slane %v7460, 5
        %v8014 = vsel %vm2024, %v8012, %v8013
        %v8015 = vrot.slane %v7861, 5
        %v8016 = vrot.slane %v8015, 4
        %v8017 = vrot.slane %v7445, 5
        %v8018 = vsel %vm2024, %v8016, %v8017
        %v8019 = vrot.slane %v8017, 4
        %v8020 = vrot.slane %v7461, 5
        %v8021 = vsel %vm2024, %v8019, %v8020
        %v8038 = vunpack.c.l.b16 %v6197
        %v8039 = vunpack.c.l.b16 %v6198
        %v8040 = vunpack.c.l.b16 %v6199
        %v8041 = vunpack.c.l.b16 %v6200
        %v8042 = vunpack.c.l.b16 %v6201
        %v8043 = vunpack.c.l.b16 %v6202
        %v8044 = vunpack.c.l.b16 %v6203
        %v8045 = vunpack.c.l.b16 %v6204
        %v8046 = vunpack.c.l.b16 %v6205
        %v8047 = vunpack.c.l.b16 %v6206
        %v8048 = vunpack.c.l.b16 %v6207
        %v8049 = vunpack.c.l.b16 %v6208
        %v8050 = vunpack.c.l.b16 %v6209
        %v8051 = vunpack.c.l.b16 %v6210
        %v8052 = vunpack.c.l.b16 %v6211
        %v8053 = vunpack.c.l.b16 %v6212
        %v8054 = vunpack.c.l.b16 %v6213
        %v8055 = vunpack.c.l.b16 %v6214
        %v8056 = vunpack.c.l.b16 %v6215
        %v8057 = vunpack.c.l.b16 %v6216
        %v8058 = vunpack.c.l.b16 %v6217
        %v8059 = vunpack.c.l.b16 %v6218
        %v8060 = vunpack.c.l.b16 %v6219
        %v8061 = vunpack.c.l.b16 %v6220
        %v8062 = vunpack.c.l.b16 %v6221
        %v8063 = vunpack.c.l.b16 %v6222
        %v8064 = vunpack.c.l.b16 %v6223
        %v8065 = vunpack.c.l.b16 %v6224
        %v8066 = vunpack.c.l.b16 %v6225
        %v8067 = vunpack.c.l.b16 %v6226
        %v8068 = vunpack.c.l.b16 %v6227
        %v8069 = vunpack.c.l.b16 %v6228
        %v8070 = vpack.c.b16 %v8039, %v8038
        %v8071 = vpack.c.b16 %v8041, %v8040
        %v8072 = vpack.c.b16 %v8043, %v8042
        %v8073 = vpack.c.b16 %v8045, %v8044
        %v8074 = vpack.c.b16 %v8047, %v8046
        %v8075 = vpack.c.b16 %v8049, %v8048
        %v8076 = vpack.c.b16 %v8051, %v8050
        %v8077 = vpack.c.b16 %v8053, %v8052
        %v8078 = vpack.c.b16 %v8055, %v8054
        %v8079 = vpack.c.b16 %v8057, %v8056
        %v8080 = vpack.c.b16 %v8059, %v8058
        %v8081 = vpack.c.b16 %v8061, %v8060
        %v8082 = vpack.c.b16 %v8063, %v8062
        %v8083 = vpack.c.b16 %v8065, %v8064
        %v8084 = vpack.c.b16 %v8067, %v8066
        %v8085 = vpack.c.b16 %v8069, %v8068
        %v8102 = vunpack.c.l.b16 %v6258
        %v8103 = vunpack.c.l.b16 %v6268
        %v8104 = vunpack.c.l.b16 %v6282
        %v8105 = vunpack.c.l.b16 %v6292
        %v8106 = vunpack.c.l.b16 %v6306
        %v8107 = vunpack.c.l.b16 %v6316
        %v8108 = vunpack.c.l.b16 %v6330
        %v8109 = vunpack.c.l.b16 %v6340
        %v8110 = vunpack.c.l.b16 %v6354
        %v8111 = vunpack.c.l.b16 %v6364
        %v8112 = vunpack.c.l.b16 %v6378
        %v8113 = vunpack.c.l.b16 %v6388
        %v8114 = vunpack.c.l.b16 %v6402
        %v8115 = vunpack.c.l.b16 %v6412
        %v8116 = vunpack.c.l.b16 %v6426
        %v8117 = vunpack.c.l.b16 %v6436
        %v8118 = vunpack.c.l.b16 %v6450
        %v8119 = vunpack.c.l.b16 %v6460
        %v8120 = vunpack.c.l.b16 %v6474
        %v8121 = vunpack.c.l.b16 %v6484
        %v8122 = vunpack.c.l.b16 %v6498
        %v8123 = vunpack.c.l.b16 %v6508
        %v8124 = vunpack.c.l.b16 %v6522
        %v8125 = vunpack.c.l.b16 %v6532
        %v8126 = vunpack.c.l.b16 %v6546
        %v8127 = vunpack.c.l.b16 %v6556
        %v8128 = vunpack.c.l.b16 %v6570
        %v8129 = vunpack.c.l.b16 %v6580
        %v8130 = vunpack.c.l.b16 %v6594
        %v8131 = vunpack.c.l.b16 %v6604
        %v8132 = vunpack.c.l.b16 %v6618
        %v8133 = vunpack.c.l.b16 %v6628
        %v8134 = vpack.c.b16 %v8103, %v8102
        %v8135 = vpack.c.b16 %v8105, %v8104
        %v8136 = vpack.c.b16 %v8107, %v8106
        %v8137 = vpack.c.b16 %v8109, %v8108
        %v8138 = vpack.c.b16 %v8111, %v8110
        %v8139 = vpack.c.b16 %v8113, %v8112
        %v8140 = vpack.c.b16 %v8115, %v8114
        %v8141 = vpack.c.b16 %v8117, %v8116
        %v8142 = vpack.c.b16 %v8119, %v8118
        %v8143 = vpack.c.b16 %v8121, %v8120
        %v8144 = vpack.c.b16 %v8123, %v8122
        %v8145 = vpack.c.b16 %v8125, %v8124
        %v8146 = vpack.c.b16 %v8127, %v8126
        %v8147 = vpack.c.b16 %v8129, %v8128
        %v8148 = vpack.c.b16 %v8131, %v8130
        %v8149 = vpack.c.b16 %v8133, %v8132
        %v8166 = vunpack.c.l.b16 %v6696
        %v8167 = vunpack.c.l.b16 %v6699
        %v8168 = vunpack.c.l.b16 %v6703
        %v8169 = vunpack.c.l.b16 %v6706
        %v8170 = vunpack.c.l.b16 %v6710
        %v8171 = vunpack.c.l.b16 %v6713
        %v8172 = vunpack.c.l.b16 %v6717
        %v8173 = vunpack.c.l.b16 %v6720
        %v8174 = vunpack.c.l.b16 %v6724
        %v8175 = vunpack.c.l.b16 %v6727
        %v8176 = vunpack.c.l.b16 %v6731
        %v8177 = vunpack.c.l.b16 %v6734
        %v8178 = vunpack.c.l.b16 %v6738
        %v8179 = vunpack.c.l.b16 %v6741
        %v8180 = vunpack.c.l.b16 %v6745
        %v8181 = vunpack.c.l.b16 %v6748
        %v8182 = vunpack.c.l.b16 %v6752
        %v8183 = vunpack.c.l.b16 %v6755
        %v8184 = vunpack.c.l.b16 %v6759
        %v8185 = vunpack.c.l.b16 %v6762
        %v8186 = vunpack.c.l.b16 %v6766
        %v8187 = vunpack.c.l.b16 %v6769
        %v8188 = vunpack.c.l.b16 %v6773
        %v8189 = vunpack.c.l.b16 %v6776
        %v8190 = vunpack.c.l.b16 %v6780
        %v8191 = vunpack.c.l.b16 %v6783
        %v8192 = vunpack.c.l.b16 %v6787
        %v8193 = vunpack.c.l.b16 %v6790
        %v8194 = vunpack.c.l.b16 %v6794
        %v8195 = vunpack.c.l.b16 %v6797
        %v8196 = vunpack.c.l.b16 %v6801
        %v8197 = vunpack.c.l.b16 %v6804
        %v8198 = vpack.c.b16 %v8167, %v8166
        %v8199 = vpack.c.b16 %v8169, %v8168
        %v8200 = vpack.c.b16 %v8171, %v8170
        %v8201 = vpack.c.b16 %v8173, %v8172
        %v8202 = vpack.c.b16 %v8175, %v8174
        %v8203 = vpack.c.b16 %v8177, %v8176
        %v8204 = vpack.c.b16 %v8179, %v8178
        %v8205 = vpack.c.b16 %v8181, %v8180
        %v8206 = vpack.c.b16 %v8183, %v8182
        %v8207 = vpack.c.b16 %v8185, %v8184
        %v8208 = vpack.c.b16 %v8187, %v8186
        %v8209 = vpack.c.b16 %v8189, %v8188
        %v8210 = vpack.c.b16 %v8191, %v8190
        %v8211 = vpack.c.b16 %v8193, %v8192
        %v8212 = vpack.c.b16 %v8195, %v8194
        %v8213 = vpack.c.b16 %v8197, %v8196
        %v8246 = vunpack.c.l.b16 %v6805
        %v8247 = vunpack.c.l.b16 %v6806
        %v8248 = vunpack.c.l.b16 %v6807
        %v8249 = vunpack.c.l.b16 %v6808
        %v8250 = vunpack.c.l.b16 %v6809
        %v8251 = vunpack.c.l.b16 %v6810
        %v8252 = vunpack.c.l.b16 %v6811
        %v8253 = vunpack.c.l.b16 %v6812
        %v8254 = vunpack.c.l.b16 %v6813
        %v8255 = vunpack.c.l.b16 %v6814
        %v8256 = vunpack.c.l.b16 %v6815
        %v8257 = vunpack.c.l.b16 %v6816
        %v8258 = vunpack.c.l.b16 %v6817
        %v8259 = vunpack.c.l.b16 %v6818
        %v8260 = vunpack.c.l.b16 %v6819
        %v8261 = vunpack.c.l.b16 %v6820
        %v8262 = vunpack.c.l.b16 %v6821
        %v8263 = vunpack.c.l.b16 %v6822
        %v8264 = vunpack.c.l.b16 %v6823
        %v8265 = vunpack.c.l.b16 %v6824
        %v8266 = vunpack.c.l.b16 %v6825
        %v8267 = vunpack.c.l.b16 %v6826
        %v8268 = vunpack.c.l.b16 %v6827
        %v8269 = vunpack.c.l.b16 %v6828
        %v8270 = vunpack.c.l.b16 %v6829
        %v8271 = vunpack.c.l.b16 %v6830
        %v8272 = vunpack.c.l.b16 %v6831
        %v8273 = vunpack.c.l.b16 %v6832
        %v8274 = vunpack.c.l.b16 %v6833
        %v8275 = vunpack.c.l.b16 %v6834
        %v8276 = vunpack.c.l.b16 %v6835
        %v8277 = vunpack.c.l.b16 %v6836
        %v8278 = vpack.c.b16 %v8247, %v8246
        %v8279 = vpack.c.b16 %v8249, %v8248
        %v8280 = vpack.c.b16 %v8251, %v8250
        %v8281 = vpack.c.b16 %v8253, %v8252
        %v8282 = vpack.c.b16 %v8255, %v8254
        %v8283 = vpack.c.b16 %v8257, %v8256
        %v8284 = vpack.c.b16 %v8259, %v8258
        %v8285 = vpack.c.b16 %v8261, %v8260
        %v8286 = vpack.c.b16 %v8263, %v8262
        %v8287 = vpack.c.b16 %v8265, %v8264
        %v8288 = vpack.c.b16 %v8267, %v8266
        %v8289 = vpack.c.b16 %v8269, %v8268
        %v8290 = vpack.c.b16 %v8271, %v8270
        %v8291 = vpack.c.b16 %v8273, %v8272
        %v8292 = vpack.c.b16 %v8275, %v8274
        %v8293 = vpack.c.b16 %v8277, %v8276
        %v8310 = vunpack.c.l.b16 %v6866
        %v8311 = vunpack.c.l.b16 %v6876
        %v8312 = vunpack.c.l.b16 %v6890
        %v8313 = vunpack.c.l.b16 %v6900
        %v8314 = vunpack.c.l.b16 %v6914
        %v8315 = vunpack.c.l.b16 %v6924
        %v8316 = vunpack.c.l.b16 %v6938
        %v8317 = vunpack.c.l.b16 %v6948
        %v8318 = vunpack.c.l.b16 %v6962
        %v8319 = vunpack.c.l.b16 %v6972
        %v8320 = vunpack.c.l.b16 %v6986
        %v8321 = vunpack.c.l.b16 %v6996
        %v8322 = vunpack.c.l.b16 %v7010
        %v8323 = vunpack.c.l.b16 %v7020
        %v8324 = vunpack.c.l.b16 %v7034
        %v8325 = vunpack.c.l.b16 %v7044
        %v8326 = vunpack.c.l.b16 %v7058
        %v8327 = vunpack.c.l.b16 %v7068
        %v8328 = vunpack.c.l.b16 %v7082
        %v8329 = vunpack.c.l.b16 %v7092
        %v8330 = vunpack.c.l.b16 %v7106
        %v8331 = vunpack.c.l.b16 %v7116
        %v8332 = vunpack.c.l.b16 %v7130
        %v8333 = vunpack.c.l.b16 %v7140
        %v8334 = vunpack.c.l.b16 %v7154
        %v8335 = vunpack.c.l.b16 %v7164
        %v8336 = vunpack.c.l.b16 %v7178
        %v8337 = vunpack.c.l.b16 %v7188
        %v8338 = vunpack.c.l.b16 %v7202
        %v8339 = vunpack.c.l.b16 %v7212
        %v8340 = vunpack.c.l.b16 %v7226
        %v8341 = vunpack.c.l.b16 %v7236
        %v8342 = vpack.c.b16 %v8311, %v8310
        %v8343 = vpack.c.b16 %v8313, %v8312
        %v8344 = vpack.c.b16 %v8315, %v8314
        %v8345 = vpack.c.b16 %v8317, %v8316
        %v8346 = vpack.c.b16 %v8319, %v8318
        %v8347 = vpack.c.b16 %v8321, %v8320
        %v8348 = vpack.c.b16 %v8323, %v8322
        %v8349 = vpack.c.b16 %v8325, %v8324
        %v8350 = vpack.c.b16 %v8327, %v8326
        %v8351 = vpack.c.b16 %v8329, %v8328
        %v8352 = vpack.c.b16 %v8331, %v8330
        %v8353 = vpack.c.b16 %v8333, %v8332
        %v8354 = vpack.c.b16 %v8335, %v8334
        %v8355 = vpack.c.b16 %v8337, %v8336
        %v8356 = vpack.c.b16 %v8339, %v8338
        %v8357 = vpack.c.b16 %v8341, %v8340
        %v8374 = vunpack.c.l.b16 %v7304
        %v8375 = vunpack.c.l.b16 %v7307
        %v8376 = vunpack.c.l.b16 %v7311
        %v8377 = vunpack.c.l.b16 %v7314
        %v8378 = vunpack.c.l.b16 %v7318
        %v8379 = vunpack.c.l.b16 %v7321
        %v8380 = vunpack.c.l.b16 %v7325
        %v8381 = vunpack.c.l.b16 %v7328
        %v8382 = vunpack.c.l.b16 %v7332
        %v8383 = vunpack.c.l.b16 %v7335
        %v8384 = vunpack.c.l.b16 %v7339
        %v8385 = vunpack.c.l.b16 %v7342
        %v8386 = vunpack.c.l.b16 %v7346
        %v8387 = vunpack.c.l.b16 %v7349
        %v8388 = vunpack.c.l.b16 %v7353
        %v8389 = vunpack.c.l.b16 %v7356
        %v8390 = vunpack.c.l.b16 %v7360
        %v8391 = vunpack.c.l.b16 %v7363
        %v8392 = vunpack.c.l.b16 %v7367
        %v8393 = vunpack.c.l.b16 %v7370
        %v8394 = vunpack.c.l.b16 %v7374
        %v8395 = vunpack.c.l.b16 %v7377
        %v8396 = vunpack.c.l.b16 %v7381
        %v8397 = vunpack.c.l.b16 %v7384
        %v8398 = vunpack.c.l.b16 %v7388
        %v8399 = vunpack.c.l.b16 %v7391
        %v8400 = vunpack.c.l.b16 %v7395
        %v8401 = vunpack.c.l.b16 %v7398
        %v8402 = vunpack.c.l.b16 %v7402
        %v8403 = vunpack.c.l.b16 %v7405
        %v8404 = vunpack.c.l.b16 %v7409
        %v8405 = vunpack.c.l.b16 %v7412
        %v8406 = vpack.c.b16 %v8375, %v8374
        %v8407 = vpack.c.b16 %v8377, %v8376
        %v8408 = vpack.c.b16 %v8379, %v8378
        %v8409 = vpack.c.b16 %v8381, %v8380
        %v8410 = vpack.c.b16 %v8383, %v8382
        %v8411 = vpack.c.b16 %v8385, %v8384
        %v8412 = vpack.c.b16 %v8387, %v8386
        %v8413 = vpack.c.b16 %v8389, %v8388
        %v8414 = vpack.c.b16 %v8391, %v8390
        %v8415 = vpack.c.b16 %v8393, %v8392
        %v8416 = vpack.c.b16 %v8395, %v8394
        %v8417 = vpack.c.b16 %v8397, %v8396
        %v8418 = vpack.c.b16 %v8399, %v8398
        %v8419 = vpack.c.b16 %v8401, %v8400
        %v8420 = vpack.c.b16 %v8403, %v8402
        %v8421 = vpack.c.b16 %v8405, %v8404
        %v8454 = vunpack.c.l.b16 %v7414
        %v8455 = vunpack.c.l.b16 %v7415
        %v8456 = vunpack.c.l.b16 %v7416
        %v8457 = vunpack.c.l.b16 %v7417
        %v8458 = vunpack.c.l.b16 %v7418
        %v8459 = vunpack.c.l.b16 %v7419
        %v8460 = vunpack.c.l.b16 %v7420
        %v8461 = vunpack.c.l.b16 %v7421
        %v8462 = vunpack.c.l.b16 %v7422
        %v8463 = vunpack.c.l.b16 %v7423
        %v8464 = vunpack.c.l.b16 %v7424
        %v8465 = vunpack.c.l.b16 %v7425
        %v8466 = vunpack.c.l.b16 %v7426
        %v8467 = vunpack.c.l.b16 %v7427
        %v8468 = vunpack.c.l.b16 %v7428
        %v8469 = vunpack.c.l.b16 %v7429
        %v8470 = vunpack.c.l.b16 %v7430
        %v8471 = vunpack.c.l.b16 %v7431
        %v8472 = vunpack.c.l.b16 %v7432
        %v8473 = vunpack.c.l.b16 %v7433
        %v8474 = vunpack.c.l.b16 %v7434
        %v8475 = vunpack.c.l.b16 %v7435
        %v8476 = vunpack.c.l.b16 %v7436
        %v8477 = vunpack.c.l.b16 %v7437
        %v8478 = vunpack.c.l.b16 %v7438
        %v8479 = vunpack.c.l.b16 %v7439
        %v8480 = vunpack.c.l.b16 %v7440
        %v8481 = vunpack.c.l.b16 %v7441
        %v8482 = vunpack.c.l.b16 %v7442
        %v8483 = vunpack.c.l.b16 %v7443
        %v8484 = vunpack.c.l.b16 %v7444
        %v8485 = vunpack.c.l.b16 %v7445
        %v8486 = vpack.c.b16 %v8455, %v8454
        %v8487 = vpack.c.b16 %v8457, %v8456
        %v8488 = vpack.c.b16 %v8459, %v8458
        %v8489 = vpack.c.b16 %v8461, %v8460
        %v8490 = vpack.c.b16 %v8463, %v8462
        %v8491 = vpack.c.b16 %v8465, %v8464
        %v8492 = vpack.c.b16 %v8467, %v8466
        %v8493 = vpack.c.b16 %v8469, %v8468
        %v8494 = vpack.c.b16 %v8471, %v8470
        %v8495 = vpack.c.b16 %v8473, %v8472
        %v8496 = vpack.c.b16 %v8475, %v8474
        %v8497 = vpack.c.b16 %v8477, %v8476
        %v8498 = vpack.c.b16 %v8479, %v8478
        %v8499 = vpack.c.b16 %v8481, %v8480
        %v8500 = vpack.c.b16 %v8483, %v8482
        %v8501 = vpack.c.b16 %v8485, %v8484
        %v8518 = vunpack.c.l.b16 %v7475
        %v8519 = vunpack.c.l.b16 %v7485
        %v8520 = vunpack.c.l.b16 %v7499
        %v8521 = vunpack.c.l.b16 %v7509
        %v8522 = vunpack.c.l.b16 %v7523
        %v8523 = vunpack.c.l.b16 %v7533
        %v8524 = vunpack.c.l.b16 %v7547
        %v8525 = vunpack.c.l.b16 %v7557
        %v8526 = vunpack.c.l.b16 %v7571
        %v8527 = vunpack.c.l.b16 %v7581
        %v8528 = vunpack.c.l.b16 %v7595
        %v8529 = vunpack.c.l.b16 %v7605
        %v8530 = vunpack.c.l.b16 %v7619
        %v8531 = vunpack.c.l.b16 %v7629
        %v8532 = vunpack.c.l.b16 %v7643
        %v8533 = vunpack.c.l.b16 %v7653
        %v8534 = vunpack.c.l.b16 %v7667
        %v8535 = vunpack.c.l.b16 %v7677
        %v8536 = vunpack.c.l.b16 %v7691
        %v8537 = vunpack.c.l.b16 %v7701
        %v8538 = vunpack.c.l.b16 %v7715
        %v8539 = vunpack.c.l.b16 %v7725
        %v8540 = vunpack.c.l.b16 %v7739
        %v8541 = vunpack.c.l.b16 %v7749
        %v8542 = vunpack.c.l.b16 %v7763
        %v8543 = vunpack.c.l.b16 %v7773
        %v8544 = vunpack.c.l.b16 %v7787
        %v8545 = vunpack.c.l.b16 %v7797
        %v8546 = vunpack.c.l.b16 %v7811
        %v8547 = vunpack.c.l.b16 %v7821
        %v8548 = vunpack.c.l.b16 %v7835
        %v8549 = vunpack.c.l.b16 %v7845
        %v8550 = vpack.c.b16 %v8519, %v8518
        %v8551 = vpack.c.b16 %v8521, %v8520
        %v8552 = vpack.c.b16 %v8523, %v8522
        %v8553 = vpack.c.b16 %v8525, %v8524
        %v8554 = vpack.c.b16 %v8527, %v8526
        %v8555 = vpack.c.b16 %v8529, %v8528
        %v8556 = vpack.c.b16 %v8531, %v8530
        %v8557 = vpack.c.b16 %v8533, %v8532
        %v8558 = vpack.c.b16 %v8535, %v8534
        %v8559 = vpack.c.b16 %v8537, %v8536
        %v8560 = vpack.c.b16 %v8539, %v8538
        %v8561 = vpack.c.b16 %v8541, %v8540
        %v8562 = vpack.c.b16 %v8543, %v8542
        %v8563 = vpack.c.b16 %v8545, %v8544
        %v8564 = vpack.c.b16 %v8547, %v8546
        %v8565 = vpack.c.b16 %v8549, %v8548
        %v8582 = vunpack.c.l.b16 %v7913
        %v8583 = vunpack.c.l.b16 %v7916
        %v8584 = vunpack.c.l.b16 %v7920
        %v8585 = vunpack.c.l.b16 %v7923
        %v8586 = vunpack.c.l.b16 %v7927
        %v8587 = vunpack.c.l.b16 %v7930
        %v8588 = vunpack.c.l.b16 %v7934
        %v8589 = vunpack.c.l.b16 %v7937
        %v8590 = vunpack.c.l.b16 %v7941
        %v8591 = vunpack.c.l.b16 %v7944
        %v8592 = vunpack.c.l.b16 %v7948
        %v8593 = vunpack.c.l.b16 %v7951
        %v8594 = vunpack.c.l.b16 %v7955
        %v8595 = vunpack.c.l.b16 %v7958
        %v8596 = vunpack.c.l.b16 %v7962
        %v8597 = vunpack.c.l.b16 %v7965
        %v8598 = vunpack.c.l.b16 %v7969
        %v8599 = vunpack.c.l.b16 %v7972
        %v8600 = vunpack.c.l.b16 %v7976
        %v8601 = vunpack.c.l.b16 %v7979
        %v8602 = vunpack.c.l.b16 %v7983
        %v8603 = vunpack.c.l.b16 %v7986
        %v8604 = vunpack.c.l.b16 %v7990
        %v8605 = vunpack.c.l.b16 %v7993
        %v8606 = vunpack.c.l.b16 %v7997
        %v8607 = vunpack.c.l.b16 %v8000
        %v8608 = vunpack.c.l.b16 %v8004
        %v8609 = vunpack.c.l.b16 %v8007
        %v8610 = vunpack.c.l.b16 %v8011
        %v8611 = vunpack.c.l.b16 %v8014
        %v8612 = vunpack.c.l.b16 %v8018
        %v8613 = vunpack.c.l.b16 %v8021
        %v8614 = vpack.c.b16 %v8583, %v8582
        %v8615 = vpack.c.b16 %v8585, %v8584
        %v8616 = vpack.c.b16 %v8587, %v8586
        %v8617 = vpack.c.b16 %v8589, %v8588
        %v8618 = vpack.c.b16 %v8591, %v8590
        %v8619 = vpack.c.b16 %v8593, %v8592
        %v8620 = vpack.c.b16 %v8595, %v8594
        %v8621 = vpack.c.b16 %v8597, %v8596
        %v8622 = vpack.c.b16 %v8599, %v8598
        %v8623 = vpack.c.b16 %v8601, %v8600
        %v8624 = vpack.c.b16 %v8603, %v8602
        %v8625 = vpack.c.b16 %v8605, %v8604
        %v8626 = vpack.c.b16 %v8607, %v8606
        %v8627 = vpack.c.b16 %v8609, %v8608
        %v8628 = vpack.c.b16 %v8611, %v8610
        %v8629 = vpack.c.b16 %v8613, %v8612
        %v8646 = vld [vmem:[%s3] sm:$0xf]
        %v8647 = vld [vmem:[%s3 + $0x4] sm:$0xf]
        %v8648 = vld [vmem:[%s3 + $0x8] sm:$0xf]
        %v8649 = vld [vmem:[%s3 + $0xc] sm:$0xf]
        %v8650 = vld [vmem:[%s3 + $0x10] sm:$0xf]
        %v8651 = vld [vmem:[%s3 + $0x14] sm:$0xf]
        %v8652 = vld [vmem:[%s3 + $0x18] sm:$0xf]
        %v8653 = vld [vmem:[%s3 + $0x1c] sm:$0xf]
        %v8654 = vld [vmem:[%s3 + $0x20] sm:$0xf]
        %v8655 = vld [vmem:[%s3 + $0x24] sm:$0xf]
        %v8656 = vld [vmem:[%s3 + $0x28] sm:$0xf]
        %v8657 = vld [vmem:[%s3 + $0x2c] sm:$0xf]
        %v8658 = vld [vmem:[%s3 + $0x30] sm:$0xf]
        %v8659 = vld [vmem:[%s3 + $0x34] sm:$0xf]
        %v8660 = vld [vmem:[%s3 + $0x38] sm:$0xf]
        %v8661 = vld [vmem:[%s3 + $0x3c] sm:$0xf]
        %v8662 = vld [vmem:[%s3 + $0x40] sm:$0xf]
        %v8663 = vld [vmem:[%s3 + $0x44] sm:$0xf]
        %v8664 = vld [vmem:[%s3 + $0x48] sm:$0xf]
        %v8665 = vld [vmem:[%s3 + $0x4c] sm:$0xf]
        %v8666 = vld [vmem:[%s3 + $0x50] sm:$0xf]
        %v8667 = vld [vmem:[%s3 + $0x54] sm:$0xf]
        %v8668 = vld [vmem:[%s3 + $0x58] sm:$0xf]
        %v8669 = vld [vmem:[%s3 + $0x5c] sm:$0xf]
        %v8670 = vld [vmem:[%s3 + $0x60] sm:$0xf]
        %v8671 = vld [vmem:[%s3 + $0x64] sm:$0xf]
        %v8672 = vld [vmem:[%s3 + $0x68] sm:$0xf]
        %v8673 = vld [vmem:[%s3 + $0x6c] sm:$0xf]
        %v8674 = vld [vmem:[%s3 + $0x70] sm:$0xf]
        %v8675 = vld [vmem:[%s3 + $0x74] sm:$0xf]
        %v8676 = vld [vmem:[%s3 + $0x78] sm:$0xf]
        %v8677 = vld [vmem:[%s3 + $0x7c] sm:$0xf]
        %v8678 = vld [vmem:[%s3 + $0x80] sm:$0xf]
        %v8679 = vld [vmem:[%s3 + $0x84] sm:$0xf]
        %v8680 = vld [vmem:[%s3 + $0x88] sm:$0xf]
        %v8681 = vld [vmem:[%s3 + $0x8c] sm:$0xf]
        %v8682 = vld [vmem:[%s3 + $0x90] sm:$0xf]
        %v8683 = vld [vmem:[%s3 + $0x94] sm:$0xf]
        %v8684 = vld [vmem:[%s3 + $0x98] sm:$0xf]
        %v8685 = vld [vmem:[%s3 + $0x9c] sm:$0xf]
        %v8686 = vld [vmem:[%s3 + $0xa0] sm:$0xf]
        %v8687 = vld [vmem:[%s3 + $0xa4] sm:$0xf]
        %v8688 = vld [vmem:[%s3 + $0xa8] sm:$0xf]
        %v8689 = vld [vmem:[%s3 + $0xac] sm:$0xf]
        %v8690 = vld [vmem:[%s3 + $0xb0] sm:$0xf]
        %v8691 = vld [vmem:[%s3 + $0xb4] sm:$0xf]
        %v8692 = vld [vmem:[%s3 + $0xb8] sm:$0xf]
        %v8693 = vld [vmem:[%s3 + $0xbc] sm:$0xf]
        %v8694 = vld [vmem:[%s3 + $0xc0] sm:$0xf]
        %v8695 = vld [vmem:[%s3 + $0xc4] sm:$0xf]
        %v8696 = vld [vmem:[%s3 + $0xc8] sm:$0xf]
        %v8697 = vld [vmem:[%s3 + $0xcc] sm:$0xf]
        %v8698 = vld [vmem:[%s3 + $0xd0] sm:$0xf]
        %v8699 = vld [vmem:[%s3 + $0xd4] sm:$0xf]
        %v8700 = vld [vmem:[%s3 + $0xd8] sm:$0xf]
        %v8701 = vld [vmem:[%s3 + $0xdc] sm:$0xf]
        %v8702 = vld [vmem:[%s3 + $0xe0] sm:$0xf]
        %v8703 = vld [vmem:[%s3 + $0xe4] sm:$0xf]
        %v8704 = vld [vmem:[%s3 + $0xe8] sm:$0xf]
        %v8705 = vld [vmem:[%s3 + $0xec] sm:$0xf]
        %v8706 = vld [vmem:[%s3 + $0xf0] sm:$0xf]
        %v8707 = vld [vmem:[%s3 + $0xf4] sm:$0xf]
        %v8708 = vld [vmem:[%s3 + $0xf8] sm:$0xf]
        %v8709 = vld [vmem:[%s3 + $0xfc] sm:$0xf]
        %v8710 = vld [vmem:[%s3 + $0x100] sm:$0xf]
        %v8711 = vld [vmem:[%s3 + $0x104] sm:$0xf]
        %v8712 = vld [vmem:[%s3 + $0x108] sm:$0xf]
        %v8713 = vld [vmem:[%s3 + $0x10c] sm:$0xf]
        %v8714 = vld [vmem:[%s3 + $0x110] sm:$0xf]
        %v8715 = vld [vmem:[%s3 + $0x114] sm:$0xf]
        %v8716 = vld [vmem:[%s3 + $0x118] sm:$0xf]
        %v8717 = vld [vmem:[%s3 + $0x11c] sm:$0xf]
        %v8718 = vld [vmem:[%s3 + $0x120] sm:$0xf]
        %v8719 = vld [vmem:[%s3 + $0x124] sm:$0xf]
        %v8720 = vld [vmem:[%s3 + $0x128] sm:$0xf]
        %v8721 = vld [vmem:[%s3 + $0x12c] sm:$0xf]
        %v8722 = vld [vmem:[%s3 + $0x130] sm:$0xf]
        %v8723 = vld [vmem:[%s3 + $0x134] sm:$0xf]
        %v8724 = vld [vmem:[%s3 + $0x138] sm:$0xf]
        %v8725 = vld [vmem:[%s3 + $0x13c] sm:$0xf]
        %v8726 = vld [vmem:[%s3 + $0x140] sm:$0xf]
        %v8727 = vld [vmem:[%s3 + $0x144] sm:$0xf]
        %v8728 = vld [vmem:[%s3 + $0x148] sm:$0xf]
        %v8729 = vld [vmem:[%s3 + $0x14c] sm:$0xf]
        %v8730 = vld [vmem:[%s3 + $0x150] sm:$0xf]
        %v8731 = vld [vmem:[%s3 + $0x154] sm:$0xf]
        %v8732 = vld [vmem:[%s3 + $0x158] sm:$0xf]
        %v8733 = vld [vmem:[%s3 + $0x15c] sm:$0xf]
        %v8734 = vld [vmem:[%s3 + $0x160] sm:$0xf]
        %v8735 = vld [vmem:[%s3 + $0x164] sm:$0xf]
        %v8736 = vld [vmem:[%s3 + $0x168] sm:$0xf]
        %v8737 = vld [vmem:[%s3 + $0x16c] sm:$0xf]
        %v8738 = vld [vmem:[%s3 + $0x170] sm:$0xf]
        %v8739 = vld [vmem:[%s3 + $0x174] sm:$0xf]
        %v8740 = vld [vmem:[%s3 + $0x178] sm:$0xf]
        %v8741 = vld [vmem:[%s3 + $0x17c] sm:$0xf]
        %v8742 = vld [vmem:[%s3 + $0x180] sm:$0xf]
        %v8743 = vld [vmem:[%s3 + $0x184] sm:$0xf]
        %v8744 = vld [vmem:[%s3 + $0x188] sm:$0xf]
        %v8745 = vld [vmem:[%s3 + $0x18c] sm:$0xf]
        %v8746 = vld [vmem:[%s3 + $0x190] sm:$0xf]
        %v8747 = vld [vmem:[%s3 + $0x194] sm:$0xf]
        %v8748 = vld [vmem:[%s3 + $0x198] sm:$0xf]
        %v8749 = vld [vmem:[%s3 + $0x19c] sm:$0xf]
        %v8750 = vld [vmem:[%s3 + $0x1a0] sm:$0xf]
        %v8751 = vld [vmem:[%s3 + $0x1a4] sm:$0xf]
        %v8752 = vld [vmem:[%s3 + $0x1a8] sm:$0xf]
        %v8753 = vld [vmem:[%s3 + $0x1ac] sm:$0xf]
        %v8754 = vld [vmem:[%s3 + $0x1b0] sm:$0xf]
        %v8755 = vld [vmem:[%s3 + $0x1b4] sm:$0xf]
        %v8756 = vld [vmem:[%s3 + $0x1b8] sm:$0xf]
        %v8757 = vld [vmem:[%s3 + $0x1bc] sm:$0xf]
        %v8758 = vld [vmem:[%s3 + $0x1c0] sm:$0xf]
        %v8759 = vld [vmem:[%s3 + $0x1c4] sm:$0xf]
        %v8760 = vld [vmem:[%s3 + $0x1c8] sm:$0xf]
        %v8761 = vld [vmem:[%s3 + $0x1cc] sm:$0xf]
        %v8762 = vld [vmem:[%s3 + $0x1d0] sm:$0xf]
        %v8763 = vld [vmem:[%s3 + $0x1d4] sm:$0xf]
        %v8764 = vld [vmem:[%s3 + $0x1d8] sm:$0xf]
        %v8765 = vld [vmem:[%s3 + $0x1dc] sm:$0xf]
        %v8766 = vld [vmem:[%s3 + $0x1e0] sm:$0xf]
        %v8767 = vld [vmem:[%s3 + $0x1e4] sm:$0xf]
        %v8768 = vld [vmem:[%s3 + $0x1e8] sm:$0xf]
        %v8769 = vld [vmem:[%s3 + $0x1ec] sm:$0xf]
        %v8770 = vld [vmem:[%s3 + $0x1f0] sm:$0xf]
        %v8771 = vld [vmem:[%s3 + $0x1f4] sm:$0xf]
        %v8772 = vld [vmem:[%s3 + $0x1f8] sm:$0xf]
        %v8773 = vld [vmem:[%s3 + $0x1fc] sm:$0xf]
        %v8774 = vld [vmem:[%s3 + $0x200] sm:$0xf]
        %v8775 = vld [vmem:[%s3 + $0x204] sm:$0xf]
        %v8776 = vld [vmem:[%s3 + $0x208] sm:$0xf]
        %v8777 = vld [vmem:[%s3 + $0x20c] sm:$0xf]
        %v8778 = vld [vmem:[%s3 + $0x210] sm:$0xf]
        %v8779 = vld [vmem:[%s3 + $0x214] sm:$0xf]
        %v8780 = vld [vmem:[%s3 + $0x218] sm:$0xf]
        %v8781 = vld [vmem:[%s3 + $0x21c] sm:$0xf]
        %v8782 = vld [vmem:[%s3 + $0x220] sm:$0xf]
        %v8783 = vld [vmem:[%s3 + $0x224] sm:$0xf]
        %v8784 = vld [vmem:[%s3 + $0x228] sm:$0xf]
        %v8785 = vld [vmem:[%s3 + $0x22c] sm:$0xf]
        %v8786 = vld [vmem:[%s3 + $0x230] sm:$0xf]
        %v8787 = vld [vmem:[%s3 + $0x234] sm:$0xf]
        %v8788 = vld [vmem:[%s3 + $0x238] sm:$0xf]
        %v8789 = vld [vmem:[%s3 + $0x23c] sm:$0xf]
        %v8791 = vlaneseq
        %v8792 = vshrl.u32 %v8791, 7
        %v8793 = vsub.s32 0, %v8792
        %v8794 = vrot.slane %v225, %v8793
        %v8940 = vunpack.c.l.b16 %v8646
        %v8941 = vunpack.c.l.b16 %v8647
        %v8942 = vunpack.c.l.b16 %v8648
        %v8943 = vunpack.c.l.b16 %v8649
        %v8944 = vunpack.c.l.b16 %v8650
        %v8945 = vunpack.c.l.b16 %v8651
        %v8946 = vunpack.c.l.b16 %v8652
        %v8947 = vunpack.c.l.b16 %v8653
        %v8948 = vunpack.c.l.b16 %v8654
        %v8949 = vunpack.c.l.b16 %v8655
        %v8950 = vunpack.c.l.b16 %v8656
        %v8951 = vunpack.c.l.b16 %v8657
        %v8952 = vunpack.c.l.b16 %v8658
        %v8953 = vunpack.c.l.b16 %v8659
        %v8954 = vunpack.c.l.b16 %v8660
        %v8955 = vunpack.c.l.b16 %v8661
        %v8956 = vunpack.c.l.b16 %v8662
        %v8957 = vunpack.c.l.b16 %v8663
        %v8958 = vunpack.c.l.b16 %v8664
        %v8959 = vunpack.c.l.b16 %v8665
        %v8960 = vunpack.c.l.b16 %v8666
        %v8961 = vunpack.c.l.b16 %v8667
        %v8962 = vunpack.c.l.b16 %v8668
        %v8963 = vunpack.c.l.b16 %v8669
        %v8964 = vunpack.c.l.b16 %v8670
        %v8965 = vunpack.c.l.b16 %v8671
        %v8966 = vunpack.c.l.b16 %v8672
        %v8967 = vunpack.c.l.b16 %v8673
        %v8968 = vunpack.c.l.b16 %v8674
        %v8969 = vunpack.c.l.b16 %v8675
        %v8970 = vunpack.c.l.b16 %v8676
        %v8971 = vunpack.c.l.b16 %v8677
        %v8972 = vunpack.c.l.b16 %v8678
        %v8973 = vunpack.c.l.b16 %v8679
        %v8974 = vunpack.c.l.b16 %v8680
        %v8975 = vunpack.c.l.b16 %v8681
        %v8976 = vunpack.c.l.b16 %v8682
        %v8977 = vunpack.c.l.b16 %v8683
        %v8978 = vunpack.c.l.b16 %v8684
        %v8979 = vunpack.c.l.b16 %v8685
        %v8980 = vunpack.c.l.b16 %v8686
        %v8981 = vunpack.c.l.b16 %v8687
        %v8982 = vunpack.c.l.b16 %v8688
        %v8983 = vunpack.c.l.b16 %v8689
        %v8984 = vunpack.c.l.b16 %v8690
        %v8985 = vunpack.c.l.b16 %v8691
        %v8986 = vunpack.c.l.b16 %v8692
        %v8987 = vunpack.c.l.b16 %v8693
        %v8988 = vunpack.c.l.b16 %v8694
        %v8989 = vunpack.c.l.b16 %v8695
        %v8990 = vunpack.c.l.b16 %v8696
        %v8991 = vunpack.c.l.b16 %v8697
        %v8992 = vunpack.c.l.b16 %v8698
        %v8993 = vunpack.c.l.b16 %v8699
        %v8994 = vunpack.c.l.b16 %v8700
        %v8995 = vunpack.c.l.b16 %v8701
        %v8996 = vunpack.c.l.b16 %v8702
        %v8997 = vunpack.c.l.b16 %v8703
        %v8998 = vunpack.c.l.b16 %v8704
        %v8999 = vunpack.c.l.b16 %v8705
        %v9000 = vunpack.c.l.b16 %v8706
        %v9001 = vunpack.c.l.b16 %v8707
        %v9002 = vunpack.c.l.b16 %v8708
        %v9003 = vunpack.c.l.b16 %v8709
        %v9004 = vunpack.c.l.b16 %v8710
        %v9005 = vunpack.c.l.b16 %v8711
        %v9006 = vunpack.c.l.b16 %v8712
        %v9007 = vunpack.c.l.b16 %v8713
        %v9008 = vunpack.c.l.b16 %v8714
        %v9009 = vunpack.c.l.b16 %v8715
        %v9010 = vunpack.c.l.b16 %v8716
        %v9011 = vunpack.c.l.b16 %v8717
        %v9012 = vunpack.c.l.b16 %v8718
        %v9013 = vunpack.c.l.b16 %v8719
        %v9014 = vunpack.c.l.b16 %v8720
        %v9015 = vunpack.c.l.b16 %v8721
        %v9016 = vunpack.c.l.b16 %v8722
        %v9017 = vunpack.c.l.b16 %v8723
        %v9018 = vunpack.c.l.b16 %v8724
        %v9019 = vunpack.c.l.b16 %v8725
        %v9020 = vunpack.c.l.b16 %v8726
        %v9021 = vunpack.c.l.b16 %v8727
        %v9022 = vunpack.c.l.b16 %v8728
        %v9023 = vunpack.c.l.b16 %v8729
        %v9024 = vunpack.c.l.b16 %v8730
        %v9025 = vunpack.c.l.b16 %v8731
        %v9026 = vunpack.c.l.b16 %v8732
        %v9027 = vunpack.c.l.b16 %v8733
        %v9028 = vunpack.c.l.b16 %v8734
        %v9029 = vunpack.c.l.b16 %v8735
        %v9030 = vunpack.c.l.b16 %v8736
        %v9031 = vunpack.c.l.b16 %v8737
        %v9032 = vunpack.c.l.b16 %v8738
        %v9033 = vunpack.c.l.b16 %v8739
        %v9034 = vunpack.c.l.b16 %v8740
        %v9035 = vunpack.c.l.b16 %v8741
        %v9036 = vunpack.c.l.b16 %v8742
        %v9037 = vunpack.c.l.b16 %v8743
        %v9038 = vunpack.c.l.b16 %v8744
        %v9039 = vunpack.c.l.b16 %v8745
        %v9040 = vunpack.c.l.b16 %v8746
        %v9041 = vunpack.c.l.b16 %v8747
        %v9042 = vunpack.c.l.b16 %v8748
        %v9043 = vunpack.c.l.b16 %v8749
        %v9044 = vunpack.c.l.b16 %v8750
        %v9045 = vunpack.c.l.b16 %v8751
        %v9046 = vunpack.c.l.b16 %v8752
        %v9047 = vunpack.c.l.b16 %v8753
        %v9048 = vunpack.c.l.b16 %v8754
        %v9049 = vunpack.c.l.b16 %v8755
        %v9050 = vunpack.c.l.b16 %v8756
        %v9051 = vunpack.c.l.b16 %v8757
        %v9052 = vunpack.c.l.b16 %v8758
        %v9053 = vunpack.c.l.b16 %v8759
        %v9054 = vunpack.c.l.b16 %v8760
        %v9055 = vunpack.c.l.b16 %v8761
        %v9056 = vunpack.c.l.b16 %v8762
        %v9057 = vunpack.c.l.b16 %v8763
        %v9058 = vunpack.c.l.b16 %v8764
        %v9059 = vunpack.c.l.b16 %v8765
        %v9060 = vunpack.c.l.b16 %v8766
        %v9061 = vunpack.c.l.b16 %v8767
        %v9062 = vunpack.c.l.b16 %v8768
        %v9063 = vunpack.c.l.b16 %v8769
        %v9064 = vunpack.c.l.b16 %v8770
        %v9065 = vunpack.c.l.b16 %v8771
        %v9066 = vunpack.c.l.b16 %v8772
        %v9067 = vunpack.c.l.b16 %v8773
        %v9068 = vunpack.c.l.b16 %v8774
        %v9069 = vunpack.c.l.b16 %v8775
        %v9070 = vunpack.c.l.b16 %v8776
        %v9071 = vunpack.c.l.b16 %v8777
        %v9072 = vunpack.c.l.b16 %v8778
        %v9073 = vunpack.c.l.b16 %v8779
        %v9074 = vunpack.c.l.b16 %v8780
        %v9075 = vunpack.c.l.b16 %v8781
        %v9076 = vunpack.c.l.b16 %v8782
        %v9077 = vunpack.c.l.b16 %v8783
        %v9078 = vunpack.c.l.b16 %v8784
        %v9079 = vunpack.c.l.b16 %v8785
        %v9080 = vunpack.c.l.b16 %v8786
        %v9081 = vunpack.c.l.b16 %v8787
        %v9082 = vunpack.c.l.b16 %v8788
        %v9083 = vunpack.c.l.b16 %v8789
        %v9084 = vpack.c.b16 %v8941, %v8940
        %v9085 = vpack.c.b16 %v8943, %v8942
        %v9086 = vpack.c.b16 %v8945, %v8944
        %v9087 = vpack.c.b16 %v8947, %v8946
        %v9088 = vpack.c.b16 %v8949, %v8948
        %v9089 = vpack.c.b16 %v8951, %v8950
        %v9090 = vpack.c.b16 %v8953, %v8952
        %v9091 = vpack.c.b16 %v8955, %v8954
        %v9092 = vpack.c.b16 %v8957, %v8956
        %v9093 = vpack.c.b16 %v8959, %v8958
        %v9094 = vpack.c.b16 %v8961, %v8960
        %v9095 = vpack.c.b16 %v8963, %v8962
        %v9096 = vpack.c.b16 %v8965, %v8964
        %v9097 = vpack.c.b16 %v8967, %v8966
        %v9098 = vpack.c.b16 %v8969, %v8968
        %v9099 = vpack.c.b16 %v8971, %v8970
        %v9100 = vpack.c.b16 %v8973, %v8972
        %v9101 = vpack.c.b16 %v8975, %v8974
        %v9102 = vpack.c.b16 %v8977, %v8976
        %v9103 = vpack.c.b16 %v8979, %v8978
        %v9104 = vpack.c.b16 %v8981, %v8980
        %v9105 = vpack.c.b16 %v8983, %v8982
        %v9106 = vpack.c.b16 %v8985, %v8984
        %v9107 = vpack.c.b16 %v8987, %v8986
        %v9108 = vpack.c.b16 %v8989, %v8988
        %v9109 = vpack.c.b16 %v8991, %v8990
        %v9110 = vpack.c.b16 %v8993, %v8992
        %v9111 = vpack.c.b16 %v8995, %v8994
        %v9112 = vpack.c.b16 %v8997, %v8996
        %v9113 = vpack.c.b16 %v8999, %v8998
        %v9114 = vpack.c.b16 %v9001, %v9000
        %v9115 = vpack.c.b16 %v9003, %v9002
        %v9116 = vpack.c.b16 %v9005, %v9004
        %v9117 = vpack.c.b16 %v9007, %v9006
        %v9118 = vpack.c.b16 %v9009, %v9008
        %v9119 = vpack.c.b16 %v9011, %v9010
        %v9120 = vpack.c.b16 %v9013, %v9012
        %v9121 = vpack.c.b16 %v9015, %v9014
        %v9122 = vpack.c.b16 %v9017, %v9016
        %v9123 = vpack.c.b16 %v9019, %v9018
        %v9124 = vpack.c.b16 %v9021, %v9020
        %v9125 = vpack.c.b16 %v9023, %v9022
        %v9126 = vpack.c.b16 %v9025, %v9024
        %v9127 = vpack.c.b16 %v9027, %v9026
        %v9128 = vpack.c.b16 %v9029, %v9028
        %v9129 = vpack.c.b16 %v9031, %v9030
        %v9130 = vpack.c.b16 %v9033, %v9032
        %v9131 = vpack.c.b16 %v9035, %v9034
        %v9132 = vpack.c.b16 %v9037, %v9036
        %v9133 = vpack.c.b16 %v9039, %v9038
        %v9134 = vpack.c.b16 %v9041, %v9040
        %v9135 = vpack.c.b16 %v9043, %v9042
        %v9136 = vpack.c.b16 %v9045, %v9044
        %v9137 = vpack.c.b16 %v9047, %v9046
        %v9138 = vpack.c.b16 %v9049, %v9048
        %v9139 = vpack.c.b16 %v9051, %v9050
        %v9140 = vpack.c.b16 %v9053, %v9052
        %v9141 = vpack.c.b16 %v9055, %v9054
        %v9142 = vpack.c.b16 %v9057, %v9056
        %v9143 = vpack.c.b16 %v9059, %v9058
        %v9144 = vpack.c.b16 %v9061, %v9060
        %v9145 = vpack.c.b16 %v9063, %v9062
        %v9146 = vpack.c.b16 %v9065, %v9064
        %v9147 = vpack.c.b16 %v9067, %v9066
        %v9148 = vpack.c.b16 %v9069, %v9068
        %v9149 = vpack.c.b16 %v9071, %v9070
        %v9150 = vpack.c.b16 %v9073, %v9072
        %v9151 = vpack.c.b16 %v9075, %v9074
        %v9152 = vpack.c.b16 %v9077, %v9076
        %v9153 = vpack.c.b16 %v9079, %v9078
        %v9154 = vpack.c.b16 %v9081, %v9080
        %v9155 = vpack.c.b16 %v9083, %v9082
        %9228 = vmatprep.subr.bf16.mxu0 0
        %9229 = vmatpush1.bf16.msra.mxu0 %v9084
        %9230 = vmatprep.subr.bf16.mxu0 0
        %9231 = vmatpush1.bf16.msra.mxu0 %v9085
        %9232 = vmatprep.subr.bf16.mxu0 0
        %9233 = vmatpush1.bf16.msra.mxu0 %v9086
        %9234 = vmatprep.subr.bf16.mxu0 0
        %9235 = vmatpush1.bf16.msra.mxu0 %v9087
        %9236 = vmatprep.subr.bf16.mxu0 0
        %9237 = vmatpush1.bf16.msra.mxu0 %v9088
        %9238 = vmatprep.subr.bf16.mxu0 0
        %9239 = vmatpush1.bf16.msra.mxu0 %v9089
        %9240 = vmatprep.subr.bf16.mxu0 0
        %9241 = vmatpush1.bf16.msra.mxu0 %v9090
        %9242 = vmatprep.subr.bf16.mxu0 0
        %9243 = vmatpush1.bf16.msra.mxu0 %v9091
        %9244 = vmatprep.subr.bf16.mxu0 0
        %9245 = vmatpush1.bf16.msra.mxu0 %v9092
        %9246 = vmatprep.subr.bf16.mxu0 0
        %9247 = vmatpush1.bf16.msra.mxu0 %v9093
        %9248 = vmatprep.subr.bf16.mxu0 0
        %9249 = vmatpush1.bf16.msra.mxu0 %v9094
        %9250 = vmatprep.subr.bf16.mxu0 0
        %9251 = vmatpush1.bf16.msra.mxu0 %v9095
        %9252 = vmatprep.subr.bf16.mxu0 0
        %9253 = vmatpush1.bf16.msra.mxu0 %v9096
        %9254 = vmatprep.subr.bf16.mxu0 0
        %9255 = vmatpush1.bf16.msra.mxu0 %v9097
        %9256 = vmatprep.subr.bf16.mxu0 0
        %9257 = vmatpush1.bf16.msra.mxu0 %v9098
        %9258 = vmatprep.subr.bf16.mxu0 0
        %9259 = vmatpush1.bf16.msra.mxu0 %v9099
        %9260 = vmatprep.mubr.bf16.mxu0 %v8134
        %9261 = vmatmul.mubr.bf16.gmra.mrb[0].mxu0 %v8070
        %v9262 = vpop.f32.mrb[0].mxu0
        %v9263 = vadd.f32 %v8794, %v9262
        %v9264 = vpop.f32.mrb[0].mxu0
        %v9265 = vpop.f32.mrb[0].mxu0
        %v9266 = vadd.f32 %v8794, %v9265
        %v9267 = vpop.f32.mrb[0].mxu0
        %9268 = vmatprep.mubr.bf16.mxu0 %v8135
        %9269 = vmatmul.mubr.bf16.gmra.mrb[0].mxu0 %v8071
        %v9270 = vpop.f32.mrb[0].mxu0
        %v9271 = vadd.f32 %v8794, %v9270
        %v9272 = vpop.f32.mrb[0].mxu0
        %v9273 = vpop.f32.mrb[0].mxu0
        %v9274 = vadd.f32 %v8794, %v9273
        %v9275 = vpop.f32.mrb[0].mxu0
        %9276 = vmatprep.mubr.bf16.mxu0 %v8136
        %9277 = vmatmul.mubr.bf16.gmra.mrb[0].mxu0 %v8072
        %v9278 = vpop.f32.mrb[0].mxu0
        %v9279 = vadd.f32 %v8794, %v9278
        %v9280 = vpop.f32.mrb[0].mxu0
        %v9281 = vpop.f32.mrb[0].mxu0
        %v9282 = vadd.f32 %v8794, %v9281
        %v9283 = vpop.f32.mrb[0].mxu0
        %9284 = vmatprep.mubr.bf16.mxu0 %v8137
        %9285 = vmatmul.mubr.bf16.gmra.mrb[0].mxu0 %v8073
        %v9286 = vpop.f32.mrb[0].mxu0
        %v9287 = vadd.f32 %v8794, %v9286
        %v9288 = vpop.f32.mrb[0].mxu0
        %v9289 = vpop.f32.mrb[0].mxu0
        %v9290 = vadd.f32 %v8794, %v9289
        %v9291 = vpop.f32.mrb[0].mxu0
        %9292 = vmatprep.mubr.bf16.mxu0 %v8138
        %9293 = vmatmul.mubr.bf16.gmra.mrb[0].mxu0 %v8074
        %v9294 = vpop.f32.mrb[0].mxu0
        %v9295 = vadd.f32 %v8794, %v9294
        %v9296 = vpop.f32.mrb[0].mxu0
        %v9297 = vpop.f32.mrb[0].mxu0
        %v9298 = vadd.f32 %v8794, %v9297
        %v9299 = vpop.f32.mrb[0].mxu0
        %9300 = vmatprep.mubr.bf16.mxu0 %v8139
        %9301 = vmatmul.mubr.bf16.gmra.mrb[0].mxu0 %v8075
        %v9302 = vpop.f32.mrb[0].mxu0
        %v9303 = vadd.f32 %v8794, %v9302
        %v9304 = vpop.f32.mrb[0].mxu0
        %v9305 = vpop.f32.mrb[0].mxu0
        %v9306 = vadd.f32 %v8794, %v9305
        %v9307 = vpop.f32.mrb[0].mxu0
        %9308 = vmatprep.mubr.bf16.mxu0 %v8140
        %9309 = vmatmul.mubr.bf16.gmra.mrb[0].mxu0 %v8076
        %v9310 = vpop.f32.mrb[0].mxu0
        %v9311 = vadd.f32 %v8794, %v9310
        %v9312 = vpop.f32.mrb[0].mxu0
        %v9313 = vpop.f32.mrb[0].mxu0
        %v9314 = vadd.f32 %v8794, %v9313
        %v9315 = vpop.f32.mrb[0].mxu0
        %9316 = vmatprep.mubr.bf16.mxu0 %v8141
        %9317 = vmatmul.mubr.bf16.gmra.mrb[0].mxu0 %v8077
        %v9318 = vpop.f32.mrb[0].mxu0
        %v9319 = vadd.f32 %v8794, %v9318
        %v9320 = vpop.f32.mrb[0].mxu0
        %v9321 = vpop.f32.mrb[0].mxu0
        %v9322 = vadd.f32 %v8794, %v9321
        %v9323 = vpop.f32.mrb[0].mxu0
        %9324 = vmatprep.mubr.bf16.mxu0 %v8142
        %9325 = vmatmul.mubr.bf16.gmra.mrb[0].mxu0 %v8078
        %v9326 = vpop.f32.mrb[0].mxu0
        %v9327 = vadd.f32 %v8794, %v9326
        %v9328 = vpop.f32.mrb[0].mxu0
        %v9329 = vpop.f32.mrb[0].mxu0
        %v9330 = vadd.f32 %v8794, %v9329
        %v9331 = vpop.f32.mrb[0].mxu0
        %9332 = vmatprep.mubr.bf16.mxu0 %v8143
        %9333 = vmatmul.mubr.bf16.gmra.mrb[0].mxu0 %v8079
        %v9334 = vpop.f32.mrb[0].mxu0
        %v9335 = vadd.f32 %v8794, %v9334
        %v9336 = vpop.f32.mrb[0].mxu0
        %v9337 = vpop.f32.mrb[0].mxu0
        %v9338 = vadd.f32 %v8794, %v9337
        %v9339 = vpop.f32.mrb[0].mxu0
        %9340 = vmatprep.mubr.bf16.mxu0 %v8144
        %9341 = vmatmul.mubr.bf16.gmra.mrb[0].mxu0 %v8080
        %v9342 = vpop.f32.mrb[0].mxu0
        %v9343 = vadd.f32 %v8794, %v9342
        %v9344 = vpop.f32.mrb[0].mxu0
        %v9345 = vpop.f32.mrb[0].mxu0
        %v9346 = vadd.f32 %v8794, %v9345
        %v9347 = vpop.f32.mrb[0].mxu0
        %9348 = vmatprep.mubr.bf16.mxu0 %v8145
        %9349 = vmatmul.mubr.bf16.gmra.mrb[0].mxu0 %v8081
        %v9350 = vpop.f32.mrb[0].mxu0
        %v9351 = vadd.f32 %v8794, %v9350
        %v9352 = vpop.f32.mrb[0].mxu0
        %v9353 = vpop.f32.mrb[0].mxu0
        %v9354 = vadd.f32 %v8794, %v9353
        %v9355 = vpop.f32.mrb[0].mxu0
        %9356 = vmatprep.mubr.bf16.mxu0 %v8146
        %9357 = vmatmul.mubr.bf16.gmra.mrb[0].mxu0 %v8082
        %v9358 = vpop.f32.mrb[0].mxu0
        %v9359 = vadd.f32 %v8794, %v9358
        %v9360 = vpop.f32.mrb[0].mxu0
        %v9361 = vpop.f32.mrb[0].mxu0
        %v9362 = vadd.f32 %v8794, %v9361
        %v9363 = vpop.f32.mrb[0].mxu0
        %9364 = vmatprep.mubr.bf16.mxu0 %v8147
        %9365 = vmatmul.mubr.bf16.gmra.mrb[0].mxu0 %v8083
        %v9366 = vpop.f32.mrb[0].mxu0
        %v9367 = vadd.f32 %v8794, %v9366
        %v9368 = vpop.f32.mrb[0].mxu0
        %v9369 = vpop.f32.mrb[0].mxu0
        %v9370 = vadd.f32 %v8794, %v9369
        %v9371 = vpop.f32.mrb[0].mxu0
        %9372 = vmatprep.mubr.bf16.mxu0 %v8148
        %9373 = vmatmul.mubr.bf16.gmra.mrb[0].mxu0 %v8084
        %v9374 = vpop.f32.mrb[0].mxu0
        %v9375 = vadd.f32 %v8794, %v9374
        %v9376 = vpop.f32.mrb[0].mxu0
        %v9377 = vpop.f32.mrb[0].mxu0
        %v9378 = vadd.f32 %v8794, %v9377
        %v9379 = vpop.f32.mrb[0].mxu0
        %9380 = vmatprep.mubr.bf16.mxu0 %v8149
        %9381 = vmatmul.mubr.bf16.gmra.mrb[0].mxu0 %v8085
        %v9382 = vpop.f32.mrb[0].mxu0
        %v9383 = vadd.f32 %v8794, %v9382
        %v9384 = vpop.f32.mrb[0].mxu0
        %v9385 = vpop.f32.mrb[0].mxu0
        %v9386 = vadd.f32 %v8794, %v9385
        %v9387 = vpop.f32.mrb[0].mxu0
        %9388 = vdwg.mxu0
        %9389 = vmatprep.subr.bf16.mxu0 0
        %9390 = vmatpush1.bf16.msra.mxu0 %v9100
        %9391 = vmatprep.subr.bf16.mxu0 0
        %9392 = vmatpush1.bf16.msra.mxu0 %v9101
        %9393 = vmatprep.subr.bf16.mxu0 0
        %9394 = vmatpush1.bf16.msra.mxu0 %v9102
        %9395 = vmatprep.subr.bf16.mxu0 0
        %9396 = vmatpush1.bf16.msra.mxu0 %v9103
        %9397 = vmatprep.subr.bf16.mxu0 0
        %9398 = vmatpush1.bf16.msra.mxu0 %v9104
        %9399 = vmatprep.subr.bf16.mxu0 0
        %9400 = vmatpush1.bf16.msra.mxu0 %v9105
        %9401 = vmatprep.subr.bf16.mxu0 0
        %9402 = vmatpush1.bf16.msra.mxu0 %v9106
        %9403 = vmatprep.subr.bf16.mxu0 0
        %9404 = vmatpush1.bf16.msra.mxu0 %v9107
        %9405 = vmatprep.subr.bf16.mxu0 0
        %9406 = vmatpush1.bf16.msra.mxu0 %v9108
        %9407 = vmatprep.subr.bf16.mxu0 0
        %9408 = vmatpush1.bf16.msra.mxu0 %v9109
        %9409 = vmatprep.subr.bf16.mxu0 0
        %9410 = vmatpush1.bf16.msra.mxu0 %v9110
        %9411 = vmatprep.subr.bf16.mxu0 0
        %9412 = vmatpush1.bf16.msra.mxu0 %v9111
        %9413 = vmatprep.subr.bf16.mxu0 0
        %9414 = vmatpush1.bf16.msra.mxu0 %v9112
        %9415 = vmatprep.subr.bf16.mxu0 0
        %9416 = vmatpush1.bf16.msra.mxu0 %v9113
        %9417 = vmatprep.subr.bf16.mxu0 0
        %9418 = vmatpush1.bf16.msra.mxu0 %v9114
        %9419 = vmatprep.subr.bf16.mxu0 0
        %9420 = vmatpush1.bf16.msra.mxu0 %v9115
        %9421 = vmatprep.mubr.bf16.mxu0 %v8278
        %9422 = vmatmul.mubr.bf16.gmra.mrb[0].mxu0 %v8198
        %v9423 = vpop.f32.mrb[0].mxu0
        %v9424 = vadd.f32 %v9263, %v9423
        %v9425 = vpop.f32.mrb[0].mxu0
        %v9426 = vpop.f32.mrb[0].mxu0
        %v9427 = vadd.f32 %v9266, %v9426
        %v9428 = vpop.f32.mrb[0].mxu0
        %9429 = vmatprep.mubr.bf16.mxu0 %v8279
        %9430 = vmatmul.mubr.bf16.gmra.mrb[0].mxu0 %v8199
        %v9431 = vpop.f32.mrb[0].mxu0
        %v9432 = vadd.f32 %v9271, %v9431
        %v9433 = vpop.f32.mrb[0].mxu0
        %v9434 = vpop.f32.mrb[0].mxu0
        %v9435 = vadd.f32 %v9274, %v9434
        %v9436 = vpop.f32.mrb[0].mxu0
        %9437 = vmatprep.mubr.bf16.mxu0 %v8280
        %9438 = vmatmul.mubr.bf16.gmra.mrb[0].mxu0 %v8200
        %v9439 = vpop.f32.mrb[0].mxu0
        %v9440 = vadd.f32 %v9279, %v9439
        %v9441 = vpop.f32.mrb[0].mxu0
        %v9442 = vpop.f32.mrb[0].mxu0
        %v9443 = vadd.f32 %v9282, %v9442
        %v9444 = vpop.f32.mrb[0].mxu0
        %9445 = vmatprep.mubr.bf16.mxu0 %v8281
        %9446 = vmatmul.mubr.bf16.gmra.mrb[0].mxu0 %v8201
        %v9447 = vpop.f32.mrb[0].mxu0
        %v9448 = vadd.f32 %v9287, %v9447
        %v9449 = vpop.f32.mrb[0].mxu0
        %v9450 = vpop.f32.mrb[0].mxu0
        %v9451 = vadd.f32 %v9290, %v9450
        %v9452 = vpop.f32.mrb[0].mxu0
        %9453 = vmatprep.mubr.bf16.mxu0 %v8282
        %9454 = vmatmul.mubr.bf16.gmra.mrb[0].mxu0 %v8202
        %v9455 = vpop.f32.mrb[0].mxu0
        %v9456 = vadd.f32 %v9295, %v9455
        %v9457 = vpop.f32.mrb[0].mxu0
        %v9458 = vpop.f32.mrb[0].mxu0
        %v9459 = vadd.f32 %v9298, %v9458
        %v9460 = vpop.f32.mrb[0].mxu0
        %9461 = vmatprep.mubr.bf16.mxu0 %v8283
        %9462 = vmatmul.mubr.bf16.gmra.mrb[0].mxu0 %v8203
        %v9463 = vpop.f32.mrb[0].mxu0
        %v9464 = vadd.f32 %v9303, %v9463
        %v9465 = vpop.f32.mrb[0].mxu0
        %v9466 = vpop.f32.mrb[0].mxu0
        %v9467 = vadd.f32 %v9306, %v9466
        %v9468 = vpop.f32.mrb[0].mxu0
        %9469 = vmatprep.mubr.bf16.mxu0 %v8284
        %9470 = vmatmul.mubr.bf16.gmra.mrb[0].mxu0 %v8204
        %v9471 = vpop.f32.mrb[0].mxu0
        %v9472 = vadd.f32 %v9311, %v9471
        %v9473 = vpop.f32.mrb[0].mxu0
        %v9474 = vpop.f32.mrb[0].mxu0
        %v9475 = vadd.f32 %v9314, %v9474
        %v9476 = vpop.f32.mrb[0].mxu0
        %9477 = vmatprep.mubr.bf16.mxu0 %v8285
        %9478 = vmatmul.mubr.bf16.gmra.mrb[0].mxu0 %v8205
        %v9479 = vpop.f32.mrb[0].mxu0
        %v9480 = vadd.f32 %v9319, %v9479
        %v9481 = vpop.f32.mrb[0].mxu0
        %v9482 = vpop.f32.mrb[0].mxu0
        %v9483 = vadd.f32 %v9322, %v9482
        %v9484 = vpop.f32.mrb[0].mxu0
        %9485 = vmatprep.mubr.bf16.mxu0 %v8286
        %9486 = vmatmul.mubr.bf16.gmra.mrb[0].mxu0 %v8206
        %v9487 = vpop.f32.mrb[0].mxu0
        %v9488 = vadd.f32 %v9327, %v9487
        %v9489 = vpop.f32.mrb[0].mxu0
        %v9490 = vpop.f32.mrb[0].mxu0
        %v9491 = vadd.f32 %v9330, %v9490
        %v9492 = vpop.f32.mrb[0].mxu0
        %9493 = vmatprep.mubr.bf16.mxu0 %v8287
        %9494 = vmatmul.mubr.bf16.gmra.mrb[0].mxu0 %v8207
        %v9495 = vpop.f32.mrb[0].mxu0
        %v9496 = vadd.f32 %v9335, %v9495
        %v9497 = vpop.f32.mrb[0].mxu0
        %v9498 = vpop.f32.mrb[0].mxu0
        %v9499 = vadd.f32 %v9338, %v9498
        %v9500 = vpop.f32.mrb[0].mxu0
        %9501 = vmatprep.mubr.bf16.mxu0 %v8288
        %9502 = vmatmul.mubr.bf16.gmra.mrb[0].mxu0 %v8208
        %v9503 = vpop.f32.mrb[0].mxu0
        %v9504 = vadd.f32 %v9343, %v9503
        %v9505 = vpop.f32.mrb[0].mxu0
        %v9506 = vpop.f32.mrb[0].mxu0
        %v9507 = vadd.f32 %v9346, %v9506
        %v9508 = vpop.f32.mrb[0].mxu0
        %9509 = vmatprep.mubr.bf16.mxu0 %v8289
        %9510 = vmatmul.mubr.bf16.gmra.mrb[0].mxu0 %v8209
        %v9511 = vpop.f32.mrb[0].mxu0
        %v9512 = vadd.f32 %v9351, %v9511
        %v9513 = vpop.f32.mrb[0].mxu0
        %v9514 = vpop.f32.mrb[0].mxu0
        %v9515 = vadd.f32 %v9354, %v9514
        %v9516 = vpop.f32.mrb[0].mxu0
        %9517 = vmatprep.mubr.bf16.mxu0 %v8290
        %9518 = vmatmul.mubr.bf16.gmra.mrb[0].mxu0 %v8210
        %v9519 = vpop.f32.mrb[0].mxu0
        %v9520 = vadd.f32 %v9359, %v9519
        %v9521 = vpop.f32.mrb[0].mxu0
        %v9522 = vpop.f32.mrb[0].mxu0
        %v9523 = vadd.f32 %v9362, %v9522
        %v9524 = vpop.f32.mrb[0].mxu0
        %9525 = vmatprep.mubr.bf16.mxu0 %v8291
        %9526 = vmatmul.mubr.bf16.gmra.mrb[0].mxu0 %v8211
        %v9527 = vpop.f32.mrb[0].mxu0
        %v9528 = vadd.f32 %v9367, %v9527
        %v9529 = vpop.f32.mrb[0].mxu0
        %v9530 = vpop.f32.mrb[0].mxu0
        %v9531 = vadd.f32 %v9370, %v9530
        %v9532 = vpop.f32.mrb[0].mxu0
        %9533 = vmatprep.mubr.bf16.mxu0 %v8292
        %9534 = vmatmul.mubr.bf16.gmra.mrb[0].mxu0 %v8212
        %v9535 = vpop.f32.mrb[0].mxu0
        %v9536 = vadd.f32 %v9375, %v9535
        %v9537 = vpop.f32.mrb[0].mxu0
        %v9538 = vpop.f32.mrb[0].mxu0
        %v9539 = vadd.f32 %v9378, %v9538
        %v9540 = vpop.f32.mrb[0].mxu0
        %9541 = vmatprep.mubr.bf16.mxu0 %v8293
        %9542 = vmatmul.mubr.bf16.gmra.mrb[0].mxu0 %v8213
        %v9543 = vpop.f32.mrb[0].mxu0
        %v9544 = vadd.f32 %v9383, %v9543
        %v9545 = vpop.f32.mrb[0].mxu0
        %v9546 = vpop.f32.mrb[0].mxu0
        %v9547 = vadd.f32 %v9386, %v9546
        %v9548 = vpop.f32.mrb[0].mxu0
        %9549 = vdwg.mxu0
        %9550 = vmatprep.subr.bf16.mxu0 0
        %9551 = vmatpush1.bf16.msra.mxu0 %v9116
        %9552 = vmatprep.subr.bf16.mxu0 0
        %9553 = vmatpush1.bf16.msra.mxu0 %v9117
        %9554 = vmatprep.subr.bf16.mxu0 0
        %9555 = vmatpush1.bf16.msra.mxu0 %v9118
        %9556 = vmatprep.subr.bf16.mxu0 0
        %9557 = vmatpush1.bf16.msra.mxu0 %v9119
        %9558 = vmatprep.subr.bf16.mxu0 0
        %9559 = vmatpush1.bf16.msra.mxu0 %v9120
        %9560 = vmatprep.subr.bf16.mxu0 0
        %9561 = vmatpush1.bf16.msra.mxu0 %v9121
        %9562 = vmatprep.subr.bf16.mxu0 0
        %9563 = vmatpush1.bf16.msra.mxu0 %v9122
        %9564 = vmatprep.subr.bf16.mxu0 0
        %9565 = vmatpush1.bf16.msra.mxu0 %v9123
        %9566 = vmatprep.subr.bf16.mxu0 0
        %9567 = vmatpush1.bf16.msra.mxu0 %v9124
        %9568 = vmatprep.subr.bf16.mxu0 0
        %9569 = vmatpush1.bf16.msra.mxu0 %v9125
        %9570 = vmatprep.subr.bf16.mxu0 0
        %9571 = vmatpush1.bf16.msra.mxu0 %v9126
        %9572 = vmatprep.subr.bf16.mxu0 0
        %9573 = vmatpush1.bf16.msra.mxu0 %v9127
        %9574 = vmatprep.subr.bf16.mxu0 0
        %9575 = vmatpush1.bf16.msra.mxu0 %v9128
        %9576 = vmatprep.subr.bf16.mxu0 0
        %9577 = vmatpush1.bf16.msra.mxu0 %v9129
        %9578 = vmatprep.subr.bf16.mxu0 0
        %9579 = vmatpush1.bf16.msra.mxu0 %v9130
        %9580 = vmatprep.subr.bf16.mxu0 0
        %9581 = vmatpush1.bf16.msra.mxu0 %v9131
        %9582 = vmatprep.mubr.bf16.mxu0 %v8406
        %9583 = vmatmul.mubr.bf16.gmra.mrb[0].mxu0 %v8342
        %v9584 = vpop.f32.mrb[0].mxu0
        %v9585 = vadd.f32 %v9424, %v9584
        %v9586 = vpop.f32.mrb[0].mxu0
        %v9587 = vpop.f32.mrb[0].mxu0
        %v9588 = vadd.f32 %v9427, %v9587
        %v9589 = vpop.f32.mrb[0].mxu0
        %9590 = vmatprep.mubr.bf16.mxu0 %v8407
        %9591 = vmatmul.mubr.bf16.gmra.mrb[0].mxu0 %v8343
        %v9592 = vpop.f32.mrb[0].mxu0
        %v9593 = vadd.f32 %v9432, %v9592
        %v9594 = vpop.f32.mrb[0].mxu0
        %v9595 = vpop.f32.mrb[0].mxu0
        %v9596 = vadd.f32 %v9435, %v9595
        %v9597 = vpop.f32.mrb[0].mxu0
        %9598 = vmatprep.mubr.bf16.mxu0 %v8408
        %9599 = vmatmul.mubr.bf16.gmra.mrb[0].mxu0 %v8344
        %v9600 = vpop.f32.mrb[0].mxu0
        %v9601 = vadd.f32 %v9440, %v9600
        %v9602 = vpop.f32.mrb[0].mxu0
        %v9603 = vpop.f32.mrb[0].mxu0
        %v9604 = vadd.f32 %v9443, %v9603
        %v9605 = vpop.f32.mrb[0].mxu0
        %9606 = vmatprep.mubr.bf16.mxu0 %v8409
        %9607 = vmatmul.mubr.bf16.gmra.mrb[0].mxu0 %v8345
        %v9608 = vpop.f32.mrb[0].mxu0
        %v9609 = vadd.f32 %v9448, %v9608
        %v9610 = vpop.f32.mrb[0].mxu0
        %v9611 = vpop.f32.mrb[0].mxu0
        %v9612 = vadd.f32 %v9451, %v9611
        %v9613 = vpop.f32.mrb[0].mxu0
        %9614 = vmatprep.mubr.bf16.mxu0 %v8410
        %9615 = vmatmul.mubr.bf16.gmra.mrb[0].mxu0 %v8346
        %v9616 = vpop.f32.mrb[0].mxu0
        %v9617 = vadd.f32 %v9456, %v9616
        %v9618 = vpop.f32.mrb[0].mxu0
        %v9619 = vpop.f32.mrb[0].mxu0
        %v9620 = vadd.f32 %v9459, %v9619
        %v9621 = vpop.f32.mrb[0].mxu0
        %9622 = vmatprep.mubr.bf16.mxu0 %v8411
        %9623 = vmatmul.mubr.bf16.gmra.mrb[0].mxu0 %v8347
        %v9624 = vpop.f32.mrb[0].mxu0
        %v9625 = vadd.f32 %v9464, %v9624
        %v9626 = vpop.f32.mrb[0].mxu0
        %v9627 = vpop.f32.mrb[0].mxu0
        %v9628 = vadd.f32 %v9467, %v9627
        %v9629 = vpop.f32.mrb[0].mxu0
        %9630 = vmatprep.mubr.bf16.mxu0 %v8412
        %9631 = vmatmul.mubr.bf16.gmra.mrb[0].mxu0 %v8348
        %v9632 = vpop.f32.mrb[0].mxu0
        %v9633 = vadd.f32 %v9472, %v9632
        %v9634 = vpop.f32.mrb[0].mxu0
        %v9635 = vpop.f32.mrb[0].mxu0
        %v9636 = vadd.f32 %v9475, %v9635
        %v9637 = vpop.f32.mrb[0].mxu0
        %9638 = vmatprep.mubr.bf16.mxu0 %v8413
        %9639 = vmatmul.mubr.bf16.gmra.mrb[0].mxu0 %v8349
        %v9640 = vpop.f32.mrb[0].mxu0
        %v9641 = vadd.f32 %v9480, %v9640
        %v9642 = vpop.f32.mrb[0].mxu0
        %v9643 = vpop.f32.mrb[0].mxu0
        %v9644 = vadd.f32 %v9483, %v9643
        %v9645 = vpop.f32.mrb[0].mxu0
        %9646 = vmatprep.mubr.bf16.mxu0 %v8414
        %9647 = vmatmul.mubr.bf16.gmra.mrb[0].mxu0 %v8350
        %v9648 = vpop.f32.mrb[0].mxu0
        %v9649 = vadd.f32 %v9488, %v9648
        %v9650 = vpop.f32.mrb[0].mxu0
        %v9651 = vpop.f32.mrb[0].mxu0
        %v9652 = vadd.f32 %v9491, %v9651
        %v9653 = vpop.f32.mrb[0].mxu0
        %9654 = vmatprep.mubr.bf16.mxu0 %v8415
        %9655 = vmatmul.mubr.bf16.gmra.mrb[0].mxu0 %v8351
        %v9656 = vpop.f32.mrb[0].mxu0
        %v9657 = vadd.f32 %v9496, %v9656
        %v9658 = vpop.f32.mrb[0].mxu0
        %v9659 = vpop.f32.mrb[0].mxu0
        %v9660 = vadd.f32 %v9499, %v9659
        %v9661 = vpop.f32.mrb[0].mxu0
        %9662 = vmatprep.mubr.bf16.mxu0 %v8416
        %9663 = vmatmul.mubr.bf16.gmra.mrb[0].mxu0 %v8352
        %v9664 = vpop.f32.mrb[0].mxu0
        %v9665 = vadd.f32 %v9504, %v9664
        %v9666 = vpop.f32.mrb[0].mxu0
        %v9667 = vpop.f32.mrb[0].mxu0
        %v9668 = vadd.f32 %v9507, %v9667
        %v9669 = vpop.f32.mrb[0].mxu0
        %9670 = vmatprep.mubr.bf16.mxu0 %v8417
        %9671 = vmatmul.mubr.bf16.gmra.mrb[0].mxu0 %v8353
        %v9672 = vpop.f32.mrb[0].mxu0
        %v9673 = vadd.f32 %v9512, %v9672
        %v9674 = vpop.f32.mrb[0].mxu0
        %v9675 = vpop.f32.mrb[0].mxu0
        %v9676 = vadd.f32 %v9515, %v9675
        %v9677 = vpop.f32.mrb[0].mxu0
        %9678 = vmatprep.mubr.bf16.mxu0 %v8418
        %9679 = vmatmul.mubr.bf16.gmra.mrb[0].mxu0 %v8354
        %v9680 = vpop.f32.mrb[0].mxu0
        %v9681 = vadd.f32 %v9520, %v9680
        %v9682 = vpop.f32.mrb[0].mxu0
        %v9683 = vpop.f32.mrb[0].mxu0
        %v9684 = vadd.f32 %v9523, %v9683
        %v9685 = vpop.f32.mrb[0].mxu0
        %9686 = vmatprep.mubr.bf16.mxu0 %v8419
        %9687 = vmatmul.mubr.bf16.gmra.mrb[0].mxu0 %v8355
        %v9688 = vpop.f32.mrb[0].mxu0
        %v9689 = vadd.f32 %v9528, %v9688
        %v9690 = vpop.f32.mrb[0].mxu0
        %v9691 = vpop.f32.mrb[0].mxu0
        %v9692 = vadd.f32 %v9531, %v9691
        %v9693 = vpop.f32.mrb[0].mxu0
        %9694 = vmatprep.mubr.bf16.mxu0 %v8420
        %9695 = vmatmul.mubr.bf16.gmra.mrb[0].mxu0 %v8356
        %v9696 = vpop.f32.mrb[0].mxu0
        %v9697 = vadd.f32 %v9536, %v9696
        %v9698 = vpop.f32.mrb[0].mxu0
        %v9699 = vpop.f32.mrb[0].mxu0
        %v9700 = vadd.f32 %v9539, %v9699
        %v9701 = vpop.f32.mrb[0].mxu0
        %9702 = vmatprep.mubr.bf16.mxu0 %v8421
        %9703 = vmatmul.mubr.bf16.gmra.mrb[0].mxu0 %v8357
        %v9704 = vpop.f32.mrb[0].mxu0
        %v9705 = vadd.f32 %v9544, %v9704
        %v9706 = vpop.f32.mrb[0].mxu0
        %v9707 = vpop.f32.mrb[0].mxu0
        %v9708 = vadd.f32 %v9547, %v9707
        %v9709 = vpop.f32.mrb[0].mxu0
        %9710 = vdwg.mxu0
        %9711 = vmatprep.subr.bf16.mxu0 0
        %9712 = vmatpush1.bf16.msra.mxu0 %v9132
        %9713 = vmatprep.subr.bf16.mxu0 0
        %9714 = vmatpush1.bf16.msra.mxu0 %v9133
        %9715 = vmatprep.subr.bf16.mxu0 0
        %9716 = vmatpush1.bf16.msra.mxu0 %v9134
        %9717 = vmatprep.subr.bf16.mxu0 0
        %9718 = vmatpush1.bf16.msra.mxu0 %v9135
        %9719 = vmatprep.subr.bf16.mxu0 0
        %9720 = vmatpush1.bf16.msra.mxu0 %v9136
        %9721 = vmatprep.subr.bf16.mxu0 0
        %9722 = vmatpush1.bf16.msra.mxu0 %v9137
        %9723 = vmatprep.subr.bf16.mxu0 0
        %9724 = vmatpush1.bf16.msra.mxu0 %v9138
        %9725 = vmatprep.subr.bf16.mxu0 0
        %9726 = vmatpush1.bf16.msra.mxu0 %v9139
        %9727 = vmatprep.subr.bf16.mxu0 0
        %9728 = vmatpush1.bf16.msra.mxu0 %v9140
        %9729 = vmatprep.subr.bf16.mxu0 0
        %9730 = vmatpush1.bf16.msra.mxu0 %v9141
        %9731 = vmatprep.subr.bf16.mxu0 0
        %9732 = vmatpush1.bf16.msra.mxu0 %v9142
        %9733 = vmatprep.subr.bf16.mxu0 0
        %9734 = vmatpush1.bf16.msra.mxu0 %v9143
        %9735 = vmatprep.subr.bf16.mxu0 0
        %9736 = vmatpush1.bf16.msra.mxu0 %v9144
        %9737 = vmatprep.subr.bf16.mxu0 0
        %9738 = vmatpush1.bf16.msra.mxu0 %v9145
        %9739 = vmatprep.subr.bf16.mxu0 0
        %9740 = vmatpush1.bf16.msra.mxu0 %v9146
        %9741 = vmatprep.subr.bf16.mxu0 0
        %9742 = vmatpush1.bf16.msra.mxu0 %v9147
        %9743 = vmatprep.mubr.bf16.mxu0 %v8550
        %9744 = vmatmul.mubr.bf16.gmra.mrb[0].mxu0 %v8486
        %v9745 = vpop.f32.mrb[0].mxu0
        %v9746 = vadd.f32 %v9585, %v9745
        %v9747 = vpop.f32.mrb[0].mxu0
        %v9748 = vpop.f32.mrb[0].mxu0
        %v9749 = vadd.f32 %v9588, %v9748
        %v9750 = vpop.f32.mrb[0].mxu0
        %9751 = vmatprep.mubr.bf16.mxu0 %v8551
        %9752 = vmatmul.mubr.bf16.gmra.mrb[0].mxu0 %v8487
        %v9753 = vpop.f32.mrb[0].mxu0
        %v9754 = vadd.f32 %v9593, %v9753
        %v9755 = vpop.f32.mrb[0].mxu0
        %v9756 = vpop.f32.mrb[0].mxu0
        %v9757 = vadd.f32 %v9596, %v9756
        %v9758 = vpop.f32.mrb[0].mxu0
        %9759 = vmatprep.mubr.bf16.mxu0 %v8552
        %9760 = vmatmul.mubr.bf16.gmra.mrb[0].mxu0 %v8488
        %v9761 = vpop.f32.mrb[0].mxu0
        %v9762 = vadd.f32 %v9601, %v9761
        %v9763 = vpop.f32.mrb[0].mxu0
        %v9764 = vpop.f32.mrb[0].mxu0
        %v9765 = vadd.f32 %v9604, %v9764
        %v9766 = vpop.f32.mrb[0].mxu0
        %9767 = vmatprep.mubr.bf16.mxu0 %v8553
        %9768 = vmatmul.mubr.bf16.gmra.mrb[0].mxu0 %v8489
        %v9769 = vpop.f32.mrb[0].mxu0
        %v9770 = vadd.f32 %v9609, %v9769
        %v9771 = vpop.f32.mrb[0].mxu0
        %v9772 = vpop.f32.mrb[0].mxu0
        %v9773 = vadd.f32 %v9612, %v9772
        %v9774 = vpop.f32.mrb[0].mxu0
        %9775 = vmatprep.mubr.bf16.mxu0 %v8554
        %9776 = vmatmul.mubr.bf16.gmra.mrb[0].mxu0 %v8490
        %v9777 = vpop.f32.mrb[0].mxu0
        %v9778 = vadd.f32 %v9617, %v9777
        %v9779 = vpop.f32.mrb[0].mxu0
        %v9780 = vpop.f32.mrb[0].mxu0
        %v9781 = vadd.f32 %v9620, %v9780
        %v9782 = vpop.f32.mrb[0].mxu0
        %9783 = vmatprep.mubr.bf16.mxu0 %v8555
        %9784 = vmatmul.mubr.bf16.gmra.mrb[0].mxu0 %v8491
        %v9785 = vpop.f32.mrb[0].mxu0
        %v9786 = vadd.f32 %v9625, %v9785
        %v9787 = vpop.f32.mrb[0].mxu0
        %v9788 = vpop.f32.mrb[0].mxu0
        %v9789 = vadd.f32 %v9628, %v9788
        %v9790 = vpop.f32.mrb[0].mxu0
        %9791 = vmatprep.mubr.bf16.mxu0 %v8556
        %9792 = vmatmul.mubr.bf16.gmra.mrb[0].mxu0 %v8492
        %v9793 = vpop.f32.mrb[0].mxu0
        %v9794 = vadd.f32 %v9633, %v9793
        %v9795 = vpop.f32.mrb[0].mxu0
        %v9796 = vpop.f32.mrb[0].mxu0
        %v9797 = vadd.f32 %v9636, %v9796
        %v9798 = vpop.f32.mrb[0].mxu0
        %9799 = vmatprep.mubr.bf16.mxu0 %v8557
        %9800 = vmatmul.mubr.bf16.gmra.mrb[0].mxu0 %v8493
        %v9801 = vpop.f32.mrb[0].mxu0
        %v9802 = vadd.f32 %v9641, %v9801
        %v9803 = vpop.f32.mrb[0].mxu0
        %v9804 = vpop.f32.mrb[0].mxu0
        %v9805 = vadd.f32 %v9644, %v9804
        %v9806 = vpop.f32.mrb[0].mxu0
        %9807 = vmatprep.mubr.bf16.mxu0 %v8558
        %9808 = vmatmul.mubr.bf16.gmra.mrb[0].mxu0 %v8494
        %v9809 = vpop.f32.mrb[0].mxu0
        %v9810 = vadd.f32 %v9649, %v9809
        %v9811 = vpop.f32.mrb[0].mxu0
        %v9812 = vpop.f32.mrb[0].mxu0
        %v9813 = vadd.f32 %v9652, %v9812
        %v9814 = vpop.f32.mrb[0].mxu0
        %9815 = vmatprep.mubr.bf16.mxu0 %v8559
        %9816 = vmatmul.mubr.bf16.gmra.mrb[0].mxu0 %v8495
        %v9817 = vpop.f32.mrb[0].mxu0
        %v9818 = vadd.f32 %v9657, %v9817
        %v9819 = vpop.f32.mrb[0].mxu0
        %v9820 = vpop.f32.mrb[0].mxu0
        %v9821 = vadd.f32 %v9660, %v9820
        %v9822 = vpop.f32.mrb[0].mxu0
        %9823 = vmatprep.mubr.bf16.mxu0 %v8560
        %9824 = vmatmul.mubr.bf16.gmra.mrb[0].mxu0 %v8496
        %v9825 = vpop.f32.mrb[0].mxu0
        %v9826 = vadd.f32 %v9665, %v9825
        %v9827 = vpop.f32.mrb[0].mxu0
        %v9828 = vpop.f32.mrb[0].mxu0
        %v9829 = vadd.f32 %v9668, %v9828
        %v9830 = vpop.f32.mrb[0].mxu0
        %9831 = vmatprep.mubr.bf16.mxu0 %v8561
        %9832 = vmatmul.mubr.bf16.gmra.mrb[0].mxu0 %v8497
        %v9833 = vpop.f32.mrb[0].mxu0
        %v9834 = vadd.f32 %v9673, %v9833
        %v9835 = vpop.f32.mrb[0].mxu0
        %v9836 = vpop.f32.mrb[0].mxu0
        %v9837 = vadd.f32 %v9676, %v9836
        %v9838 = vpop.f32.mrb[0].mxu0
        %9839 = vmatprep.mubr.bf16.mxu0 %v8562
        %9840 = vmatmul.mubr.bf16.gmra.mrb[0].mxu0 %v8498
        %v9841 = vpop.f32.mrb[0].mxu0
        %v9842 = vadd.f32 %v9681, %v9841
        %v9843 = vpop.f32.mrb[0].mxu0
        %v9844 = vpop.f32.mrb[0].mxu0
        %v9845 = vadd.f32 %v9684, %v9844
        %v9846 = vpop.f32.mrb[0].mxu0
        %9847 = vmatprep.mubr.bf16.mxu0 %v8563
        %9848 = vmatmul.mubr.bf16.gmra.mrb[0].mxu0 %v8499
        %v9849 = vpop.f32.mrb[0].mxu0
        %v9850 = vadd.f32 %v9689, %v9849
        %v9851 = vpop.f32.mrb[0].mxu0
        %v9852 = vpop.f32.mrb[0].mxu0
        %v9853 = vadd.f32 %v9692, %v9852
        %v9854 = vpop.f32.mrb[0].mxu0
        %9855 = vmatprep.mubr.bf16.mxu0 %v8564
        %9856 = vmatmul.mubr.bf16.gmra.mrb[0].mxu0 %v8500
        %v9857 = vpop.f32.mrb[0].mxu0
        %v9858 = vadd.f32 %v9697, %v9857
        %v9859 = vpop.f32.mrb[0].mxu0
        %v9860 = vpop.f32.mrb[0].mxu0
        %v9861 = vadd.f32 %v9700, %v9860
        %v9862 = vpop.f32.mrb[0].mxu0
        %9863 = vmatprep.mubr.bf16.mxu0 %v8565
        %9864 = vmatmul.mubr.bf16.gmra.mrb[0].mxu0 %v8501
        %v9865 = vpop.f32.mrb[0].mxu0
        %v9866 = vadd.f32 %v9705, %v9865
        %v9867 = vpop.f32.mrb[0].mxu0
        %v9868 = vpop.f32.mrb[0].mxu0
        %v9869 = vadd.f32 %v9708, %v9868
        %v9870 = vpop.f32.mrb[0].mxu0
        %9871 = vdwg.mxu0
        %9872 = vmatprep.subr.bf16.mxu0 0
        %9873 = vmatpush1.bf16.msra.mxu0 %v9148
        %9874 = vmatprep.subr.bf16.mxu0 0
        %9875 = vmatpush1.bf16.msra.mxu0 %v9149
        %9876 = vmatprep.subr.bf16.mxu0 0
        %9877 = vmatpush1.bf16.msra.mxu0 %v9150
        %9878 = vmatprep.subr.bf16.mxu0 0
        %9879 = vmatpush1.bf16.msra.mxu0 %v9151
        %9880 = vmatprep.subr.bf16.mxu0 0
        %9881 = vmatpush1.bf16.msra.mxu0 %v9152
        %9882 = vmatprep.subr.bf16.mxu0 0
        %9883 = vmatpush1.bf16.msra.mxu0 %v9153
        %9884 = vmatprep.subr.bf16.mxu0 0
        %9885 = vmatpush1.bf16.msra.mxu0 %v9154
        %9886 = vmatprep.subr.bf16.mxu0 0
        %9887 = vmatpush1.bf16.msra.mxu0 %v9155
        %9888 = vmatprep.subr.bf16.mxu0 0
        %9889 = vmatpush1.bf16.msra.mxu0 0
        %9890 = vmatprep.subr.bf16.mxu0 0
        %9891 = vmatpush1.bf16.msra.mxu0 0
        %9892 = vmatprep.subr.bf16.mxu0 0
        %9893 = vmatpush1.bf16.msra.mxu0 0
        %9894 = vmatprep.subr.bf16.mxu0 0
        %9895 = vmatpush1.bf16.msra.mxu0 0
        %9896 = vmatprep.subr.bf16.mxu0 0
        %9897 = vmatpush1.bf16.msra.mxu0 0
        %9898 = vmatprep.subr.bf16.mxu0 0
        %9899 = vmatpush1.bf16.msra.mxu0 0
        %9900 = vmatprep.subr.bf16.mxu0 0
        %9901 = vmatpush1.bf16.msra.mxu0 0
        %9902 = vmatprep.subr.bf16.mxu0 0
        %9903 = vmatpush1.bf16.msra.mxu0 0
        %9904 = vmatprep.mubr.bf16.mxu0 0
        %9905 = vmatmul.mubr.bf16.gmra.mrb[0].mxu0 %v8614
        %v9906 = vpop.f32.mrb[0].mxu0
        %v9907 = vadd.f32 %v9746, %v9906
        %v9908 = vpop.f32.mrb[0].mxu0
        %v9909 = vpop.f32.mrb[0].mxu0
        %v9910 = vadd.f32 %v9749, %v9909
        %v9911 = vpop.f32.mrb[0].mxu0
        %9912 = vmatprep.mubr.bf16.mxu0 0
        %9913 = vmatmul.mubr.bf16.gmra.mrb[0].mxu0 %v8615
        %v9914 = vpop.f32.mrb[0].mxu0
        %v9915 = vadd.f32 %v9754, %v9914
        %v9916 = vpop.f32.mrb[0].mxu0
        %v9917 = vpop.f32.mrb[0].mxu0
        %v9918 = vadd.f32 %v9757, %v9917
        %v9919 = vpop.f32.mrb[0].mxu0
        %9920 = vmatprep.mubr.bf16.mxu0 0
        %9921 = vmatmul.mubr.bf16.gmra.mrb[0].mxu0 %v8616
        %v9922 = vpop.f32.mrb[0].mxu0
        %v9923 = vadd.f32 %v9762, %v9922
        %v9924 = vpop.f32.mrb[0].mxu0
        %v9925 = vpop.f32.mrb[0].mxu0
        %v9926 = vadd.f32 %v9765, %v9925
        %v9927 = vpop.f32.mrb[0].mxu0
        %9928 = vmatprep.mubr.bf16.mxu0 0
        %9929 = vmatmul.mubr.bf16.gmra.mrb[0].mxu0 %v8617
        %v9930 = vpop.f32.mrb[0].mxu0
        %v9931 = vadd.f32 %v9770, %v9930
        %v9932 = vpop.f32.mrb[0].mxu0
        %v9933 = vpop.f32.mrb[0].mxu0
        %v9934 = vadd.f32 %v9773, %v9933
        %v9935 = vpop.f32.mrb[0].mxu0
        %9936 = vmatprep.mubr.bf16.mxu0 0
        %9937 = vmatmul.mubr.bf16.gmra.mrb[0].mxu0 %v8618
        %v9938 = vpop.f32.mrb[0].mxu0
        %v9939 = vadd.f32 %v9778, %v9938
        %v9940 = vpop.f32.mrb[0].mxu0
        %v9941 = vpop.f32.mrb[0].mxu0
        %v9942 = vadd.f32 %v9781, %v9941
        %v9943 = vpop.f32.mrb[0].mxu0
        %9944 = vmatprep.mubr.bf16.mxu0 0
        %9945 = vmatmul.mubr.bf16.gmra.mrb[0].mxu0 %v8619
        %v9946 = vpop.f32.mrb[0].mxu0
        %v9947 = vadd.f32 %v9786, %v9946
        %v9948 = vpop.f32.mrb[0].mxu0
        %v9949 = vpop.f32.mrb[0].mxu0
        %v9950 = vadd.f32 %v9789, %v9949
        %v9951 = vpop.f32.mrb[0].mxu0
        %9952 = vmatprep.mubr.bf16.mxu0 0
        %9953 = vmatmul.mubr.bf16.gmra.mrb[0].mxu0 %v8620
        %v9954 = vpop.f32.mrb[0].mxu0
        %v9955 = vadd.f32 %v9794, %v9954
        %v9956 = vpop.f32.mrb[0].mxu0
        %v9957 = vpop.f32.mrb[0].mxu0
        %v9958 = vadd.f32 %v9797, %v9957
        %v9959 = vpop.f32.mrb[0].mxu0
        %9960 = vmatprep.mubr.bf16.mxu0 0
        %9961 = vmatmul.mubr.bf16.gmra.mrb[0].mxu0 %v8621
        %v9962 = vpop.f32.mrb[0].mxu0
        %v9963 = vadd.f32 %v9802, %v9962
        %v9964 = vpop.f32.mrb[0].mxu0
        %v9965 = vpop.f32.mrb[0].mxu0
        %v9966 = vadd.f32 %v9805, %v9965
        %v9967 = vpop.f32.mrb[0].mxu0
        %9968 = vmatprep.mubr.bf16.mxu0 0
        %9969 = vmatmul.mubr.bf16.gmra.mrb[0].mxu0 %v8622
        %v9970 = vpop.f32.mrb[0].mxu0
        %v9971 = vadd.f32 %v9810, %v9970
        %v9972 = vpop.f32.mrb[0].mxu0
        %v9973 = vpop.f32.mrb[0].mxu0
        %v9974 = vadd.f32 %v9813, %v9973
        %v9975 = vpop.f32.mrb[0].mxu0
        %9976 = vmatprep.mubr.bf16.mxu0 0
        %9977 = vmatmul.mubr.bf16.gmra.mrb[0].mxu0 %v8623
        %v9978 = vpop.f32.mrb[0].mxu0
        %v9979 = vadd.f32 %v9818, %v9978
        %v9980 = vpop.f32.mrb[0].mxu0
        %v9981 = vpop.f32.mrb[0].mxu0
        %v9982 = vadd.f32 %v9821, %v9981
        %v9983 = vpop.f32.mrb[0].mxu0
        %9984 = vmatprep.mubr.bf16.mxu0 0
        %9985 = vmatmul.mubr.bf16.gmra.mrb[0].mxu0 %v8624
        %v9986 = vpop.f32.mrb[0].mxu0
        %v9987 = vadd.f32 %v9826, %v9986
        %v9988 = vpop.f32.mrb[0].mxu0
        %v9989 = vpop.f32.mrb[0].mxu0
        %v9990 = vadd.f32 %v9829, %v9989
        %v9991 = vpop.f32.mrb[0].mxu0
        %9992 = vmatprep.mubr.bf16.mxu0 0
        %9993 = vmatmul.mubr.bf16.gmra.mrb[0].mxu0 %v8625
        %v9994 = vpop.f32.mrb[0].mxu0
        %v9995 = vadd.f32 %v9834, %v9994
        %v9996 = vpop.f32.mrb[0].mxu0
        %v9997 = vpop.f32.mrb[0].mxu0
        %v9998 = vadd.f32 %v9837, %v9997
        %v9999 = vpop.f32.mrb[0].mxu0
        %10000 = vmatprep.mubr.bf16.mxu0 0
        %10001 = vmatmul.mubr.bf16.gmra.mrb[0].mxu0 %v8626
        %v10002 = vpop.f32.mrb[0].mxu0
        %v10003 = vadd.f32 %v9842, %v10002
        %v10004 = vpop.f32.mrb[0].mxu0
        %v10005 = vpop.f32.mrb[0].mxu0
        %v10006 = vadd.f32 %v9845, %v10005
        %v10007 = vpop.f32.mrb[0].mxu0
        %10008 = vmatprep.mubr.bf16.mxu0 0
        %10009 = vmatmul.mubr.bf16.gmra.mrb[0].mxu0 %v8627
        %v10010 = vpop.f32.mrb[0].mxu0
        %v10011 = vadd.f32 %v9850, %v10010
        %v10012 = vpop.f32.mrb[0].mxu0
        %v10013 = vpop.f32.mrb[0].mxu0
        %v10014 = vadd.f32 %v9853, %v10013
        %v10015 = vpop.f32.mrb[0].mxu0
        %10016 = vmatprep.mubr.bf16.mxu0 0
        %10017 = vmatmul.mubr.bf16.gmra.mrb[0].mxu0 %v8628
        %v10018 = vpop.f32.mrb[0].mxu0
        %v10019 = vadd.f32 %v9858, %v10018
        %v10020 = vpop.f32.mrb[0].mxu0
        %v10021 = vpop.f32.mrb[0].mxu0
        %v10022 = vadd.f32 %v9861, %v10021
        %v10023 = vpop.f32.mrb[0].mxu0
        %10024 = vmatprep.mubr.bf16.mxu0 0
        %10025 = vmatmul.mubr.bf16.gmra.mrb[0].mxu0 %v8629
        %v10026 = vpop.f32.mrb[0].mxu0
        %v10027 = vadd.f32 %v9866, %v10026
        %v10028 = vpop.f32.mrb[0].mxu0
        %v10029 = vpop.f32.mrb[0].mxu0
        %v10030 = vadd.f32 %v9869, %v10029
        %v10031 = vpop.f32.mrb[0].mxu0
        %10032 = vdwg.mxu0
        %v10033 = vmax.f32 %v9907, 0.0
        %v10034 = vmax.f32 %v9910, 0.0
        %v10035 = vmax.f32 %v9915, 0.0
        %v10036 = vmax.f32 %v9918, 0.0
        %v10037 = vmax.f32 %v9923, 0.0
        %v10038 = vmax.f32 %v9926, 0.0
        %v10039 = vmax.f32 %v9931, 0.0
        %v10040 = vmax.f32 %v9934, 0.0
        %v10041 = vmax.f32 %v9939, 0.0
        %v10042 = vmax.f32 %v9942, 0.0
        %v10043 = vmax.f32 %v9947, 0.0
        %v10044 = vmax.f32 %v9950, 0.0
        %v10045 = vmax.f32 %v9955, 0.0
        %v10046 = vmax.f32 %v9958, 0.0
        %v10047 = vmax.f32 %v9963, 0.0
        %v10048 = vmax.f32 %v9966, 0.0
        %v10049 = vmax.f32 %v9971, 0.0
        %v10050 = vmax.f32 %v9974, 0.0
        %v10051 = vmax.f32 %v9979, 0.0
        %v10052 = vmax.f32 %v9982, 0.0
        %v10053 = vmax.f32 %v9987, 0.0
        %v10054 = vmax.f32 %v9990, 0.0
        %v10055 = vmax.f32 %v9995, 0.0
        %v10056 = vmax.f32 %v9998, 0.0
        %v10057 = vmax.f32 %v10003, 0.0
        %v10058 = vmax.f32 %v10006, 0.0
        %v10059 = vmax.f32 %v10011, 0.0
        %v10060 = vmax.f32 %v10014, 0.0
        %v10061 = vmax.f32 %v10019, 0.0
        %v10062 = vmax.f32 %v10022, 0.0
        %v10063 = vmax.f32 %v10027, 0.0
        %v10064 = vmax.f32 %v10030, 0.0
        %10065 = vst [vmem:[%s217] sm:$0xff] %v10033
        %10066 = vst [vmem:[%s217 + $0x8] sm:$0xff] %v10034
        %10067 = vst [vmem:[%s217 + $0x10] sm:$0xff] %v10035
        %10068 = vst [vmem:[%s217 + $0x18] sm:$0xff] %v10036
        %10069 = vst [vmem:[%s217 + $0x20] sm:$0xff] %v10037
        %10070 = vst [vmem:[%s217 + $0x28] sm:$0xff] %v10038
        %10071 = vst [vmem:[%s217 + $0x30] sm:$0xff] %v10039
        %10072 = vst [vmem:[%s217 + $0x38] sm:$0xff] %v10040
        %10073 = vst [vmem:[%s217 + $0x40] sm:$0xff] %v10041
        %10074 = vst [vmem:[%s217 + $0x48] sm:$0xff] %v10042
        %10075 = vst [vmem:[%s217 + $0x50] sm:$0xff] %v10043
        %10076 = vst [vmem:[%s217 + $0x58] sm:$0xff] %v10044
        %10077 = vst [vmem:[%s217 + $0x60] sm:$0xff] %v10045
        %10078 = vst [vmem:[%s217 + $0x68] sm:$0xff] %v10046
        %10079 = vst [vmem:[%s217 + $0x70] sm:$0xff] %v10047
        %10080 = vst [vmem:[%s217 + $0x78] sm:$0xff] %v10048
        %10081 = vst [vmem:[%s217 + $0x80] sm:$0xff] %v10049
        %10082 = vst [vmem:[%s217 + $0x88] sm:$0xff] %v10050
        %10083 = vst [vmem:[%s217 + $0x90] sm:$0xff] %v10051
        %10084 = vst [vmem:[%s217 + $0x98] sm:$0xff] %v10052
        %10085 = vst [vmem:[%s217 + $0xa0] sm:$0xff] %v10053
        %10086 = vst [vmem:[%s217 + $0xa8] sm:$0xff] %v10054
        %10087 = vst [vmem:[%s217 + $0xb0] sm:$0xff] %v10055
        %10088 = vst [vmem:[%s217 + $0xb8] sm:$0xff] %v10056
        %10089 = vst [vmem:[%s217 + $0xc0] sm:$0xff] %v10057
        %10090 = vst [vmem:[%s217 + $0xc8] sm:$0xff] %v10058
        %10091 = vst [vmem:[%s217 + $0xd0] sm:$0xff] %v10059
        %10092 = vst [vmem:[%s217 + $0xd8] sm:$0xff] %v10060
        %10093 = vst [vmem:[%s217 + $0xe0] sm:$0xff] %v10061
        %10094 = vst [vmem:[%s217 + $0xe8] sm:$0xff] %v10062
        %10095 = vst [vmem:[%s217 + $0xf0] sm:$0xff] %v10063
        %10096 = vst [vmem:[%s217 + $0xf8] sm:$0xff] %v10064
        %s10097 = sand.u32 %s137, 1
        %s10098 = scalar_lea.sflag [#allocation5], %s10097
        %s10099 = sand.u32 %s137, 1
        %s10100 = smul.addr %s10099, 256
        %s10101 = scalar_lea.vmem [#allocation4], %s10100
        // Predicated region
        $region41: #{ocr_feature_extractor_forward.1} parent=39 // pred_check
          %p10102 = pneg %p147
        $region42: #{ocr_feature_extractor_forward.1} parent=39 // pred_check_branch
          %10104 = sbr.rel (%p10102) target = $region44
        $region43: #{ocr_feature_extractor_forward.1} parent=39 // pred_region
          %s10106 = ssub.s32 4096, 4096
          %10107 = vsyncadd %s10098, %s10106
          %s10108 = smul.addr %s19, 32
          %s10109 = smul.addr %s10108, 128
          %s10110 = scalar_lea.hbm %s5, %s10109
          %s10111 = sshll.u32 %s10101, 4
          %s10112 = int_to_ptr.vmem [resolvable:$true] %s10111
          %10117 = dma.vmem_to_hbm [thread:$0]  %s10112, 4096, %s10110, %s10098, 128, 128, 8
        $region44: #{ocr_feature_extractor_forward.1} parent=39 // pred_fallthru
          _
      $region40: #{ocr_feature_extractor_forward.1} parent=5 // pred_fallthru
        _
      %p10118 = scmp.le.s32.totalorder 2, %s14
      // Predicated region
      $region45: #{ocr_feature_extractor_forward.1} parent=5 // pred_check
        %p10119 = pneg %p10118
      $region46: #{ocr_feature_extractor_forward.1} parent=5 // pred_check_branch
        %10121 = sbr.rel (%p10119) target = $region48
      $region47: #{ocr_feature_extractor_forward.1} parent=5 // pred_region
        %s10122 = ssub.s32 %s14, 2
        // Predicated region
        $region49: #{ocr_feature_extractor_forward.1} parent=47 // pred_check
          %p10123 = pneg %p153
        $region50: #{ocr_feature_extractor_forward.1} parent=47 // pred_check_branch
          %10125 = sbr.rel (%p10123) target = $region52
        $region51: #{ocr_feature_extractor_forward.1} parent=47 // pred_region
          %s10126 = sand.u32 %s138, 1
          %s10127 = scalar_lea.sflag [#allocation5], %s10126
          %s10128 = sand.u32 %s138, 1
          %s10129 = smul.addr %s10128, 256
          %s10130 = scalar_lea.vmem [#allocation4], %s10129
          %10131 = dma.done %s10127, 4096
        $region52: #{ocr_feature_extractor_forward.1} parent=47 // pred_fallthru
          _
      $region48: #{ocr_feature_extractor_forward.1} parent=5 // pred_fallthru
        _
    $region6: #{ocr_feature_extractor_forward.1} parent=1 // loop_footer
      %s18 = sadd.s32 1, %s14
    $region7: #{ocr_feature_extractor_forward.1} parent=1 // loop_footer_branch
      %13 = sbr.rel target = $region3
    $region8: #{ocr_feature_extractor_forward.1} parent=1 // loop_exit
      _
    %10132 = vsyncpa [#allocation5], 1
    %s10133 = scalar_lea.sflag [#allocation5], 1
    %10134 = vsyncpa %s10133, 1

</llo_original>
